<compile_context>
chip_gen: v6e
topology: v6e:2x2x1
jax: 0.10.0
libtpu: 0.0.40
codegen_flags: <defaults>
</compile_context>

<pallas_src>
import functools

import jax
import jax.numpy as jnp
import numpy as np
from jax.experimental import pallas as pl
from jax.experimental.pallas import tpu as pltpu

LANES = 128      # vreg lane width; every spatial block is padded to this
CH_ALIGN = 8     # sublane alignment for channel / contraction axes


# ------------------------------ Pallas kernel ------------------------------ #

def _fused_cnn_kernel(p1_ref, w1_ref, b1_ref,
                      s2_ref, w2_ref, b2_ref,
                      s3_ref, w3_ref, b3_ref,
                      s4_ref, w4_ref, b4_ref,
                      fcw_ref, fcb_ref, r_ref,
                      o_ref):
    f32 = jnp.float32
    bf16 = jnp.bfloat16

    def pool_bias_relu(y, b_col):
        # y: (C, 4*LANES) f32 with columns grouped by 2x2-pool corner.
        # Fused maxpool + (conv bias + BN shift) + ReLU -> (C, LANES) f32.
        p = jnp.maximum(jnp.maximum(y[:, 0 * LANES:1 * LANES],
                                    y[:, 1 * LANES:2 * LANES]),
                        jnp.maximum(y[:, 2 * LANES:3 * LANES],
                                    y[:, 3 * LANES:4 * LANES]))
        return jnp.maximum(p + b_col, 0.0)

    # ---- layer 1: conv(5x5)+BN+ReLU+pool (bf16 patches built by XLA glue) ---
    y = jnp.dot(w1_ref[...], p1_ref[...], preferred_element_type=f32)
    a = pool_bias_relu(y, b1_ref[...])                       # (C1p, LANES) f32

    # ---- layers 2..4: two big matmuls per layer, pool fused -----------------
    # Z_all = W_stacked @ A        (n_off*Cout, LANES)   -- large-M matmul
    # Z_cat = lane-concat of the per-tap (Cout, LANES) row blocks of Z_all
    # Y     = Z_cat @ S_cat        (Cout, 4*LANES)       -- single K=n_off*128
    for s_ref, w_ref, b_ref in ((s2_ref, w2_ref, b2_ref),
                                (s3_ref, w3_ref, b3_ref),
                                (s4_ref, w4_ref, b4_ref)):
        cout_p = b_ref.shape[0]
        n_off = w_ref.shape[0] // cout_p
        z_all = jnp.dot(w_ref[...], a.astype(bf16),
                        preferred_element_type=f32)          # (n_off*Cp, LANES)
        # vreg-aligned row slices placed side-by-side along lanes (cheap copies)
        z_cat = jnp.concatenate(
            [z_all[k * cout_p:(k + 1) * cout_p, :] for k in range(n_off)],
            axis=1)                                          # (Cp, n_off*LANES)
        y = jnp.dot(z_cat.astype(bf16), s_ref[...],
                    preferred_element_type=f32)              # (Cp, 4*LANES)
        a = pool_bias_relu(y, b_ref[...])                    # (Cp, LANES) f32

    # ---- fused flatten (NCHW order) + Linear --------------------------------
    n_sp = fcw_ref.shape[0]
    a_bf = a.astype(bf16)
    o = jnp.zeros((o_ref.shape[0], LANES), f32)
    for sp in range(n_sp):
        t = jnp.dot(fcw_ref[sp], a_bf, preferred_element_type=f32)   # (F, LANES)
        o = o + jnp.dot(t.astype(bf16), r_ref[sp],
                        preferred_element_type=f32)
    o_ref[...] = o + fcb_ref[...]


# --------------------------- plan / constant prep --------------------------- #

def _ceil_to(v, m):
    return -(-v // m) * m


def _fold_conv_layer(layer, cin_pad, eps=1e-5):
    """Fold BN scale into conv weights.

    Returns (k*k, cout_pad, cin_pad) f32 weight stack and (cout_pad, 1) f32
    bias column containing conv bias + BN shift.  Padded channels are zero."""
    w, b = layer["w"], layer["b"]
    cout, cin, k, _ = w.shape
    scale = layer["gamma"] / jnp.sqrt(layer["rvar"] + eps)
    shift = (b - layer["rmean"]) * scale + layer["beta"]
    wf = w * scale[:, None, None, None]
    w_stack = jnp.transpose(wf, (2, 3, 0, 1)).reshape(k * k, cout, cin)
    cout_p = _ceil_to(cout, CH_ALIGN)
    w_stack = jnp.pad(w_stack, ((0, 0), (0, cout_p - cout), (0, cin_pad - cin)))
    b_col = jnp.pad(shift, (0, cout_p - cout))[:, None]
    return w_stack.astype(jnp.float32), b_col.astype(jnp.float32)


def _build_select_matrices(k, h_in, w_in, bc, dtype):
    """0/1 selection matrices implementing the 'same'-conv shift, zero padding
    and the pool-corner-grouped output ordering.  Shape (k*k, LANES, 4*LANES)."""
    pad = k // 2
    h_out, w_out = h_in // 2, w_in // 2
    s = np.zeros((k * k, LANES, 4 * LANES), np.float32)
    for ki in range(k):
        for kj in range(k):
            kidx = ki * k + kj
            for b in range(bc):
                for i in range(h_out):
                    for j in range(w_out):
                        m = (b * h_out + i) * w_out + j
                        for di in range(2):
                            for dj in range(2):
                                hi = 2 * i + di + ki - pad
                                wi = 2 * j + dj + kj - pad
                                if 0 <= hi < h_in and 0 <= wi < w_in:
                                    n = (b * h_in + hi) * w_in + wi
                                    col = (di * 2 + dj) * LANES + m
                                    s[kidx, n, col] = 1.0
    return jnp.asarray(s, dtype)


def build_plan(params, input_dims, batch, eps=1e-5):
    """Precompute every x-independent kernel operand (folded bf16 weights,
    f32 biases, bf16 selection matrices, FC head)."""
    H, W = input_dims
    assert H % 16 == 0 and W % 16 == 0, "4 pooling stages require dims % 16 == 0"
    convs = params["convs"]
    assert len(convs) == 4

    hq, wq = H // 2, W // 2
    assert hq * wq <= LANES, "first pooled plane must fit one 128-lane block"
    bc_cap = max(1, LANES // (hq * wq))
    # keep >= 2 grid steps whenever batch >= 2 so the "parallel" axis can shard
    # across v7x's two TensorCores
    min_chunks = 2 if batch >= 2 else 1
    bc = max(1, min(batch, bc_cap, -(-batch // min_chunks)))
    nc = -(-batch // bc)

    k1 = convs[0]["k"]
    kk1_pad = _ceil_to(k1 * k1, CH_ALIGN)       # 25 -> 32 sublanes, clean tiles
    plan = dict(bc=bc, nc=nc, H=H, W=W, k1=k1, kk1_pad=kk1_pad,
                feature_size=int(params["fc_b"].shape[0]))

    # layer 1 (in_channels == 1): weights as (C1p, kk1_pad), patches at runtime
    c0 = convs[0]
    assert c0["w"].shape[1] == 1, "in_channels must be 1 (module constraint)"
    w_stack, b_col = _fold_conv_layer(c0, cin_pad=1, eps=eps)
    w1 = w_stack.reshape(k1 * k1, -1).T                      # (C1p, k1*k1)
    w1 = jnp.pad(w1, ((0, 0), (0, kk1_pad - k1 * k1)))
    plan["w1"] = w1.astype(jnp.bfloat16)
    plan["b1"] = b_col

    # layers 2..4: stacked selection matrices + stacked folded weights (bf16)
    sels, wsts, bcols = [], [], []
    h_in, w_in = hq, wq
    cin_pad = plan["w1"].shape[0]
    for layer in convs[1:]:
        w_stack, b_col = _fold_conv_layer(layer, cin_pad=cin_pad, eps=eps)
        kk, cout_p, _ = w_stack.shape
        sel = _build_select_matrices(layer["k"], h_in, w_in, bc, jnp.bfloat16)
        sels.append(sel.reshape(kk * LANES, 4 * LANES))           # S_cat
        wsts.append(w_stack.reshape(kk * cout_p, cin_pad).astype(jnp.bfloat16))
        bcols.append(b_col)
        cin_pad = cout_p
        h_in //= 2
        w_in //= 2
    plan["sel"], plan["wst"], plan["bcol"] = sels, wsts, bcols

    # fused fully-connected head (PyTorch flattens NCHW -> (c, h, w) order)
    c_last = convs[-1]["w"].shape[0]
    c_last_p = cin_pad
    hw_f = h_in * w_in
    fsz = plan["feature_size"]
    fcw = params["fc_w"].reshape(c_last, hw_f, fsz)
    fcw_t = jnp.transpose(fcw, (1, 2, 0))                    # (hw_f, F, C)
    fcw_t = jnp.pad(fcw_t, ((0, 0), (0, 0), (0, c_last_p - c_last)))
    plan["fcw_t"] = fcw_t.astype(jnp.bfloat16)
    plan["fcb"] = params["fc_b"][:, None].astype(jnp.float32)
    r = np.zeros((hw_f, LANES, LANES), np.float32)
    for sp in range(hw_f):
        for b in range(bc):
            r[sp, b * hw_f + sp, b] = 1.0
    plan["r"] = jnp.asarray(r, jnp.bfloat16)                 # exact 0/1 values
    return plan


def _build_layer1_patches(x, k, bc, nc, kk_pad):
    """im2col for layer 1 only (input preprocessing): returns bf16
    (kk_pad, nc*4*LANES) with columns grouped by (chunk, pool corner)."""
    B, H, W = x.shape
    hq, wq = H // 2, W // 2
    if nc * bc != B:
        x = jnp.pad(x, ((0, nc * bc - B), (0, 0), (0, 0)))
    pad = k // 2
    xp = jnp.pad(x.reshape(nc, bc, H, W),
                 ((0, 0), (0, 0), (pad, pad), (pad, pad)))
    cols = []
    for ki in range(k):
        for kj in range(k):
            v = xp[:, :, ki:ki + H, kj:kj + W]             # (nc, bc, H, W)
            v = v.reshape(nc, bc, hq, 2, wq, 2)
            v = jnp.transpose(v, (0, 3, 5, 1, 2, 4))       # (nc, di, dj, b, i, j)
            v = v.reshape(nc, 4, bc * hq * wq)
            v = jnp.pad(v, ((0, 0), (0, 0), (0, LANES - bc * hq * wq)))
            cols.append(v.reshape(nc, 4 * LANES))
    p = jnp.stack(cols, axis=0)                            # (k*k, nc, 4*LANES)
    p = jnp.pad(p, ((0, kk_pad - k * k), (0, 0), (0, 0)))
    return p.reshape(kk_pad, nc * 4 * LANES).astype(jnp.bfloat16)


# --------------------------------- forward ---------------------------------- #

def cnn_backbone_forward(x, plan):
    B = x.shape[0]
    nc, bc, k1 = plan["nc"], plan["bc"], plan["k1"]
    kk1 = plan["kk1_pad"]
    fsz = plan["feature_size"]
    p1 = _build_layer1_patches(x, k1, bc, nc, kk1)

    s2, s3, s4 = plan["sel"]
    w2, w3, w4 = plan["wst"]
    b2, b3, b4 = plan["bcol"]
    consts = (plan["w1"], plan["b1"], s2, w2, b2, s3, w3, b3, s4, w4, b4,
              plan["fcw_t"], plan["fcb"], plan["r"])

    def full(a):
        return pl.BlockSpec(a.shape, lambda g, nd=a.ndim: (0,) * nd)

    # advisory cost so XLA can overlap patch-building / output glue with us
    c1p = plan["w1"].shape[0]
    flops_chunk = 2 * c1p * kk1 * 4 * LANES
    for s, w, b in ((s2, w2, b2), (s3, w3, b3), (s4, w4, b4)):
        flops_chunk += 2 * w.shape[0] * w.shape[1] * LANES            # W @ A
        flops_chunk += 2 * b.shape[0] * s.shape[0] * s.shape[1]       # Z @ S
    hw_f = plan["fcw_t"].shape[0]
    c4p = plan["fcw_t"].shape[2]
    flops_chunk += 2 * hw_f * (fsz * c4p * LANES + fsz * LANES * LANES)
    bytes_accessed = int(p1.size) * 2 \
        + sum(int(c.size) * c.dtype.itemsize for c in consts) \
        + fsz * nc * LANES * 4
    cost = pl.CostEstimate(flops=int(nc * flops_chunk), transcendentals=0,
                           bytes_accessed=int(bytes_accessed))

    out = pl.pallas_call(
        _fused_cnn_kernel,
        out_shape=jax.ShapeDtypeStruct((fsz, nc * LANES), jnp.float32),
        grid=(nc,),
        in_specs=[pl.BlockSpec((kk1, 4 * LANES), lambda g: (0, g))]
                 + [full(c) for c in consts],
        out_specs=pl.BlockSpec((fsz, LANES), lambda g: (0, g)),
        compiler_params=pltpu.CompilerParams(
            dimension_semantics=("parallel",),   # batch chunks -> megacore/TCs
            vmem_limit_bytes=32 * 1024 * 1024),
        cost_estimate=cost,
    )(p1, *consts)

    out = out.reshape(fsz, nc, LANES)[:, :, :bc]           # (F, nc, bc)
    return jnp.transpose(out, (1, 2, 0)).reshape(nc * bc, fsz)[:B]


# ------------------------------- model params ------------------------------- #

def init_params(input_dims, in_channels, filters, feature_size, key):
    assert in_channels == 1, "module's view()/BatchNorm counts require in_channels==1"
    kernel_sizes = [5, 5, 3, 3]
    cins = [in_channels] + list(filters[:-1])
    keys = jax.random.split(key, len(filters) + 1)
    convs = []
    for i, (cin, cout, k) in enumerate(zip(cins, filters, kernel_sizes)):
        wkey, bkey = jax.random.split(keys[i])
        fan_in = cin * k * k
        w = jax.random.normal(wkey, (cout, cin, k, k), jnp.float32) * (2.0 / fan_in) ** 0.5
        b = jax.random.normal(bkey, (cout,), jnp.float32) * 0.01
        convs.append(dict(
            w=w, b=b, k=k,
            gamma=jnp.ones((cout,), jnp.float32),
            beta=jnp.zeros((cout,), jnp.float32),
            rmean=jnp.zeros((cout,), jnp.float32),
            rvar=jnp.ones((cout,), jnp.float32),
        ))
    shape_after = [input_dims[0] // 2 ** len(filters), input_dims[1] // 2 ** len(filters)]
    in_features = filters[3] * shape_after[0] * shape_after[1]
    wkey, bkey = jax.random.split(keys[-1])
    fc_w = jax.random.normal(wkey, (in_features, feature_size), jnp.float32) * (1.0 / in_features) ** 0.5
    fc_b = jax.random.normal(bkey, (feature_size,), jnp.float32) * 0.01
    return dict(convs=convs, fc_w=fc_w, fc_b=fc_b)


# ------------------------- pure-JAX reference (check) ----------------------- #

def _reference_forward(x, params, eps=1e-5):
    out = x[:, None]                                       # NCHW, Cin = 1
    for layer in params["convs"]:
        k = layer["k"]
        pad = k // 2
        y = jax.lax.conv_general_dilated(
            out, layer["w"], window_strides=(1, 1),
            padding=((pad, pad), (pad, pad)),
            dimension_numbers=("NCHW", "OIHW", "NCHW"),
            precision=jax.lax.Precision.HIGHEST)
        y = y + layer["b"][None, :, None, None]
        scale = layer["gamma"] / jnp.sqrt(layer["rvar"] + eps)
        y = (y - layer["rmean"][None, :, None, None]) * scale[None, :, None, None] \
            + layer["beta"][None, :, None, None]
        y = jnp.maximum(y, 0.0)
        Bn, Cn, Hn, Wn = y.shape
        out = y.reshape(Bn, Cn, Hn // 2, 2, Wn // 2, 2).max(axis=(3, 5))
    flat = out.reshape(out.shape[0], -1)
    return jnp.dot(flat, params["fc_w"],
                   precision=jax.lax.Precision.HIGHEST) + params["fc_b"]


# ----------------------------------- main ------------------------------------ #

if __name__ == "__main__":
    key = jax.random.PRNGKey(0)
    pkey, xkey = jax.random.split(key)

    input_dims = (16, 16)
    in_channels = 1
    filters = [4, 8, 8, 8]
    feature_size = 32
    batch = 2

    params = init_params(input_dims, in_channels, filters, feature_size, pkey)
    x = jax.random.normal(xkey, (batch, input_dims[0], input_dims[1]), jnp.float32)

    plan = build_plan(params, input_dims, batch)
    fwd = jax.jit(functools.partial(cnn_backbone_forward, plan=plan))
    out = fwd(x)
    jax.block_until_ready(out)
    assert out.shape == (batch, feature_size), out.shape
    assert out.dtype == jnp.float32

    ref = _reference_forward(x, params)
    np.testing.assert_allclose(np.asarray(out), np.asarray(ref),
                               rtol=5e-2, atol=5e-2)
    print("KERNEL_OK")
</pallas_src>

<mosaic_0001>
module attributes {stable_mosaic.version = 11 : i64} {
  func.func @_fused_cnn_kernel(%arg0: i32, %arg1: memref<32x512xbf16, #tpu.memory_space<vmem>>, %arg2: memref<8x32xbf16, #tpu.memory_space<vmem>>, %arg3: memref<8x1xf32, #tpu.memory_space<vmem>>, %arg4: memref<3200x512xbf16, #tpu.memory_space<vmem>>, %arg5: memref<200x8xbf16, #tpu.memory_space<vmem>>, %arg6: memref<8x1xf32, #tpu.memory_space<vmem>>, %arg7: memref<1152x512xbf16, #tpu.memory_space<vmem>>, %arg8: memref<72x8xbf16, #tpu.memory_space<vmem>>, %arg9: memref<8x1xf32, #tpu.memory_space<vmem>>, %arg10: memref<1152x512xbf16, #tpu.memory_space<vmem>>, %arg11: memref<72x8xbf16, #tpu.memory_space<vmem>>, %arg12: memref<8x1xf32, #tpu.memory_space<vmem>>, %arg13: memref<1x32x8xbf16, #tpu.memory_space<vmem>>, %arg14: memref<32x1xf32, #tpu.memory_space<vmem>>, %arg15: memref<1x128x128xbf16, #tpu.memory_space<vmem>>, %arg16: memref<32x128xf32, #tpu.memory_space<vmem>>) attributes {dimension_semantics = [#tpu.dimension_semantics<parallel>], iteration_bounds = array<i64: 2>, scalar_prefetch = 0 : i64, scratch_operands = 0 : i64, tpu.core_type = #tpu.core_type<tc>, window_params = [{transform_indices = @transform_0, window_bounds = array<i64: 32, 512>}, {pipeline_mode = #tpu.pipeline_mode<synchronous>, transform_indices = @transform_1, window_bounds = array<i64: 8, 32>}, {pipeline_mode = #tpu.pipeline_mode<synchronous>, transform_indices = @transform_2, window_bounds = array<i64: 8, 1>}, {pipeline_mode = #tpu.pipeline_mode<synchronous>, transform_indices = @transform_3, window_bounds = array<i64: 3200, 512>}, {pipeline_mode = #tpu.pipeline_mode<synchronous>, transform_indices = @transform_4, window_bounds = array<i64: 200, 8>}, {pipeline_mode = #tpu.pipeline_mode<synchronous>, transform_indices = @transform_5, window_bounds = array<i64: 8, 1>}, {pipeline_mode = #tpu.pipeline_mode<synchronous>, transform_indices = @transform_6, window_bounds = array<i64: 1152, 512>}, {pipeline_mode = #tpu.pipeline_mode<synchronous>, transform_indices = @transform_7, window_bounds = array<i64: 72, 8>}, {pipeline_mode = #tpu.pipeline_mode<synchronous>, transform_indices = @transform_8, window_bounds = array<i64: 8, 1>}, {pipeline_mode = #tpu.pipeline_mode<synchronous>, transform_indices = @transform_9, window_bounds = array<i64: 1152, 512>}, {pipeline_mode = #tpu.pipeline_mode<synchronous>, transform_indices = @transform_10, window_bounds = array<i64: 72, 8>}, {pipeline_mode = #tpu.pipeline_mode<synchronous>, transform_indices = @transform_11, window_bounds = array<i64: 8, 1>}, {pipeline_mode = #tpu.pipeline_mode<synchronous>, transform_indices = @transform_12, window_bounds = array<i64: 1, 32, 8>}, {pipeline_mode = #tpu.pipeline_mode<synchronous>, transform_indices = @transform_13, window_bounds = array<i64: 32, 1>}, {pipeline_mode = #tpu.pipeline_mode<synchronous>, transform_indices = @transform_14, window_bounds = array<i64: 1, 128, 128>}, {transform_indices = @transform_15, window_bounds = array<i64: 32, 128>}]} {
    %c0 = arith.constant 0 : index
    %c0_0 = arith.constant 0 : index
    %0 = vector.load %arg2[%c0, %c0_0] : memref<8x32xbf16, #tpu.memory_space<vmem>>, vector<8x32xbf16>
    %c0_1 = arith.constant 0 : index
    %c0_2 = arith.constant 0 : index
    %1 = vector.load %arg1[%c0_1, %c0_2] : memref<32x512xbf16, #tpu.memory_space<vmem>>, vector<32x512xbf16>
    %cst = arith.constant dense<0.000000e+00> : vector<8x512xf32>
    %2 = tpu.matmul %0, %1, %cst {dimension_numbers = #tpu.dot_dimension_numbers<[1], [0], [0], [1], [0, 0, 1, 1], [], []>} : vector<8x32xbf16>, vector<32x512xbf16>, vector<8x512xf32> -> vector<8x512xf32>
    %c0_3 = arith.constant 0 : index
    %c0_4 = arith.constant 0 : index
    %3 = vector.load %arg3[%c0_3, %c0_4] : memref<8x1xf32, #tpu.memory_space<vmem>>, vector<8x1xf32>
    %4 = vector.extract_strided_slice %2 {offsets = [0, 0], sizes = [8, 128], strides = [1, 1]} : vector<8x512xf32> to vector<8x128xf32>
    %5 = vector.extract_strided_slice %2 {offsets = [0, 128], sizes = [8, 128], strides = [1, 1]} : vector<8x512xf32> to vector<8x128xf32>
    %6 = arith.maximumf %4, %5 : vector<8x128xf32>
    %7 = vector.extract_strided_slice %2 {offsets = [0, 256], sizes = [8, 128], strides = [1, 1]} : vector<8x512xf32> to vector<8x128xf32>
    %8 = vector.extract_strided_slice %2 {offsets = [0, 384], sizes = [8, 128], strides = [1, 1]} : vector<8x512xf32> to vector<8x128xf32>
    %9 = arith.maximumf %7, %8 : vector<8x128xf32>
    %10 = arith.maximumf %6, %9 : vector<8x128xf32>
    %11 = vector.broadcast %3 : vector<8x1xf32> to vector<8x128xf32>
    %12 = arith.addf %10, %11 : vector<8x128xf32>
    %cst_5 = arith.constant 0.000000e+00 : f32
    %13 = vector.broadcast %cst_5 : f32 to vector<8x128xf32>
    %14 = arith.maximumf %12, %13 : vector<8x128xf32>
    %c0_6 = arith.constant 0 : index
    %c0_7 = arith.constant 0 : index
    %15 = vector.load %arg5[%c0_6, %c0_7] : memref<200x8xbf16, #tpu.memory_space<vmem>>, vector<200x8xbf16>
    %16 = arith.truncf %14 : vector<8x128xf32> to vector<8x128xbf16>
    %cst_8 = arith.constant dense<0.000000e+00> : vector<200x128xf32>
    %17 = tpu.matmul %15, %16, %cst_8 {dimension_numbers = #tpu.dot_dimension_numbers<[1], [0], [0], [1], [0, 0, 1, 1], [], []>} : vector<200x8xbf16>, vector<8x128xbf16>, vector<200x128xf32> -> vector<200x128xf32>
    %18 = vector.extract_strided_slice %17 {offsets = [0, 0], sizes = [8, 128], strides = [1, 1]} : vector<200x128xf32> to vector<8x128xf32>
    %19 = vector.extract_strided_slice %17 {offsets = [8, 0], sizes = [8, 128], strides = [1, 1]} : vector<200x128xf32> to vector<8x128xf32>
    %20 = vector.extract_strided_slice %17 {offsets = [16, 0], sizes = [8, 128], strides = [1, 1]} : vector<200x128xf32> to vector<8x128xf32>
    %21 = vector.extract_strided_slice %17 {offsets = [24, 0], sizes = [8, 128], strides = [1, 1]} : vector<200x128xf32> to vector<8x128xf32>
    %22 = vector.extract_strided_slice %17 {offsets = [32, 0], sizes = [8, 128], strides = [1, 1]} : vector<200x128xf32> to vector<8x128xf32>
    %23 = vector.extract_strided_slice %17 {offsets = [40, 0], sizes = [8, 128], strides = [1, 1]} : vector<200x128xf32> to vector<8x128xf32>
    %24 = vector.extract_strided_slice %17 {offsets = [48, 0], sizes = [8, 128], strides = [1, 1]} : vector<200x128xf32> to vector<8x128xf32>
    %25 = vector.extract_strided_slice %17 {offsets = [56, 0], sizes = [8, 128], strides = [1, 1]} : vector<200x128xf32> to vector<8x128xf32>
    %26 = vector.extract_strided_slice %17 {offsets = [64, 0], sizes = [8, 128], strides = [1, 1]} : vector<200x128xf32> to vector<8x128xf32>
    %27 = vector.extract_strided_slice %17 {offsets = [72, 0], sizes = [8, 128], strides = [1, 1]} : vector<200x128xf32> to vector<8x128xf32>
    %28 = vector.extract_strided_slice %17 {offsets = [80, 0], sizes = [8, 128], strides = [1, 1]} : vector<200x128xf32> to vector<8x128xf32>
    %29 = vector.extract_strided_slice %17 {offsets = [88, 0], sizes = [8, 128], strides = [1, 1]} : vector<200x128xf32> to vector<8x128xf32>
    %30 = vector.extract_strided_slice %17 {offsets = [96, 0], sizes = [8, 128], strides = [1, 1]} : vector<200x128xf32> to vector<8x128xf32>
    %31 = vector.extract_strided_slice %17 {offsets = [104, 0], sizes = [8, 128], strides = [1, 1]} : vector<200x128xf32> to vector<8x128xf32>
    %32 = vector.extract_strided_slice %17 {offsets = [112, 0], sizes = [8, 128], strides = [1, 1]} : vector<200x128xf32> to vector<8x128xf32>
    %33 = vector.extract_strided_slice %17 {offsets = [120, 0], sizes = [8, 128], strides = [1, 1]} : vector<200x128xf32> to vector<8x128xf32>
    %34 = vector.extract_strided_slice %17 {offsets = [128, 0], sizes = [8, 128], strides = [1, 1]} : vector<200x128xf32> to vector<8x128xf32>
    %35 = vector.extract_strided_slice %17 {offsets = [136, 0], sizes = [8, 128], strides = [1, 1]} : vector<200x128xf32> to vector<8x128xf32>
    %36 = vector.extract_strided_slice %17 {offsets = [144, 0], sizes = [8, 128], strides = [1, 1]} : vector<200x128xf32> to vector<8x128xf32>
    %37 = vector.extract_strided_slice %17 {offsets = [152, 0], sizes = [8, 128], strides = [1, 1]} : vector<200x128xf32> to vector<8x128xf32>
    %38 = vector.extract_strided_slice %17 {offsets = [160, 0], sizes = [8, 128], strides = [1, 1]} : vector<200x128xf32> to vector<8x128xf32>
    %39 = vector.extract_strided_slice %17 {offsets = [168, 0], sizes = [8, 128], strides = [1, 1]} : vector<200x128xf32> to vector<8x128xf32>
    %40 = vector.extract_strided_slice %17 {offsets = [176, 0], sizes = [8, 128], strides = [1, 1]} : vector<200x128xf32> to vector<8x128xf32>
    %41 = vector.extract_strided_slice %17 {offsets = [184, 0], sizes = [8, 128], strides = [1, 1]} : vector<200x128xf32> to vector<8x128xf32>
    %42 = vector.extract_strided_slice %17 {offsets = [192, 0], sizes = [8, 128], strides = [1, 1]} : vector<200x128xf32> to vector<8x128xf32>
    %43 = tpu.concatenate %18, %19, %20, %21, %22, %23, %24, %25, %26, %27, %28, %29, %30, %31, %32, %33 in 1 : vector<8x128xf32>, vector<8x128xf32>, vector<8x128xf32>, vector<8x128xf32>, vector<8x128xf32>, vector<8x128xf32>, vector<8x128xf32>, vector<8x128xf32>, vector<8x128xf32>, vector<8x128xf32>, vector<8x128xf32>, vector<8x128xf32>, vector<8x128xf32>, vector<8x128xf32>, vector<8x128xf32>, vector<8x128xf32> -> vector<8x2048xf32>
    %44 = tpu.concatenate %34, %35, %36, %37, %38, %39, %40, %41, %42 in 1 : vector<8x128xf32>, vector<8x128xf32>, vector<8x128xf32>, vector<8x128xf32>, vector<8x128xf32>, vector<8x128xf32>, vector<8x128xf32>, vector<8x128xf32>, vector<8x128xf32> -> vector<8x1152xf32>
    %45 = tpu.concatenate %43, %44 in 1 : vector<8x2048xf32>, vector<8x1152xf32> -> vector<8x3200xf32>
    %46 = arith.truncf %45 : vector<8x3200xf32> to vector<8x3200xbf16>
    %c0_9 = arith.constant 0 : index
    %c0_10 = arith.constant 0 : index
    %47 = vector.load %arg4[%c0_9, %c0_10] : memref<3200x512xbf16, #tpu.memory_space<vmem>>, vector<3200x512xbf16>
    %cst_11 = arith.constant dense<0.000000e+00> : vector<8x512xf32>
    %48 = tpu.matmul %46, %47, %cst_11 {dimension_numbers = #tpu.dot_dimension_numbers<[1], [0], [0], [1], [0, 0, 1, 1], [], []>} : vector<8x3200xbf16>, vector<3200x512xbf16>, vector<8x512xf32> -> vector<8x512xf32>
    %c0_12 = arith.constant 0 : index
    %c0_13 = arith.constant 0 : index
    %49 = vector.load %arg6[%c0_12, %c0_13] : memref<8x1xf32, #tpu.memory_space<vmem>>, vector<8x1xf32>
    %50 = vector.extract_strided_slice %48 {offsets = [0, 0], sizes = [8, 128], strides = [1, 1]} : vector<8x512xf32> to vector<8x128xf32>
    %51 = vector.extract_strided_slice %48 {offsets = [0, 128], sizes = [8, 128], strides = [1, 1]} : vector<8x512xf32> to vector<8x128xf32>
    %52 = arith.maximumf %50, %51 : vector<8x128xf32>
    %53 = vector.extract_strided_slice %48 {offsets = [0, 256], sizes = [8, 128], strides = [1, 1]} : vector<8x512xf32> to vector<8x128xf32>
    %54 = vector.extract_strided_slice %48 {offsets = [0, 384], sizes = [8, 128], strides = [1, 1]} : vector<8x512xf32> to vector<8x128xf32>
    %55 = arith.maximumf %53, %54 : vector<8x128xf32>
    %56 = arith.maximumf %52, %55 : vector<8x128xf32>
    %57 = vector.broadcast %49 : vector<8x1xf32> to vector<8x128xf32>
    %58 = arith.addf %56, %57 : vector<8x128xf32>
    %cst_14 = arith.constant 0.000000e+00 : f32
    %59 = vector.broadcast %cst_14 : f32 to vector<8x128xf32>
    %60 = arith.maximumf %58, %59 : vector<8x128xf32>
    %c0_15 = arith.constant 0 : index
    %c0_16 = arith.constant 0 : index
    %61 = vector.load %arg8[%c0_15, %c0_16] : memref<72x8xbf16, #tpu.memory_space<vmem>>, vector<72x8xbf16>
    %62 = arith.truncf %60 : vector<8x128xf32> to vector<8x128xbf16>
    %cst_17 = arith.constant dense<0.000000e+00> : vector<72x128xf32>
    %63 = tpu.matmul %61, %62, %cst_17 {dimension_numbers = #tpu.dot_dimension_numbers<[1], [0], [0], [1], [0, 0, 1, 1], [], []>} : vector<72x8xbf16>, vector<8x128xbf16>, vector<72x128xf32> -> vector<72x128xf32>
    %64 = vector.extract_strided_slice %63 {offsets = [0, 0], sizes = [8, 128], strides = [1, 1]} : vector<72x128xf32> to vector<8x128xf32>
    %65 = vector.extract_strided_slice %63 {offsets = [8, 0], sizes = [8, 128], strides = [1, 1]} : vector<72x128xf32> to vector<8x128xf32>
    %66 = vector.extract_strided_slice %63 {offsets = [16, 0], sizes = [8, 128], strides = [1, 1]} : vector<72x128xf32> to vector<8x128xf32>
    %67 = vector.extract_strided_slice %63 {offsets = [24, 0], sizes = [8, 128], strides = [1, 1]} : vector<72x128xf32> to vector<8x128xf32>
    %68 = vector.extract_strided_slice %63 {offsets = [32, 0], sizes = [8, 128], strides = [1, 1]} : vector<72x128xf32> to vector<8x128xf32>
    %69 = vector.extract_strided_slice %63 {offsets = [40, 0], sizes = [8, 128], strides = [1, 1]} : vector<72x128xf32> to vector<8x128xf32>
    %70 = vector.extract_strided_slice %63 {offsets = [48, 0], sizes = [8, 128], strides = [1, 1]} : vector<72x128xf32> to vector<8x128xf32>
    %71 = vector.extract_strided_slice %63 {offsets = [56, 0], sizes = [8, 128], strides = [1, 1]} : vector<72x128xf32> to vector<8x128xf32>
    %72 = vector.extract_strided_slice %63 {offsets = [64, 0], sizes = [8, 128], strides = [1, 1]} : vector<72x128xf32> to vector<8x128xf32>
    %73 = tpu.concatenate %64, %65, %66, %67, %68, %69, %70, %71, %72 in 1 : vector<8x128xf32>, vector<8x128xf32>, vector<8x128xf32>, vector<8x128xf32>, vector<8x128xf32>, vector<8x128xf32>, vector<8x128xf32>, vector<8x128xf32>, vector<8x128xf32> -> vector<8x1152xf32>
    %74 = arith.truncf %73 : vector<8x1152xf32> to vector<8x1152xbf16>
    %c0_18 = arith.constant 0 : index
    %c0_19 = arith.constant 0 : index
    %75 = vector.load %arg7[%c0_18, %c0_19] : memref<1152x512xbf16, #tpu.memory_space<vmem>>, vector<1152x512xbf16>
    %cst_20 = arith.constant dense<0.000000e+00> : vector<8x512xf32>
    %76 = tpu.matmul %74, %75, %cst_20 {dimension_numbers = #tpu.dot_dimension_numbers<[1], [0], [0], [1], [0, 0, 1, 1], [], []>} : vector<8x1152xbf16>, vector<1152x512xbf16>, vector<8x512xf32> -> vector<8x512xf32>
    %c0_21 = arith.constant 0 : index
    %c0_22 = arith.constant 0 : index
    %77 = vector.load %arg9[%c0_21, %c0_22] : memref<8x1xf32, #tpu.memory_space<vmem>>, vector<8x1xf32>
    %78 = vector.extract_strided_slice %76 {offsets = [0, 0], sizes = [8, 128], strides = [1, 1]} : vector<8x512xf32> to vector<8x128xf32>
    %79 = vector.extract_strided_slice %76 {offsets = [0, 128], sizes = [8, 128], strides = [1, 1]} : vector<8x512xf32> to vector<8x128xf32>
    %80 = arith.maximumf %78, %79 : vector<8x128xf32>
    %81 = vector.extract_strided_slice %76 {offsets = [0, 256], sizes = [8, 128], strides = [1, 1]} : vector<8x512xf32> to vector<8x128xf32>
    %82 = vector.extract_strided_slice %76 {offsets = [0, 384], sizes = [8, 128], strides = [1, 1]} : vector<8x512xf32> to vector<8x128xf32>
    %83 = arith.maximumf %81, %82 : vector<8x128xf32>
    %84 = arith.maximumf %80, %83 : vector<8x128xf32>
    %85 = vector.broadcast %77 : vector<8x1xf32> to vector<8x128xf32>
    %86 = arith.addf %84, %85 : vector<8x128xf32>
    %cst_23 = arith.constant 0.000000e+00 : f32
    %87 = vector.broadcast %cst_23 : f32 to vector<8x128xf32>
    %88 = arith.maximumf %86, %87 : vector<8x128xf32>
    %c0_24 = arith.constant 0 : index
    %c0_25 = arith.constant 0 : index
    %89 = vector.load %arg11[%c0_24, %c0_25] : memref<72x8xbf16, #tpu.memory_space<vmem>>, vector<72x8xbf16>
    %90 = arith.truncf %88 : vector<8x128xf32> to vector<8x128xbf16>
    %cst_26 = arith.constant dense<0.000000e+00> : vector<72x128xf32>
    %91 = tpu.matmul %89, %90, %cst_26 {dimension_numbers = #tpu.dot_dimension_numbers<[1], [0], [0], [1], [0, 0, 1, 1], [], []>} : vector<72x8xbf16>, vector<8x128xbf16>, vector<72x128xf32> -> vector<72x128xf32>
    %92 = vector.extract_strided_slice %91 {offsets = [0, 0], sizes = [8, 128], strides = [1, 1]} : vector<72x128xf32> to vector<8x128xf32>
    %93 = vector.extract_strided_slice %91 {offsets = [8, 0], sizes = [8, 128], strides = [1, 1]} : vector<72x128xf32> to vector<8x128xf32>
    %94 = vector.extract_strided_slice %91 {offsets = [16, 0], sizes = [8, 128], strides = [1, 1]} : vector<72x128xf32> to vector<8x128xf32>
    %95 = vector.extract_strided_slice %91 {offsets = [24, 0], sizes = [8, 128], strides = [1, 1]} : vector<72x128xf32> to vector<8x128xf32>
    %96 = vector.extract_strided_slice %91 {offsets = [32, 0], sizes = [8, 128], strides = [1, 1]} : vector<72x128xf32> to vector<8x128xf32>
    %97 = vector.extract_strided_slice %91 {offsets = [40, 0], sizes = [8, 128], strides = [1, 1]} : vector<72x128xf32> to vector<8x128xf32>
    %98 = vector.extract_strided_slice %91 {offsets = [48, 0], sizes = [8, 128], strides = [1, 1]} : vector<72x128xf32> to vector<8x128xf32>
    %99 = vector.extract_strided_slice %91 {offsets = [56, 0], sizes = [8, 128], strides = [1, 1]} : vector<72x128xf32> to vector<8x128xf32>
    %100 = vector.extract_strided_slice %91 {offsets = [64, 0], sizes = [8, 128], strides = [1, 1]} : vector<72x128xf32> to vector<8x128xf32>
    %101 = tpu.concatenate %92, %93, %94, %95, %96, %97, %98, %99, %100 in 1 : vector<8x128xf32>, vector<8x128xf32>, vector<8x128xf32>, vector<8x128xf32>, vector<8x128xf32>, vector<8x128xf32>, vector<8x128xf32>, vector<8x128xf32>, vector<8x128xf32> -> vector<8x1152xf32>
    %102 = arith.truncf %101 : vector<8x1152xf32> to vector<8x1152xbf16>
    %c0_27 = arith.constant 0 : index
    %c0_28 = arith.constant 0 : index
    %103 = vector.load %arg10[%c0_27, %c0_28] : memref<1152x512xbf16, #tpu.memory_space<vmem>>, vector<1152x512xbf16>
    %cst_29 = arith.constant dense<0.000000e+00> : vector<8x512xf32>
    %104 = tpu.matmul %102, %103, %cst_29 {dimension_numbers = #tpu.dot_dimension_numbers<[1], [0], [0], [1], [0, 0, 1, 1], [], []>} : vector<8x1152xbf16>, vector<1152x512xbf16>, vector<8x512xf32> -> vector<8x512xf32>
    %c0_30 = arith.constant 0 : index
    %c0_31 = arith.constant 0 : index
    %105 = vector.load %arg12[%c0_30, %c0_31] : memref<8x1xf32, #tpu.memory_space<vmem>>, vector<8x1xf32>
    %106 = vector.extract_strided_slice %104 {offsets = [0, 0], sizes = [8, 128], strides = [1, 1]} : vector<8x512xf32> to vector<8x128xf32>
    %107 = vector.extract_strided_slice %104 {offsets = [0, 128], sizes = [8, 128], strides = [1, 1]} : vector<8x512xf32> to vector<8x128xf32>
    %108 = arith.maximumf %106, %107 : vector<8x128xf32>
    %109 = vector.extract_strided_slice %104 {offsets = [0, 256], sizes = [8, 128], strides = [1, 1]} : vector<8x512xf32> to vector<8x128xf32>
    %110 = vector.extract_strided_slice %104 {offsets = [0, 384], sizes = [8, 128], strides = [1, 1]} : vector<8x512xf32> to vector<8x128xf32>
    %111 = arith.maximumf %109, %110 : vector<8x128xf32>
    %112 = arith.maximumf %108, %111 : vector<8x128xf32>
    %113 = vector.broadcast %105 : vector<8x1xf32> to vector<8x128xf32>
    %114 = arith.addf %112, %113 : vector<8x128xf32>
    %cst_32 = arith.constant 0.000000e+00 : f32
    %115 = vector.broadcast %cst_32 : f32 to vector<8x128xf32>
    %116 = arith.maximumf %114, %115 : vector<8x128xf32>
    %117 = arith.truncf %116 : vector<8x128xf32> to vector<8x128xbf16>
    %cst_33 = arith.constant 0.000000e+00 : f32
    %118 = vector.broadcast %cst_33 : f32 to vector<32x128xf32>
    %c0_34 = arith.constant 0 : index
    %c0_35 = arith.constant 0 : index
    %c0_36 = arith.constant 0 : index
    %119 = vector.load %arg13[%c0_34, %c0_35, %c0_36] : memref<1x32x8xbf16, #tpu.memory_space<vmem>>, vector<1x32x8xbf16>
    %120 = vector.shape_cast %119 : vector<1x32x8xbf16> to vector<32x8xbf16>
    %cst_37 = arith.constant dense<0.000000e+00> : vector<32x128xf32>
    %121 = tpu.matmul %120, %117, %cst_37 {dimension_numbers = #tpu.dot_dimension_numbers<[1], [0], [0], [1], [0, 0, 1, 1], [], []>} : vector<32x8xbf16>, vector<8x128xbf16>, vector<32x128xf32> -> vector<32x128xf32>
    %122 = arith.truncf %121 : vector<32x128xf32> to vector<32x128xbf16>
    %c0_38 = arith.constant 0 : index
    %c0_39 = arith.constant 0 : index
    %c0_40 = arith.constant 0 : index
    %123 = vector.load %arg15[%c0_38, %c0_39, %c0_40] : memref<1x128x128xbf16, #tpu.memory_space<vmem>>, vector<1x128x128xbf16>
    %124 = vector.shape_cast %123 : vector<1x128x128xbf16> to vector<128x128xbf16>
    %cst_41 = arith.constant dense<0.000000e+00> : vector<32x128xf32>
    %125 = tpu.matmul %122, %124, %cst_41 {dimension_numbers = #tpu.dot_dimension_numbers<[1], [0], [0], [1], [0, 0, 1, 1], [], []>} : vector<32x128xbf16>, vector<128x128xbf16>, vector<32x128xf32> -> vector<32x128xf32>
    %126 = arith.addf %118, %125 : vector<32x128xf32>
    %c0_42 = arith.constant 0 : index
    %c0_43 = arith.constant 0 : index
    %127 = vector.load %arg14[%c0_42, %c0_43] : memref<32x1xf32, #tpu.memory_space<vmem>>, vector<32x1xf32>
    %128 = vector.broadcast %127 : vector<32x1xf32> to vector<32x128xf32>
    %129 = arith.addf %126, %128 : vector<32x128xf32>
    %c0_44 = arith.constant 0 : index
    %c0_45 = arith.constant 0 : index
    %130 = vector.load %arg16[%c0_44, %c0_45] : memref<32x128xf32, #tpu.memory_space<vmem>>, vector<32x128xf32>
    tpu.vector_store %arg16[%c0_44, %c0_45], %129 {strides = array<i32>} : memref<32x128xf32, #tpu.memory_space<vmem>>, vector<32x128xf32>,
    return
  }
  func.func @transform_0(%arg0: i32) -> (i32, i32) {
    %c0_i32 = arith.constant 0 : i32
    %c0_i32_0 = arith.constant 0 : i32
    return %c0_i32, %arg0 : i32, i32
  }
  func.func @transform_1(%arg0: i32) -> (i32, i32) {
    %c0_i32 = arith.constant 0 : i32
    %c0_i32_0 = arith.constant 0 : i32
    %c0_i32_1 = arith.constant 0 : i32
    return %c0_i32, %c0_i32_0 : i32, i32
  }
  func.func @transform_2(%arg0: i32) -> (i32, i32) {
    %c0_i32 = arith.constant 0 : i32
    %c0_i32_0 = arith.constant 0 : i32
    %c0_i32_1 = arith.constant 0 : i32
    return %c0_i32, %c0_i32_0 : i32, i32
  }
  func.func @transform_3(%arg0: i32) -> (i32, i32) {
    %c0_i32 = arith.constant 0 : i32
    %c0_i32_0 = arith.constant 0 : i32
    %c0_i32_1 = arith.constant 0 : i32
    return %c0_i32, %c0_i32_0 : i32, i32
  }
  func.func @transform_4(%arg0: i32) -> (i32, i32) {
    %c0_i32 = arith.constant 0 : i32
    %c0_i32_0 = arith.constant 0 : i32
    %c0_i32_1 = arith.constant 0 : i32
    return %c0_i32, %c0_i32_0 : i32, i32
  }
  func.func @transform_5(%arg0: i32) -> (i32, i32) {
    %c0_i32 = arith.constant 0 : i32
    %c0_i32_0 = arith.constant 0 : i32
    %c0_i32_1 = arith.constant 0 : i32
    return %c0_i32, %c0_i32_0 : i32, i32
  }
  func.func @transform_6(%arg0: i32) -> (i32, i32) {
    %c0_i32 = arith.constant 0 : i32
    %c0_i32_0 = arith.constant 0 : i32
    %c0_i32_1 = arith.constant 0 : i32
    return %c0_i32, %c0_i32_0 : i32, i32
  }
  func.func @transform_7(%arg0: i32) -> (i32, i32) {
    %c0_i32 = arith.constant 0 : i32
    %c0_i32_0 = arith.constant 0 : i32
    %c0_i32_1 = arith.constant 0 : i32
    return %c0_i32, %c0_i32_0 : i32, i32
  }
  func.func @transform_8(%arg0: i32) -> (i32, i32) {
    %c0_i32 = arith.constant 0 : i32
    %c0_i32_0 = arith.constant 0 : i32
    %c0_i32_1 = arith.constant 0 : i32
    return %c0_i32, %c0_i32_0 : i32, i32
  }
  func.func @transform_9(%arg0: i32) -> (i32, i32) {
    %c0_i32 = arith.constant 0 : i32
    %c0_i32_0 = arith.constant 0 : i32
    %c0_i32_1 = arith.constant 0 : i32
    return %c0_i32, %c0_i32_0 : i32, i32
  }
  func.func @transform_10(%arg0: i32) -> (i32, i32) {
    %c0_i32 = arith.constant 0 : i32
    %c0_i32_0 = arith.constant 0 : i32
    %c0_i32_1 = arith.constant 0 : i32
    return %c0_i32, %c0_i32_0 : i32, i32
  }
  func.func @transform_11(%arg0: i32) -> (i32, i32) {
    %c0_i32 = arith.constant 0 : i32
    %c0_i32_0 = arith.constant 0 : i32
    %c0_i32_1 = arith.constant 0 : i32
    return %c0_i32, %c0_i32_0 : i32, i32
  }
  func.func @transform_12(%arg0: i32) -> (i32, i32, i32) {
    %c0_i32 = arith.constant 0 : i32
    %c0_i32_0 = arith.constant 0 : i32
    %c0_i32_1 = arith.constant 0 : i32
    %c0_i32_2 = arith.constant 0 : i32
    return %c0_i32, %c0_i32_0, %c0_i32_1 : i32, i32, i32
  }
  func.func @transform_13(%arg0: i32) -> (i32, i32) {
    %c0_i32 = arith.constant 0 : i32
    %c0_i32_0 = arith.constant 0 : i32
    %c0_i32_1 = arith.constant 0 : i32
    return %c0_i32, %c0_i32_0 : i32, i32
  }
  func.func @transform_14(%arg0: i32) -> (i32, i32, i32) {
    %c0_i32 = arith.constant 0 : i32
    %c0_i32_0 = arith.constant 0 : i32
    %c0_i32_1 = arith.constant 0 : i32
    %c0_i32_2 = arith.constant 0 : i32
    return %c0_i32, %c0_i32_0, %c0_i32_1 : i32, i32, i32
  }
  func.func @transform_15(%arg0: i32) -> (i32, i32) {
    %c0_i32 = arith.constant 0 : i32
    %c0_i32_0 = arith.constant 0 : i32
    return %c0_i32, %arg0 : i32, i32
  }
}

</mosaic_0001>

<llo_original>
// kernel: cnn_backbone_forward.1
$region0: #{cnn_backbone_forward.1}
  #allocation0 [shape = 'u32[]', space=smem, size = 0x4, offset = 0x4, fixed_abs, tag = 'smem constant byte address 0x4 - core index']
  #allocation1 [shape = 'u32[144,128]{1,0:T(1,128)}', space=vmem, size = 0x12000, scoped, tag = 'internal scratch']
  %s0 = inlined_call_operand.vmem [shape: bf16[32,1024], index: 0, kind: input, shape index: {}]
  %s1 = inlined_call_operand.vmem [shape: bf16[8,32], index: 1, kind: input, shape index: {}]
  %s2 = inlined_call_operand.vmem [shape: f32[8,1], index: 2, kind: input, shape index: {}]
  %s3 = inlined_call_operand.vmem [shape: bf16[3200,512], index: 3, kind: input, shape index: {}]
  %s4 = inlined_call_operand.vmem [shape: bf16[200,8], index: 4, kind: input, shape index: {}]
  %s5 = inlined_call_operand.vmem [shape: f32[8,1], index: 5, kind: input, shape index: {}]
  %s6 = inlined_call_operand.vmem [shape: bf16[1152,512], index: 6, kind: input, shape index: {}]
  %s7 = inlined_call_operand.vmem [shape: bf16[72,8], index: 7, kind: input, shape index: {}]
  %s8 = inlined_call_operand.vmem [shape: f32[8,1], index: 8, kind: input, shape index: {}]
  %s9 = inlined_call_operand.hbm [shape: bf16[1152,512], index: 9, kind: input, shape index: {}]
  %s10 = inlined_call_operand.vmem [shape: bf16[72,8], index: 10, kind: input, shape index: {}]
  %s11 = inlined_call_operand.vmem [shape: f32[8,1], index: 11, kind: input, shape index: {}]
  %s12 = inlined_call_operand.vmem [shape: bf16[1,32,8], index: 12, kind: input, shape index: {}]
  %s13 = inlined_call_operand.vmem [shape: f32[32,1], index: 13, kind: input, shape index: {}]
  %s14 = inlined_call_operand.vmem [shape: bf16[1,128,128], index: 14, kind: input, shape index: {}]
  %s15 = inlined_call_operand.vmem [shape: f32[32,256], index: 15, kind: output, shape index: {}]
  %s16 = sld [smem:[#allocation0]]
  $region154: #{cnn_backbone_forward.1} parent=0
    _
  %s18 = ssub.s32 1, %s16
  %s19 = scalar_select 0, %s18, %s16
  $region1: #{cnn_backbone_forward.1} parent=0
    #allocation2 [shape = 'u8[65536]{0}', space=vmem, size = 0x10000, scoped, tag = 'input window, operand 0']
    #allocation3 [shape = 'u8[1179648]{0}', space=vmem, size = 0x120000, scoped, tag = 'input window, operand 9, single buffered']
    #allocation4 [shape = 's32[2]{0}', space=sflag, size = 0x8, scoped, tag = 'scoped memory for cnn_backbone_forward.1']
    #allocation5 [shape = 'u8[32768]{0}', space=vmem, size = 0x8000, scoped, tag = 'output window, operand 0']
    %20 = vsyncpa [#allocation4], 0
    loop: start=0, step=1, limit=4
    $region2: #{cnn_backbone_forward.1} parent=1 // loop_pre_header
      _
    $region3: #{cnn_backbone_forward.1} parent=1 // loop_header
      %s22 = sphi 0, %s26
      %p23 = scmp.ge.s32.totalorder %s22, 4
      %s32 = sphi 0, %s34
      %s35 = sphi 0, %s32
      %s36 = sphi 0, %s35
      %s52 = sphi 0, %s36
      %s56 = sphi 0, %s56
      %s58 = sphi 0, %s56
      %s59 = sphi 0, %s58
      %s73 = sphi 0, %s59
      %s77 = sphi 0, %s77
      %s79 = sphi 0, %s77
      %s80 = sphi 0, %s79
      %s94 = sphi 0, %s80
      %s98 = sphi 0, %s98
      %s100 = sphi 0, %s98
      %s101 = sphi 0, %s100
      %s115 = sphi 0, %s101
      %s119 = sphi 0, %s119
      %s121 = sphi 0, %s119
      %s122 = sphi 0, %s121
      %s136 = sphi 0, %s122
      %s140 = sphi 0, %s140
      %s142 = sphi 0, %s140
      %s143 = sphi 0, %s142
      %s157 = sphi 0, %s143
      %s161 = sphi 0, %s161
      %s163 = sphi 0, %s161
      %s164 = sphi 0, %s163
      %s178 = sphi 0, %s164
      %s182 = sphi 0, %s182
      %s184 = sphi 0, %s182
      %s185 = sphi 0, %s184
      %s199 = sphi 0, %s185
      %s203 = sphi 0, %s203
      %s205 = sphi 0, %s203
      %s206 = sphi 0, %s205
      %s220 = sphi 0, %s206
      %s224 = sphi 0, %s224
      %s226 = sphi 0, %s224
      %s227 = sphi 0, %s226
      %s241 = sphi 0, %s227
      %s245 = sphi 0, %s245
      %s247 = sphi 0, %s245
      %s248 = sphi 0, %s247
      %s262 = sphi 0, %s248
      %s266 = sphi 0, %s266
      %s268 = sphi 0, %s266
      %s269 = sphi 0, %s268
      %s283 = sphi 0, %s269
      %s287 = sphi 0, %s287
      %s289 = sphi 0, %s287
      %s290 = sphi 0, %s289
      %s304 = sphi 0, %s290
      %s308 = sphi 0, %s308
      %s310 = sphi 0, %s308
      %s311 = sphi 0, %s310
      %s325 = sphi 0, %s311
      %s329 = sphi 0, %s329
      %s331 = sphi 0, %s329
      %s332 = sphi 0, %s331
      %s346 = sphi 0, %s332
      %s352 = sphi 0, %s354
      %s355 = sphi 0, %s352
      %s356 = sphi 0, %s355
      %s372 = sphi 0, %s356
    $region4: #{cnn_backbone_forward.1} parent=1 // loop_header_branch
      %25 = sbr.rel (%p23) target = $region8
    $region5: #{cnn_backbone_forward.1} parent=1 // loop_body
      %s27 = ssub.s32 %s22, 1
      %s28 = ssub.s32 %s22, 2
      %s29 = sadd.s32 %s22, 1
      %s30 = ssub.s32 %s22, %s29
      %p31 = scmp.eq.s32.totalorder %s30, 0
      %s33 = sadd.s32 %s32, 1
      %s34 = scalar_select %p31, %s32, %s33
      %p37 = pneg %p31
      %p38 = scmp.eq.s32.totalorder %s22, 1
      %p39 = por %p37, %p38
      %p40 = scmp.ne.s32.totalorder %s32, %s35
      %p41 = scmp.eq.s32.totalorder %s22, 0
      %p42 = por %p40, %p41
      %p43 = scmp.ne.s32.totalorder %s32, %s35
      %p44 = scmp.eq.s32.totalorder %s27, 1
      %p45 = por %p43, %p44
      %p46 = scmp.ne.s32.totalorder %s35, %s36
      %p47 = scmp.eq.s32.totalorder %s27, 0
      %p48 = por %p46, %p47
      %p49 = scmp.ne.s32.totalorder %s35, %s36
      %p50 = scmp.eq.s32.totalorder %s28, 1
      %p51 = por %p49, %p50
      %p53 = scmp.ne.s32.totalorder %s36, %s52
      %p54 = scmp.eq.s32.totalorder %s28, 0
      %p55 = por %p53, %p54
      %s57 = sadd.s32 %s56, 1
      %p60 = scmp.eq.s32.totalorder %s22, 1
      %p61 = scmp.ne.s32.totalorder %s56, %s58
      %p62 = scmp.eq.s32.totalorder %s22, 0
      %p63 = por %p61, %p62
      %p64 = scmp.ne.s32.totalorder %s56, %s58
      %p65 = scmp.eq.s32.totalorder %s27, 1
      %p66 = por %p64, %p65
      %p67 = scmp.ne.s32.totalorder %s58, %s59
      %p68 = scmp.eq.s32.totalorder %s27, 0
      %p69 = por %p67, %p68
      %p70 = scmp.ne.s32.totalorder %s58, %s59
      %p71 = scmp.eq.s32.totalorder %s28, 1
      %p72 = por %p70, %p71
      %p74 = scmp.ne.s32.totalorder %s59, %s73
      %p75 = scmp.eq.s32.totalorder %s28, 0
      %p76 = por %p74, %p75
      %s78 = sadd.s32 %s77, 1
      %p81 = scmp.eq.s32.totalorder %s22, 1
      %p82 = scmp.ne.s32.totalorder %s77, %s79
      %p83 = scmp.eq.s32.totalorder %s22, 0
      %p84 = por %p82, %p83
      %p85 = scmp.ne.s32.totalorder %s77, %s79
      %p86 = scmp.eq.s32.totalorder %s27, 1
      %p87 = por %p85, %p86
      %p88 = scmp.ne.s32.totalorder %s79, %s80
      %p89 = scmp.eq.s32.totalorder %s27, 0
      %p90 = por %p88, %p89
      %p91 = scmp.ne.s32.totalorder %s79, %s80
      %p92 = scmp.eq.s32.totalorder %s28, 1
      %p93 = por %p91, %p92
      %p95 = scmp.ne.s32.totalorder %s80, %s94
      %p96 = scmp.eq.s32.totalorder %s28, 0
      %p97 = por %p95, %p96
      %s99 = sadd.s32 %s98, 1
      %p102 = scmp.eq.s32.totalorder %s22, 1
      %p103 = scmp.ne.s32.totalorder %s98, %s100
      %p104 = scmp.eq.s32.totalorder %s22, 0
      %p105 = por %p103, %p104
      %p106 = scmp.ne.s32.totalorder %s98, %s100
      %p107 = scmp.eq.s32.totalorder %s27, 1
      %p108 = por %p106, %p107
      %p109 = scmp.ne.s32.totalorder %s100, %s101
      %p110 = scmp.eq.s32.totalorder %s27, 0
      %p111 = por %p109, %p110
      %p112 = scmp.ne.s32.totalorder %s100, %s101
      %p113 = scmp.eq.s32.totalorder %s28, 1
      %p114 = por %p112, %p113
      %p116 = scmp.ne.s32.totalorder %s101, %s115
      %p117 = scmp.eq.s32.totalorder %s28, 0
      %p118 = por %p116, %p117
      %s120 = sadd.s32 %s119, 1
      %p123 = scmp.eq.s32.totalorder %s22, 1
      %p124 = scmp.ne.s32.totalorder %s119, %s121
      %p125 = scmp.eq.s32.totalorder %s22, 0
      %p126 = por %p124, %p125
      %p127 = scmp.ne.s32.totalorder %s119, %s121
      %p128 = scmp.eq.s32.totalorder %s27, 1
      %p129 = por %p127, %p128
      %p130 = scmp.ne.s32.totalorder %s121, %s122
      %p131 = scmp.eq.s32.totalorder %s27, 0
      %p132 = por %p130, %p131
      %p133 = scmp.ne.s32.totalorder %s121, %s122
      %p134 = scmp.eq.s32.totalorder %s28, 1
      %p135 = por %p133, %p134
      %p137 = scmp.ne.s32.totalorder %s122, %s136
      %p138 = scmp.eq.s32.totalorder %s28, 0
      %p139 = por %p137, %p138
      %s141 = sadd.s32 %s140, 1
      %p144 = scmp.eq.s32.totalorder %s22, 1
      %p145 = scmp.ne.s32.totalorder %s140, %s142
      %p146 = scmp.eq.s32.totalorder %s22, 0
      %p147 = por %p145, %p146
      %p148 = scmp.ne.s32.totalorder %s140, %s142
      %p149 = scmp.eq.s32.totalorder %s27, 1
      %p150 = por %p148, %p149
      %p151 = scmp.ne.s32.totalorder %s142, %s143
      %p152 = scmp.eq.s32.totalorder %s27, 0
      %p153 = por %p151, %p152
      %p154 = scmp.ne.s32.totalorder %s142, %s143
      %p155 = scmp.eq.s32.totalorder %s28, 1
      %p156 = por %p154, %p155
      %p158 = scmp.ne.s32.totalorder %s143, %s157
      %p159 = scmp.eq.s32.totalorder %s28, 0
      %p160 = por %p158, %p159
      %s162 = sadd.s32 %s161, 1
      %p165 = scmp.eq.s32.totalorder %s22, 1
      %p166 = scmp.ne.s32.totalorder %s161, %s163
      %p167 = scmp.eq.s32.totalorder %s22, 0
      %p168 = por %p166, %p167
      %p169 = scmp.ne.s32.totalorder %s161, %s163
      %p170 = scmp.eq.s32.totalorder %s27, 1
      %p171 = por %p169, %p170
      %p172 = scmp.ne.s32.totalorder %s163, %s164
      %p173 = scmp.eq.s32.totalorder %s27, 0
      %p174 = por %p172, %p173
      %p175 = scmp.ne.s32.totalorder %s163, %s164
      %p176 = scmp.eq.s32.totalorder %s28, 1
      %p177 = por %p175, %p176
      %p179 = scmp.ne.s32.totalorder %s164, %s178
      %p180 = scmp.eq.s32.totalorder %s28, 0
      %p181 = por %p179, %p180
      %s183 = sadd.s32 %s182, 1
      %p186 = scmp.eq.s32.totalorder %s22, 1
      %p187 = scmp.ne.s32.totalorder %s182, %s184
      %p188 = scmp.eq.s32.totalorder %s22, 0
      %p189 = por %p187, %p188
      %p190 = scmp.ne.s32.totalorder %s182, %s184
      %p191 = scmp.eq.s32.totalorder %s27, 1
      %p192 = por %p190, %p191
      %p193 = scmp.ne.s32.totalorder %s184, %s185
      %p194 = scmp.eq.s32.totalorder %s27, 0
      %p195 = por %p193, %p194
      %p196 = scmp.ne.s32.totalorder %s184, %s185
      %p197 = scmp.eq.s32.totalorder %s28, 1
      %p198 = por %p196, %p197
      %p200 = scmp.ne.s32.totalorder %s185, %s199
      %p201 = scmp.eq.s32.totalorder %s28, 0
      %p202 = por %p200, %p201
      %s204 = sadd.s32 %s203, 1
      %p207 = scmp.eq.s32.totalorder %s22, 1
      %p208 = scmp.ne.s32.totalorder %s203, %s205
      %p209 = scmp.eq.s32.totalorder %s22, 0
      %p210 = por %p208, %p209
      %p211 = scmp.ne.s32.totalorder %s203, %s205
      %p212 = scmp.eq.s32.totalorder %s27, 1
      %p213 = por %p211, %p212
      %p214 = scmp.ne.s32.totalorder %s205, %s206
      %p215 = scmp.eq.s32.totalorder %s27, 0
      %p216 = por %p214, %p215
      %p217 = scmp.ne.s32.totalorder %s205, %s206
      %p218 = scmp.eq.s32.totalorder %s28, 1
      %p219 = por %p217, %p218
      %p221 = scmp.ne.s32.totalorder %s206, %s220
      %p222 = scmp.eq.s32.totalorder %s28, 0
      %p223 = por %p221, %p222
      %s225 = sadd.s32 %s224, 1
      %p228 = scmp.eq.s32.totalorder %s22, 1
      %p229 = scmp.ne.s32.totalorder %s224, %s226
      %p230 = scmp.eq.s32.totalorder %s22, 0
      %p231 = por %p229, %p230
      %p232 = scmp.ne.s32.totalorder %s224, %s226
      %p233 = scmp.eq.s32.totalorder %s27, 1
      %p234 = por %p232, %p233
      %p235 = scmp.ne.s32.totalorder %s226, %s227
      %p236 = scmp.eq.s32.totalorder %s27, 0
      %p237 = por %p235, %p236
      %p238 = scmp.ne.s32.totalorder %s226, %s227
      %p239 = scmp.eq.s32.totalorder %s28, 1
      %p240 = por %p238, %p239
      %p242 = scmp.ne.s32.totalorder %s227, %s241
      %p243 = scmp.eq.s32.totalorder %s28, 0
      %p244 = por %p242, %p243
      %s246 = sadd.s32 %s245, 1
      %p249 = scmp.eq.s32.totalorder %s22, 1
      %p250 = scmp.ne.s32.totalorder %s245, %s247
      %p251 = scmp.eq.s32.totalorder %s22, 0
      %p252 = por %p250, %p251
      %p253 = scmp.ne.s32.totalorder %s245, %s247
      %p254 = scmp.eq.s32.totalorder %s27, 1
      %p255 = por %p253, %p254
      %p256 = scmp.ne.s32.totalorder %s247, %s248
      %p257 = scmp.eq.s32.totalorder %s27, 0
      %p258 = por %p256, %p257
      %p259 = scmp.ne.s32.totalorder %s247, %s248
      %p260 = scmp.eq.s32.totalorder %s28, 1
      %p261 = por %p259, %p260
      %p263 = scmp.ne.s32.totalorder %s248, %s262
      %p264 = scmp.eq.s32.totalorder %s28, 0
      %p265 = por %p263, %p264
      %s267 = sadd.s32 %s266, 1
      %p270 = scmp.eq.s32.totalorder %s22, 1
      %p271 = scmp.ne.s32.totalorder %s266, %s268
      %p272 = scmp.eq.s32.totalorder %s22, 0
      %p273 = por %p271, %p272
      %p274 = scmp.ne.s32.totalorder %s266, %s268
      %p275 = scmp.eq.s32.totalorder %s27, 1
      %p276 = por %p274, %p275
      %p277 = scmp.ne.s32.totalorder %s268, %s269
      %p278 = scmp.eq.s32.totalorder %s27, 0
      %p279 = por %p277, %p278
      %p280 = scmp.ne.s32.totalorder %s268, %s269
      %p281 = scmp.eq.s32.totalorder %s28, 1
      %p282 = por %p280, %p281
      %p284 = scmp.ne.s32.totalorder %s269, %s283
      %p285 = scmp.eq.s32.totalorder %s28, 0
      %p286 = por %p284, %p285
      %s288 = sadd.s32 %s287, 1
      %p291 = scmp.eq.s32.totalorder %s22, 1
      %p292 = scmp.ne.s32.totalorder %s287, %s289
      %p293 = scmp.eq.s32.totalorder %s22, 0
      %p294 = por %p292, %p293
      %p295 = scmp.ne.s32.totalorder %s287, %s289
      %p296 = scmp.eq.s32.totalorder %s27, 1
      %p297 = por %p295, %p296
      %p298 = scmp.ne.s32.totalorder %s289, %s290
      %p299 = scmp.eq.s32.totalorder %s27, 0
      %p300 = por %p298, %p299
      %p301 = scmp.ne.s32.totalorder %s289, %s290
      %p302 = scmp.eq.s32.totalorder %s28, 1
      %p303 = por %p301, %p302
      %p305 = scmp.ne.s32.totalorder %s290, %s304
      %p306 = scmp.eq.s32.totalorder %s28, 0
      %p307 = por %p305, %p306
      %s309 = sadd.s32 %s308, 1
      %p312 = scmp.eq.s32.totalorder %s22, 1
      %p313 = scmp.ne.s32.totalorder %s308, %s310
      %p314 = scmp.eq.s32.totalorder %s22, 0
      %p315 = por %p313, %p314
      %p316 = scmp.ne.s32.totalorder %s308, %s310
      %p317 = scmp.eq.s32.totalorder %s27, 1
      %p318 = por %p316, %p317
      %p319 = scmp.ne.s32.totalorder %s310, %s311
      %p320 = scmp.eq.s32.totalorder %s27, 0
      %p321 = por %p319, %p320
      %p322 = scmp.ne.s32.totalorder %s310, %s311
      %p323 = scmp.eq.s32.totalorder %s28, 1
      %p324 = por %p322, %p323
      %p326 = scmp.ne.s32.totalorder %s311, %s325
      %p327 = scmp.eq.s32.totalorder %s28, 0
      %p328 = por %p326, %p327
      %s330 = sadd.s32 %s329, 1
      %p333 = scmp.eq.s32.totalorder %s22, 1
      %p334 = scmp.ne.s32.totalorder %s329, %s331
      %p335 = scmp.eq.s32.totalorder %s22, 0
      %p336 = por %p334, %p335
      %p337 = scmp.ne.s32.totalorder %s329, %s331
      %p338 = scmp.eq.s32.totalorder %s27, 1
      %p339 = por %p337, %p338
      %p340 = scmp.ne.s32.totalorder %s331, %s332
      %p341 = scmp.eq.s32.totalorder %s27, 0
      %p342 = por %p340, %p341
      %p343 = scmp.ne.s32.totalorder %s331, %s332
      %p344 = scmp.eq.s32.totalorder %s28, 1
      %p345 = por %p343, %p344
      %p347 = scmp.ne.s32.totalorder %s332, %s346
      %p348 = scmp.eq.s32.totalorder %s28, 0
      %p349 = por %p347, %p348
      %s350 = ssub.s32 %s22, %s29
      %p351 = scmp.eq.s32.totalorder %s350, 0
      %s353 = sadd.s32 %s352, 1
      %s354 = scalar_select %p351, %s352, %s353
      %p357 = pneg %p351
      %p358 = scmp.eq.s32.totalorder %s22, 1
      %p359 = por %p357, %p358
      %p360 = scmp.ne.s32.totalorder %s352, %s355
      %p361 = scmp.eq.s32.totalorder %s22, 0
      %p362 = por %p360, %p361
      %p363 = scmp.ne.s32.totalorder %s352, %s355
      %p364 = scmp.eq.s32.totalorder %s27, 1
      %p365 = por %p363, %p364
      %p366 = scmp.ne.s32.totalorder %s355, %s356
      %p367 = scmp.eq.s32.totalorder %s27, 0
      %p368 = por %p366, %p367
      %p369 = scmp.ne.s32.totalorder %s355, %s356
      %p370 = scmp.eq.s32.totalorder %s28, 1
      %p371 = por %p369, %p370
      %p373 = scmp.ne.s32.totalorder %s356, %s372
      %p374 = scmp.eq.s32.totalorder %s28, 0
      %p375 = por %p373, %p374
      %p376 = scmp.le.s32.totalorder 1, %s22
      %p377 = scmp.lt.s32.totalorder %s22, 3
      %p378 = pnand %p376, %p377
      %p379 = pneg %p378
      // Predicated region
      $region9: #{cnn_backbone_forward.1} parent=5 // pred_check
        _
      $region10: #{cnn_backbone_forward.1} parent=5 // pred_check_branch
        %381 = sbr.rel (%p378) target = $region12
      $region11: #{cnn_backbone_forward.1} parent=5 // pred_region
        %s382 = ssub.s32 %s22, 1
        // Predicated region
        $region13: #{cnn_backbone_forward.1} parent=11 // pred_check
          %p383 = pneg %p69
        $region14: #{cnn_backbone_forward.1} parent=11 // pred_check_branch
          %385 = sbr.rel (%p383) target = $region16
        $region15: #{cnn_backbone_forward.1} parent=11 // pred_region
          _
        $region16: #{cnn_backbone_forward.1} parent=11 // pred_fallthru
          _
        // Predicated region
        $region17: #{cnn_backbone_forward.1} parent=11 // pred_check
          %p386 = pneg %p90
        $region18: #{cnn_backbone_forward.1} parent=11 // pred_check_branch
          %388 = sbr.rel (%p386) target = $region20
        $region19: #{cnn_backbone_forward.1} parent=11 // pred_region
          _
        $region20: #{cnn_backbone_forward.1} parent=11 // pred_fallthru
          _
        // Predicated region
        $region21: #{cnn_backbone_forward.1} parent=11 // pred_check
          %p389 = pneg %p111
        $region22: #{cnn_backbone_forward.1} parent=11 // pred_check_branch
          %391 = sbr.rel (%p389) target = $region24
        $region23: #{cnn_backbone_forward.1} parent=11 // pred_region
          _
        $region24: #{cnn_backbone_forward.1} parent=11 // pred_fallthru
          _
        // Predicated region
        $region25: #{cnn_backbone_forward.1} parent=11 // pred_check
          %p392 = pneg %p132
        $region26: #{cnn_backbone_forward.1} parent=11 // pred_check_branch
          %394 = sbr.rel (%p392) target = $region28
        $region27: #{cnn_backbone_forward.1} parent=11 // pred_region
          _
        $region28: #{cnn_backbone_forward.1} parent=11 // pred_fallthru
          _
        // Predicated region
        $region29: #{cnn_backbone_forward.1} parent=11 // pred_check
          %p395 = pneg %p153
        $region30: #{cnn_backbone_forward.1} parent=11 // pred_check_branch
          %397 = sbr.rel (%p395) target = $region32
        $region31: #{cnn_backbone_forward.1} parent=11 // pred_region
          _
        $region32: #{cnn_backbone_forward.1} parent=11 // pred_fallthru
          _
        // Predicated region
        $region33: #{cnn_backbone_forward.1} parent=11 // pred_check
          %p398 = pneg %p174
        $region34: #{cnn_backbone_forward.1} parent=11 // pred_check_branch
          %400 = sbr.rel (%p398) target = $region36
        $region35: #{cnn_backbone_forward.1} parent=11 // pred_region
          _
        $region36: #{cnn_backbone_forward.1} parent=11 // pred_fallthru
          _
        // Predicated region
        $region37: #{cnn_backbone_forward.1} parent=11 // pred_check
          %p401 = pneg %p195
        $region38: #{cnn_backbone_forward.1} parent=11 // pred_check_branch
          %403 = sbr.rel (%p401) target = $region40
        $region39: #{cnn_backbone_forward.1} parent=11 // pred_region
          _
        $region40: #{cnn_backbone_forward.1} parent=11 // pred_fallthru
          _
        // Predicated region
        $region41: #{cnn_backbone_forward.1} parent=11 // pred_check
          %p404 = pneg %p216
        $region42: #{cnn_backbone_forward.1} parent=11 // pred_check_branch
          %406 = sbr.rel (%p404) target = $region44
        $region43: #{cnn_backbone_forward.1} parent=11 // pred_region
          _
        $region44: #{cnn_backbone_forward.1} parent=11 // pred_fallthru
          _
        // Predicated region
        $region45: #{cnn_backbone_forward.1} parent=11 // pred_check
          %p407 = pneg %p237
        $region46: #{cnn_backbone_forward.1} parent=11 // pred_check_branch
          %409 = sbr.rel (%p407) target = $region48
        $region47: #{cnn_backbone_forward.1} parent=11 // pred_region
          %s411 = ssub.s32 36864, 36864
          %412 = vsyncadd [#allocation4], %s411
          %s413 = sshll.u32 [#allocation3], 4
          %s414 = int_to_ptr.vmem [resolvable:$true] %s413
          %419 = dma.hbm_to_vmem [thread:$0]  %s9, 36864, %s414, [#allocation4], 256, 256, 16
        $region48: #{cnn_backbone_forward.1} parent=11 // pred_fallthru
          _
        // Predicated region
        $region49: #{cnn_backbone_forward.1} parent=11 // pred_check
          %p420 = pneg %p258
        $region50: #{cnn_backbone_forward.1} parent=11 // pred_check_branch
          %422 = sbr.rel (%p420) target = $region52
        $region51: #{cnn_backbone_forward.1} parent=11 // pred_region
          _
        $region52: #{cnn_backbone_forward.1} parent=11 // pred_fallthru
          _
        // Predicated region
        $region53: #{cnn_backbone_forward.1} parent=11 // pred_check
          %p423 = pneg %p279
        $region54: #{cnn_backbone_forward.1} parent=11 // pred_check_branch
          %425 = sbr.rel (%p423) target = $region56
        $region55: #{cnn_backbone_forward.1} parent=11 // pred_region
          _
        $region56: #{cnn_backbone_forward.1} parent=11 // pred_fallthru
          _
        // Predicated region
        $region57: #{cnn_backbone_forward.1} parent=11 // pred_check
          %p426 = pneg %p300
        $region58: #{cnn_backbone_forward.1} parent=11 // pred_check_branch
          %428 = sbr.rel (%p426) target = $region60
        $region59: #{cnn_backbone_forward.1} parent=11 // pred_region
          _
        $region60: #{cnn_backbone_forward.1} parent=11 // pred_fallthru
          _
        // Predicated region
        $region61: #{cnn_backbone_forward.1} parent=11 // pred_check
          %p429 = pneg %p321
        $region62: #{cnn_backbone_forward.1} parent=11 // pred_check_branch
          %431 = sbr.rel (%p429) target = $region64
        $region63: #{cnn_backbone_forward.1} parent=11 // pred_region
          _
        $region64: #{cnn_backbone_forward.1} parent=11 // pred_fallthru
          _
        // Predicated region
        $region65: #{cnn_backbone_forward.1} parent=11 // pred_check
          %p432 = pneg %p342
        $region66: #{cnn_backbone_forward.1} parent=11 // pred_check_branch
          %434 = sbr.rel (%p432) target = $region68
        $region67: #{cnn_backbone_forward.1} parent=11 // pred_region
          _
        $region68: #{cnn_backbone_forward.1} parent=11 // pred_fallthru
          _
      $region12: #{cnn_backbone_forward.1} parent=5 // pred_fallthru
        _
      %p435 = scmp.lt.s32.totalorder %s22, 2
      // Predicated region
      $region69: #{cnn_backbone_forward.1} parent=5 // pred_check
        %p436 = pneg %p435
      $region70: #{cnn_backbone_forward.1} parent=5 // pred_check_branch
        %438 = sbr.rel (%p436) target = $region72
      $region71: #{cnn_backbone_forward.1} parent=5 // pred_region
        // Predicated region
        $region73: #{cnn_backbone_forward.1} parent=71 // pred_check
          %p439 = pneg %p42
        $region74: #{cnn_backbone_forward.1} parent=71 // pred_check_branch
          %441 = sbr.rel (%p439) target = $region76
        $region75: #{cnn_backbone_forward.1} parent=71 // pred_region
          %s442 = sand.u32 %s32, 1
          %s443 = sand.u32 %s32, 1
          %s444 = smul.addr %s443, 64
          %s445 = scalar_lea.vmem [#allocation2], %s444
          %s446 = smul.u32 4, %s22
          %s447 = smul.addr %s446, 4
          %s448 = scalar_lea.vmem %s0, %s447
          // Predicated region
          $region77: #{cnn_backbone_forward.1} parent=75 // pred_check
            _
          $region78: #{cnn_backbone_forward.1} parent=75 // pred_check_branch
            %450 = sbr.rel (0) target = $region80
          $region79: #{cnn_backbone_forward.1} parent=75 // pred_region
            // Predicated region
            $region81: #{cnn_backbone_forward.1} parent=79 // pred_check
              _
            $region82: #{cnn_backbone_forward.1} parent=79 // pred_check_branch
              %452 = sbr.rel (0) target = $region84
            $region83: #{cnn_backbone_forward.1} parent=79 // pred_region
              loop: start=0, step=1, limit=1
              $region85: #{cnn_backbone_forward.1} parent=83 // loop_pre_header
                _
              $region86: #{cnn_backbone_forward.1} parent=83 // loop_header
                %s454 = sphi 0, %s458
                %p455 = scmp.ge.s32.totalorder %s454, 1
                %s459 = sphi %s448, %s448
                %s460 = sphi %s445, %s445
              $region87: #{cnn_backbone_forward.1} parent=83 // loop_header_branch
                %457 = sbr.rel (%p455) target = $region91
              $region88: #{cnn_backbone_forward.1} parent=83 // loop_body
                %v461 = vld [vmem:[%s459] sm:$0xff]
                %462 = vst [vmem:[%s460] sm:$0xff] %v461
                %v463 = vld [vmem:[%s459 + $0x8] sm:$0xff]
                %464 = vst [vmem:[%s460 + $0x8] sm:$0xff] %v463
                %v465 = vld [vmem:[%s459 + $0x20] sm:$0xff]
                %466 = vst [vmem:[%s460 + $0x10] sm:$0xff] %v465
                %v467 = vld [vmem:[%s459 + $0x28] sm:$0xff]
                %468 = vst [vmem:[%s460 + $0x18] sm:$0xff] %v467
                %v469 = vld [vmem:[%s459 + $0x40] sm:$0xff]
                %470 = vst [vmem:[%s460 + $0x20] sm:$0xff] %v469
                %v471 = vld [vmem:[%s459 + $0x48] sm:$0xff]
                %472 = vst [vmem:[%s460 + $0x28] sm:$0xff] %v471
                %v473 = vld [vmem:[%s459 + $0x60] sm:$0xff]
                %474 = vst [vmem:[%s460 + $0x30] sm:$0xff] %v473
                %v475 = vld [vmem:[%s459 + $0x68] sm:$0xff]
                %476 = vst [vmem:[%s460 + $0x38] sm:$0xff] %v475
              $region89: #{cnn_backbone_forward.1} parent=83 // loop_footer
                %s458 = sadd.s32 1, %s454
              $region90: #{cnn_backbone_forward.1} parent=83 // loop_footer_branch
                %453 = sbr.rel target = $region86
              $region91: #{cnn_backbone_forward.1} parent=83 // loop_exit
                _
            $region84: #{cnn_backbone_forward.1} parent=79 // pred_fallthru
              _
            // Predicated region
            $region92: #{cnn_backbone_forward.1} parent=79 // pred_check
              _
            $region93: #{cnn_backbone_forward.1} parent=79 // pred_check_branch
              %478 = sbr.rel target = $region95
            $region94: #{cnn_backbone_forward.1} parent=79 // pred_region
              _
            $region95: #{cnn_backbone_forward.1} parent=79 // pred_fallthru
              _
          $region80: #{cnn_backbone_forward.1} parent=75 // pred_fallthru
            _
          %479 = vnop
        $region76: #{cnn_backbone_forward.1} parent=71 // pred_fallthru
          _
      $region72: #{cnn_backbone_forward.1} parent=5 // pred_fallthru
        _
      %p480 = scmp.le.s32.totalorder 1, %s22
      %p481 = scmp.lt.s32.totalorder %s22, 3
      %p482 = pnand %p480, %p481
      %p483 = pneg %p482
      // Predicated region
      $region96: #{cnn_backbone_forward.1} parent=5 // pred_check
        _
      $region97: #{cnn_backbone_forward.1} parent=5 // pred_check_branch
        %485 = sbr.rel (%p482) target = $region99
      $region98: #{cnn_backbone_forward.1} parent=5 // pred_region
        %s486 = ssub.s32 %s22, 1
        %s487 = sand.u32 %s35, 1
        %s488 = sand.u32 %s35, 1
        %s489 = smul.addr %s488, 64
        %s490 = scalar_lea.vmem [#allocation2], %s489
        // Predicated region
        $region100: #{cnn_backbone_forward.1} parent=98 // pred_check
          %p491 = pneg %p48
        $region101: #{cnn_backbone_forward.1} parent=98 // pred_check_branch
          %493 = sbr.rel (%p491) target = $region103
        $region102: #{cnn_backbone_forward.1} parent=98 // pred_region
          _
        $region103: #{cnn_backbone_forward.1} parent=98 // pred_fallthru
          _
        // Predicated region
        $region104: #{cnn_backbone_forward.1} parent=98 // pred_check
          %p494 = pneg %p237
        $region105: #{cnn_backbone_forward.1} parent=98 // pred_check_branch
          %496 = sbr.rel (%p494) target = $region107
        $region106: #{cnn_backbone_forward.1} parent=98 // pred_region
          %497 = dma.done [#allocation4], 36864
        $region107: #{cnn_backbone_forward.1} parent=98 // pred_fallthru
          _
        %s498 = sand.u32 %s35, 1
        %s499 = sand.u32 %s35, 1
        %s500 = smul.addr %s499, 64
        %s501 = scalar_lea.vmem [#allocation2], %s500
        %p502 = pneg %p48
        %p503 = pneg %p45
        %p504 = pneg %p69
        %p505 = pneg %p66
        %p506 = pneg %p90
        %p507 = pneg %p87
        %p508 = pneg %p111
        %p509 = pneg %p108
        %p510 = pneg %p132
        %p511 = pneg %p129
        %p512 = pneg %p153
        %p513 = pneg %p150
        %p514 = pneg %p174
        %p515 = pneg %p171
        %p516 = pneg %p195
        %p517 = pneg %p192
        %p518 = pneg %p216
        %p519 = pneg %p213
        %p520 = pneg %p237
        %p521 = pneg %p234
        %p522 = pneg %p258
        %p523 = pneg %p255
        %p524 = pneg %p279
        %p525 = pneg %p276
        %p526 = pneg %p300
        %p527 = pneg %p297
        %p528 = pneg %p321
        %p529 = pneg %p318
        %p530 = pneg %p342
        %p531 = pneg %p339
        %p532 = pneg %p368
        %p533 = pneg %p365
        %s534 = sand.u32 %s355, 1
        %s535 = sand.u32 %s355, 1
        %s536 = smul.addr %s535, 32
        %s537 = scalar_lea.vmem [#allocation5], %s536
        %s538 = smul.u32 4, %s27
        %v540 = vld [vmem:[%s1] sm:$0xf]
        %v541 = vld [vmem:[%s490] sm:$0xff]
        %v542 = vld [vmem:[%s490 + $0x8] sm:$0xff]
        %v543 = vld [vmem:[%s490 + $0x10] sm:$0xff]
        %v544 = vld [vmem:[%s490 + $0x18] sm:$0xff]
        %v545 = vld [vmem:[%s490 + $0x20] sm:$0xff]
        %v546 = vld [vmem:[%s490 + $0x28] sm:$0xff]
        %v547 = vld [vmem:[%s490 + $0x30] sm:$0xff]
        %v548 = vld [vmem:[%s490 + $0x38] sm:$0xff]
        %v557 = vunpack.c.l.b16 %v541
        %v558 = vunpack.c.h.b16 %v541
        %v559 = vunpack.c.l.b16 %v542
        %v560 = vunpack.c.h.b16 %v542
        %v561 = vunpack.c.l.b16 %v543
        %v562 = vunpack.c.h.b16 %v543
        %v563 = vunpack.c.l.b16 %v544
        %v564 = vunpack.c.h.b16 %v544
        %v565 = vunpack.c.l.b16 %v545
        %v566 = vunpack.c.h.b16 %v545
        %v567 = vunpack.c.l.b16 %v546
        %v568 = vunpack.c.h.b16 %v546
        %v569 = vunpack.c.l.b16 %v547
        %v570 = vunpack.c.h.b16 %v547
        %v571 = vunpack.c.l.b16 %v548
        %v572 = vunpack.c.h.b16 %v548
        %v573 = vpack.c.b16 %v561, %v557
        %v574 = vpack.c.b16 %v562, %v558
        %v575 = vpack.c.b16 %v563, %v559
        %v576 = vpack.c.b16 %v564, %v560
        %v577 = vpack.c.b16 %v569, %v565
        %v578 = vpack.c.b16 %v570, %v566
        %v579 = vpack.c.b16 %v571, %v567
        %v580 = vpack.c.b16 %v572, %v568
        %vm589 = vcmask 261120
        %v591 = vsel %vm589, %v540, 0
        %593 = vmatprep.subr.bf16.mxu0 0
        %594 = vmatpush1.bf16.msra.mxu0 0
        %595 = vmatprep.subr.bf16.mxu0 0
        %596 = vmatpush1.bf16.msra.mxu0 0
        %597 = vmatprep.subr.bf16.mxu0 0
        %598 = vmatpush1.bf16.msra.mxu0 0
        %599 = vmatprep.subr.bf16.mxu0 0
        %600 = vmatpush1.bf16.msra.mxu0 0
        %601 = vmatprep.subr.bf16.mxu0 0
        %602 = vmatpush1.bf16.msra.mxu0 0
        %603 = vmatprep.subr.bf16.mxu0 0
        %604 = vmatpush1.bf16.msra.mxu0 0
        %605 = vmatprep.subr.bf16.mxu0 %v578
        %606 = vmatpush1.bf16.msra.mxu0 %v577
        %607 = vmatprep.subr.bf16.mxu0 %v574
        %608 = vmatpush1.bf16.msra.mxu0 %v573
        %609 = vmatprep.subr.bf16.mxu0 0
        %610 = vmatpush2.bf16.msra.mxu0 0
        %611 = vmatprep.subr.bf16.mxu0 0
        %612 = vmatpush2.bf16.msra.mxu0 0
        %613 = vmatprep.subr.bf16.mxu0 0
        %614 = vmatpush2.bf16.msra.mxu0 0
        %615 = vmatprep.subr.bf16.mxu0 0
        %616 = vmatpush2.bf16.msra.mxu0 0
        %617 = vmatprep.subr.bf16.mxu0 0
        %618 = vmatpush2.bf16.msra.mxu0 0
        %619 = vmatprep.subr.bf16.mxu0 0
        %620 = vmatpush2.bf16.msra.mxu0 0
        %621 = vmatprep.subr.bf16.mxu0 0
        %622 = vmatpush2.bf16.msra.mxu0 0
        %623 = vmatprep.subr.bf16.mxu0 0
        %624 = vmatpush2.bf16.msra.mxu0 0
        %625 = vmatprep.mubr.bf16.mxu0 0
        %626 = vmatmul.mubr.bf16.gmra.mxu0 %v591
        %v627 = vpop.f32.mrf.mxu0
        %v628 = vadd.f32 0.0, %v627
        %v629 = vpop.f32.mrf.mxu0
        %v630 = vadd.f32 0.0, %v629
        %v631 = vpop.f32.mrf.mxu0
        %v632 = vpop.f32.mrf.mxu0
        %633 = vdwg.mxu0
        %634 = vmatprep.subr.bf16.mxu0 0
        %635 = vmatpush1.bf16.msra.mxu0 0
        %636 = vmatprep.subr.bf16.mxu0 0
        %637 = vmatpush1.bf16.msra.mxu0 0
        %638 = vmatprep.subr.bf16.mxu0 0
        %639 = vmatpush1.bf16.msra.mxu0 0
        %640 = vmatprep.subr.bf16.mxu0 0
        %641 = vmatpush1.bf16.msra.mxu0 0
        %642 = vmatprep.subr.bf16.mxu0 0
        %643 = vmatpush1.bf16.msra.mxu0 0
        %644 = vmatprep.subr.bf16.mxu0 0
        %645 = vmatpush1.bf16.msra.mxu0 0
        %646 = vmatprep.subr.bf16.mxu0 %v580
        %647 = vmatpush1.bf16.msra.mxu0 %v579
        %648 = vmatprep.subr.bf16.mxu0 %v576
        %649 = vmatpush1.bf16.msra.mxu0 %v575
        %650 = vmatprep.subr.bf16.mxu0 0
        %651 = vmatpush2.bf16.msra.mxu0 0
        %652 = vmatprep.subr.bf16.mxu0 0
        %653 = vmatpush2.bf16.msra.mxu0 0
        %654 = vmatprep.subr.bf16.mxu0 0
        %655 = vmatpush2.bf16.msra.mxu0 0
        %656 = vmatprep.subr.bf16.mxu0 0
        %657 = vmatpush2.bf16.msra.mxu0 0
        %658 = vmatprep.subr.bf16.mxu0 0
        %659 = vmatpush2.bf16.msra.mxu0 0
        %660 = vmatprep.subr.bf16.mxu0 0
        %661 = vmatpush2.bf16.msra.mxu0 0
        %662 = vmatprep.subr.bf16.mxu0 0
        %663 = vmatpush2.bf16.msra.mxu0 0
        %664 = vmatprep.subr.bf16.mxu0 0
        %665 = vmatpush2.bf16.msra.mxu0 0
        %666 = vmatprep.mubr.bf16.mxu0 0
        %667 = vmatmul.mubr.bf16.gmra.mxu0 %v591
        %v668 = vpop.f32.mrf.mxu0
        %v669 = vadd.f32 0.0, %v668
        %v670 = vpop.f32.mrf.mxu0
        %v671 = vadd.f32 0.0, %v670
        %v672 = vpop.f32.mrf.mxu0
        %v673 = vpop.f32.mrf.mxu0
        %674 = vdwg.mxu0
        %v675 = vld [vmem:[%s2] sm:$0xff]
        %v676 = vmax.f32 %v628, %v630
        %v677 = vmax.f32 %v669, %v671
        %v678 = vmax.f32 %v676, %v677
        %680 = vset.pattern.permute.xlu0 0
        %681 = vperm.xlu0 %680, %v675
        %v682 = vpop.permute.xlu0 %681
        %v684 = vadd.f32 %v678, %v682
        %v685 = vmax.f32 %v684, 0.0
        %v686 = vld [vmem:[%s4] sm:$0xf]
        %v687 = vld [vmem:[%s4 + $0x4] sm:$0xf]
        %v688 = vld [vmem:[%s4 + $0x8] sm:$0xf]
        %v689 = vld [vmem:[%s4 + $0xc] sm:$0xf]
        %v690 = vld [vmem:[%s4 + $0x10] sm:$0xf]
        %v691 = vld [vmem:[%s4 + $0x14] sm:$0xf]
        %v692 = vld [vmem:[%s4 + $0x18] sm:$0xf]
        %v693 = vld [vmem:[%s4 + $0x1c] sm:$0xf]
        %v694 = vld [vmem:[%s4 + $0x20] sm:$0xf]
        %v695 = vld [vmem:[%s4 + $0x24] sm:$0xf]
        %v696 = vld [vmem:[%s4 + $0x28] sm:$0xf]
        %v697 = vld [vmem:[%s4 + $0x2c] sm:$0xf]
        %v698 = vld [vmem:[%s4 + $0x30] sm:$0xf]
        %v699 = vld [vmem:[%s4 + $0x34] sm:$0xf]
        %v700 = vld [vmem:[%s4 + $0x38] sm:$0xf]
        %v701 = vld [vmem:[%s4 + $0x3c] sm:$0xf]
        %v702 = vld [vmem:[%s4 + $0x40] sm:$0xf]
        %v703 = vld [vmem:[%s4 + $0x44] sm:$0xf]
        %v704 = vld [vmem:[%s4 + $0x48] sm:$0xf]
        %v705 = vld [vmem:[%s4 + $0x4c] sm:$0xf]
        %v706 = vld [vmem:[%s4 + $0x50] sm:$0xf]
        %v707 = vld [vmem:[%s4 + $0x54] sm:$0xf]
        %v708 = vld [vmem:[%s4 + $0x58] sm:$0xf]
        %v709 = vld [vmem:[%s4 + $0x5c] sm:$0xf]
        %v710 = vld [vmem:[%s4 + $0x60] sm:$0xf]
        %v711 = vpack.c.bf16 %v685, %v685
        %v737 = vunpack.c.l.b16 %v686
        %v738 = vunpack.c.l.b16 %v687
        %v739 = vunpack.c.l.b16 %v688
        %v740 = vunpack.c.l.b16 %v689
        %v741 = vunpack.c.l.b16 %v690
        %v742 = vunpack.c.l.b16 %v691
        %v743 = vunpack.c.l.b16 %v692
        %v744 = vunpack.c.l.b16 %v693
        %v745 = vunpack.c.l.b16 %v694
        %v746 = vunpack.c.l.b16 %v695
        %v747 = vunpack.c.l.b16 %v696
        %v748 = vunpack.c.l.b16 %v697
        %v749 = vunpack.c.l.b16 %v698
        %v750 = vunpack.c.l.b16 %v699
        %v751 = vunpack.c.l.b16 %v700
        %v752 = vunpack.c.l.b16 %v701
        %v753 = vunpack.c.l.b16 %v702
        %v754 = vunpack.c.l.b16 %v703
        %v755 = vunpack.c.l.b16 %v704
        %v756 = vunpack.c.l.b16 %v705
        %v757 = vunpack.c.l.b16 %v706
        %v758 = vunpack.c.l.b16 %v707
        %v759 = vunpack.c.l.b16 %v708
        %v760 = vunpack.c.l.b16 %v709
        %v761 = vunpack.c.l.b16 %v710
        %v762 = vpack.c.b16 %v738, %v737
        %v763 = vpack.c.b16 %v740, %v739
        %v764 = vpack.c.b16 %v742, %v741
        %v765 = vpack.c.b16 %v744, %v743
        %v766 = vpack.c.b16 %v746, %v745
        %v767 = vpack.c.b16 %v748, %v747
        %v768 = vpack.c.b16 %v750, %v749
        %v769 = vpack.c.b16 %v752, %v751
        %v770 = vpack.c.b16 %v754, %v753
        %v771 = vpack.c.b16 %v756, %v755
        %v772 = vpack.c.b16 %v758, %v757
        %v773 = vpack.c.b16 %v760, %v759
        %v774 = vpack.c.b16 %v761, %v761
        %vm775 = vcmask 64512
        %v777 = vsel %vm775, %v762, 0
        %v780 = vsel %vm775, %v763, 0
        %v783 = vsel %vm775, %v764, 0
        %v786 = vsel %vm775, %v765, 0
        %v789 = vsel %vm775, %v766, 0
        %v792 = vsel %vm775, %v767, 0
        %v795 = vsel %vm775, %v768, 0
        %v798 = vsel %vm775, %v769, 0
        %v801 = vsel %vm775, %v770, 0
        %v804 = vsel %vm775, %v771, 0
        %v807 = vsel %vm775, %v772, 0
        %v810 = vsel %vm775, %v773, 0
        %v813 = vsel %vm775, %v774, 0
        %vm815 = vcmask 1043456
        %v817 = vsel %vm815, %v711, 0
        %819 = vmatprep.subr.bf16.mxu0 0
        %820 = vmatpush1.bf16.msra.mxu0 0
        %821 = vmatprep.subr.bf16.mxu0 0
        %822 = vmatpush1.bf16.msra.mxu0 0
        %823 = vmatprep.subr.bf16.mxu0 0
        %824 = vmatpush1.bf16.msra.mxu0 0
        %825 = vmatprep.subr.bf16.mxu0 0
        %826 = vmatpush1.bf16.msra.mxu0 0
        %827 = vmatprep.subr.bf16.mxu0 0
        %828 = vmatpush1.bf16.msra.mxu0 0
        %829 = vmatprep.subr.bf16.mxu0 0
        %830 = vmatpush1.bf16.msra.mxu0 0
        %831 = vmatprep.subr.bf16.mxu0 0
        %832 = vmatpush1.bf16.msra.mxu0 0
        %833 = vmatprep.subr.bf16.mxu0 0
        %834 = vmatpush1.bf16.msra.mxu0 %v817
        %835 = vmatprep.subr.bf16.mxu0 0
        %836 = vmatpush2.bf16.msra.mxu0 0
        %837 = vmatprep.subr.bf16.mxu0 0
        %838 = vmatpush2.bf16.msra.mxu0 0
        %839 = vmatprep.subr.bf16.mxu0 0
        %840 = vmatpush2.bf16.msra.mxu0 0
        %841 = vmatprep.subr.bf16.mxu0 0
        %842 = vmatpush2.bf16.msra.mxu0 0
        %843 = vmatprep.subr.bf16.mxu0 0
        %844 = vmatpush2.bf16.msra.mxu0 0
        %845 = vmatprep.subr.bf16.mxu0 0
        %846 = vmatpush2.bf16.msra.mxu0 0
        %847 = vmatprep.subr.bf16.mxu0 0
        %848 = vmatpush2.bf16.msra.mxu0 0
        %849 = vmatprep.subr.bf16.mxu0 0
        %850 = vmatpush2.bf16.msra.mxu0 0
        %851 = vmatprep.mubr.bf16.mxu0 0
        %852 = vmatmul.mubr.bf16.gmra.mxu0 %v777
        %v853 = vpop.f32.mrf.mxu0
        %v854 = vadd.f32 0.0, %v853
        %v855 = vpop.f32.mrf.mxu0
        %v856 = vpop.f32.mrf.mxu0
        %v857 = vadd.f32 0.0, %v856
        %v858 = vpop.f32.mrf.mxu0
        %859 = vmatprep.mubr.bf16.mxu0 0
        %860 = vmatmul.mubr.bf16.gmra.mxu0 %v780
        %v861 = vpop.f32.mrf.mxu0
        %v862 = vadd.f32 0.0, %v861
        %v863 = vpop.f32.mrf.mxu0
        %v864 = vpop.f32.mrf.mxu0
        %v865 = vadd.f32 0.0, %v864
        %v866 = vpop.f32.mrf.mxu0
        %867 = vmatprep.mubr.bf16.mxu0 0
        %868 = vmatmul.mubr.bf16.gmra.mxu0 %v783
        %v869 = vpop.f32.mrf.mxu0
        %v870 = vadd.f32 0.0, %v869
        %v871 = vpop.f32.mrf.mxu0
        %v872 = vpop.f32.mrf.mxu0
        %v873 = vadd.f32 0.0, %v872
        %v874 = vpop.f32.mrf.mxu0
        %875 = vmatprep.mubr.bf16.mxu0 0
        %876 = vmatmul.mubr.bf16.gmra.mxu0 %v786
        %v877 = vpop.f32.mrf.mxu0
        %v878 = vadd.f32 0.0, %v877
        %v879 = vpop.f32.mrf.mxu0
        %v880 = vpop.f32.mrf.mxu0
        %v881 = vadd.f32 0.0, %v880
        %v882 = vpop.f32.mrf.mxu0
        %883 = vmatprep.mubr.bf16.mxu0 0
        %884 = vmatmul.mubr.bf16.gmra.mxu0 %v789
        %v885 = vpop.f32.mrf.mxu0
        %v886 = vadd.f32 0.0, %v885
        %v887 = vpop.f32.mrf.mxu0
        %v888 = vpop.f32.mrf.mxu0
        %v889 = vadd.f32 0.0, %v888
        %v890 = vpop.f32.mrf.mxu0
        %891 = vmatprep.mubr.bf16.mxu0 0
        %892 = vmatmul.mubr.bf16.gmra.mxu0 %v792
        %v893 = vpop.f32.mrf.mxu0
        %v894 = vadd.f32 0.0, %v893
        %v895 = vpop.f32.mrf.mxu0
        %v896 = vpop.f32.mrf.mxu0
        %v897 = vadd.f32 0.0, %v896
        %v898 = vpop.f32.mrf.mxu0
        %899 = vmatprep.mubr.bf16.mxu0 0
        %900 = vmatmul.mubr.bf16.gmra.mxu0 %v795
        %v901 = vpop.f32.mrf.mxu0
        %v902 = vadd.f32 0.0, %v901
        %v903 = vpop.f32.mrf.mxu0
        %v904 = vpop.f32.mrf.mxu0
        %v905 = vadd.f32 0.0, %v904
        %v906 = vpop.f32.mrf.mxu0
        %907 = vmatprep.mubr.bf16.mxu0 0
        %908 = vmatmul.mubr.bf16.gmra.mxu0 %v798
        %v909 = vpop.f32.mrf.mxu0
        %v910 = vadd.f32 0.0, %v909
        %v911 = vpop.f32.mrf.mxu0
        %v912 = vpop.f32.mrf.mxu0
        %v913 = vadd.f32 0.0, %v912
        %v914 = vpop.f32.mrf.mxu0
        %915 = vmatprep.mubr.bf16.mxu0 0
        %916 = vmatmul.mubr.bf16.gmra.mxu0 %v801
        %v917 = vpop.f32.mrf.mxu0
        %v918 = vadd.f32 0.0, %v917
        %v919 = vpop.f32.mrf.mxu0
        %v920 = vpop.f32.mrf.mxu0
        %v921 = vadd.f32 0.0, %v920
        %v922 = vpop.f32.mrf.mxu0
        %923 = vmatprep.mubr.bf16.mxu0 0
        %924 = vmatmul.mubr.bf16.gmra.mxu0 %v804
        %v925 = vpop.f32.mrf.mxu0
        %v926 = vadd.f32 0.0, %v925
        %v927 = vpop.f32.mrf.mxu0
        %v928 = vpop.f32.mrf.mxu0
        %v929 = vadd.f32 0.0, %v928
        %v930 = vpop.f32.mrf.mxu0
        %931 = vmatprep.mubr.bf16.mxu0 0
        %932 = vmatmul.mubr.bf16.gmra.mxu0 %v807
        %v933 = vpop.f32.mrf.mxu0
        %v934 = vadd.f32 0.0, %v933
        %v935 = vpop.f32.mrf.mxu0
        %v936 = vpop.f32.mrf.mxu0
        %v937 = vadd.f32 0.0, %v936
        %v938 = vpop.f32.mrf.mxu0
        %939 = vmatprep.mubr.bf16.mxu0 0
        %940 = vmatmul.mubr.bf16.gmra.mxu0 %v810
        %v941 = vpop.f32.mrf.mxu0
        %v942 = vadd.f32 0.0, %v941
        %v943 = vpop.f32.mrf.mxu0
        %v944 = vpop.f32.mrf.mxu0
        %v945 = vadd.f32 0.0, %v944
        %v946 = vpop.f32.mrf.mxu0
        %947 = vmatprep.mubr.bf16.mxu0 0
        %948 = vmatmul.mubr.bf16.gmra.mxu0 %v813
        %v949 = vpop.f32.mrf.mxu0
        %v950 = vadd.f32 0.0, %v949
        %v951 = vpop.f32.mrf.mxu0
        %v952 = vpop.f32.mrf.mxu0
        %v953 = vpop.f32.mrf.mxu0
        %954 = vdwg.mxu0
        %v955 = vpack.c.bf16 %v854, %v854
        %v956 = vpack.c.bf16 %v857, %v857
        %v957 = vpack.c.bf16 %v862, %v862
        %v958 = vpack.c.bf16 %v865, %v865
        %v959 = vpack.c.bf16 %v870, %v870
        %v960 = vpack.c.bf16 %v873, %v873
        %v961 = vpack.c.bf16 %v878, %v878
        %v962 = vpack.c.bf16 %v881, %v881
        %v963 = vpack.c.bf16 %v886, %v886
        %v964 = vpack.c.bf16 %v889, %v889
        %v965 = vpack.c.bf16 %v894, %v894
        %v966 = vpack.c.bf16 %v897, %v897
        %v967 = vpack.c.bf16 %v902, %v902
        %v968 = vpack.c.bf16 %v905, %v905
        %v969 = vpack.c.bf16 %v910, %v910
        %v970 = vpack.c.bf16 %v913, %v913
        %v971 = vpack.c.bf16 %v918, %v918
        %v972 = vpack.c.bf16 %v921, %v921
        %v973 = vpack.c.bf16 %v926, %v926
        %v974 = vpack.c.bf16 %v929, %v929
        %v975 = vpack.c.bf16 %v934, %v934
        %v976 = vpack.c.bf16 %v937, %v937
        %v977 = vpack.c.bf16 %v942, %v942
        %v978 = vpack.c.bf16 %v945, %v945
        %v979 = vpack.c.bf16 %v950, %v950
        %v980 = vld [vmem:[%s3] sm:$0xff]
        %v981 = vld [vmem:[%s3 + $0x8] sm:$0xff]
        %v982 = vld [vmem:[%s3 + $0x10] sm:$0xff]
        %v983 = vld [vmem:[%s3 + $0x18] sm:$0xff]
        %v984 = vld [vmem:[%s3 + $0x20] sm:$0xff]
        %v985 = vld [vmem:[%s3 + $0x28] sm:$0xff]
        %v986 = vld [vmem:[%s3 + $0x30] sm:$0xff]
        %v987 = vld [vmem:[%s3 + $0x38] sm:$0xff]
        %v988 = vld [vmem:[%s3 + $0x40] sm:$0xff]
        %v989 = vld [vmem:[%s3 + $0x48] sm:$0xff]
        %v990 = vld [vmem:[%s3 + $0x50] sm:$0xff]
        %v991 = vld [vmem:[%s3 + $0x58] sm:$0xff]
        %v992 = vld [vmem:[%s3 + $0x60] sm:$0xff]
        %v993 = vld [vmem:[%s3 + $0x68] sm:$0xff]
        %v994 = vld [vmem:[%s3 + $0x70] sm:$0xff]
        %v995 = vld [vmem:[%s3 + $0x78] sm:$0xff]
        %v996 = vld [vmem:[%s3 + $0x80] sm:$0xff]
        %v997 = vld [vmem:[%s3 + $0x88] sm:$0xff]
        %v998 = vld [vmem:[%s3 + $0x90] sm:$0xff]
        %v999 = vld [vmem:[%s3 + $0x98] sm:$0xff]
        %v1000 = vld [vmem:[%s3 + $0xa0] sm:$0xff]
        %v1001 = vld [vmem:[%s3 + $0xa8] sm:$0xff]
        %v1002 = vld [vmem:[%s3 + $0xb0] sm:$0xff]
        %v1003 = vld [vmem:[%s3 + $0xb8] sm:$0xff]
        %v1004 = vld [vmem:[%s3 + $0xc0] sm:$0xff]
        %v1005 = vld [vmem:[%s3 + $0xc8] sm:$0xff]
        %v1006 = vld [vmem:[%s3 + $0xd0] sm:$0xff]
        %v1007 = vld [vmem:[%s3 + $0xd8] sm:$0xff]
        %v1008 = vld [vmem:[%s3 + $0xe0] sm:$0xff]
        %v1009 = vld [vmem:[%s3 + $0xe8] sm:$0xff]
        %v1010 = vld [vmem:[%s3 + $0xf0] sm:$0xff]
        %v1011 = vld [vmem:[%s3 + $0xf8] sm:$0xff]
        %v1012 = vld [vmem:[%s3 + $0x100] sm:$0xff]
        %v1013 = vld [vmem:[%s3 + $0x108] sm:$0xff]
        %v1014 = vld [vmem:[%s3 + $0x110] sm:$0xff]
        %v1015 = vld [vmem:[%s3 + $0x118] sm:$0xff]
        %v1016 = vld [vmem:[%s3 + $0x120] sm:$0xff]
        %v1017 = vld [vmem:[%s3 + $0x128] sm:$0xff]
        %v1018 = vld [vmem:[%s3 + $0x130] sm:$0xff]
        %v1019 = vld [vmem:[%s3 + $0x138] sm:$0xff]
        %v1020 = vld [vmem:[%s3 + $0x140] sm:$0xff]
        %v1021 = vld [vmem:[%s3 + $0x148] sm:$0xff]
        %v1022 = vld [vmem:[%s3 + $0x150] sm:$0xff]
        %v1023 = vld [vmem:[%s3 + $0x158] sm:$0xff]
        %v1024 = vld [vmem:[%s3 + $0x160] sm:$0xff]
        %v1025 = vld [vmem:[%s3 + $0x168] sm:$0xff]
        %v1026 = vld [vmem:[%s3 + $0x170] sm:$0xff]
        %v1027 = vld [vmem:[%s3 + $0x178] sm:$0xff]
        %v1028 = vld [vmem:[%s3 + $0x180] sm:$0xff]
        %v1029 = vld [vmem:[%s3 + $0x188] sm:$0xff]
        %v1030 = vld [vmem:[%s3 + $0x190] sm:$0xff]
        %v1031 = vld [vmem:[%s3 + $0x198] sm:$0xff]
        %v1032 = vld [vmem:[%s3 + $0x1a0] sm:$0xff]
        %v1033 = vld [vmem:[%s3 + $0x1a8] sm:$0xff]
        %v1034 = vld [vmem:[%s3 + $0x1b0] sm:$0xff]
        %v1035 = vld [vmem:[%s3 + $0x1b8] sm:$0xff]
        %v1036 = vld [vmem:[%s3 + $0x1c0] sm:$0xff]
        %v1037 = vld [vmem:[%s3 + $0x1c8] sm:$0xff]
        %v1038 = vld [vmem:[%s3 + $0x1d0] sm:$0xff]
        %v1039 = vld [vmem:[%s3 + $0x1d8] sm:$0xff]
        %v1040 = vld [vmem:[%s3 + $0x1e0] sm:$0xff]
        %v1041 = vld [vmem:[%s3 + $0x1e8] sm:$0xff]
        %v1042 = vld [vmem:[%s3 + $0x1f0] sm:$0xff]
        %v1043 = vld [vmem:[%s3 + $0x1f8] sm:$0xff]
        %v1044 = vld [vmem:[%s3 + $0x200] sm:$0xff]
        %v1045 = vld [vmem:[%s3 + $0x208] sm:$0xff]
        %v1046 = vld [vmem:[%s3 + $0x210] sm:$0xff]
        %v1047 = vld [vmem:[%s3 + $0x218] sm:$0xff]
        %v1048 = vld [vmem:[%s3 + $0x220] sm:$0xff]
        %v1049 = vld [vmem:[%s3 + $0x228] sm:$0xff]
        %v1050 = vld [vmem:[%s3 + $0x230] sm:$0xff]
        %v1051 = vld [vmem:[%s3 + $0x238] sm:$0xff]
        %v1052 = vld [vmem:[%s3 + $0x240] sm:$0xff]
        %v1053 = vld [vmem:[%s3 + $0x248] sm:$0xff]
        %v1054 = vld [vmem:[%s3 + $0x250] sm:$0xff]
        %v1055 = vld [vmem:[%s3 + $0x258] sm:$0xff]
        %v1056 = vld [vmem:[%s3 + $0x260] sm:$0xff]
        %v1057 = vld [vmem:[%s3 + $0x268] sm:$0xff]
        %v1058 = vld [vmem:[%s3 + $0x270] sm:$0xff]
        %v1059 = vld [vmem:[%s3 + $0x278] sm:$0xff]
        %v1060 = vld [vmem:[%s3 + $0x280] sm:$0xff]
        %v1061 = vld [vmem:[%s3 + $0x288] sm:$0xff]
        %v1062 = vld [vmem:[%s3 + $0x290] sm:$0xff]
        %v1063 = vld [vmem:[%s3 + $0x298] sm:$0xff]
        %v1064 = vld [vmem:[%s3 + $0x2a0] sm:$0xff]
        %v1065 = vld [vmem:[%s3 + $0x2a8] sm:$0xff]
        %v1066 = vld [vmem:[%s3 + $0x2b0] sm:$0xff]
        %v1067 = vld [vmem:[%s3 + $0x2b8] sm:$0xff]
        %v1068 = vld [vmem:[%s3 + $0x2c0] sm:$0xff]
        %v1069 = vld [vmem:[%s3 + $0x2c8] sm:$0xff]
        %v1070 = vld [vmem:[%s3 + $0x2d0] sm:$0xff]
        %v1071 = vld [vmem:[%s3 + $0x2d8] sm:$0xff]
        %v1072 = vld [vmem:[%s3 + $0x2e0] sm:$0xff]
        %v1073 = vld [vmem:[%s3 + $0x2e8] sm:$0xff]
        %v1074 = vld [vmem:[%s3 + $0x2f0] sm:$0xff]
        %v1075 = vld [vmem:[%s3 + $0x2f8] sm:$0xff]
        %v1076 = vld [vmem:[%s3 + $0x300] sm:$0xff]
        %v1077 = vld [vmem:[%s3 + $0x308] sm:$0xff]
        %v1078 = vld [vmem:[%s3 + $0x310] sm:$0xff]
        %v1079 = vld [vmem:[%s3 + $0x318] sm:$0xff]
        %v1080 = vld [vmem:[%s3 + $0x320] sm:$0xff]
        %v1081 = vld [vmem:[%s3 + $0x328] sm:$0xff]
        %v1082 = vld [vmem:[%s3 + $0x330] sm:$0xff]
        %v1083 = vld [vmem:[%s3 + $0x338] sm:$0xff]
        %v1084 = vld [vmem:[%s3 + $0x340] sm:$0xff]
        %v1085 = vld [vmem:[%s3 + $0x348] sm:$0xff]
        %v1086 = vld [vmem:[%s3 + $0x350] sm:$0xff]
        %v1087 = vld [vmem:[%s3 + $0x358] sm:$0xff]
        %v1088 = vld [vmem:[%s3 + $0x360] sm:$0xff]
        %v1089 = vld [vmem:[%s3 + $0x368] sm:$0xff]
        %v1090 = vld [vmem:[%s3 + $0x370] sm:$0xff]
        %v1091 = vld [vmem:[%s3 + $0x378] sm:$0xff]
        %v1092 = vld [vmem:[%s3 + $0x380] sm:$0xff]
        %v1093 = vld [vmem:[%s3 + $0x388] sm:$0xff]
        %v1094 = vld [vmem:[%s3 + $0x390] sm:$0xff]
        %v1095 = vld [vmem:[%s3 + $0x398] sm:$0xff]
        %v1096 = vld [vmem:[%s3 + $0x3a0] sm:$0xff]
        %v1097 = vld [vmem:[%s3 + $0x3a8] sm:$0xff]
        %v1098 = vld [vmem:[%s3 + $0x3b0] sm:$0xff]
        %v1099 = vld [vmem:[%s3 + $0x3b8] sm:$0xff]
        %v1100 = vld [vmem:[%s3 + $0x3c0] sm:$0xff]
        %v1101 = vld [vmem:[%s3 + $0x3c8] sm:$0xff]
        %v1102 = vld [vmem:[%s3 + $0x3d0] sm:$0xff]
        %v1103 = vld [vmem:[%s3 + $0x3d8] sm:$0xff]
        %v1104 = vld [vmem:[%s3 + $0x3e0] sm:$0xff]
        %v1105 = vld [vmem:[%s3 + $0x3e8] sm:$0xff]
        %v1106 = vld [vmem:[%s3 + $0x3f0] sm:$0xff]
        %v1107 = vld [vmem:[%s3 + $0x3f8] sm:$0xff]
        %v1108 = vld [vmem:[%s3 + $0x400] sm:$0xff]
        %v1109 = vld [vmem:[%s3 + $0x408] sm:$0xff]
        %v1110 = vld [vmem:[%s3 + $0x410] sm:$0xff]
        %v1111 = vld [vmem:[%s3 + $0x418] sm:$0xff]
        %v1112 = vld [vmem:[%s3 + $0x420] sm:$0xff]
        %v1113 = vld [vmem:[%s3 + $0x428] sm:$0xff]
        %v1114 = vld [vmem:[%s3 + $0x430] sm:$0xff]
        %v1115 = vld [vmem:[%s3 + $0x438] sm:$0xff]
        %v1116 = vld [vmem:[%s3 + $0x440] sm:$0xff]
        %v1117 = vld [vmem:[%s3 + $0x448] sm:$0xff]
        %v1118 = vld [vmem:[%s3 + $0x450] sm:$0xff]
        %v1119 = vld [vmem:[%s3 + $0x458] sm:$0xff]
        %v1120 = vld [vmem:[%s3 + $0x460] sm:$0xff]
        %v1121 = vld [vmem:[%s3 + $0x468] sm:$0xff]
        %v1122 = vld [vmem:[%s3 + $0x470] sm:$0xff]
        %v1123 = vld [vmem:[%s3 + $0x478] sm:$0xff]
        %v1124 = vld [vmem:[%s3 + $0x480] sm:$0xff]
        %v1125 = vld [vmem:[%s3 + $0x488] sm:$0xff]
        %v1126 = vld [vmem:[%s3 + $0x490] sm:$0xff]
        %v1127 = vld [vmem:[%s3 + $0x498] sm:$0xff]
        %v1128 = vld [vmem:[%s3 + $0x4a0] sm:$0xff]
        %v1129 = vld [vmem:[%s3 + $0x4a8] sm:$0xff]
        %v1130 = vld [vmem:[%s3 + $0x4b0] sm:$0xff]
        %v1131 = vld [vmem:[%s3 + $0x4b8] sm:$0xff]
        %v1132 = vld [vmem:[%s3 + $0x4c0] sm:$0xff]
        %v1133 = vld [vmem:[%s3 + $0x4c8] sm:$0xff]
        %v1134 = vld [vmem:[%s3 + $0x4d0] sm:$0xff]
        %v1135 = vld [vmem:[%s3 + $0x4d8] sm:$0xff]
        %v1136 = vld [vmem:[%s3 + $0x4e0] sm:$0xff]
        %v1137 = vld [vmem:[%s3 + $0x4e8] sm:$0xff]
        %v1138 = vld [vmem:[%s3 + $0x4f0] sm:$0xff]
        %v1139 = vld [vmem:[%s3 + $0x4f8] sm:$0xff]
        %v1140 = vld [vmem:[%s3 + $0x500] sm:$0xff]
        %v1141 = vld [vmem:[%s3 + $0x508] sm:$0xff]
        %v1142 = vld [vmem:[%s3 + $0x510] sm:$0xff]
        %v1143 = vld [vmem:[%s3 + $0x518] sm:$0xff]
        %v1144 = vld [vmem:[%s3 + $0x520] sm:$0xff]
        %v1145 = vld [vmem:[%s3 + $0x528] sm:$0xff]
        %v1146 = vld [vmem:[%s3 + $0x530] sm:$0xff]
        %v1147 = vld [vmem:[%s3 + $0x538] sm:$0xff]
        %v1148 = vld [vmem:[%s3 + $0x540] sm:$0xff]
        %v1149 = vld [vmem:[%s3 + $0x548] sm:$0xff]
        %v1150 = vld [vmem:[%s3 + $0x550] sm:$0xff]
        %v1151 = vld [vmem:[%s3 + $0x558] sm:$0xff]
        %v1152 = vld [vmem:[%s3 + $0x560] sm:$0xff]
        %v1153 = vld [vmem:[%s3 + $0x568] sm:$0xff]
        %v1154 = vld [vmem:[%s3 + $0x570] sm:$0xff]
        %v1155 = vld [vmem:[%s3 + $0x578] sm:$0xff]
        %v1156 = vld [vmem:[%s3 + $0x580] sm:$0xff]
        %v1157 = vld [vmem:[%s3 + $0x588] sm:$0xff]
        %v1158 = vld [vmem:[%s3 + $0x590] sm:$0xff]
        %v1159 = vld [vmem:[%s3 + $0x598] sm:$0xff]
        %v1160 = vld [vmem:[%s3 + $0x5a0] sm:$0xff]
        %v1161 = vld [vmem:[%s3 + $0x5a8] sm:$0xff]
        %v1162 = vld [vmem:[%s3 + $0x5b0] sm:$0xff]
        %v1163 = vld [vmem:[%s3 + $0x5b8] sm:$0xff]
        %v1164 = vld [vmem:[%s3 + $0x5c0] sm:$0xff]
        %v1165 = vld [vmem:[%s3 + $0x5c8] sm:$0xff]
        %v1166 = vld [vmem:[%s3 + $0x5d0] sm:$0xff]
        %v1167 = vld [vmem:[%s3 + $0x5d8] sm:$0xff]
        %v1168 = vld [vmem:[%s3 + $0x5e0] sm:$0xff]
        %v1169 = vld [vmem:[%s3 + $0x5e8] sm:$0xff]
        %v1170 = vld [vmem:[%s3 + $0x5f0] sm:$0xff]
        %v1171 = vld [vmem:[%s3 + $0x5f8] sm:$0xff]
        %v1172 = vld [vmem:[%s3 + $0x600] sm:$0xff]
        %v1173 = vld [vmem:[%s3 + $0x608] sm:$0xff]
        %v1174 = vld [vmem:[%s3 + $0x610] sm:$0xff]
        %v1175 = vld [vmem:[%s3 + $0x618] sm:$0xff]
        %v1176 = vld [vmem:[%s3 + $0x620] sm:$0xff]
        %v1177 = vld [vmem:[%s3 + $0x628] sm:$0xff]
        %v1178 = vld [vmem:[%s3 + $0x630] sm:$0xff]
        %v1179 = vld [vmem:[%s3 + $0x638] sm:$0xff]
        %v1180 = vld [vmem:[%s3 + $0x640] sm:$0xff]
        %v1181 = vld [vmem:[%s3 + $0x648] sm:$0xff]
        %v1182 = vld [vmem:[%s3 + $0x650] sm:$0xff]
        %v1183 = vld [vmem:[%s3 + $0x658] sm:$0xff]
        %v1184 = vld [vmem:[%s3 + $0x660] sm:$0xff]
        %v1185 = vld [vmem:[%s3 + $0x668] sm:$0xff]
        %v1186 = vld [vmem:[%s3 + $0x670] sm:$0xff]
        %v1187 = vld [vmem:[%s3 + $0x678] sm:$0xff]
        %v1188 = vld [vmem:[%s3 + $0x680] sm:$0xff]
        %v1189 = vld [vmem:[%s3 + $0x688] sm:$0xff]
        %v1190 = vld [vmem:[%s3 + $0x690] sm:$0xff]
        %v1191 = vld [vmem:[%s3 + $0x698] sm:$0xff]
        %v1192 = vld [vmem:[%s3 + $0x6a0] sm:$0xff]
        %v1193 = vld [vmem:[%s3 + $0x6a8] sm:$0xff]
        %v1194 = vld [vmem:[%s3 + $0x6b0] sm:$0xff]
        %v1195 = vld [vmem:[%s3 + $0x6b8] sm:$0xff]
        %v1196 = vld [vmem:[%s3 + $0x6c0] sm:$0xff]
        %v1197 = vld [vmem:[%s3 + $0x6c8] sm:$0xff]
        %v1198 = vld [vmem:[%s3 + $0x6d0] sm:$0xff]
        %v1199 = vld [vmem:[%s3 + $0x6d8] sm:$0xff]
        %v1200 = vld [vmem:[%s3 + $0x6e0] sm:$0xff]
        %v1201 = vld [vmem:[%s3 + $0x6e8] sm:$0xff]
        %v1202 = vld [vmem:[%s3 + $0x6f0] sm:$0xff]
        %v1203 = vld [vmem:[%s3 + $0x6f8] sm:$0xff]
        %v1204 = vld [vmem:[%s3 + $0x700] sm:$0xff]
        %v1205 = vld [vmem:[%s3 + $0x708] sm:$0xff]
        %v1206 = vld [vmem:[%s3 + $0x710] sm:$0xff]
        %v1207 = vld [vmem:[%s3 + $0x718] sm:$0xff]
        %v1208 = vld [vmem:[%s3 + $0x720] sm:$0xff]
        %v1209 = vld [vmem:[%s3 + $0x728] sm:$0xff]
        %v1210 = vld [vmem:[%s3 + $0x730] sm:$0xff]
        %v1211 = vld [vmem:[%s3 + $0x738] sm:$0xff]
        %v1212 = vld [vmem:[%s3 + $0x740] sm:$0xff]
        %v1213 = vld [vmem:[%s3 + $0x748] sm:$0xff]
        %v1214 = vld [vmem:[%s3 + $0x750] sm:$0xff]
        %v1215 = vld [vmem:[%s3 + $0x758] sm:$0xff]
        %v1216 = vld [vmem:[%s3 + $0x760] sm:$0xff]
        %v1217 = vld [vmem:[%s3 + $0x768] sm:$0xff]
        %v1218 = vld [vmem:[%s3 + $0x770] sm:$0xff]
        %v1219 = vld [vmem:[%s3 + $0x778] sm:$0xff]
        %v1220 = vld [vmem:[%s3 + $0x780] sm:$0xff]
        %v1221 = vld [vmem:[%s3 + $0x788] sm:$0xff]
        %v1222 = vld [vmem:[%s3 + $0x790] sm:$0xff]
        %v1223 = vld [vmem:[%s3 + $0x798] sm:$0xff]
        %v1224 = vld [vmem:[%s3 + $0x7a0] sm:$0xff]
        %v1225 = vld [vmem:[%s3 + $0x7a8] sm:$0xff]
        %v1226 = vld [vmem:[%s3 + $0x7b0] sm:$0xff]
        %v1227 = vld [vmem:[%s3 + $0x7b8] sm:$0xff]
        %v1228 = vld [vmem:[%s3 + $0x7c0] sm:$0xff]
        %v1229 = vld [vmem:[%s3 + $0x7c8] sm:$0xff]
        %v1230 = vld [vmem:[%s3 + $0x7d0] sm:$0xff]
        %v1231 = vld [vmem:[%s3 + $0x7d8] sm:$0xff]
        %v1232 = vld [vmem:[%s3 + $0x7e0] sm:$0xff]
        %v1233 = vld [vmem:[%s3 + $0x7e8] sm:$0xff]
        %v1234 = vld [vmem:[%s3 + $0x7f0] sm:$0xff]
        %v1235 = vld [vmem:[%s3 + $0x7f8] sm:$0xff]
        %v1236 = vld [vmem:[%s3 + $0x800] sm:$0xff]
        %v1237 = vld [vmem:[%s3 + $0x808] sm:$0xff]
        %v1238 = vld [vmem:[%s3 + $0x810] sm:$0xff]
        %v1239 = vld [vmem:[%s3 + $0x818] sm:$0xff]
        %v1240 = vld [vmem:[%s3 + $0x820] sm:$0xff]
        %v1241 = vld [vmem:[%s3 + $0x828] sm:$0xff]
        %v1242 = vld [vmem:[%s3 + $0x830] sm:$0xff]
        %v1243 = vld [vmem:[%s3 + $0x838] sm:$0xff]
        %v1244 = vld [vmem:[%s3 + $0x840] sm:$0xff]
        %v1245 = vld [vmem:[%s3 + $0x848] sm:$0xff]
        %v1246 = vld [vmem:[%s3 + $0x850] sm:$0xff]
        %v1247 = vld [vmem:[%s3 + $0x858] sm:$0xff]
        %v1248 = vld [vmem:[%s3 + $0x860] sm:$0xff]
        %v1249 = vld [vmem:[%s3 + $0x868] sm:$0xff]
        %v1250 = vld [vmem:[%s3 + $0x870] sm:$0xff]
        %v1251 = vld [vmem:[%s3 + $0x878] sm:$0xff]
        %v1252 = vld [vmem:[%s3 + $0x880] sm:$0xff]
        %v1253 = vld [vmem:[%s3 + $0x888] sm:$0xff]
        %v1254 = vld [vmem:[%s3 + $0x890] sm:$0xff]
        %v1255 = vld [vmem:[%s3 + $0x898] sm:$0xff]
        %v1256 = vld [vmem:[%s3 + $0x8a0] sm:$0xff]
        %v1257 = vld [vmem:[%s3 + $0x8a8] sm:$0xff]
        %v1258 = vld [vmem:[%s3 + $0x8b0] sm:$0xff]
        %v1259 = vld [vmem:[%s3 + $0x8b8] sm:$0xff]
        %v1260 = vld [vmem:[%s3 + $0x8c0] sm:$0xff]
        %v1261 = vld [vmem:[%s3 + $0x8c8] sm:$0xff]
        %v1262 = vld [vmem:[%s3 + $0x8d0] sm:$0xff]
        %v1263 = vld [vmem:[%s3 + $0x8d8] sm:$0xff]
        %v1264 = vld [vmem:[%s3 + $0x8e0] sm:$0xff]
        %v1265 = vld [vmem:[%s3 + $0x8e8] sm:$0xff]
        %v1266 = vld [vmem:[%s3 + $0x8f0] sm:$0xff]
        %v1267 = vld [vmem:[%s3 + $0x8f8] sm:$0xff]
        %v1268 = vld [vmem:[%s3 + $0x900] sm:$0xff]
        %v1269 = vld [vmem:[%s3 + $0x908] sm:$0xff]
        %v1270 = vld [vmem:[%s3 + $0x910] sm:$0xff]
        %v1271 = vld [vmem:[%s3 + $0x918] sm:$0xff]
        %v1272 = vld [vmem:[%s3 + $0x920] sm:$0xff]
        %v1273 = vld [vmem:[%s3 + $0x928] sm:$0xff]
        %v1274 = vld [vmem:[%s3 + $0x930] sm:$0xff]
        %v1275 = vld [vmem:[%s3 + $0x938] sm:$0xff]
        %v1276 = vld [vmem:[%s3 + $0x940] sm:$0xff]
        %v1277 = vld [vmem:[%s3 + $0x948] sm:$0xff]
        %v1278 = vld [vmem:[%s3 + $0x950] sm:$0xff]
        %v1279 = vld [vmem:[%s3 + $0x958] sm:$0xff]
        %v1280 = vld [vmem:[%s3 + $0x960] sm:$0xff]
        %v1281 = vld [vmem:[%s3 + $0x968] sm:$0xff]
        %v1282 = vld [vmem:[%s3 + $0x970] sm:$0xff]
        %v1283 = vld [vmem:[%s3 + $0x978] sm:$0xff]
        %v1284 = vld [vmem:[%s3 + $0x980] sm:$0xff]
        %v1285 = vld [vmem:[%s3 + $0x988] sm:$0xff]
        %v1286 = vld [vmem:[%s3 + $0x990] sm:$0xff]
        %v1287 = vld [vmem:[%s3 + $0x998] sm:$0xff]
        %v1288 = vld [vmem:[%s3 + $0x9a0] sm:$0xff]
        %v1289 = vld [vmem:[%s3 + $0x9a8] sm:$0xff]
        %v1290 = vld [vmem:[%s3 + $0x9b0] sm:$0xff]
        %v1291 = vld [vmem:[%s3 + $0x9b8] sm:$0xff]
        %v1292 = vld [vmem:[%s3 + $0x9c0] sm:$0xff]
        %v1293 = vld [vmem:[%s3 + $0x9c8] sm:$0xff]
        %v1294 = vld [vmem:[%s3 + $0x9d0] sm:$0xff]
        %v1295 = vld [vmem:[%s3 + $0x9d8] sm:$0xff]
        %v1296 = vld [vmem:[%s3 + $0x9e0] sm:$0xff]
        %v1297 = vld [vmem:[%s3 + $0x9e8] sm:$0xff]
        %v1298 = vld [vmem:[%s3 + $0x9f0] sm:$0xff]
        %v1299 = vld [vmem:[%s3 + $0x9f8] sm:$0xff]
        %v1300 = vld [vmem:[%s3 + $0xa00] sm:$0xff]
        %v1301 = vld [vmem:[%s3 + $0xa08] sm:$0xff]
        %v1302 = vld [vmem:[%s3 + $0xa10] sm:$0xff]
        %v1303 = vld [vmem:[%s3 + $0xa18] sm:$0xff]
        %v1304 = vld [vmem:[%s3 + $0xa20] sm:$0xff]
        %v1305 = vld [vmem:[%s3 + $0xa28] sm:$0xff]
        %v1306 = vld [vmem:[%s3 + $0xa30] sm:$0xff]
        %v1307 = vld [vmem:[%s3 + $0xa38] sm:$0xff]
        %v1308 = vld [vmem:[%s3 + $0xa40] sm:$0xff]
        %v1309 = vld [vmem:[%s3 + $0xa48] sm:$0xff]
        %v1310 = vld [vmem:[%s3 + $0xa50] sm:$0xff]
        %v1311 = vld [vmem:[%s3 + $0xa58] sm:$0xff]
        %v1312 = vld [vmem:[%s3 + $0xa60] sm:$0xff]
        %v1313 = vld [vmem:[%s3 + $0xa68] sm:$0xff]
        %v1314 = vld [vmem:[%s3 + $0xa70] sm:$0xff]
        %v1315 = vld [vmem:[%s3 + $0xa78] sm:$0xff]
        %v1316 = vld [vmem:[%s3 + $0xa80] sm:$0xff]
        %v1317 = vld [vmem:[%s3 + $0xa88] sm:$0xff]
        %v1318 = vld [vmem:[%s3 + $0xa90] sm:$0xff]
        %v1319 = vld [vmem:[%s3 + $0xa98] sm:$0xff]
        %v1320 = vld [vmem:[%s3 + $0xaa0] sm:$0xff]
        %v1321 = vld [vmem:[%s3 + $0xaa8] sm:$0xff]
        %v1322 = vld [vmem:[%s3 + $0xab0] sm:$0xff]
        %v1323 = vld [vmem:[%s3 + $0xab8] sm:$0xff]
        %v1324 = vld [vmem:[%s3 + $0xac0] sm:$0xff]
        %v1325 = vld [vmem:[%s3 + $0xac8] sm:$0xff]
        %v1326 = vld [vmem:[%s3 + $0xad0] sm:$0xff]
        %v1327 = vld [vmem:[%s3 + $0xad8] sm:$0xff]
        %v1328 = vld [vmem:[%s3 + $0xae0] sm:$0xff]
        %v1329 = vld [vmem:[%s3 + $0xae8] sm:$0xff]
        %v1330 = vld [vmem:[%s3 + $0xaf0] sm:$0xff]
        %v1331 = vld [vmem:[%s3 + $0xaf8] sm:$0xff]
        %v1332 = vld [vmem:[%s3 + $0xb00] sm:$0xff]
        %v1333 = vld [vmem:[%s3 + $0xb08] sm:$0xff]
        %v1334 = vld [vmem:[%s3 + $0xb10] sm:$0xff]
        %v1335 = vld [vmem:[%s3 + $0xb18] sm:$0xff]
        %v1336 = vld [vmem:[%s3 + $0xb20] sm:$0xff]
        %v1337 = vld [vmem:[%s3 + $0xb28] sm:$0xff]
        %v1338 = vld [vmem:[%s3 + $0xb30] sm:$0xff]
        %v1339 = vld [vmem:[%s3 + $0xb38] sm:$0xff]
        %v1340 = vld [vmem:[%s3 + $0xb40] sm:$0xff]
        %v1341 = vld [vmem:[%s3 + $0xb48] sm:$0xff]
        %v1342 = vld [vmem:[%s3 + $0xb50] sm:$0xff]
        %v1343 = vld [vmem:[%s3 + $0xb58] sm:$0xff]
        %v1344 = vld [vmem:[%s3 + $0xb60] sm:$0xff]
        %v1345 = vld [vmem:[%s3 + $0xb68] sm:$0xff]
        %v1346 = vld [vmem:[%s3 + $0xb70] sm:$0xff]
        %v1347 = vld [vmem:[%s3 + $0xb78] sm:$0xff]
        %v1348 = vld [vmem:[%s3 + $0xb80] sm:$0xff]
        %v1349 = vld [vmem:[%s3 + $0xb88] sm:$0xff]
        %v1350 = vld [vmem:[%s3 + $0xb90] sm:$0xff]
        %v1351 = vld [vmem:[%s3 + $0xb98] sm:$0xff]
        %v1352 = vld [vmem:[%s3 + $0xba0] sm:$0xff]
        %v1353 = vld [vmem:[%s3 + $0xba8] sm:$0xff]
        %v1354 = vld [vmem:[%s3 + $0xbb0] sm:$0xff]
        %v1355 = vld [vmem:[%s3 + $0xbb8] sm:$0xff]
        %v1356 = vld [vmem:[%s3 + $0xbc0] sm:$0xff]
        %v1357 = vld [vmem:[%s3 + $0xbc8] sm:$0xff]
        %v1358 = vld [vmem:[%s3 + $0xbd0] sm:$0xff]
        %v1359 = vld [vmem:[%s3 + $0xbd8] sm:$0xff]
        %v1360 = vld [vmem:[%s3 + $0xbe0] sm:$0xff]
        %v1361 = vld [vmem:[%s3 + $0xbe8] sm:$0xff]
        %v1362 = vld [vmem:[%s3 + $0xbf0] sm:$0xff]
        %v1363 = vld [vmem:[%s3 + $0xbf8] sm:$0xff]
        %v1364 = vld [vmem:[%s3 + $0xc00] sm:$0xff]
        %v1365 = vld [vmem:[%s3 + $0xc08] sm:$0xff]
        %v1366 = vld [vmem:[%s3 + $0xc10] sm:$0xff]
        %v1367 = vld [vmem:[%s3 + $0xc18] sm:$0xff]
        %v1368 = vld [vmem:[%s3 + $0xc20] sm:$0xff]
        %v1369 = vld [vmem:[%s3 + $0xc28] sm:$0xff]
        %v1370 = vld [vmem:[%s3 + $0xc30] sm:$0xff]
        %v1371 = vld [vmem:[%s3 + $0xc38] sm:$0xff]
        %v1372 = vld [vmem:[%s3 + $0xc40] sm:$0xff]
        %v1373 = vld [vmem:[%s3 + $0xc48] sm:$0xff]
        %v1374 = vld [vmem:[%s3 + $0xc50] sm:$0xff]
        %v1375 = vld [vmem:[%s3 + $0xc58] sm:$0xff]
        %v1376 = vld [vmem:[%s3 + $0xc60] sm:$0xff]
        %v1377 = vld [vmem:[%s3 + $0xc68] sm:$0xff]
        %v1378 = vld [vmem:[%s3 + $0xc70] sm:$0xff]
        %v1379 = vld [vmem:[%s3 + $0xc78] sm:$0xff]
        %v1380 = vld [vmem:[%s3 + $0xc80] sm:$0xff]
        %v1381 = vld [vmem:[%s3 + $0xc88] sm:$0xff]
        %v1382 = vld [vmem:[%s3 + $0xc90] sm:$0xff]
        %v1383 = vld [vmem:[%s3 + $0xc98] sm:$0xff]
        %v1384 = vld [vmem:[%s3 + $0xca0] sm:$0xff]
        %v1385 = vld [vmem:[%s3 + $0xca8] sm:$0xff]
        %v1386 = vld [vmem:[%s3 + $0xcb0] sm:$0xff]
        %v1387 = vld [vmem:[%s3 + $0xcb8] sm:$0xff]
        %v1388 = vld [vmem:[%s3 + $0xcc0] sm:$0xff]
        %v1389 = vld [vmem:[%s3 + $0xcc8] sm:$0xff]
        %v1390 = vld [vmem:[%s3 + $0xcd0] sm:$0xff]
        %v1391 = vld [vmem:[%s3 + $0xcd8] sm:$0xff]
        %v1392 = vld [vmem:[%s3 + $0xce0] sm:$0xff]
        %v1393 = vld [vmem:[%s3 + $0xce8] sm:$0xff]
        %v1394 = vld [vmem:[%s3 + $0xcf0] sm:$0xff]
        %v1395 = vld [vmem:[%s3 + $0xcf8] sm:$0xff]
        %v1396 = vld [vmem:[%s3 + $0xd00] sm:$0xff]
        %v1397 = vld [vmem:[%s3 + $0xd08] sm:$0xff]
        %v1398 = vld [vmem:[%s3 + $0xd10] sm:$0xff]
        %v1399 = vld [vmem:[%s3 + $0xd18] sm:$0xff]
        %v1400 = vld [vmem:[%s3 + $0xd20] sm:$0xff]
        %v1401 = vld [vmem:[%s3 + $0xd28] sm:$0xff]
        %v1402 = vld [vmem:[%s3 + $0xd30] sm:$0xff]
        %v1403 = vld [vmem:[%s3 + $0xd38] sm:$0xff]
        %v1404 = vld [vmem:[%s3 + $0xd40] sm:$0xff]
        %v1405 = vld [vmem:[%s3 + $0xd48] sm:$0xff]
        %v1406 = vld [vmem:[%s3 + $0xd50] sm:$0xff]
        %v1407 = vld [vmem:[%s3 + $0xd58] sm:$0xff]
        %v1408 = vld [vmem:[%s3 + $0xd60] sm:$0xff]
        %v1409 = vld [vmem:[%s3 + $0xd68] sm:$0xff]
        %v1410 = vld [vmem:[%s3 + $0xd70] sm:$0xff]
        %v1411 = vld [vmem:[%s3 + $0xd78] sm:$0xff]
        %v1412 = vld [vmem:[%s3 + $0xd80] sm:$0xff]
        %v1413 = vld [vmem:[%s3 + $0xd88] sm:$0xff]
        %v1414 = vld [vmem:[%s3 + $0xd90] sm:$0xff]
        %v1415 = vld [vmem:[%s3 + $0xd98] sm:$0xff]
        %v1416 = vld [vmem:[%s3 + $0xda0] sm:$0xff]
        %v1417 = vld [vmem:[%s3 + $0xda8] sm:$0xff]
        %v1418 = vld [vmem:[%s3 + $0xdb0] sm:$0xff]
        %v1419 = vld [vmem:[%s3 + $0xdb8] sm:$0xff]
        %v1420 = vld [vmem:[%s3 + $0xdc0] sm:$0xff]
        %v1421 = vld [vmem:[%s3 + $0xdc8] sm:$0xff]
        %v1422 = vld [vmem:[%s3 + $0xdd0] sm:$0xff]
        %v1423 = vld [vmem:[%s3 + $0xdd8] sm:$0xff]
        %v1424 = vld [vmem:[%s3 + $0xde0] sm:$0xff]
        %v1425 = vld [vmem:[%s3 + $0xde8] sm:$0xff]
        %v1426 = vld [vmem:[%s3 + $0xdf0] sm:$0xff]
        %v1427 = vld [vmem:[%s3 + $0xdf8] sm:$0xff]
        %v1428 = vld [vmem:[%s3 + $0xe00] sm:$0xff]
        %v1429 = vld [vmem:[%s3 + $0xe08] sm:$0xff]
        %v1430 = vld [vmem:[%s3 + $0xe10] sm:$0xff]
        %v1431 = vld [vmem:[%s3 + $0xe18] sm:$0xff]
        %v1432 = vld [vmem:[%s3 + $0xe20] sm:$0xff]
        %v1433 = vld [vmem:[%s3 + $0xe28] sm:$0xff]
        %v1434 = vld [vmem:[%s3 + $0xe30] sm:$0xff]
        %v1435 = vld [vmem:[%s3 + $0xe38] sm:$0xff]
        %v1436 = vld [vmem:[%s3 + $0xe40] sm:$0xff]
        %v1437 = vld [vmem:[%s3 + $0xe48] sm:$0xff]
        %v1438 = vld [vmem:[%s3 + $0xe50] sm:$0xff]
        %v1439 = vld [vmem:[%s3 + $0xe58] sm:$0xff]
        %v1440 = vld [vmem:[%s3 + $0xe60] sm:$0xff]
        %v1441 = vld [vmem:[%s3 + $0xe68] sm:$0xff]
        %v1442 = vld [vmem:[%s3 + $0xe70] sm:$0xff]
        %v1443 = vld [vmem:[%s3 + $0xe78] sm:$0xff]
        %v1444 = vld [vmem:[%s3 + $0xe80] sm:$0xff]
        %v1445 = vld [vmem:[%s3 + $0xe88] sm:$0xff]
        %v1446 = vld [vmem:[%s3 + $0xe90] sm:$0xff]
        %v1447 = vld [vmem:[%s3 + $0xe98] sm:$0xff]
        %v1448 = vld [vmem:[%s3 + $0xea0] sm:$0xff]
        %v1449 = vld [vmem:[%s3 + $0xea8] sm:$0xff]
        %v1450 = vld [vmem:[%s3 + $0xeb0] sm:$0xff]
        %v1451 = vld [vmem:[%s3 + $0xeb8] sm:$0xff]
        %v1452 = vld [vmem:[%s3 + $0xec0] sm:$0xff]
        %v1453 = vld [vmem:[%s3 + $0xec8] sm:$0xff]
        %v1454 = vld [vmem:[%s3 + $0xed0] sm:$0xff]
        %v1455 = vld [vmem:[%s3 + $0xed8] sm:$0xff]
        %v1456 = vld [vmem:[%s3 + $0xee0] sm:$0xff]
        %v1457 = vld [vmem:[%s3 + $0xee8] sm:$0xff]
        %v1458 = vld [vmem:[%s3 + $0xef0] sm:$0xff]
        %v1459 = vld [vmem:[%s3 + $0xef8] sm:$0xff]
        %v1460 = vld [vmem:[%s3 + $0xf00] sm:$0xff]
        %v1461 = vld [vmem:[%s3 + $0xf08] sm:$0xff]
        %v1462 = vld [vmem:[%s3 + $0xf10] sm:$0xff]
        %v1463 = vld [vmem:[%s3 + $0xf18] sm:$0xff]
        %v1464 = vld [vmem:[%s3 + $0xf20] sm:$0xff]
        %v1465 = vld [vmem:[%s3 + $0xf28] sm:$0xff]
        %v1466 = vld [vmem:[%s3 + $0xf30] sm:$0xff]
        %v1467 = vld [vmem:[%s3 + $0xf38] sm:$0xff]
        %v1468 = vld [vmem:[%s3 + $0xf40] sm:$0xff]
        %v1469 = vld [vmem:[%s3 + $0xf48] sm:$0xff]
        %v1470 = vld [vmem:[%s3 + $0xf50] sm:$0xff]
        %v1471 = vld [vmem:[%s3 + $0xf58] sm:$0xff]
        %v1472 = vld [vmem:[%s3 + $0xf60] sm:$0xff]
        %v1473 = vld [vmem:[%s3 + $0xf68] sm:$0xff]
        %v1474 = vld [vmem:[%s3 + $0xf70] sm:$0xff]
        %v1475 = vld [vmem:[%s3 + $0xf78] sm:$0xff]
        %v1476 = vld [vmem:[%s3 + $0xf80] sm:$0xff]
        %v1477 = vld [vmem:[%s3 + $0xf88] sm:$0xff]
        %v1478 = vld [vmem:[%s3 + $0xf90] sm:$0xff]
        %v1479 = vld [vmem:[%s3 + $0xf98] sm:$0xff]
        %v1480 = vld [vmem:[%s3 + $0xfa0] sm:$0xff]
        %v1481 = vld [vmem:[%s3 + $0xfa8] sm:$0xff]
        %v1482 = vld [vmem:[%s3 + $0xfb0] sm:$0xff]
        %v1483 = vld [vmem:[%s3 + $0xfb8] sm:$0xff]
        %v1484 = vld [vmem:[%s3 + $0xfc0] sm:$0xff]
        %v1485 = vld [vmem:[%s3 + $0xfc8] sm:$0xff]
        %v1486 = vld [vmem:[%s3 + $0xfd0] sm:$0xff]
        %v1487 = vld [vmem:[%s3 + $0xfd8] sm:$0xff]
        %v1488 = vld [vmem:[%s3 + $0xfe0] sm:$0xff]
        %v1489 = vld [vmem:[%s3 + $0xfe8] sm:$0xff]
        %v1490 = vld [vmem:[%s3 + $0xff0] sm:$0xff]
        %v1491 = vld [vmem:[%s3 + $0xff8] sm:$0xff]
        %v1492 = vld [vmem:[%s3 + $0x1000] sm:$0xff]
        %v1493 = vld [vmem:[%s3 + $0x1008] sm:$0xff]
        %v1494 = vld [vmem:[%s3 + $0x1010] sm:$0xff]
        %v1495 = vld [vmem:[%s3 + $0x1018] sm:$0xff]
        %v1496 = vld [vmem:[%s3 + $0x1020] sm:$0xff]
        %v1497 = vld [vmem:[%s3 + $0x1028] sm:$0xff]
        %v1498 = vld [vmem:[%s3 + $0x1030] sm:$0xff]
        %v1499 = vld [vmem:[%s3 + $0x1038] sm:$0xff]
        %v1500 = vld [vmem:[%s3 + $0x1040] sm:$0xff]
        %v1501 = vld [vmem:[%s3 + $0x1048] sm:$0xff]
        %v1502 = vld [vmem:[%s3 + $0x1050] sm:$0xff]
        %v1503 = vld [vmem:[%s3 + $0x1058] sm:$0xff]
        %v1504 = vld [vmem:[%s3 + $0x1060] sm:$0xff]
        %v1505 = vld [vmem:[%s3 + $0x1068] sm:$0xff]
        %v1506 = vld [vmem:[%s3 + $0x1070] sm:$0xff]
        %v1507 = vld [vmem:[%s3 + $0x1078] sm:$0xff]
        %v1508 = vld [vmem:[%s3 + $0x1080] sm:$0xff]
        %v1509 = vld [vmem:[%s3 + $0x1088] sm:$0xff]
        %v1510 = vld [vmem:[%s3 + $0x1090] sm:$0xff]
        %v1511 = vld [vmem:[%s3 + $0x1098] sm:$0xff]
        %v1512 = vld [vmem:[%s3 + $0x10a0] sm:$0xff]
        %v1513 = vld [vmem:[%s3 + $0x10a8] sm:$0xff]
        %v1514 = vld [vmem:[%s3 + $0x10b0] sm:$0xff]
        %v1515 = vld [vmem:[%s3 + $0x10b8] sm:$0xff]
        %v1516 = vld [vmem:[%s3 + $0x10c0] sm:$0xff]
        %v1517 = vld [vmem:[%s3 + $0x10c8] sm:$0xff]
        %v1518 = vld [vmem:[%s3 + $0x10d0] sm:$0xff]
        %v1519 = vld [vmem:[%s3 + $0x10d8] sm:$0xff]
        %v1520 = vld [vmem:[%s3 + $0x10e0] sm:$0xff]
        %v1521 = vld [vmem:[%s3 + $0x10e8] sm:$0xff]
        %v1522 = vld [vmem:[%s3 + $0x10f0] sm:$0xff]
        %v1523 = vld [vmem:[%s3 + $0x10f8] sm:$0xff]
        %v1524 = vld [vmem:[%s3 + $0x1100] sm:$0xff]
        %v1525 = vld [vmem:[%s3 + $0x1108] sm:$0xff]
        %v1526 = vld [vmem:[%s3 + $0x1110] sm:$0xff]
        %v1527 = vld [vmem:[%s3 + $0x1118] sm:$0xff]
        %v1528 = vld [vmem:[%s3 + $0x1120] sm:$0xff]
        %v1529 = vld [vmem:[%s3 + $0x1128] sm:$0xff]
        %v1530 = vld [vmem:[%s3 + $0x1130] sm:$0xff]
        %v1531 = vld [vmem:[%s3 + $0x1138] sm:$0xff]
        %v1532 = vld [vmem:[%s3 + $0x1140] sm:$0xff]
        %v1533 = vld [vmem:[%s3 + $0x1148] sm:$0xff]
        %v1534 = vld [vmem:[%s3 + $0x1150] sm:$0xff]
        %v1535 = vld [vmem:[%s3 + $0x1158] sm:$0xff]
        %v1536 = vld [vmem:[%s3 + $0x1160] sm:$0xff]
        %v1537 = vld [vmem:[%s3 + $0x1168] sm:$0xff]
        %v1538 = vld [vmem:[%s3 + $0x1170] sm:$0xff]
        %v1539 = vld [vmem:[%s3 + $0x1178] sm:$0xff]
        %v1540 = vld [vmem:[%s3 + $0x1180] sm:$0xff]
        %v1541 = vld [vmem:[%s3 + $0x1188] sm:$0xff]
        %v1542 = vld [vmem:[%s3 + $0x1190] sm:$0xff]
        %v1543 = vld [vmem:[%s3 + $0x1198] sm:$0xff]
        %v1544 = vld [vmem:[%s3 + $0x11a0] sm:$0xff]
        %v1545 = vld [vmem:[%s3 + $0x11a8] sm:$0xff]
        %v1546 = vld [vmem:[%s3 + $0x11b0] sm:$0xff]
        %v1547 = vld [vmem:[%s3 + $0x11b8] sm:$0xff]
        %v1548 = vld [vmem:[%s3 + $0x11c0] sm:$0xff]
        %v1549 = vld [vmem:[%s3 + $0x11c8] sm:$0xff]
        %v1550 = vld [vmem:[%s3 + $0x11d0] sm:$0xff]
        %v1551 = vld [vmem:[%s3 + $0x11d8] sm:$0xff]
        %v1552 = vld [vmem:[%s3 + $0x11e0] sm:$0xff]
        %v1553 = vld [vmem:[%s3 + $0x11e8] sm:$0xff]
        %v1554 = vld [vmem:[%s3 + $0x11f0] sm:$0xff]
        %v1555 = vld [vmem:[%s3 + $0x11f8] sm:$0xff]
        %v1556 = vld [vmem:[%s3 + $0x1200] sm:$0xff]
        %v1557 = vld [vmem:[%s3 + $0x1208] sm:$0xff]
        %v1558 = vld [vmem:[%s3 + $0x1210] sm:$0xff]
        %v1559 = vld [vmem:[%s3 + $0x1218] sm:$0xff]
        %v1560 = vld [vmem:[%s3 + $0x1220] sm:$0xff]
        %v1561 = vld [vmem:[%s3 + $0x1228] sm:$0xff]
        %v1562 = vld [vmem:[%s3 + $0x1230] sm:$0xff]
        %v1563 = vld [vmem:[%s3 + $0x1238] sm:$0xff]
        %v1564 = vld [vmem:[%s3 + $0x1240] sm:$0xff]
        %v1565 = vld [vmem:[%s3 + $0x1248] sm:$0xff]
        %v1566 = vld [vmem:[%s3 + $0x1250] sm:$0xff]
        %v1567 = vld [vmem:[%s3 + $0x1258] sm:$0xff]
        %v1568 = vld [vmem:[%s3 + $0x1260] sm:$0xff]
        %v1569 = vld [vmem:[%s3 + $0x1268] sm:$0xff]
        %v1570 = vld [vmem:[%s3 + $0x1270] sm:$0xff]
        %v1571 = vld [vmem:[%s3 + $0x1278] sm:$0xff]
        %v1572 = vld [vmem:[%s3 + $0x1280] sm:$0xff]
        %v1573 = vld [vmem:[%s3 + $0x1288] sm:$0xff]
        %v1574 = vld [vmem:[%s3 + $0x1290] sm:$0xff]
        %v1575 = vld [vmem:[%s3 + $0x1298] sm:$0xff]
        %v1576 = vld [vmem:[%s3 + $0x12a0] sm:$0xff]
        %v1577 = vld [vmem:[%s3 + $0x12a8] sm:$0xff]
        %v1578 = vld [vmem:[%s3 + $0x12b0] sm:$0xff]
        %v1579 = vld [vmem:[%s3 + $0x12b8] sm:$0xff]
        %v1580 = vld [vmem:[%s3 + $0x12c0] sm:$0xff]
        %v1581 = vld [vmem:[%s3 + $0x12c8] sm:$0xff]
        %v1582 = vld [vmem:[%s3 + $0x12d0] sm:$0xff]
        %v1583 = vld [vmem:[%s3 + $0x12d8] sm:$0xff]
        %v1584 = vld [vmem:[%s3 + $0x12e0] sm:$0xff]
        %v1585 = vld [vmem:[%s3 + $0x12e8] sm:$0xff]
        %v1586 = vld [vmem:[%s3 + $0x12f0] sm:$0xff]
        %v1587 = vld [vmem:[%s3 + $0x12f8] sm:$0xff]
        %v1588 = vld [vmem:[%s3 + $0x1300] sm:$0xff]
        %v1589 = vld [vmem:[%s3 + $0x1308] sm:$0xff]
        %v1590 = vld [vmem:[%s3 + $0x1310] sm:$0xff]
        %v1591 = vld [vmem:[%s3 + $0x1318] sm:$0xff]
        %v1592 = vld [vmem:[%s3 + $0x1320] sm:$0xff]
        %v1593 = vld [vmem:[%s3 + $0x1328] sm:$0xff]
        %v1594 = vld [vmem:[%s3 + $0x1330] sm:$0xff]
        %v1595 = vld [vmem:[%s3 + $0x1338] sm:$0xff]
        %v1596 = vld [vmem:[%s3 + $0x1340] sm:$0xff]
        %v1597 = vld [vmem:[%s3 + $0x1348] sm:$0xff]
        %v1598 = vld [vmem:[%s3 + $0x1350] sm:$0xff]
        %v1599 = vld [vmem:[%s3 + $0x1358] sm:$0xff]
        %v1600 = vld [vmem:[%s3 + $0x1360] sm:$0xff]
        %v1601 = vld [vmem:[%s3 + $0x1368] sm:$0xff]
        %v1602 = vld [vmem:[%s3 + $0x1370] sm:$0xff]
        %v1603 = vld [vmem:[%s3 + $0x1378] sm:$0xff]
        %v1604 = vld [vmem:[%s3 + $0x1380] sm:$0xff]
        %v1605 = vld [vmem:[%s3 + $0x1388] sm:$0xff]
        %v1606 = vld [vmem:[%s3 + $0x1390] sm:$0xff]
        %v1607 = vld [vmem:[%s3 + $0x1398] sm:$0xff]
        %v1608 = vld [vmem:[%s3 + $0x13a0] sm:$0xff]
        %v1609 = vld [vmem:[%s3 + $0x13a8] sm:$0xff]
        %v1610 = vld [vmem:[%s3 + $0x13b0] sm:$0xff]
        %v1611 = vld [vmem:[%s3 + $0x13b8] sm:$0xff]
        %v1612 = vld [vmem:[%s3 + $0x13c0] sm:$0xff]
        %v1613 = vld [vmem:[%s3 + $0x13c8] sm:$0xff]
        %v1614 = vld [vmem:[%s3 + $0x13d0] sm:$0xff]
        %v1615 = vld [vmem:[%s3 + $0x13d8] sm:$0xff]
        %v1616 = vld [vmem:[%s3 + $0x13e0] sm:$0xff]
        %v1617 = vld [vmem:[%s3 + $0x13e8] sm:$0xff]
        %v1618 = vld [vmem:[%s3 + $0x13f0] sm:$0xff]
        %v1619 = vld [vmem:[%s3 + $0x13f8] sm:$0xff]
        %v1620 = vld [vmem:[%s3 + $0x1400] sm:$0xff]
        %v1621 = vld [vmem:[%s3 + $0x1408] sm:$0xff]
        %v1622 = vld [vmem:[%s3 + $0x1410] sm:$0xff]
        %v1623 = vld [vmem:[%s3 + $0x1418] sm:$0xff]
        %v1624 = vld [vmem:[%s3 + $0x1420] sm:$0xff]
        %v1625 = vld [vmem:[%s3 + $0x1428] sm:$0xff]
        %v1626 = vld [vmem:[%s3 + $0x1430] sm:$0xff]
        %v1627 = vld [vmem:[%s3 + $0x1438] sm:$0xff]
        %v1628 = vld [vmem:[%s3 + $0x1440] sm:$0xff]
        %v1629 = vld [vmem:[%s3 + $0x1448] sm:$0xff]
        %v1630 = vld [vmem:[%s3 + $0x1450] sm:$0xff]
        %v1631 = vld [vmem:[%s3 + $0x1458] sm:$0xff]
        %v1632 = vld [vmem:[%s3 + $0x1460] sm:$0xff]
        %v1633 = vld [vmem:[%s3 + $0x1468] sm:$0xff]
        %v1634 = vld [vmem:[%s3 + $0x1470] sm:$0xff]
        %v1635 = vld [vmem:[%s3 + $0x1478] sm:$0xff]
        %v1636 = vld [vmem:[%s3 + $0x1480] sm:$0xff]
        %v1637 = vld [vmem:[%s3 + $0x1488] sm:$0xff]
        %v1638 = vld [vmem:[%s3 + $0x1490] sm:$0xff]
        %v1639 = vld [vmem:[%s3 + $0x1498] sm:$0xff]
        %v1640 = vld [vmem:[%s3 + $0x14a0] sm:$0xff]
        %v1641 = vld [vmem:[%s3 + $0x14a8] sm:$0xff]
        %v1642 = vld [vmem:[%s3 + $0x14b0] sm:$0xff]
        %v1643 = vld [vmem:[%s3 + $0x14b8] sm:$0xff]
        %v1644 = vld [vmem:[%s3 + $0x14c0] sm:$0xff]
        %v1645 = vld [vmem:[%s3 + $0x14c8] sm:$0xff]
        %v1646 = vld [vmem:[%s3 + $0x14d0] sm:$0xff]
        %v1647 = vld [vmem:[%s3 + $0x14d8] sm:$0xff]
        %v1648 = vld [vmem:[%s3 + $0x14e0] sm:$0xff]
        %v1649 = vld [vmem:[%s3 + $0x14e8] sm:$0xff]
        %v1650 = vld [vmem:[%s3 + $0x14f0] sm:$0xff]
        %v1651 = vld [vmem:[%s3 + $0x14f8] sm:$0xff]
        %v1652 = vld [vmem:[%s3 + $0x1500] sm:$0xff]
        %v1653 = vld [vmem:[%s3 + $0x1508] sm:$0xff]
        %v1654 = vld [vmem:[%s3 + $0x1510] sm:$0xff]
        %v1655 = vld [vmem:[%s3 + $0x1518] sm:$0xff]
        %v1656 = vld [vmem:[%s3 + $0x1520] sm:$0xff]
        %v1657 = vld [vmem:[%s3 + $0x1528] sm:$0xff]
        %v1658 = vld [vmem:[%s3 + $0x1530] sm:$0xff]
        %v1659 = vld [vmem:[%s3 + $0x1538] sm:$0xff]
        %v1660 = vld [vmem:[%s3 + $0x1540] sm:$0xff]
        %v1661 = vld [vmem:[%s3 + $0x1548] sm:$0xff]
        %v1662 = vld [vmem:[%s3 + $0x1550] sm:$0xff]
        %v1663 = vld [vmem:[%s3 + $0x1558] sm:$0xff]
        %v1664 = vld [vmem:[%s3 + $0x1560] sm:$0xff]
        %v1665 = vld [vmem:[%s3 + $0x1568] sm:$0xff]
        %v1666 = vld [vmem:[%s3 + $0x1570] sm:$0xff]
        %v1667 = vld [vmem:[%s3 + $0x1578] sm:$0xff]
        %v1668 = vld [vmem:[%s3 + $0x1580] sm:$0xff]
        %v1669 = vld [vmem:[%s3 + $0x1588] sm:$0xff]
        %v1670 = vld [vmem:[%s3 + $0x1590] sm:$0xff]
        %v1671 = vld [vmem:[%s3 + $0x1598] sm:$0xff]
        %v1672 = vld [vmem:[%s3 + $0x15a0] sm:$0xff]
        %v1673 = vld [vmem:[%s3 + $0x15a8] sm:$0xff]
        %v1674 = vld [vmem:[%s3 + $0x15b0] sm:$0xff]
        %v1675 = vld [vmem:[%s3 + $0x15b8] sm:$0xff]
        %v1676 = vld [vmem:[%s3 + $0x15c0] sm:$0xff]
        %v1677 = vld [vmem:[%s3 + $0x15c8] sm:$0xff]
        %v1678 = vld [vmem:[%s3 + $0x15d0] sm:$0xff]
        %v1679 = vld [vmem:[%s3 + $0x15d8] sm:$0xff]
        %v1680 = vld [vmem:[%s3 + $0x15e0] sm:$0xff]
        %v1681 = vld [vmem:[%s3 + $0x15e8] sm:$0xff]
        %v1682 = vld [vmem:[%s3 + $0x15f0] sm:$0xff]
        %v1683 = vld [vmem:[%s3 + $0x15f8] sm:$0xff]
        %v1684 = vld [vmem:[%s3 + $0x1600] sm:$0xff]
        %v1685 = vld [vmem:[%s3 + $0x1608] sm:$0xff]
        %v1686 = vld [vmem:[%s3 + $0x1610] sm:$0xff]
        %v1687 = vld [vmem:[%s3 + $0x1618] sm:$0xff]
        %v1688 = vld [vmem:[%s3 + $0x1620] sm:$0xff]
        %v1689 = vld [vmem:[%s3 + $0x1628] sm:$0xff]
        %v1690 = vld [vmem:[%s3 + $0x1630] sm:$0xff]
        %v1691 = vld [vmem:[%s3 + $0x1638] sm:$0xff]
        %v1692 = vld [vmem:[%s3 + $0x1640] sm:$0xff]
        %v1693 = vld [vmem:[%s3 + $0x1648] sm:$0xff]
        %v1694 = vld [vmem:[%s3 + $0x1650] sm:$0xff]
        %v1695 = vld [vmem:[%s3 + $0x1658] sm:$0xff]
        %v1696 = vld [vmem:[%s3 + $0x1660] sm:$0xff]
        %v1697 = vld [vmem:[%s3 + $0x1668] sm:$0xff]
        %v1698 = vld [vmem:[%s3 + $0x1670] sm:$0xff]
        %v1699 = vld [vmem:[%s3 + $0x1678] sm:$0xff]
        %v1700 = vld [vmem:[%s3 + $0x1680] sm:$0xff]
        %v1701 = vld [vmem:[%s3 + $0x1688] sm:$0xff]
        %v1702 = vld [vmem:[%s3 + $0x1690] sm:$0xff]
        %v1703 = vld [vmem:[%s3 + $0x1698] sm:$0xff]
        %v1704 = vld [vmem:[%s3 + $0x16a0] sm:$0xff]
        %v1705 = vld [vmem:[%s3 + $0x16a8] sm:$0xff]
        %v1706 = vld [vmem:[%s3 + $0x16b0] sm:$0xff]
        %v1707 = vld [vmem:[%s3 + $0x16b8] sm:$0xff]
        %v1708 = vld [vmem:[%s3 + $0x16c0] sm:$0xff]
        %v1709 = vld [vmem:[%s3 + $0x16c8] sm:$0xff]
        %v1710 = vld [vmem:[%s3 + $0x16d0] sm:$0xff]
        %v1711 = vld [vmem:[%s3 + $0x16d8] sm:$0xff]
        %v1712 = vld [vmem:[%s3 + $0x16e0] sm:$0xff]
        %v1713 = vld [vmem:[%s3 + $0x16e8] sm:$0xff]
        %v1714 = vld [vmem:[%s3 + $0x16f0] sm:$0xff]
        %v1715 = vld [vmem:[%s3 + $0x16f8] sm:$0xff]
        %v1716 = vld [vmem:[%s3 + $0x1700] sm:$0xff]
        %v1717 = vld [vmem:[%s3 + $0x1708] sm:$0xff]
        %v1718 = vld [vmem:[%s3 + $0x1710] sm:$0xff]
        %v1719 = vld [vmem:[%s3 + $0x1718] sm:$0xff]
        %v1720 = vld [vmem:[%s3 + $0x1720] sm:$0xff]
        %v1721 = vld [vmem:[%s3 + $0x1728] sm:$0xff]
        %v1722 = vld [vmem:[%s3 + $0x1730] sm:$0xff]
        %v1723 = vld [vmem:[%s3 + $0x1738] sm:$0xff]
        %v1724 = vld [vmem:[%s3 + $0x1740] sm:$0xff]
        %v1725 = vld [vmem:[%s3 + $0x1748] sm:$0xff]
        %v1726 = vld [vmem:[%s3 + $0x1750] sm:$0xff]
        %v1727 = vld [vmem:[%s3 + $0x1758] sm:$0xff]
        %v1728 = vld [vmem:[%s3 + $0x1760] sm:$0xff]
        %v1729 = vld [vmem:[%s3 + $0x1768] sm:$0xff]
        %v1730 = vld [vmem:[%s3 + $0x1770] sm:$0xff]
        %v1731 = vld [vmem:[%s3 + $0x1778] sm:$0xff]
        %v1732 = vld [vmem:[%s3 + $0x1780] sm:$0xff]
        %v1733 = vld [vmem:[%s3 + $0x1788] sm:$0xff]
        %v1734 = vld [vmem:[%s3 + $0x1790] sm:$0xff]
        %v1735 = vld [vmem:[%s3 + $0x1798] sm:$0xff]
        %v1736 = vld [vmem:[%s3 + $0x17a0] sm:$0xff]
        %v1737 = vld [vmem:[%s3 + $0x17a8] sm:$0xff]
        %v1738 = vld [vmem:[%s3 + $0x17b0] sm:$0xff]
        %v1739 = vld [vmem:[%s3 + $0x17b8] sm:$0xff]
        %v1740 = vld [vmem:[%s3 + $0x17c0] sm:$0xff]
        %v1741 = vld [vmem:[%s3 + $0x17c8] sm:$0xff]
        %v1742 = vld [vmem:[%s3 + $0x17d0] sm:$0xff]
        %v1743 = vld [vmem:[%s3 + $0x17d8] sm:$0xff]
        %v1744 = vld [vmem:[%s3 + $0x17e0] sm:$0xff]
        %v1745 = vld [vmem:[%s3 + $0x17e8] sm:$0xff]
        %v1746 = vld [vmem:[%s3 + $0x17f0] sm:$0xff]
        %v1747 = vld [vmem:[%s3 + $0x17f8] sm:$0xff]
        %v1748 = vld [vmem:[%s3 + $0x1800] sm:$0xff]
        %v1749 = vld [vmem:[%s3 + $0x1808] sm:$0xff]
        %v1750 = vld [vmem:[%s3 + $0x1810] sm:$0xff]
        %v1751 = vld [vmem:[%s3 + $0x1818] sm:$0xff]
        %v1752 = vld [vmem:[%s3 + $0x1820] sm:$0xff]
        %v1753 = vld [vmem:[%s3 + $0x1828] sm:$0xff]
        %v1754 = vld [vmem:[%s3 + $0x1830] sm:$0xff]
        %v1755 = vld [vmem:[%s3 + $0x1838] sm:$0xff]
        %v1756 = vld [vmem:[%s3 + $0x1840] sm:$0xff]
        %v1757 = vld [vmem:[%s3 + $0x1848] sm:$0xff]
        %v1758 = vld [vmem:[%s3 + $0x1850] sm:$0xff]
        %v1759 = vld [vmem:[%s3 + $0x1858] sm:$0xff]
        %v1760 = vld [vmem:[%s3 + $0x1860] sm:$0xff]
        %v1761 = vld [vmem:[%s3 + $0x1868] sm:$0xff]
        %v1762 = vld [vmem:[%s3 + $0x1870] sm:$0xff]
        %v1763 = vld [vmem:[%s3 + $0x1878] sm:$0xff]
        %v1764 = vld [vmem:[%s3 + $0x1880] sm:$0xff]
        %v1765 = vld [vmem:[%s3 + $0x1888] sm:$0xff]
        %v1766 = vld [vmem:[%s3 + $0x1890] sm:$0xff]
        %v1767 = vld [vmem:[%s3 + $0x1898] sm:$0xff]
        %v1768 = vld [vmem:[%s3 + $0x18a0] sm:$0xff]
        %v1769 = vld [vmem:[%s3 + $0x18a8] sm:$0xff]
        %v1770 = vld [vmem:[%s3 + $0x18b0] sm:$0xff]
        %v1771 = vld [vmem:[%s3 + $0x18b8] sm:$0xff]
        %v1772 = vld [vmem:[%s3 + $0x18c0] sm:$0xff]
        %v1773 = vld [vmem:[%s3 + $0x18c8] sm:$0xff]
        %v1774 = vld [vmem:[%s3 + $0x18d0] sm:$0xff]
        %v1775 = vld [vmem:[%s3 + $0x18d8] sm:$0xff]
        %v1776 = vld [vmem:[%s3 + $0x18e0] sm:$0xff]
        %v1777 = vld [vmem:[%s3 + $0x18e8] sm:$0xff]
        %v1778 = vld [vmem:[%s3 + $0x18f0] sm:$0xff]
        %v1779 = vld [vmem:[%s3 + $0x18f8] sm:$0xff]
        %v2580 = vunpack.c.l.b16 %v980
        %v2581 = vunpack.c.h.b16 %v980
        %v2582 = vunpack.c.l.b16 %v981
        %v2583 = vunpack.c.h.b16 %v981
        %v2584 = vunpack.c.l.b16 %v982
        %v2585 = vunpack.c.h.b16 %v982
        %v2586 = vunpack.c.l.b16 %v983
        %v2587 = vunpack.c.h.b16 %v983
        %v2588 = vunpack.c.l.b16 %v984
        %v2589 = vunpack.c.h.b16 %v984
        %v2590 = vunpack.c.l.b16 %v985
        %v2591 = vunpack.c.h.b16 %v985
        %v2592 = vunpack.c.l.b16 %v986
        %v2593 = vunpack.c.h.b16 %v986
        %v2594 = vunpack.c.l.b16 %v987
        %v2595 = vunpack.c.h.b16 %v987
        %v2596 = vunpack.c.l.b16 %v988
        %v2597 = vunpack.c.h.b16 %v988
        %v2598 = vunpack.c.l.b16 %v989
        %v2599 = vunpack.c.h.b16 %v989
        %v2600 = vunpack.c.l.b16 %v990
        %v2601 = vunpack.c.h.b16 %v990
        %v2602 = vunpack.c.l.b16 %v991
        %v2603 = vunpack.c.h.b16 %v991
        %v2604 = vunpack.c.l.b16 %v992
        %v2605 = vunpack.c.h.b16 %v992
        %v2606 = vunpack.c.l.b16 %v993
        %v2607 = vunpack.c.h.b16 %v993
        %v2608 = vunpack.c.l.b16 %v994
        %v2609 = vunpack.c.h.b16 %v994
        %v2610 = vunpack.c.l.b16 %v995
        %v2611 = vunpack.c.h.b16 %v995
        %v2612 = vunpack.c.l.b16 %v996
        %v2613 = vunpack.c.h.b16 %v996
        %v2614 = vunpack.c.l.b16 %v997
        %v2615 = vunpack.c.h.b16 %v997
        %v2616 = vunpack.c.l.b16 %v998
        %v2617 = vunpack.c.h.b16 %v998
        %v2618 = vunpack.c.l.b16 %v999
        %v2619 = vunpack.c.h.b16 %v999
        %v2620 = vunpack.c.l.b16 %v1000
        %v2621 = vunpack.c.h.b16 %v1000
        %v2622 = vunpack.c.l.b16 %v1001
        %v2623 = vunpack.c.h.b16 %v1001
        %v2624 = vunpack.c.l.b16 %v1002
        %v2625 = vunpack.c.h.b16 %v1002
        %v2626 = vunpack.c.l.b16 %v1003
        %v2627 = vunpack.c.h.b16 %v1003
        %v2628 = vunpack.c.l.b16 %v1004
        %v2629 = vunpack.c.h.b16 %v1004
        %v2630 = vunpack.c.l.b16 %v1005
        %v2631 = vunpack.c.h.b16 %v1005
        %v2632 = vunpack.c.l.b16 %v1006
        %v2633 = vunpack.c.h.b16 %v1006
        %v2634 = vunpack.c.l.b16 %v1007
        %v2635 = vunpack.c.h.b16 %v1007
        %v2636 = vunpack.c.l.b16 %v1008
        %v2637 = vunpack.c.h.b16 %v1008
        %v2638 = vunpack.c.l.b16 %v1009
        %v2639 = vunpack.c.h.b16 %v1009
        %v2640 = vunpack.c.l.b16 %v1010
        %v2641 = vunpack.c.h.b16 %v1010
        %v2642 = vunpack.c.l.b16 %v1011
        %v2643 = vunpack.c.h.b16 %v1011
        %v2644 = vunpack.c.l.b16 %v1012
        %v2645 = vunpack.c.h.b16 %v1012
        %v2646 = vunpack.c.l.b16 %v1013
        %v2647 = vunpack.c.h.b16 %v1013
        %v2648 = vunpack.c.l.b16 %v1014
        %v2649 = vunpack.c.h.b16 %v1014
        %v2650 = vunpack.c.l.b16 %v1015
        %v2651 = vunpack.c.h.b16 %v1015
        %v2652 = vunpack.c.l.b16 %v1016
        %v2653 = vunpack.c.h.b16 %v1016
        %v2654 = vunpack.c.l.b16 %v1017
        %v2655 = vunpack.c.h.b16 %v1017
        %v2656 = vunpack.c.l.b16 %v1018
        %v2657 = vunpack.c.h.b16 %v1018
        %v2658 = vunpack.c.l.b16 %v1019
        %v2659 = vunpack.c.h.b16 %v1019
        %v2660 = vunpack.c.l.b16 %v1020
        %v2661 = vunpack.c.h.b16 %v1020
        %v2662 = vunpack.c.l.b16 %v1021
        %v2663 = vunpack.c.h.b16 %v1021
        %v2664 = vunpack.c.l.b16 %v1022
        %v2665 = vunpack.c.h.b16 %v1022
        %v2666 = vunpack.c.l.b16 %v1023
        %v2667 = vunpack.c.h.b16 %v1023
        %v2668 = vunpack.c.l.b16 %v1024
        %v2669 = vunpack.c.h.b16 %v1024
        %v2670 = vunpack.c.l.b16 %v1025
        %v2671 = vunpack.c.h.b16 %v1025
        %v2672 = vunpack.c.l.b16 %v1026
        %v2673 = vunpack.c.h.b16 %v1026
        %v2674 = vunpack.c.l.b16 %v1027
        %v2675 = vunpack.c.h.b16 %v1027
        %v2676 = vunpack.c.l.b16 %v1028
        %v2677 = vunpack.c.h.b16 %v1028
        %v2678 = vunpack.c.l.b16 %v1029
        %v2679 = vunpack.c.h.b16 %v1029
        %v2680 = vunpack.c.l.b16 %v1030
        %v2681 = vunpack.c.h.b16 %v1030
        %v2682 = vunpack.c.l.b16 %v1031
        %v2683 = vunpack.c.h.b16 %v1031
        %v2684 = vunpack.c.l.b16 %v1032
        %v2685 = vunpack.c.h.b16 %v1032
        %v2686 = vunpack.c.l.b16 %v1033
        %v2687 = vunpack.c.h.b16 %v1033
        %v2688 = vunpack.c.l.b16 %v1034
        %v2689 = vunpack.c.h.b16 %v1034
        %v2690 = vunpack.c.l.b16 %v1035
        %v2691 = vunpack.c.h.b16 %v1035
        %v2692 = vunpack.c.l.b16 %v1036
        %v2693 = vunpack.c.h.b16 %v1036
        %v2694 = vunpack.c.l.b16 %v1037
        %v2695 = vunpack.c.h.b16 %v1037
        %v2696 = vunpack.c.l.b16 %v1038
        %v2697 = vunpack.c.h.b16 %v1038
        %v2698 = vunpack.c.l.b16 %v1039
        %v2699 = vunpack.c.h.b16 %v1039
        %v2700 = vunpack.c.l.b16 %v1040
        %v2701 = vunpack.c.h.b16 %v1040
        %v2702 = vunpack.c.l.b16 %v1041
        %v2703 = vunpack.c.h.b16 %v1041
        %v2704 = vunpack.c.l.b16 %v1042
        %v2705 = vunpack.c.h.b16 %v1042
        %v2706 = vunpack.c.l.b16 %v1043
        %v2707 = vunpack.c.h.b16 %v1043
        %v2708 = vunpack.c.l.b16 %v1044
        %v2709 = vunpack.c.h.b16 %v1044
        %v2710 = vunpack.c.l.b16 %v1045
        %v2711 = vunpack.c.h.b16 %v1045
        %v2712 = vunpack.c.l.b16 %v1046
        %v2713 = vunpack.c.h.b16 %v1046
        %v2714 = vunpack.c.l.b16 %v1047
        %v2715 = vunpack.c.h.b16 %v1047
        %v2716 = vunpack.c.l.b16 %v1048
        %v2717 = vunpack.c.h.b16 %v1048
        %v2718 = vunpack.c.l.b16 %v1049
        %v2719 = vunpack.c.h.b16 %v1049
        %v2720 = vunpack.c.l.b16 %v1050
        %v2721 = vunpack.c.h.b16 %v1050
        %v2722 = vunpack.c.l.b16 %v1051
        %v2723 = vunpack.c.h.b16 %v1051
        %v2724 = vunpack.c.l.b16 %v1052
        %v2725 = vunpack.c.h.b16 %v1052
        %v2726 = vunpack.c.l.b16 %v1053
        %v2727 = vunpack.c.h.b16 %v1053
        %v2728 = vunpack.c.l.b16 %v1054
        %v2729 = vunpack.c.h.b16 %v1054
        %v2730 = vunpack.c.l.b16 %v1055
        %v2731 = vunpack.c.h.b16 %v1055
        %v2732 = vunpack.c.l.b16 %v1056
        %v2733 = vunpack.c.h.b16 %v1056
        %v2734 = vunpack.c.l.b16 %v1057
        %v2735 = vunpack.c.h.b16 %v1057
        %v2736 = vunpack.c.l.b16 %v1058
        %v2737 = vunpack.c.h.b16 %v1058
        %v2738 = vunpack.c.l.b16 %v1059
        %v2739 = vunpack.c.h.b16 %v1059
        %v2740 = vunpack.c.l.b16 %v1060
        %v2741 = vunpack.c.h.b16 %v1060
        %v2742 = vunpack.c.l.b16 %v1061
        %v2743 = vunpack.c.h.b16 %v1061
        %v2744 = vunpack.c.l.b16 %v1062
        %v2745 = vunpack.c.h.b16 %v1062
        %v2746 = vunpack.c.l.b16 %v1063
        %v2747 = vunpack.c.h.b16 %v1063
        %v2748 = vunpack.c.l.b16 %v1064
        %v2749 = vunpack.c.h.b16 %v1064
        %v2750 = vunpack.c.l.b16 %v1065
        %v2751 = vunpack.c.h.b16 %v1065
        %v2752 = vunpack.c.l.b16 %v1066
        %v2753 = vunpack.c.h.b16 %v1066
        %v2754 = vunpack.c.l.b16 %v1067
        %v2755 = vunpack.c.h.b16 %v1067
        %v2756 = vunpack.c.l.b16 %v1068
        %v2757 = vunpack.c.h.b16 %v1068
        %v2758 = vunpack.c.l.b16 %v1069
        %v2759 = vunpack.c.h.b16 %v1069
        %v2760 = vunpack.c.l.b16 %v1070
        %v2761 = vunpack.c.h.b16 %v1070
        %v2762 = vunpack.c.l.b16 %v1071
        %v2763 = vunpack.c.h.b16 %v1071
        %v2764 = vunpack.c.l.b16 %v1072
        %v2765 = vunpack.c.h.b16 %v1072
        %v2766 = vunpack.c.l.b16 %v1073
        %v2767 = vunpack.c.h.b16 %v1073
        %v2768 = vunpack.c.l.b16 %v1074
        %v2769 = vunpack.c.h.b16 %v1074
        %v2770 = vunpack.c.l.b16 %v1075
        %v2771 = vunpack.c.h.b16 %v1075
        %v2772 = vunpack.c.l.b16 %v1076
        %v2773 = vunpack.c.h.b16 %v1076
        %v2774 = vunpack.c.l.b16 %v1077
        %v2775 = vunpack.c.h.b16 %v1077
        %v2776 = vunpack.c.l.b16 %v1078
        %v2777 = vunpack.c.h.b16 %v1078
        %v2778 = vunpack.c.l.b16 %v1079
        %v2779 = vunpack.c.h.b16 %v1079
        %v2780 = vunpack.c.l.b16 %v1080
        %v2781 = vunpack.c.h.b16 %v1080
        %v2782 = vunpack.c.l.b16 %v1081
        %v2783 = vunpack.c.h.b16 %v1081
        %v2784 = vunpack.c.l.b16 %v1082
        %v2785 = vunpack.c.h.b16 %v1082
        %v2786 = vunpack.c.l.b16 %v1083
        %v2787 = vunpack.c.h.b16 %v1083
        %v2788 = vunpack.c.l.b16 %v1084
        %v2789 = vunpack.c.h.b16 %v1084
        %v2790 = vunpack.c.l.b16 %v1085
        %v2791 = vunpack.c.h.b16 %v1085
        %v2792 = vunpack.c.l.b16 %v1086
        %v2793 = vunpack.c.h.b16 %v1086
        %v2794 = vunpack.c.l.b16 %v1087
        %v2795 = vunpack.c.h.b16 %v1087
        %v2796 = vunpack.c.l.b16 %v1088
        %v2797 = vunpack.c.h.b16 %v1088
        %v2798 = vunpack.c.l.b16 %v1089
        %v2799 = vunpack.c.h.b16 %v1089
        %v2800 = vunpack.c.l.b16 %v1090
        %v2801 = vunpack.c.h.b16 %v1090
        %v2802 = vunpack.c.l.b16 %v1091
        %v2803 = vunpack.c.h.b16 %v1091
        %v2804 = vunpack.c.l.b16 %v1092
        %v2805 = vunpack.c.h.b16 %v1092
        %v2806 = vunpack.c.l.b16 %v1093
        %v2807 = vunpack.c.h.b16 %v1093
        %v2808 = vunpack.c.l.b16 %v1094
        %v2809 = vunpack.c.h.b16 %v1094
        %v2810 = vunpack.c.l.b16 %v1095
        %v2811 = vunpack.c.h.b16 %v1095
        %v2812 = vunpack.c.l.b16 %v1096
        %v2813 = vunpack.c.h.b16 %v1096
        %v2814 = vunpack.c.l.b16 %v1097
        %v2815 = vunpack.c.h.b16 %v1097
        %v2816 = vunpack.c.l.b16 %v1098
        %v2817 = vunpack.c.h.b16 %v1098
        %v2818 = vunpack.c.l.b16 %v1099
        %v2819 = vunpack.c.h.b16 %v1099
        %v2820 = vunpack.c.l.b16 %v1100
        %v2821 = vunpack.c.h.b16 %v1100
        %v2822 = vunpack.c.l.b16 %v1101
        %v2823 = vunpack.c.h.b16 %v1101
        %v2824 = vunpack.c.l.b16 %v1102
        %v2825 = vunpack.c.h.b16 %v1102
        %v2826 = vunpack.c.l.b16 %v1103
        %v2827 = vunpack.c.h.b16 %v1103
        %v2828 = vunpack.c.l.b16 %v1104
        %v2829 = vunpack.c.h.b16 %v1104
        %v2830 = vunpack.c.l.b16 %v1105
        %v2831 = vunpack.c.h.b16 %v1105
        %v2832 = vunpack.c.l.b16 %v1106
        %v2833 = vunpack.c.h.b16 %v1106
        %v2834 = vunpack.c.l.b16 %v1107
        %v2835 = vunpack.c.h.b16 %v1107
        %v2836 = vunpack.c.l.b16 %v1108
        %v2837 = vunpack.c.h.b16 %v1108
        %v2838 = vunpack.c.l.b16 %v1109
        %v2839 = vunpack.c.h.b16 %v1109
        %v2840 = vunpack.c.l.b16 %v1110
        %v2841 = vunpack.c.h.b16 %v1110
        %v2842 = vunpack.c.l.b16 %v1111
        %v2843 = vunpack.c.h.b16 %v1111
        %v2844 = vunpack.c.l.b16 %v1112
        %v2845 = vunpack.c.h.b16 %v1112
        %v2846 = vunpack.c.l.b16 %v1113
        %v2847 = vunpack.c.h.b16 %v1113
        %v2848 = vunpack.c.l.b16 %v1114
        %v2849 = vunpack.c.h.b16 %v1114
        %v2850 = vunpack.c.l.b16 %v1115
        %v2851 = vunpack.c.h.b16 %v1115
        %v2852 = vunpack.c.l.b16 %v1116
        %v2853 = vunpack.c.h.b16 %v1116
        %v2854 = vunpack.c.l.b16 %v1117
        %v2855 = vunpack.c.h.b16 %v1117
        %v2856 = vunpack.c.l.b16 %v1118
        %v2857 = vunpack.c.h.b16 %v1118
        %v2858 = vunpack.c.l.b16 %v1119
        %v2859 = vunpack.c.h.b16 %v1119
        %v2860 = vunpack.c.l.b16 %v1120
        %v2861 = vunpack.c.h.b16 %v1120
        %v2862 = vunpack.c.l.b16 %v1121
        %v2863 = vunpack.c.h.b16 %v1121
        %v2864 = vunpack.c.l.b16 %v1122
        %v2865 = vunpack.c.h.b16 %v1122
        %v2866 = vunpack.c.l.b16 %v1123
        %v2867 = vunpack.c.h.b16 %v1123
        %v2868 = vunpack.c.l.b16 %v1124
        %v2869 = vunpack.c.h.b16 %v1124
        %v2870 = vunpack.c.l.b16 %v1125
        %v2871 = vunpack.c.h.b16 %v1125
        %v2872 = vunpack.c.l.b16 %v1126
        %v2873 = vunpack.c.h.b16 %v1126
        %v2874 = vunpack.c.l.b16 %v1127
        %v2875 = vunpack.c.h.b16 %v1127
        %v2876 = vunpack.c.l.b16 %v1128
        %v2877 = vunpack.c.h.b16 %v1128
        %v2878 = vunpack.c.l.b16 %v1129
        %v2879 = vunpack.c.h.b16 %v1129
        %v2880 = vunpack.c.l.b16 %v1130
        %v2881 = vunpack.c.h.b16 %v1130
        %v2882 = vunpack.c.l.b16 %v1131
        %v2883 = vunpack.c.h.b16 %v1131
        %v2884 = vunpack.c.l.b16 %v1132
        %v2885 = vunpack.c.h.b16 %v1132
        %v2886 = vunpack.c.l.b16 %v1133
        %v2887 = vunpack.c.h.b16 %v1133
        %v2888 = vunpack.c.l.b16 %v1134
        %v2889 = vunpack.c.h.b16 %v1134
        %v2890 = vunpack.c.l.b16 %v1135
        %v2891 = vunpack.c.h.b16 %v1135
        %v2892 = vunpack.c.l.b16 %v1136
        %v2893 = vunpack.c.h.b16 %v1136
        %v2894 = vunpack.c.l.b16 %v1137
        %v2895 = vunpack.c.h.b16 %v1137
        %v2896 = vunpack.c.l.b16 %v1138
        %v2897 = vunpack.c.h.b16 %v1138
        %v2898 = vunpack.c.l.b16 %v1139
        %v2899 = vunpack.c.h.b16 %v1139
        %v2900 = vunpack.c.l.b16 %v1140
        %v2901 = vunpack.c.h.b16 %v1140
        %v2902 = vunpack.c.l.b16 %v1141
        %v2903 = vunpack.c.h.b16 %v1141
        %v2904 = vunpack.c.l.b16 %v1142
        %v2905 = vunpack.c.h.b16 %v1142
        %v2906 = vunpack.c.l.b16 %v1143
        %v2907 = vunpack.c.h.b16 %v1143
        %v2908 = vunpack.c.l.b16 %v1144
        %v2909 = vunpack.c.h.b16 %v1144
        %v2910 = vunpack.c.l.b16 %v1145
        %v2911 = vunpack.c.h.b16 %v1145
        %v2912 = vunpack.c.l.b16 %v1146
        %v2913 = vunpack.c.h.b16 %v1146
        %v2914 = vunpack.c.l.b16 %v1147
        %v2915 = vunpack.c.h.b16 %v1147
        %v2916 = vunpack.c.l.b16 %v1148
        %v2917 = vunpack.c.h.b16 %v1148
        %v2918 = vunpack.c.l.b16 %v1149
        %v2919 = vunpack.c.h.b16 %v1149
        %v2920 = vunpack.c.l.b16 %v1150
        %v2921 = vunpack.c.h.b16 %v1150
        %v2922 = vunpack.c.l.b16 %v1151
        %v2923 = vunpack.c.h.b16 %v1151
        %v2924 = vunpack.c.l.b16 %v1152
        %v2925 = vunpack.c.h.b16 %v1152
        %v2926 = vunpack.c.l.b16 %v1153
        %v2927 = vunpack.c.h.b16 %v1153
        %v2928 = vunpack.c.l.b16 %v1154
        %v2929 = vunpack.c.h.b16 %v1154
        %v2930 = vunpack.c.l.b16 %v1155
        %v2931 = vunpack.c.h.b16 %v1155
        %v2932 = vunpack.c.l.b16 %v1156
        %v2933 = vunpack.c.h.b16 %v1156
        %v2934 = vunpack.c.l.b16 %v1157
        %v2935 = vunpack.c.h.b16 %v1157
        %v2936 = vunpack.c.l.b16 %v1158
        %v2937 = vunpack.c.h.b16 %v1158
        %v2938 = vunpack.c.l.b16 %v1159
        %v2939 = vunpack.c.h.b16 %v1159
        %v2940 = vunpack.c.l.b16 %v1160
        %v2941 = vunpack.c.h.b16 %v1160
        %v2942 = vunpack.c.l.b16 %v1161
        %v2943 = vunpack.c.h.b16 %v1161
        %v2944 = vunpack.c.l.b16 %v1162
        %v2945 = vunpack.c.h.b16 %v1162
        %v2946 = vunpack.c.l.b16 %v1163
        %v2947 = vunpack.c.h.b16 %v1163
        %v2948 = vunpack.c.l.b16 %v1164
        %v2949 = vunpack.c.h.b16 %v1164
        %v2950 = vunpack.c.l.b16 %v1165
        %v2951 = vunpack.c.h.b16 %v1165
        %v2952 = vunpack.c.l.b16 %v1166
        %v2953 = vunpack.c.h.b16 %v1166
        %v2954 = vunpack.c.l.b16 %v1167
        %v2955 = vunpack.c.h.b16 %v1167
        %v2956 = vunpack.c.l.b16 %v1168
        %v2957 = vunpack.c.h.b16 %v1168
        %v2958 = vunpack.c.l.b16 %v1169
        %v2959 = vunpack.c.h.b16 %v1169
        %v2960 = vunpack.c.l.b16 %v1170
        %v2961 = vunpack.c.h.b16 %v1170
        %v2962 = vunpack.c.l.b16 %v1171
        %v2963 = vunpack.c.h.b16 %v1171
        %v2964 = vunpack.c.l.b16 %v1172
        %v2965 = vunpack.c.h.b16 %v1172
        %v2966 = vunpack.c.l.b16 %v1173
        %v2967 = vunpack.c.h.b16 %v1173
        %v2968 = vunpack.c.l.b16 %v1174
        %v2969 = vunpack.c.h.b16 %v1174
        %v2970 = vunpack.c.l.b16 %v1175
        %v2971 = vunpack.c.h.b16 %v1175
        %v2972 = vunpack.c.l.b16 %v1176
        %v2973 = vunpack.c.h.b16 %v1176
        %v2974 = vunpack.c.l.b16 %v1177
        %v2975 = vunpack.c.h.b16 %v1177
        %v2976 = vunpack.c.l.b16 %v1178
        %v2977 = vunpack.c.h.b16 %v1178
        %v2978 = vunpack.c.l.b16 %v1179
        %v2979 = vunpack.c.h.b16 %v1179
        %v2980 = vunpack.c.l.b16 %v1180
        %v2981 = vunpack.c.h.b16 %v1180
        %v2982 = vunpack.c.l.b16 %v1181
        %v2983 = vunpack.c.h.b16 %v1181
        %v2984 = vunpack.c.l.b16 %v1182
        %v2985 = vunpack.c.h.b16 %v1182
        %v2986 = vunpack.c.l.b16 %v1183
        %v2987 = vunpack.c.h.b16 %v1183
        %v2988 = vunpack.c.l.b16 %v1184
        %v2989 = vunpack.c.h.b16 %v1184
        %v2990 = vunpack.c.l.b16 %v1185
        %v2991 = vunpack.c.h.b16 %v1185
        %v2992 = vunpack.c.l.b16 %v1186
        %v2993 = vunpack.c.h.b16 %v1186
        %v2994 = vunpack.c.l.b16 %v1187
        %v2995 = vunpack.c.h.b16 %v1187
        %v2996 = vunpack.c.l.b16 %v1188
        %v2997 = vunpack.c.h.b16 %v1188
        %v2998 = vunpack.c.l.b16 %v1189
        %v2999 = vunpack.c.h.b16 %v1189
        %v3000 = vunpack.c.l.b16 %v1190
        %v3001 = vunpack.c.h.b16 %v1190
        %v3002 = vunpack.c.l.b16 %v1191
        %v3003 = vunpack.c.h.b16 %v1191
        %v3004 = vunpack.c.l.b16 %v1192
        %v3005 = vunpack.c.h.b16 %v1192
        %v3006 = vunpack.c.l.b16 %v1193
        %v3007 = vunpack.c.h.b16 %v1193
        %v3008 = vunpack.c.l.b16 %v1194
        %v3009 = vunpack.c.h.b16 %v1194
        %v3010 = vunpack.c.l.b16 %v1195
        %v3011 = vunpack.c.h.b16 %v1195
        %v3012 = vunpack.c.l.b16 %v1196
        %v3013 = vunpack.c.h.b16 %v1196
        %v3014 = vunpack.c.l.b16 %v1197
        %v3015 = vunpack.c.h.b16 %v1197
        %v3016 = vunpack.c.l.b16 %v1198
        %v3017 = vunpack.c.h.b16 %v1198
        %v3018 = vunpack.c.l.b16 %v1199
        %v3019 = vunpack.c.h.b16 %v1199
        %v3020 = vunpack.c.l.b16 %v1200
        %v3021 = vunpack.c.h.b16 %v1200
        %v3022 = vunpack.c.l.b16 %v1201
        %v3023 = vunpack.c.h.b16 %v1201
        %v3024 = vunpack.c.l.b16 %v1202
        %v3025 = vunpack.c.h.b16 %v1202
        %v3026 = vunpack.c.l.b16 %v1203
        %v3027 = vunpack.c.h.b16 %v1203
        %v3028 = vunpack.c.l.b16 %v1204
        %v3029 = vunpack.c.h.b16 %v1204
        %v3030 = vunpack.c.l.b16 %v1205
        %v3031 = vunpack.c.h.b16 %v1205
        %v3032 = vunpack.c.l.b16 %v1206
        %v3033 = vunpack.c.h.b16 %v1206
        %v3034 = vunpack.c.l.b16 %v1207
        %v3035 = vunpack.c.h.b16 %v1207
        %v3036 = vunpack.c.l.b16 %v1208
        %v3037 = vunpack.c.h.b16 %v1208
        %v3038 = vunpack.c.l.b16 %v1209
        %v3039 = vunpack.c.h.b16 %v1209
        %v3040 = vunpack.c.l.b16 %v1210
        %v3041 = vunpack.c.h.b16 %v1210
        %v3042 = vunpack.c.l.b16 %v1211
        %v3043 = vunpack.c.h.b16 %v1211
        %v3044 = vunpack.c.l.b16 %v1212
        %v3045 = vunpack.c.h.b16 %v1212
        %v3046 = vunpack.c.l.b16 %v1213
        %v3047 = vunpack.c.h.b16 %v1213
        %v3048 = vunpack.c.l.b16 %v1214
        %v3049 = vunpack.c.h.b16 %v1214
        %v3050 = vunpack.c.l.b16 %v1215
        %v3051 = vunpack.c.h.b16 %v1215
        %v3052 = vunpack.c.l.b16 %v1216
        %v3053 = vunpack.c.h.b16 %v1216
        %v3054 = vunpack.c.l.b16 %v1217
        %v3055 = vunpack.c.h.b16 %v1217
        %v3056 = vunpack.c.l.b16 %v1218
        %v3057 = vunpack.c.h.b16 %v1218
        %v3058 = vunpack.c.l.b16 %v1219
        %v3059 = vunpack.c.h.b16 %v1219
        %v3060 = vunpack.c.l.b16 %v1220
        %v3061 = vunpack.c.h.b16 %v1220
        %v3062 = vunpack.c.l.b16 %v1221
        %v3063 = vunpack.c.h.b16 %v1221
        %v3064 = vunpack.c.l.b16 %v1222
        %v3065 = vunpack.c.h.b16 %v1222
        %v3066 = vunpack.c.l.b16 %v1223
        %v3067 = vunpack.c.h.b16 %v1223
        %v3068 = vunpack.c.l.b16 %v1224
        %v3069 = vunpack.c.h.b16 %v1224
        %v3070 = vunpack.c.l.b16 %v1225
        %v3071 = vunpack.c.h.b16 %v1225
        %v3072 = vunpack.c.l.b16 %v1226
        %v3073 = vunpack.c.h.b16 %v1226
        %v3074 = vunpack.c.l.b16 %v1227
        %v3075 = vunpack.c.h.b16 %v1227
        %v3076 = vunpack.c.l.b16 %v1228
        %v3077 = vunpack.c.h.b16 %v1228
        %v3078 = vunpack.c.l.b16 %v1229
        %v3079 = vunpack.c.h.b16 %v1229
        %v3080 = vunpack.c.l.b16 %v1230
        %v3081 = vunpack.c.h.b16 %v1230
        %v3082 = vunpack.c.l.b16 %v1231
        %v3083 = vunpack.c.h.b16 %v1231
        %v3084 = vunpack.c.l.b16 %v1232
        %v3085 = vunpack.c.h.b16 %v1232
        %v3086 = vunpack.c.l.b16 %v1233
        %v3087 = vunpack.c.h.b16 %v1233
        %v3088 = vunpack.c.l.b16 %v1234
        %v3089 = vunpack.c.h.b16 %v1234
        %v3090 = vunpack.c.l.b16 %v1235
        %v3091 = vunpack.c.h.b16 %v1235
        %v3092 = vunpack.c.l.b16 %v1236
        %v3093 = vunpack.c.h.b16 %v1236
        %v3094 = vunpack.c.l.b16 %v1237
        %v3095 = vunpack.c.h.b16 %v1237
        %v3096 = vunpack.c.l.b16 %v1238
        %v3097 = vunpack.c.h.b16 %v1238
        %v3098 = vunpack.c.l.b16 %v1239
        %v3099 = vunpack.c.h.b16 %v1239
        %v3100 = vunpack.c.l.b16 %v1240
        %v3101 = vunpack.c.h.b16 %v1240
        %v3102 = vunpack.c.l.b16 %v1241
        %v3103 = vunpack.c.h.b16 %v1241
        %v3104 = vunpack.c.l.b16 %v1242
        %v3105 = vunpack.c.h.b16 %v1242
        %v3106 = vunpack.c.l.b16 %v1243
        %v3107 = vunpack.c.h.b16 %v1243
        %v3108 = vunpack.c.l.b16 %v1244
        %v3109 = vunpack.c.h.b16 %v1244
        %v3110 = vunpack.c.l.b16 %v1245
        %v3111 = vunpack.c.h.b16 %v1245
        %v3112 = vunpack.c.l.b16 %v1246
        %v3113 = vunpack.c.h.b16 %v1246
        %v3114 = vunpack.c.l.b16 %v1247
        %v3115 = vunpack.c.h.b16 %v1247
        %v3116 = vunpack.c.l.b16 %v1248
        %v3117 = vunpack.c.h.b16 %v1248
        %v3118 = vunpack.c.l.b16 %v1249
        %v3119 = vunpack.c.h.b16 %v1249
        %v3120 = vunpack.c.l.b16 %v1250
        %v3121 = vunpack.c.h.b16 %v1250
        %v3122 = vunpack.c.l.b16 %v1251
        %v3123 = vunpack.c.h.b16 %v1251
        %v3124 = vunpack.c.l.b16 %v1252
        %v3125 = vunpack.c.h.b16 %v1252
        %v3126 = vunpack.c.l.b16 %v1253
        %v3127 = vunpack.c.h.b16 %v1253
        %v3128 = vunpack.c.l.b16 %v1254
        %v3129 = vunpack.c.h.b16 %v1254
        %v3130 = vunpack.c.l.b16 %v1255
        %v3131 = vunpack.c.h.b16 %v1255
        %v3132 = vunpack.c.l.b16 %v1256
        %v3133 = vunpack.c.h.b16 %v1256
        %v3134 = vunpack.c.l.b16 %v1257
        %v3135 = vunpack.c.h.b16 %v1257
        %v3136 = vunpack.c.l.b16 %v1258
        %v3137 = vunpack.c.h.b16 %v1258
        %v3138 = vunpack.c.l.b16 %v1259
        %v3139 = vunpack.c.h.b16 %v1259
        %v3140 = vunpack.c.l.b16 %v1260
        %v3141 = vunpack.c.h.b16 %v1260
        %v3142 = vunpack.c.l.b16 %v1261
        %v3143 = vunpack.c.h.b16 %v1261
        %v3144 = vunpack.c.l.b16 %v1262
        %v3145 = vunpack.c.h.b16 %v1262
        %v3146 = vunpack.c.l.b16 %v1263
        %v3147 = vunpack.c.h.b16 %v1263
        %v3148 = vunpack.c.l.b16 %v1264
        %v3149 = vunpack.c.h.b16 %v1264
        %v3150 = vunpack.c.l.b16 %v1265
        %v3151 = vunpack.c.h.b16 %v1265
        %v3152 = vunpack.c.l.b16 %v1266
        %v3153 = vunpack.c.h.b16 %v1266
        %v3154 = vunpack.c.l.b16 %v1267
        %v3155 = vunpack.c.h.b16 %v1267
        %v3156 = vunpack.c.l.b16 %v1268
        %v3157 = vunpack.c.h.b16 %v1268
        %v3158 = vunpack.c.l.b16 %v1269
        %v3159 = vunpack.c.h.b16 %v1269
        %v3160 = vunpack.c.l.b16 %v1270
        %v3161 = vunpack.c.h.b16 %v1270
        %v3162 = vunpack.c.l.b16 %v1271
        %v3163 = vunpack.c.h.b16 %v1271
        %v3164 = vunpack.c.l.b16 %v1272
        %v3165 = vunpack.c.h.b16 %v1272
        %v3166 = vunpack.c.l.b16 %v1273
        %v3167 = vunpack.c.h.b16 %v1273
        %v3168 = vunpack.c.l.b16 %v1274
        %v3169 = vunpack.c.h.b16 %v1274
        %v3170 = vunpack.c.l.b16 %v1275
        %v3171 = vunpack.c.h.b16 %v1275
        %v3172 = vunpack.c.l.b16 %v1276
        %v3173 = vunpack.c.h.b16 %v1276
        %v3174 = vunpack.c.l.b16 %v1277
        %v3175 = vunpack.c.h.b16 %v1277
        %v3176 = vunpack.c.l.b16 %v1278
        %v3177 = vunpack.c.h.b16 %v1278
        %v3178 = vunpack.c.l.b16 %v1279
        %v3179 = vunpack.c.h.b16 %v1279
        %v3180 = vunpack.c.l.b16 %v1280
        %v3181 = vunpack.c.h.b16 %v1280
        %v3182 = vunpack.c.l.b16 %v1281
        %v3183 = vunpack.c.h.b16 %v1281
        %v3184 = vunpack.c.l.b16 %v1282
        %v3185 = vunpack.c.h.b16 %v1282
        %v3186 = vunpack.c.l.b16 %v1283
        %v3187 = vunpack.c.h.b16 %v1283
        %v3188 = vunpack.c.l.b16 %v1284
        %v3189 = vunpack.c.h.b16 %v1284
        %v3190 = vunpack.c.l.b16 %v1285
        %v3191 = vunpack.c.h.b16 %v1285
        %v3192 = vunpack.c.l.b16 %v1286
        %v3193 = vunpack.c.h.b16 %v1286
        %v3194 = vunpack.c.l.b16 %v1287
        %v3195 = vunpack.c.h.b16 %v1287
        %v3196 = vunpack.c.l.b16 %v1288
        %v3197 = vunpack.c.h.b16 %v1288
        %v3198 = vunpack.c.l.b16 %v1289
        %v3199 = vunpack.c.h.b16 %v1289
        %v3200 = vunpack.c.l.b16 %v1290
        %v3201 = vunpack.c.h.b16 %v1290
        %v3202 = vunpack.c.l.b16 %v1291
        %v3203 = vunpack.c.h.b16 %v1291
        %v3204 = vunpack.c.l.b16 %v1292
        %v3205 = vunpack.c.h.b16 %v1292
        %v3206 = vunpack.c.l.b16 %v1293
        %v3207 = vunpack.c.h.b16 %v1293
        %v3208 = vunpack.c.l.b16 %v1294
        %v3209 = vunpack.c.h.b16 %v1294
        %v3210 = vunpack.c.l.b16 %v1295
        %v3211 = vunpack.c.h.b16 %v1295
        %v3212 = vunpack.c.l.b16 %v1296
        %v3213 = vunpack.c.h.b16 %v1296
        %v3214 = vunpack.c.l.b16 %v1297
        %v3215 = vunpack.c.h.b16 %v1297
        %v3216 = vunpack.c.l.b16 %v1298
        %v3217 = vunpack.c.h.b16 %v1298
        %v3218 = vunpack.c.l.b16 %v1299
        %v3219 = vunpack.c.h.b16 %v1299
        %v3220 = vunpack.c.l.b16 %v1300
        %v3221 = vunpack.c.h.b16 %v1300
        %v3222 = vunpack.c.l.b16 %v1301
        %v3223 = vunpack.c.h.b16 %v1301
        %v3224 = vunpack.c.l.b16 %v1302
        %v3225 = vunpack.c.h.b16 %v1302
        %v3226 = vunpack.c.l.b16 %v1303
        %v3227 = vunpack.c.h.b16 %v1303
        %v3228 = vunpack.c.l.b16 %v1304
        %v3229 = vunpack.c.h.b16 %v1304
        %v3230 = vunpack.c.l.b16 %v1305
        %v3231 = vunpack.c.h.b16 %v1305
        %v3232 = vunpack.c.l.b16 %v1306
        %v3233 = vunpack.c.h.b16 %v1306
        %v3234 = vunpack.c.l.b16 %v1307
        %v3235 = vunpack.c.h.b16 %v1307
        %v3236 = vunpack.c.l.b16 %v1308
        %v3237 = vunpack.c.h.b16 %v1308
        %v3238 = vunpack.c.l.b16 %v1309
        %v3239 = vunpack.c.h.b16 %v1309
        %v3240 = vunpack.c.l.b16 %v1310
        %v3241 = vunpack.c.h.b16 %v1310
        %v3242 = vunpack.c.l.b16 %v1311
        %v3243 = vunpack.c.h.b16 %v1311
        %v3244 = vunpack.c.l.b16 %v1312
        %v3245 = vunpack.c.h.b16 %v1312
        %v3246 = vunpack.c.l.b16 %v1313
        %v3247 = vunpack.c.h.b16 %v1313
        %v3248 = vunpack.c.l.b16 %v1314
        %v3249 = vunpack.c.h.b16 %v1314
        %v3250 = vunpack.c.l.b16 %v1315
        %v3251 = vunpack.c.h.b16 %v1315
        %v3252 = vunpack.c.l.b16 %v1316
        %v3253 = vunpack.c.h.b16 %v1316
        %v3254 = vunpack.c.l.b16 %v1317
        %v3255 = vunpack.c.h.b16 %v1317
        %v3256 = vunpack.c.l.b16 %v1318
        %v3257 = vunpack.c.h.b16 %v1318
        %v3258 = vunpack.c.l.b16 %v1319
        %v3259 = vunpack.c.h.b16 %v1319
        %v3260 = vunpack.c.l.b16 %v1320
        %v3261 = vunpack.c.h.b16 %v1320
        %v3262 = vunpack.c.l.b16 %v1321
        %v3263 = vunpack.c.h.b16 %v1321
        %v3264 = vunpack.c.l.b16 %v1322
        %v3265 = vunpack.c.h.b16 %v1322
        %v3266 = vunpack.c.l.b16 %v1323
        %v3267 = vunpack.c.h.b16 %v1323
        %v3268 = vunpack.c.l.b16 %v1324
        %v3269 = vunpack.c.h.b16 %v1324
        %v3270 = vunpack.c.l.b16 %v1325
        %v3271 = vunpack.c.h.b16 %v1325
        %v3272 = vunpack.c.l.b16 %v1326
        %v3273 = vunpack.c.h.b16 %v1326
        %v3274 = vunpack.c.l.b16 %v1327
        %v3275 = vunpack.c.h.b16 %v1327
        %v3276 = vunpack.c.l.b16 %v1328
        %v3277 = vunpack.c.h.b16 %v1328
        %v3278 = vunpack.c.l.b16 %v1329
        %v3279 = vunpack.c.h.b16 %v1329
        %v3280 = vunpack.c.l.b16 %v1330
        %v3281 = vunpack.c.h.b16 %v1330
        %v3282 = vunpack.c.l.b16 %v1331
        %v3283 = vunpack.c.h.b16 %v1331
        %v3284 = vunpack.c.l.b16 %v1332
        %v3285 = vunpack.c.h.b16 %v1332
        %v3286 = vunpack.c.l.b16 %v1333
        %v3287 = vunpack.c.h.b16 %v1333
        %v3288 = vunpack.c.l.b16 %v1334
        %v3289 = vunpack.c.h.b16 %v1334
        %v3290 = vunpack.c.l.b16 %v1335
        %v3291 = vunpack.c.h.b16 %v1335
        %v3292 = vunpack.c.l.b16 %v1336
        %v3293 = vunpack.c.h.b16 %v1336
        %v3294 = vunpack.c.l.b16 %v1337
        %v3295 = vunpack.c.h.b16 %v1337
        %v3296 = vunpack.c.l.b16 %v1338
        %v3297 = vunpack.c.h.b16 %v1338
        %v3298 = vunpack.c.l.b16 %v1339
        %v3299 = vunpack.c.h.b16 %v1339
        %v3300 = vunpack.c.l.b16 %v1340
        %v3301 = vunpack.c.h.b16 %v1340
        %v3302 = vunpack.c.l.b16 %v1341
        %v3303 = vunpack.c.h.b16 %v1341
        %v3304 = vunpack.c.l.b16 %v1342
        %v3305 = vunpack.c.h.b16 %v1342
        %v3306 = vunpack.c.l.b16 %v1343
        %v3307 = vunpack.c.h.b16 %v1343
        %v3308 = vunpack.c.l.b16 %v1344
        %v3309 = vunpack.c.h.b16 %v1344
        %v3310 = vunpack.c.l.b16 %v1345
        %v3311 = vunpack.c.h.b16 %v1345
        %v3312 = vunpack.c.l.b16 %v1346
        %v3313 = vunpack.c.h.b16 %v1346
        %v3314 = vunpack.c.l.b16 %v1347
        %v3315 = vunpack.c.h.b16 %v1347
        %v3316 = vunpack.c.l.b16 %v1348
        %v3317 = vunpack.c.h.b16 %v1348
        %v3318 = vunpack.c.l.b16 %v1349
        %v3319 = vunpack.c.h.b16 %v1349
        %v3320 = vunpack.c.l.b16 %v1350
        %v3321 = vunpack.c.h.b16 %v1350
        %v3322 = vunpack.c.l.b16 %v1351
        %v3323 = vunpack.c.h.b16 %v1351
        %v3324 = vunpack.c.l.b16 %v1352
        %v3325 = vunpack.c.h.b16 %v1352
        %v3326 = vunpack.c.l.b16 %v1353
        %v3327 = vunpack.c.h.b16 %v1353
        %v3328 = vunpack.c.l.b16 %v1354
        %v3329 = vunpack.c.h.b16 %v1354
        %v3330 = vunpack.c.l.b16 %v1355
        %v3331 = vunpack.c.h.b16 %v1355
        %v3332 = vunpack.c.l.b16 %v1356
        %v3333 = vunpack.c.h.b16 %v1356
        %v3334 = vunpack.c.l.b16 %v1357
        %v3335 = vunpack.c.h.b16 %v1357
        %v3336 = vunpack.c.l.b16 %v1358
        %v3337 = vunpack.c.h.b16 %v1358
        %v3338 = vunpack.c.l.b16 %v1359
        %v3339 = vunpack.c.h.b16 %v1359
        %v3340 = vunpack.c.l.b16 %v1360
        %v3341 = vunpack.c.h.b16 %v1360
        %v3342 = vunpack.c.l.b16 %v1361
        %v3343 = vunpack.c.h.b16 %v1361
        %v3344 = vunpack.c.l.b16 %v1362
        %v3345 = vunpack.c.h.b16 %v1362
        %v3346 = vunpack.c.l.b16 %v1363
        %v3347 = vunpack.c.h.b16 %v1363
        %v3348 = vunpack.c.l.b16 %v1364
        %v3349 = vunpack.c.h.b16 %v1364
        %v3350 = vunpack.c.l.b16 %v1365
        %v3351 = vunpack.c.h.b16 %v1365
        %v3352 = vunpack.c.l.b16 %v1366
        %v3353 = vunpack.c.h.b16 %v1366
        %v3354 = vunpack.c.l.b16 %v1367
        %v3355 = vunpack.c.h.b16 %v1367
        %v3356 = vunpack.c.l.b16 %v1368
        %v3357 = vunpack.c.h.b16 %v1368
        %v3358 = vunpack.c.l.b16 %v1369
        %v3359 = vunpack.c.h.b16 %v1369
        %v3360 = vunpack.c.l.b16 %v1370
        %v3361 = vunpack.c.h.b16 %v1370
        %v3362 = vunpack.c.l.b16 %v1371
        %v3363 = vunpack.c.h.b16 %v1371
        %v3364 = vunpack.c.l.b16 %v1372
        %v3365 = vunpack.c.h.b16 %v1372
        %v3366 = vunpack.c.l.b16 %v1373
        %v3367 = vunpack.c.h.b16 %v1373
        %v3368 = vunpack.c.l.b16 %v1374
        %v3369 = vunpack.c.h.b16 %v1374
        %v3370 = vunpack.c.l.b16 %v1375
        %v3371 = vunpack.c.h.b16 %v1375
        %v3372 = vunpack.c.l.b16 %v1376
        %v3373 = vunpack.c.h.b16 %v1376
        %v3374 = vunpack.c.l.b16 %v1377
        %v3375 = vunpack.c.h.b16 %v1377
        %v3376 = vunpack.c.l.b16 %v1378
        %v3377 = vunpack.c.h.b16 %v1378
        %v3378 = vunpack.c.l.b16 %v1379
        %v3379 = vunpack.c.h.b16 %v1379
        %v3380 = vunpack.c.l.b16 %v1380
        %v3381 = vunpack.c.h.b16 %v1380
        %v3382 = vunpack.c.l.b16 %v1381
        %v3383 = vunpack.c.h.b16 %v1381
        %v3384 = vunpack.c.l.b16 %v1382
        %v3385 = vunpack.c.h.b16 %v1382
        %v3386 = vunpack.c.l.b16 %v1383
        %v3387 = vunpack.c.h.b16 %v1383
        %v3388 = vunpack.c.l.b16 %v1384
        %v3389 = vunpack.c.h.b16 %v1384
        %v3390 = vunpack.c.l.b16 %v1385
        %v3391 = vunpack.c.h.b16 %v1385
        %v3392 = vunpack.c.l.b16 %v1386
        %v3393 = vunpack.c.h.b16 %v1386
        %v3394 = vunpack.c.l.b16 %v1387
        %v3395 = vunpack.c.h.b16 %v1387
        %v3396 = vunpack.c.l.b16 %v1388
        %v3397 = vunpack.c.h.b16 %v1388
        %v3398 = vunpack.c.l.b16 %v1389
        %v3399 = vunpack.c.h.b16 %v1389
        %v3400 = vunpack.c.l.b16 %v1390
        %v3401 = vunpack.c.h.b16 %v1390
        %v3402 = vunpack.c.l.b16 %v1391
        %v3403 = vunpack.c.h.b16 %v1391
        %v3404 = vunpack.c.l.b16 %v1392
        %v3405 = vunpack.c.h.b16 %v1392
        %v3406 = vunpack.c.l.b16 %v1393
        %v3407 = vunpack.c.h.b16 %v1393
        %v3408 = vunpack.c.l.b16 %v1394
        %v3409 = vunpack.c.h.b16 %v1394
        %v3410 = vunpack.c.l.b16 %v1395
        %v3411 = vunpack.c.h.b16 %v1395
        %v3412 = vunpack.c.l.b16 %v1396
        %v3413 = vunpack.c.h.b16 %v1396
        %v3414 = vunpack.c.l.b16 %v1397
        %v3415 = vunpack.c.h.b16 %v1397
        %v3416 = vunpack.c.l.b16 %v1398
        %v3417 = vunpack.c.h.b16 %v1398
        %v3418 = vunpack.c.l.b16 %v1399
        %v3419 = vunpack.c.h.b16 %v1399
        %v3420 = vunpack.c.l.b16 %v1400
        %v3421 = vunpack.c.h.b16 %v1400
        %v3422 = vunpack.c.l.b16 %v1401
        %v3423 = vunpack.c.h.b16 %v1401
        %v3424 = vunpack.c.l.b16 %v1402
        %v3425 = vunpack.c.h.b16 %v1402
        %v3426 = vunpack.c.l.b16 %v1403
        %v3427 = vunpack.c.h.b16 %v1403
        %v3428 = vunpack.c.l.b16 %v1404
        %v3429 = vunpack.c.h.b16 %v1404
        %v3430 = vunpack.c.l.b16 %v1405
        %v3431 = vunpack.c.h.b16 %v1405
        %v3432 = vunpack.c.l.b16 %v1406
        %v3433 = vunpack.c.h.b16 %v1406
        %v3434 = vunpack.c.l.b16 %v1407
        %v3435 = vunpack.c.h.b16 %v1407
        %v3436 = vunpack.c.l.b16 %v1408
        %v3437 = vunpack.c.h.b16 %v1408
        %v3438 = vunpack.c.l.b16 %v1409
        %v3439 = vunpack.c.h.b16 %v1409
        %v3440 = vunpack.c.l.b16 %v1410
        %v3441 = vunpack.c.h.b16 %v1410
        %v3442 = vunpack.c.l.b16 %v1411
        %v3443 = vunpack.c.h.b16 %v1411
        %v3444 = vunpack.c.l.b16 %v1412
        %v3445 = vunpack.c.h.b16 %v1412
        %v3446 = vunpack.c.l.b16 %v1413
        %v3447 = vunpack.c.h.b16 %v1413
        %v3448 = vunpack.c.l.b16 %v1414
        %v3449 = vunpack.c.h.b16 %v1414
        %v3450 = vunpack.c.l.b16 %v1415
        %v3451 = vunpack.c.h.b16 %v1415
        %v3452 = vunpack.c.l.b16 %v1416
        %v3453 = vunpack.c.h.b16 %v1416
        %v3454 = vunpack.c.l.b16 %v1417
        %v3455 = vunpack.c.h.b16 %v1417
        %v3456 = vunpack.c.l.b16 %v1418
        %v3457 = vunpack.c.h.b16 %v1418
        %v3458 = vunpack.c.l.b16 %v1419
        %v3459 = vunpack.c.h.b16 %v1419
        %v3460 = vunpack.c.l.b16 %v1420
        %v3461 = vunpack.c.h.b16 %v1420
        %v3462 = vunpack.c.l.b16 %v1421
        %v3463 = vunpack.c.h.b16 %v1421
        %v3464 = vunpack.c.l.b16 %v1422
        %v3465 = vunpack.c.h.b16 %v1422
        %v3466 = vunpack.c.l.b16 %v1423
        %v3467 = vunpack.c.h.b16 %v1423
        %v3468 = vunpack.c.l.b16 %v1424
        %v3469 = vunpack.c.h.b16 %v1424
        %v3470 = vunpack.c.l.b16 %v1425
        %v3471 = vunpack.c.h.b16 %v1425
        %v3472 = vunpack.c.l.b16 %v1426
        %v3473 = vunpack.c.h.b16 %v1426
        %v3474 = vunpack.c.l.b16 %v1427
        %v3475 = vunpack.c.h.b16 %v1427
        %v3476 = vunpack.c.l.b16 %v1428
        %v3477 = vunpack.c.h.b16 %v1428
        %v3478 = vunpack.c.l.b16 %v1429
        %v3479 = vunpack.c.h.b16 %v1429
        %v3480 = vunpack.c.l.b16 %v1430
        %v3481 = vunpack.c.h.b16 %v1430
        %v3482 = vunpack.c.l.b16 %v1431
        %v3483 = vunpack.c.h.b16 %v1431
        %v3484 = vunpack.c.l.b16 %v1432
        %v3485 = vunpack.c.h.b16 %v1432
        %v3486 = vunpack.c.l.b16 %v1433
        %v3487 = vunpack.c.h.b16 %v1433
        %v3488 = vunpack.c.l.b16 %v1434
        %v3489 = vunpack.c.h.b16 %v1434
        %v3490 = vunpack.c.l.b16 %v1435
        %v3491 = vunpack.c.h.b16 %v1435
        %v3492 = vunpack.c.l.b16 %v1436
        %v3493 = vunpack.c.h.b16 %v1436
        %v3494 = vunpack.c.l.b16 %v1437
        %v3495 = vunpack.c.h.b16 %v1437
        %v3496 = vunpack.c.l.b16 %v1438
        %v3497 = vunpack.c.h.b16 %v1438
        %v3498 = vunpack.c.l.b16 %v1439
        %v3499 = vunpack.c.h.b16 %v1439
        %v3500 = vunpack.c.l.b16 %v1440
        %v3501 = vunpack.c.h.b16 %v1440
        %v3502 = vunpack.c.l.b16 %v1441
        %v3503 = vunpack.c.h.b16 %v1441
        %v3504 = vunpack.c.l.b16 %v1442
        %v3505 = vunpack.c.h.b16 %v1442
        %v3506 = vunpack.c.l.b16 %v1443
        %v3507 = vunpack.c.h.b16 %v1443
        %v3508 = vunpack.c.l.b16 %v1444
        %v3509 = vunpack.c.h.b16 %v1444
        %v3510 = vunpack.c.l.b16 %v1445
        %v3511 = vunpack.c.h.b16 %v1445
        %v3512 = vunpack.c.l.b16 %v1446
        %v3513 = vunpack.c.h.b16 %v1446
        %v3514 = vunpack.c.l.b16 %v1447
        %v3515 = vunpack.c.h.b16 %v1447
        %v3516 = vunpack.c.l.b16 %v1448
        %v3517 = vunpack.c.h.b16 %v1448
        %v3518 = vunpack.c.l.b16 %v1449
        %v3519 = vunpack.c.h.b16 %v1449
        %v3520 = vunpack.c.l.b16 %v1450
        %v3521 = vunpack.c.h.b16 %v1450
        %v3522 = vunpack.c.l.b16 %v1451
        %v3523 = vunpack.c.h.b16 %v1451
        %v3524 = vunpack.c.l.b16 %v1452
        %v3525 = vunpack.c.h.b16 %v1452
        %v3526 = vunpack.c.l.b16 %v1453
        %v3527 = vunpack.c.h.b16 %v1453
        %v3528 = vunpack.c.l.b16 %v1454
        %v3529 = vunpack.c.h.b16 %v1454
        %v3530 = vunpack.c.l.b16 %v1455
        %v3531 = vunpack.c.h.b16 %v1455
        %v3532 = vunpack.c.l.b16 %v1456
        %v3533 = vunpack.c.h.b16 %v1456
        %v3534 = vunpack.c.l.b16 %v1457
        %v3535 = vunpack.c.h.b16 %v1457
        %v3536 = vunpack.c.l.b16 %v1458
        %v3537 = vunpack.c.h.b16 %v1458
        %v3538 = vunpack.c.l.b16 %v1459
        %v3539 = vunpack.c.h.b16 %v1459
        %v3540 = vunpack.c.l.b16 %v1460
        %v3541 = vunpack.c.h.b16 %v1460
        %v3542 = vunpack.c.l.b16 %v1461
        %v3543 = vunpack.c.h.b16 %v1461
        %v3544 = vunpack.c.l.b16 %v1462
        %v3545 = vunpack.c.h.b16 %v1462
        %v3546 = vunpack.c.l.b16 %v1463
        %v3547 = vunpack.c.h.b16 %v1463
        %v3548 = vunpack.c.l.b16 %v1464
        %v3549 = vunpack.c.h.b16 %v1464
        %v3550 = vunpack.c.l.b16 %v1465
        %v3551 = vunpack.c.h.b16 %v1465
        %v3552 = vunpack.c.l.b16 %v1466
        %v3553 = vunpack.c.h.b16 %v1466
        %v3554 = vunpack.c.l.b16 %v1467
        %v3555 = vunpack.c.h.b16 %v1467
        %v3556 = vunpack.c.l.b16 %v1468
        %v3557 = vunpack.c.h.b16 %v1468
        %v3558 = vunpack.c.l.b16 %v1469
        %v3559 = vunpack.c.h.b16 %v1469
        %v3560 = vunpack.c.l.b16 %v1470
        %v3561 = vunpack.c.h.b16 %v1470
        %v3562 = vunpack.c.l.b16 %v1471
        %v3563 = vunpack.c.h.b16 %v1471
        %v3564 = vunpack.c.l.b16 %v1472
        %v3565 = vunpack.c.h.b16 %v1472
        %v3566 = vunpack.c.l.b16 %v1473
        %v3567 = vunpack.c.h.b16 %v1473
        %v3568 = vunpack.c.l.b16 %v1474
        %v3569 = vunpack.c.h.b16 %v1474
        %v3570 = vunpack.c.l.b16 %v1475
        %v3571 = vunpack.c.h.b16 %v1475
        %v3572 = vunpack.c.l.b16 %v1476
        %v3573 = vunpack.c.h.b16 %v1476
        %v3574 = vunpack.c.l.b16 %v1477
        %v3575 = vunpack.c.h.b16 %v1477
        %v3576 = vunpack.c.l.b16 %v1478
        %v3577 = vunpack.c.h.b16 %v1478
        %v3578 = vunpack.c.l.b16 %v1479
        %v3579 = vunpack.c.h.b16 %v1479
        %v3580 = vunpack.c.l.b16 %v1480
        %v3581 = vunpack.c.h.b16 %v1480
        %v3582 = vunpack.c.l.b16 %v1481
        %v3583 = vunpack.c.h.b16 %v1481
        %v3584 = vunpack.c.l.b16 %v1482
        %v3585 = vunpack.c.h.b16 %v1482
        %v3586 = vunpack.c.l.b16 %v1483
        %v3587 = vunpack.c.h.b16 %v1483
        %v3588 = vunpack.c.l.b16 %v1484
        %v3589 = vunpack.c.h.b16 %v1484
        %v3590 = vunpack.c.l.b16 %v1485
        %v3591 = vunpack.c.h.b16 %v1485
        %v3592 = vunpack.c.l.b16 %v1486
        %v3593 = vunpack.c.h.b16 %v1486
        %v3594 = vunpack.c.l.b16 %v1487
        %v3595 = vunpack.c.h.b16 %v1487
        %v3596 = vunpack.c.l.b16 %v1488
        %v3597 = vunpack.c.h.b16 %v1488
        %v3598 = vunpack.c.l.b16 %v1489
        %v3599 = vunpack.c.h.b16 %v1489
        %v3600 = vunpack.c.l.b16 %v1490
        %v3601 = vunpack.c.h.b16 %v1490
        %v3602 = vunpack.c.l.b16 %v1491
        %v3603 = vunpack.c.h.b16 %v1491
        %v3604 = vunpack.c.l.b16 %v1492
        %v3605 = vunpack.c.h.b16 %v1492
        %v3606 = vunpack.c.l.b16 %v1493
        %v3607 = vunpack.c.h.b16 %v1493
        %v3608 = vunpack.c.l.b16 %v1494
        %v3609 = vunpack.c.h.b16 %v1494
        %v3610 = vunpack.c.l.b16 %v1495
        %v3611 = vunpack.c.h.b16 %v1495
        %v3612 = vunpack.c.l.b16 %v1496
        %v3613 = vunpack.c.h.b16 %v1496
        %v3614 = vunpack.c.l.b16 %v1497
        %v3615 = vunpack.c.h.b16 %v1497
        %v3616 = vunpack.c.l.b16 %v1498
        %v3617 = vunpack.c.h.b16 %v1498
        %v3618 = vunpack.c.l.b16 %v1499
        %v3619 = vunpack.c.h.b16 %v1499
        %v3620 = vunpack.c.l.b16 %v1500
        %v3621 = vunpack.c.h.b16 %v1500
        %v3622 = vunpack.c.l.b16 %v1501
        %v3623 = vunpack.c.h.b16 %v1501
        %v3624 = vunpack.c.l.b16 %v1502
        %v3625 = vunpack.c.h.b16 %v1502
        %v3626 = vunpack.c.l.b16 %v1503
        %v3627 = vunpack.c.h.b16 %v1503
        %v3628 = vunpack.c.l.b16 %v1504
        %v3629 = vunpack.c.h.b16 %v1504
        %v3630 = vunpack.c.l.b16 %v1505
        %v3631 = vunpack.c.h.b16 %v1505
        %v3632 = vunpack.c.l.b16 %v1506
        %v3633 = vunpack.c.h.b16 %v1506
        %v3634 = vunpack.c.l.b16 %v1507
        %v3635 = vunpack.c.h.b16 %v1507
        %v3636 = vunpack.c.l.b16 %v1508
        %v3637 = vunpack.c.h.b16 %v1508
        %v3638 = vunpack.c.l.b16 %v1509
        %v3639 = vunpack.c.h.b16 %v1509
        %v3640 = vunpack.c.l.b16 %v1510
        %v3641 = vunpack.c.h.b16 %v1510
        %v3642 = vunpack.c.l.b16 %v1511
        %v3643 = vunpack.c.h.b16 %v1511
        %v3644 = vunpack.c.l.b16 %v1512
        %v3645 = vunpack.c.h.b16 %v1512
        %v3646 = vunpack.c.l.b16 %v1513
        %v3647 = vunpack.c.h.b16 %v1513
        %v3648 = vunpack.c.l.b16 %v1514
        %v3649 = vunpack.c.h.b16 %v1514
        %v3650 = vunpack.c.l.b16 %v1515
        %v3651 = vunpack.c.h.b16 %v1515
        %v3652 = vunpack.c.l.b16 %v1516
        %v3653 = vunpack.c.h.b16 %v1516
        %v3654 = vunpack.c.l.b16 %v1517
        %v3655 = vunpack.c.h.b16 %v1517
        %v3656 = vunpack.c.l.b16 %v1518
        %v3657 = vunpack.c.h.b16 %v1518
        %v3658 = vunpack.c.l.b16 %v1519
        %v3659 = vunpack.c.h.b16 %v1519
        %v3660 = vunpack.c.l.b16 %v1520
        %v3661 = vunpack.c.h.b16 %v1520
        %v3662 = vunpack.c.l.b16 %v1521
        %v3663 = vunpack.c.h.b16 %v1521
        %v3664 = vunpack.c.l.b16 %v1522
        %v3665 = vunpack.c.h.b16 %v1522
        %v3666 = vunpack.c.l.b16 %v1523
        %v3667 = vunpack.c.h.b16 %v1523
        %v3668 = vunpack.c.l.b16 %v1524
        %v3669 = vunpack.c.h.b16 %v1524
        %v3670 = vunpack.c.l.b16 %v1525
        %v3671 = vunpack.c.h.b16 %v1525
        %v3672 = vunpack.c.l.b16 %v1526
        %v3673 = vunpack.c.h.b16 %v1526
        %v3674 = vunpack.c.l.b16 %v1527
        %v3675 = vunpack.c.h.b16 %v1527
        %v3676 = vunpack.c.l.b16 %v1528
        %v3677 = vunpack.c.h.b16 %v1528
        %v3678 = vunpack.c.l.b16 %v1529
        %v3679 = vunpack.c.h.b16 %v1529
        %v3680 = vunpack.c.l.b16 %v1530
        %v3681 = vunpack.c.h.b16 %v1530
        %v3682 = vunpack.c.l.b16 %v1531
        %v3683 = vunpack.c.h.b16 %v1531
        %v3684 = vunpack.c.l.b16 %v1532
        %v3685 = vunpack.c.h.b16 %v1532
        %v3686 = vunpack.c.l.b16 %v1533
        %v3687 = vunpack.c.h.b16 %v1533
        %v3688 = vunpack.c.l.b16 %v1534
        %v3689 = vunpack.c.h.b16 %v1534
        %v3690 = vunpack.c.l.b16 %v1535
        %v3691 = vunpack.c.h.b16 %v1535
        %v3692 = vunpack.c.l.b16 %v1536
        %v3693 = vunpack.c.h.b16 %v1536
        %v3694 = vunpack.c.l.b16 %v1537
        %v3695 = vunpack.c.h.b16 %v1537
        %v3696 = vunpack.c.l.b16 %v1538
        %v3697 = vunpack.c.h.b16 %v1538
        %v3698 = vunpack.c.l.b16 %v1539
        %v3699 = vunpack.c.h.b16 %v1539
        %v3700 = vunpack.c.l.b16 %v1540
        %v3701 = vunpack.c.h.b16 %v1540
        %v3702 = vunpack.c.l.b16 %v1541
        %v3703 = vunpack.c.h.b16 %v1541
        %v3704 = vunpack.c.l.b16 %v1542
        %v3705 = vunpack.c.h.b16 %v1542
        %v3706 = vunpack.c.l.b16 %v1543
        %v3707 = vunpack.c.h.b16 %v1543
        %v3708 = vunpack.c.l.b16 %v1544
        %v3709 = vunpack.c.h.b16 %v1544
        %v3710 = vunpack.c.l.b16 %v1545
        %v3711 = vunpack.c.h.b16 %v1545
        %v3712 = vunpack.c.l.b16 %v1546
        %v3713 = vunpack.c.h.b16 %v1546
        %v3714 = vunpack.c.l.b16 %v1547
        %v3715 = vunpack.c.h.b16 %v1547
        %v3716 = vunpack.c.l.b16 %v1548
        %v3717 = vunpack.c.h.b16 %v1548
        %v3718 = vunpack.c.l.b16 %v1549
        %v3719 = vunpack.c.h.b16 %v1549
        %v3720 = vunpack.c.l.b16 %v1550
        %v3721 = vunpack.c.h.b16 %v1550
        %v3722 = vunpack.c.l.b16 %v1551
        %v3723 = vunpack.c.h.b16 %v1551
        %v3724 = vunpack.c.l.b16 %v1552
        %v3725 = vunpack.c.h.b16 %v1552
        %v3726 = vunpack.c.l.b16 %v1553
        %v3727 = vunpack.c.h.b16 %v1553
        %v3728 = vunpack.c.l.b16 %v1554
        %v3729 = vunpack.c.h.b16 %v1554
        %v3730 = vunpack.c.l.b16 %v1555
        %v3731 = vunpack.c.h.b16 %v1555
        %v3732 = vunpack.c.l.b16 %v1556
        %v3733 = vunpack.c.h.b16 %v1556
        %v3734 = vunpack.c.l.b16 %v1557
        %v3735 = vunpack.c.h.b16 %v1557
        %v3736 = vunpack.c.l.b16 %v1558
        %v3737 = vunpack.c.h.b16 %v1558
        %v3738 = vunpack.c.l.b16 %v1559
        %v3739 = vunpack.c.h.b16 %v1559
        %v3740 = vunpack.c.l.b16 %v1560
        %v3741 = vunpack.c.h.b16 %v1560
        %v3742 = vunpack.c.l.b16 %v1561
        %v3743 = vunpack.c.h.b16 %v1561
        %v3744 = vunpack.c.l.b16 %v1562
        %v3745 = vunpack.c.h.b16 %v1562
        %v3746 = vunpack.c.l.b16 %v1563
        %v3747 = vunpack.c.h.b16 %v1563
        %v3748 = vunpack.c.l.b16 %v1564
        %v3749 = vunpack.c.h.b16 %v1564
        %v3750 = vunpack.c.l.b16 %v1565
        %v3751 = vunpack.c.h.b16 %v1565
        %v3752 = vunpack.c.l.b16 %v1566
        %v3753 = vunpack.c.h.b16 %v1566
        %v3754 = vunpack.c.l.b16 %v1567
        %v3755 = vunpack.c.h.b16 %v1567
        %v3756 = vunpack.c.l.b16 %v1568
        %v3757 = vunpack.c.h.b16 %v1568
        %v3758 = vunpack.c.l.b16 %v1569
        %v3759 = vunpack.c.h.b16 %v1569
        %v3760 = vunpack.c.l.b16 %v1570
        %v3761 = vunpack.c.h.b16 %v1570
        %v3762 = vunpack.c.l.b16 %v1571
        %v3763 = vunpack.c.h.b16 %v1571
        %v3764 = vunpack.c.l.b16 %v1572
        %v3765 = vunpack.c.h.b16 %v1572
        %v3766 = vunpack.c.l.b16 %v1573
        %v3767 = vunpack.c.h.b16 %v1573
        %v3768 = vunpack.c.l.b16 %v1574
        %v3769 = vunpack.c.h.b16 %v1574
        %v3770 = vunpack.c.l.b16 %v1575
        %v3771 = vunpack.c.h.b16 %v1575
        %v3772 = vunpack.c.l.b16 %v1576
        %v3773 = vunpack.c.h.b16 %v1576
        %v3774 = vunpack.c.l.b16 %v1577
        %v3775 = vunpack.c.h.b16 %v1577
        %v3776 = vunpack.c.l.b16 %v1578
        %v3777 = vunpack.c.h.b16 %v1578
        %v3778 = vunpack.c.l.b16 %v1579
        %v3779 = vunpack.c.h.b16 %v1579
        %v3780 = vunpack.c.l.b16 %v1580
        %v3781 = vunpack.c.h.b16 %v1580
        %v3782 = vunpack.c.l.b16 %v1581
        %v3783 = vunpack.c.h.b16 %v1581
        %v3784 = vunpack.c.l.b16 %v1582
        %v3785 = vunpack.c.h.b16 %v1582
        %v3786 = vunpack.c.l.b16 %v1583
        %v3787 = vunpack.c.h.b16 %v1583
        %v3788 = vunpack.c.l.b16 %v1584
        %v3789 = vunpack.c.h.b16 %v1584
        %v3790 = vunpack.c.l.b16 %v1585
        %v3791 = vunpack.c.h.b16 %v1585
        %v3792 = vunpack.c.l.b16 %v1586
        %v3793 = vunpack.c.h.b16 %v1586
        %v3794 = vunpack.c.l.b16 %v1587
        %v3795 = vunpack.c.h.b16 %v1587
        %v3796 = vunpack.c.l.b16 %v1588
        %v3797 = vunpack.c.h.b16 %v1588
        %v3798 = vunpack.c.l.b16 %v1589
        %v3799 = vunpack.c.h.b16 %v1589
        %v3800 = vunpack.c.l.b16 %v1590
        %v3801 = vunpack.c.h.b16 %v1590
        %v3802 = vunpack.c.l.b16 %v1591
        %v3803 = vunpack.c.h.b16 %v1591
        %v3804 = vunpack.c.l.b16 %v1592
        %v3805 = vunpack.c.h.b16 %v1592
        %v3806 = vunpack.c.l.b16 %v1593
        %v3807 = vunpack.c.h.b16 %v1593
        %v3808 = vunpack.c.l.b16 %v1594
        %v3809 = vunpack.c.h.b16 %v1594
        %v3810 = vunpack.c.l.b16 %v1595
        %v3811 = vunpack.c.h.b16 %v1595
        %v3812 = vunpack.c.l.b16 %v1596
        %v3813 = vunpack.c.h.b16 %v1596
        %v3814 = vunpack.c.l.b16 %v1597
        %v3815 = vunpack.c.h.b16 %v1597
        %v3816 = vunpack.c.l.b16 %v1598
        %v3817 = vunpack.c.h.b16 %v1598
        %v3818 = vunpack.c.l.b16 %v1599
        %v3819 = vunpack.c.h.b16 %v1599
        %v3820 = vunpack.c.l.b16 %v1600
        %v3821 = vunpack.c.h.b16 %v1600
        %v3822 = vunpack.c.l.b16 %v1601
        %v3823 = vunpack.c.h.b16 %v1601
        %v3824 = vunpack.c.l.b16 %v1602
        %v3825 = vunpack.c.h.b16 %v1602
        %v3826 = vunpack.c.l.b16 %v1603
        %v3827 = vunpack.c.h.b16 %v1603
        %v3828 = vunpack.c.l.b16 %v1604
        %v3829 = vunpack.c.h.b16 %v1604
        %v3830 = vunpack.c.l.b16 %v1605
        %v3831 = vunpack.c.h.b16 %v1605
        %v3832 = vunpack.c.l.b16 %v1606
        %v3833 = vunpack.c.h.b16 %v1606
        %v3834 = vunpack.c.l.b16 %v1607
        %v3835 = vunpack.c.h.b16 %v1607
        %v3836 = vunpack.c.l.b16 %v1608
        %v3837 = vunpack.c.h.b16 %v1608
        %v3838 = vunpack.c.l.b16 %v1609
        %v3839 = vunpack.c.h.b16 %v1609
        %v3840 = vunpack.c.l.b16 %v1610
        %v3841 = vunpack.c.h.b16 %v1610
        %v3842 = vunpack.c.l.b16 %v1611
        %v3843 = vunpack.c.h.b16 %v1611
        %v3844 = vunpack.c.l.b16 %v1612
        %v3845 = vunpack.c.h.b16 %v1612
        %v3846 = vunpack.c.l.b16 %v1613
        %v3847 = vunpack.c.h.b16 %v1613
        %v3848 = vunpack.c.l.b16 %v1614
        %v3849 = vunpack.c.h.b16 %v1614
        %v3850 = vunpack.c.l.b16 %v1615
        %v3851 = vunpack.c.h.b16 %v1615
        %v3852 = vunpack.c.l.b16 %v1616
        %v3853 = vunpack.c.h.b16 %v1616
        %v3854 = vunpack.c.l.b16 %v1617
        %v3855 = vunpack.c.h.b16 %v1617
        %v3856 = vunpack.c.l.b16 %v1618
        %v3857 = vunpack.c.h.b16 %v1618
        %v3858 = vunpack.c.l.b16 %v1619
        %v3859 = vunpack.c.h.b16 %v1619
        %v3860 = vunpack.c.l.b16 %v1620
        %v3861 = vunpack.c.h.b16 %v1620
        %v3862 = vunpack.c.l.b16 %v1621
        %v3863 = vunpack.c.h.b16 %v1621
        %v3864 = vunpack.c.l.b16 %v1622
        %v3865 = vunpack.c.h.b16 %v1622
        %v3866 = vunpack.c.l.b16 %v1623
        %v3867 = vunpack.c.h.b16 %v1623
        %v3868 = vunpack.c.l.b16 %v1624
        %v3869 = vunpack.c.h.b16 %v1624
        %v3870 = vunpack.c.l.b16 %v1625
        %v3871 = vunpack.c.h.b16 %v1625
        %v3872 = vunpack.c.l.b16 %v1626
        %v3873 = vunpack.c.h.b16 %v1626
        %v3874 = vunpack.c.l.b16 %v1627
        %v3875 = vunpack.c.h.b16 %v1627
        %v3876 = vunpack.c.l.b16 %v1628
        %v3877 = vunpack.c.h.b16 %v1628
        %v3878 = vunpack.c.l.b16 %v1629
        %v3879 = vunpack.c.h.b16 %v1629
        %v3880 = vunpack.c.l.b16 %v1630
        %v3881 = vunpack.c.h.b16 %v1630
        %v3882 = vunpack.c.l.b16 %v1631
        %v3883 = vunpack.c.h.b16 %v1631
        %v3884 = vunpack.c.l.b16 %v1632
        %v3885 = vunpack.c.h.b16 %v1632
        %v3886 = vunpack.c.l.b16 %v1633
        %v3887 = vunpack.c.h.b16 %v1633
        %v3888 = vunpack.c.l.b16 %v1634
        %v3889 = vunpack.c.h.b16 %v1634
        %v3890 = vunpack.c.l.b16 %v1635
        %v3891 = vunpack.c.h.b16 %v1635
        %v3892 = vunpack.c.l.b16 %v1636
        %v3893 = vunpack.c.h.b16 %v1636
        %v3894 = vunpack.c.l.b16 %v1637
        %v3895 = vunpack.c.h.b16 %v1637
        %v3896 = vunpack.c.l.b16 %v1638
        %v3897 = vunpack.c.h.b16 %v1638
        %v3898 = vunpack.c.l.b16 %v1639
        %v3899 = vunpack.c.h.b16 %v1639
        %v3900 = vunpack.c.l.b16 %v1640
        %v3901 = vunpack.c.h.b16 %v1640
        %v3902 = vunpack.c.l.b16 %v1641
        %v3903 = vunpack.c.h.b16 %v1641
        %v3904 = vunpack.c.l.b16 %v1642
        %v3905 = vunpack.c.h.b16 %v1642
        %v3906 = vunpack.c.l.b16 %v1643
        %v3907 = vunpack.c.h.b16 %v1643
        %v3908 = vunpack.c.l.b16 %v1644
        %v3909 = vunpack.c.h.b16 %v1644
        %v3910 = vunpack.c.l.b16 %v1645
        %v3911 = vunpack.c.h.b16 %v1645
        %v3912 = vunpack.c.l.b16 %v1646
        %v3913 = vunpack.c.h.b16 %v1646
        %v3914 = vunpack.c.l.b16 %v1647
        %v3915 = vunpack.c.h.b16 %v1647
        %v3916 = vunpack.c.l.b16 %v1648
        %v3917 = vunpack.c.h.b16 %v1648
        %v3918 = vunpack.c.l.b16 %v1649
        %v3919 = vunpack.c.h.b16 %v1649
        %v3920 = vunpack.c.l.b16 %v1650
        %v3921 = vunpack.c.h.b16 %v1650
        %v3922 = vunpack.c.l.b16 %v1651
        %v3923 = vunpack.c.h.b16 %v1651
        %v3924 = vunpack.c.l.b16 %v1652
        %v3925 = vunpack.c.h.b16 %v1652
        %v3926 = vunpack.c.l.b16 %v1653
        %v3927 = vunpack.c.h.b16 %v1653
        %v3928 = vunpack.c.l.b16 %v1654
        %v3929 = vunpack.c.h.b16 %v1654
        %v3930 = vunpack.c.l.b16 %v1655
        %v3931 = vunpack.c.h.b16 %v1655
        %v3932 = vunpack.c.l.b16 %v1656
        %v3933 = vunpack.c.h.b16 %v1656
        %v3934 = vunpack.c.l.b16 %v1657
        %v3935 = vunpack.c.h.b16 %v1657
        %v3936 = vunpack.c.l.b16 %v1658
        %v3937 = vunpack.c.h.b16 %v1658
        %v3938 = vunpack.c.l.b16 %v1659
        %v3939 = vunpack.c.h.b16 %v1659
        %v3940 = vunpack.c.l.b16 %v1660
        %v3941 = vunpack.c.h.b16 %v1660
        %v3942 = vunpack.c.l.b16 %v1661
        %v3943 = vunpack.c.h.b16 %v1661
        %v3944 = vunpack.c.l.b16 %v1662
        %v3945 = vunpack.c.h.b16 %v1662
        %v3946 = vunpack.c.l.b16 %v1663
        %v3947 = vunpack.c.h.b16 %v1663
        %v3948 = vunpack.c.l.b16 %v1664
        %v3949 = vunpack.c.h.b16 %v1664
        %v3950 = vunpack.c.l.b16 %v1665
        %v3951 = vunpack.c.h.b16 %v1665
        %v3952 = vunpack.c.l.b16 %v1666
        %v3953 = vunpack.c.h.b16 %v1666
        %v3954 = vunpack.c.l.b16 %v1667
        %v3955 = vunpack.c.h.b16 %v1667
        %v3956 = vunpack.c.l.b16 %v1668
        %v3957 = vunpack.c.h.b16 %v1668
        %v3958 = vunpack.c.l.b16 %v1669
        %v3959 = vunpack.c.h.b16 %v1669
        %v3960 = vunpack.c.l.b16 %v1670
        %v3961 = vunpack.c.h.b16 %v1670
        %v3962 = vunpack.c.l.b16 %v1671
        %v3963 = vunpack.c.h.b16 %v1671
        %v3964 = vunpack.c.l.b16 %v1672
        %v3965 = vunpack.c.h.b16 %v1672
        %v3966 = vunpack.c.l.b16 %v1673
        %v3967 = vunpack.c.h.b16 %v1673
        %v3968 = vunpack.c.l.b16 %v1674
        %v3969 = vunpack.c.h.b16 %v1674
        %v3970 = vunpack.c.l.b16 %v1675
        %v3971 = vunpack.c.h.b16 %v1675
        %v3972 = vunpack.c.l.b16 %v1676
        %v3973 = vunpack.c.h.b16 %v1676
        %v3974 = vunpack.c.l.b16 %v1677
        %v3975 = vunpack.c.h.b16 %v1677
        %v3976 = vunpack.c.l.b16 %v1678
        %v3977 = vunpack.c.h.b16 %v1678
        %v3978 = vunpack.c.l.b16 %v1679
        %v3979 = vunpack.c.h.b16 %v1679
        %v3980 = vunpack.c.l.b16 %v1680
        %v3981 = vunpack.c.h.b16 %v1680
        %v3982 = vunpack.c.l.b16 %v1681
        %v3983 = vunpack.c.h.b16 %v1681
        %v3984 = vunpack.c.l.b16 %v1682
        %v3985 = vunpack.c.h.b16 %v1682
        %v3986 = vunpack.c.l.b16 %v1683
        %v3987 = vunpack.c.h.b16 %v1683
        %v3988 = vunpack.c.l.b16 %v1684
        %v3989 = vunpack.c.h.b16 %v1684
        %v3990 = vunpack.c.l.b16 %v1685
        %v3991 = vunpack.c.h.b16 %v1685
        %v3992 = vunpack.c.l.b16 %v1686
        %v3993 = vunpack.c.h.b16 %v1686
        %v3994 = vunpack.c.l.b16 %v1687
        %v3995 = vunpack.c.h.b16 %v1687
        %v3996 = vunpack.c.l.b16 %v1688
        %v3997 = vunpack.c.h.b16 %v1688
        %v3998 = vunpack.c.l.b16 %v1689
        %v3999 = vunpack.c.h.b16 %v1689
        %v4000 = vunpack.c.l.b16 %v1690
        %v4001 = vunpack.c.h.b16 %v1690
        %v4002 = vunpack.c.l.b16 %v1691
        %v4003 = vunpack.c.h.b16 %v1691
        %v4004 = vunpack.c.l.b16 %v1692
        %v4005 = vunpack.c.h.b16 %v1692
        %v4006 = vunpack.c.l.b16 %v1693
        %v4007 = vunpack.c.h.b16 %v1693
        %v4008 = vunpack.c.l.b16 %v1694
        %v4009 = vunpack.c.h.b16 %v1694
        %v4010 = vunpack.c.l.b16 %v1695
        %v4011 = vunpack.c.h.b16 %v1695
        %v4012 = vunpack.c.l.b16 %v1696
        %v4013 = vunpack.c.h.b16 %v1696
        %v4014 = vunpack.c.l.b16 %v1697
        %v4015 = vunpack.c.h.b16 %v1697
        %v4016 = vunpack.c.l.b16 %v1698
        %v4017 = vunpack.c.h.b16 %v1698
        %v4018 = vunpack.c.l.b16 %v1699
        %v4019 = vunpack.c.h.b16 %v1699
        %v4020 = vunpack.c.l.b16 %v1700
        %v4021 = vunpack.c.h.b16 %v1700
        %v4022 = vunpack.c.l.b16 %v1701
        %v4023 = vunpack.c.h.b16 %v1701
        %v4024 = vunpack.c.l.b16 %v1702
        %v4025 = vunpack.c.h.b16 %v1702
        %v4026 = vunpack.c.l.b16 %v1703
        %v4027 = vunpack.c.h.b16 %v1703
        %v4028 = vunpack.c.l.b16 %v1704
        %v4029 = vunpack.c.h.b16 %v1704
        %v4030 = vunpack.c.l.b16 %v1705
        %v4031 = vunpack.c.h.b16 %v1705
        %v4032 = vunpack.c.l.b16 %v1706
        %v4033 = vunpack.c.h.b16 %v1706
        %v4034 = vunpack.c.l.b16 %v1707
        %v4035 = vunpack.c.h.b16 %v1707
        %v4036 = vunpack.c.l.b16 %v1708
        %v4037 = vunpack.c.h.b16 %v1708
        %v4038 = vunpack.c.l.b16 %v1709
        %v4039 = vunpack.c.h.b16 %v1709
        %v4040 = vunpack.c.l.b16 %v1710
        %v4041 = vunpack.c.h.b16 %v1710
        %v4042 = vunpack.c.l.b16 %v1711
        %v4043 = vunpack.c.h.b16 %v1711
        %v4044 = vunpack.c.l.b16 %v1712
        %v4045 = vunpack.c.h.b16 %v1712
        %v4046 = vunpack.c.l.b16 %v1713
        %v4047 = vunpack.c.h.b16 %v1713
        %v4048 = vunpack.c.l.b16 %v1714
        %v4049 = vunpack.c.h.b16 %v1714
        %v4050 = vunpack.c.l.b16 %v1715
        %v4051 = vunpack.c.h.b16 %v1715
        %v4052 = vunpack.c.l.b16 %v1716
        %v4053 = vunpack.c.h.b16 %v1716
        %v4054 = vunpack.c.l.b16 %v1717
        %v4055 = vunpack.c.h.b16 %v1717
        %v4056 = vunpack.c.l.b16 %v1718
        %v4057 = vunpack.c.h.b16 %v1718
        %v4058 = vunpack.c.l.b16 %v1719
        %v4059 = vunpack.c.h.b16 %v1719
        %v4060 = vunpack.c.l.b16 %v1720
        %v4061 = vunpack.c.h.b16 %v1720
        %v4062 = vunpack.c.l.b16 %v1721
        %v4063 = vunpack.c.h.b16 %v1721
        %v4064 = vunpack.c.l.b16 %v1722
        %v4065 = vunpack.c.h.b16 %v1722
        %v4066 = vunpack.c.l.b16 %v1723
        %v4067 = vunpack.c.h.b16 %v1723
        %v4068 = vunpack.c.l.b16 %v1724
        %v4069 = vunpack.c.h.b16 %v1724
        %v4070 = vunpack.c.l.b16 %v1725
        %v4071 = vunpack.c.h.b16 %v1725
        %v4072 = vunpack.c.l.b16 %v1726
        %v4073 = vunpack.c.h.b16 %v1726
        %v4074 = vunpack.c.l.b16 %v1727
        %v4075 = vunpack.c.h.b16 %v1727
        %v4076 = vunpack.c.l.b16 %v1728
        %v4077 = vunpack.c.h.b16 %v1728
        %v4078 = vunpack.c.l.b16 %v1729
        %v4079 = vunpack.c.h.b16 %v1729
        %v4080 = vunpack.c.l.b16 %v1730
        %v4081 = vunpack.c.h.b16 %v1730
        %v4082 = vunpack.c.l.b16 %v1731
        %v4083 = vunpack.c.h.b16 %v1731
        %v4084 = vunpack.c.l.b16 %v1732
        %v4085 = vunpack.c.h.b16 %v1732
        %v4086 = vunpack.c.l.b16 %v1733
        %v4087 = vunpack.c.h.b16 %v1733
        %v4088 = vunpack.c.l.b16 %v1734
        %v4089 = vunpack.c.h.b16 %v1734
        %v4090 = vunpack.c.l.b16 %v1735
        %v4091 = vunpack.c.h.b16 %v1735
        %v4092 = vunpack.c.l.b16 %v1736
        %v4093 = vunpack.c.h.b16 %v1736
        %v4094 = vunpack.c.l.b16 %v1737
        %v4095 = vunpack.c.h.b16 %v1737
        %v4096 = vunpack.c.l.b16 %v1738
        %v4097 = vunpack.c.h.b16 %v1738
        %v4098 = vunpack.c.l.b16 %v1739
        %v4099 = vunpack.c.h.b16 %v1739
        %v4100 = vunpack.c.l.b16 %v1740
        %v4101 = vunpack.c.h.b16 %v1740
        %v4102 = vunpack.c.l.b16 %v1741
        %v4103 = vunpack.c.h.b16 %v1741
        %v4104 = vunpack.c.l.b16 %v1742
        %v4105 = vunpack.c.h.b16 %v1742
        %v4106 = vunpack.c.l.b16 %v1743
        %v4107 = vunpack.c.h.b16 %v1743
        %v4108 = vunpack.c.l.b16 %v1744
        %v4109 = vunpack.c.h.b16 %v1744
        %v4110 = vunpack.c.l.b16 %v1745
        %v4111 = vunpack.c.h.b16 %v1745
        %v4112 = vunpack.c.l.b16 %v1746
        %v4113 = vunpack.c.h.b16 %v1746
        %v4114 = vunpack.c.l.b16 %v1747
        %v4115 = vunpack.c.h.b16 %v1747
        %v4116 = vunpack.c.l.b16 %v1748
        %v4117 = vunpack.c.h.b16 %v1748
        %v4118 = vunpack.c.l.b16 %v1749
        %v4119 = vunpack.c.h.b16 %v1749
        %v4120 = vunpack.c.l.b16 %v1750
        %v4121 = vunpack.c.h.b16 %v1750
        %v4122 = vunpack.c.l.b16 %v1751
        %v4123 = vunpack.c.h.b16 %v1751
        %v4124 = vunpack.c.l.b16 %v1752
        %v4125 = vunpack.c.h.b16 %v1752
        %v4126 = vunpack.c.l.b16 %v1753
        %v4127 = vunpack.c.h.b16 %v1753
        %v4128 = vunpack.c.l.b16 %v1754
        %v4129 = vunpack.c.h.b16 %v1754
        %v4130 = vunpack.c.l.b16 %v1755
        %v4131 = vunpack.c.h.b16 %v1755
        %v4132 = vunpack.c.l.b16 %v1756
        %v4133 = vunpack.c.h.b16 %v1756
        %v4134 = vunpack.c.l.b16 %v1757
        %v4135 = vunpack.c.h.b16 %v1757
        %v4136 = vunpack.c.l.b16 %v1758
        %v4137 = vunpack.c.h.b16 %v1758
        %v4138 = vunpack.c.l.b16 %v1759
        %v4139 = vunpack.c.h.b16 %v1759
        %v4140 = vunpack.c.l.b16 %v1760
        %v4141 = vunpack.c.h.b16 %v1760
        %v4142 = vunpack.c.l.b16 %v1761
        %v4143 = vunpack.c.h.b16 %v1761
        %v4144 = vunpack.c.l.b16 %v1762
        %v4145 = vunpack.c.h.b16 %v1762
        %v4146 = vunpack.c.l.b16 %v1763
        %v4147 = vunpack.c.h.b16 %v1763
        %v4148 = vunpack.c.l.b16 %v1764
        %v4149 = vunpack.c.h.b16 %v1764
        %v4150 = vunpack.c.l.b16 %v1765
        %v4151 = vunpack.c.h.b16 %v1765
        %v4152 = vunpack.c.l.b16 %v1766
        %v4153 = vunpack.c.h.b16 %v1766
        %v4154 = vunpack.c.l.b16 %v1767
        %v4155 = vunpack.c.h.b16 %v1767
        %v4156 = vunpack.c.l.b16 %v1768
        %v4157 = vunpack.c.h.b16 %v1768
        %v4158 = vunpack.c.l.b16 %v1769
        %v4159 = vunpack.c.h.b16 %v1769
        %v4160 = vunpack.c.l.b16 %v1770
        %v4161 = vunpack.c.h.b16 %v1770
        %v4162 = vunpack.c.l.b16 %v1771
        %v4163 = vunpack.c.h.b16 %v1771
        %v4164 = vunpack.c.l.b16 %v1772
        %v4165 = vunpack.c.h.b16 %v1772
        %v4166 = vunpack.c.l.b16 %v1773
        %v4167 = vunpack.c.h.b16 %v1773
        %v4168 = vunpack.c.l.b16 %v1774
        %v4169 = vunpack.c.h.b16 %v1774
        %v4170 = vunpack.c.l.b16 %v1775
        %v4171 = vunpack.c.h.b16 %v1775
        %v4172 = vunpack.c.l.b16 %v1776
        %v4173 = vunpack.c.h.b16 %v1776
        %v4174 = vunpack.c.l.b16 %v1777
        %v4175 = vunpack.c.h.b16 %v1777
        %v4176 = vunpack.c.l.b16 %v1778
        %v4177 = vunpack.c.h.b16 %v1778
        %v4178 = vunpack.c.l.b16 %v1779
        %v4179 = vunpack.c.h.b16 %v1779
        %v4180 = vpack.c.b16 %v2584, %v2580
        %v4181 = vpack.c.b16 %v2585, %v2581
        %v4182 = vpack.c.b16 %v2586, %v2582
        %v4183 = vpack.c.b16 %v2587, %v2583
        %v4184 = vpack.c.b16 %v2592, %v2588
        %v4185 = vpack.c.b16 %v2593, %v2589
        %v4186 = vpack.c.b16 %v2594, %v2590
        %v4187 = vpack.c.b16 %v2595, %v2591
        %v4188 = vpack.c.b16 %v2600, %v2596
        %v4189 = vpack.c.b16 %v2601, %v2597
        %v4190 = vpack.c.b16 %v2602, %v2598
        %v4191 = vpack.c.b16 %v2603, %v2599
        %v4192 = vpack.c.b16 %v2608, %v2604
        %v4193 = vpack.c.b16 %v2609, %v2605
        %v4194 = vpack.c.b16 %v2610, %v2606
        %v4195 = vpack.c.b16 %v2611, %v2607
        %v4196 = vpack.c.b16 %v2616, %v2612
        %v4197 = vpack.c.b16 %v2617, %v2613
        %v4198 = vpack.c.b16 %v2618, %v2614
        %v4199 = vpack.c.b16 %v2619, %v2615
        %v4200 = vpack.c.b16 %v2624, %v2620
        %v4201 = vpack.c.b16 %v2625, %v2621
        %v4202 = vpack.c.b16 %v2626, %v2622
        %v4203 = vpack.c.b16 %v2627, %v2623
        %v4204 = vpack.c.b16 %v2632, %v2628
        %v4205 = vpack.c.b16 %v2633, %v2629
        %v4206 = vpack.c.b16 %v2634, %v2630
        %v4207 = vpack.c.b16 %v2635, %v2631
        %v4208 = vpack.c.b16 %v2640, %v2636
        %v4209 = vpack.c.b16 %v2641, %v2637
        %v4210 = vpack.c.b16 %v2642, %v2638
        %v4211 = vpack.c.b16 %v2643, %v2639
        %v4212 = vpack.c.b16 %v2648, %v2644
        %v4213 = vpack.c.b16 %v2649, %v2645
        %v4214 = vpack.c.b16 %v2650, %v2646
        %v4215 = vpack.c.b16 %v2651, %v2647
        %v4216 = vpack.c.b16 %v2656, %v2652
        %v4217 = vpack.c.b16 %v2657, %v2653
        %v4218 = vpack.c.b16 %v2658, %v2654
        %v4219 = vpack.c.b16 %v2659, %v2655
        %v4220 = vpack.c.b16 %v2664, %v2660
        %v4221 = vpack.c.b16 %v2665, %v2661
        %v4222 = vpack.c.b16 %v2666, %v2662
        %v4223 = vpack.c.b16 %v2667, %v2663
        %v4224 = vpack.c.b16 %v2672, %v2668
        %v4225 = vpack.c.b16 %v2673, %v2669
        %v4226 = vpack.c.b16 %v2674, %v2670
        %v4227 = vpack.c.b16 %v2675, %v2671
        %v4228 = vpack.c.b16 %v2680, %v2676
        %v4229 = vpack.c.b16 %v2681, %v2677
        %v4230 = vpack.c.b16 %v2682, %v2678
        %v4231 = vpack.c.b16 %v2683, %v2679
        %v4232 = vpack.c.b16 %v2688, %v2684
        %v4233 = vpack.c.b16 %v2689, %v2685
        %v4234 = vpack.c.b16 %v2690, %v2686
        %v4235 = vpack.c.b16 %v2691, %v2687
        %v4236 = vpack.c.b16 %v2696, %v2692
        %v4237 = vpack.c.b16 %v2697, %v2693
        %v4238 = vpack.c.b16 %v2698, %v2694
        %v4239 = vpack.c.b16 %v2699, %v2695
        %v4240 = vpack.c.b16 %v2704, %v2700
        %v4241 = vpack.c.b16 %v2705, %v2701
        %v4242 = vpack.c.b16 %v2706, %v2702
        %v4243 = vpack.c.b16 %v2707, %v2703
        %v4244 = vpack.c.b16 %v2712, %v2708
        %v4245 = vpack.c.b16 %v2713, %v2709
        %v4246 = vpack.c.b16 %v2714, %v2710
        %v4247 = vpack.c.b16 %v2715, %v2711
        %v4248 = vpack.c.b16 %v2720, %v2716
        %v4249 = vpack.c.b16 %v2721, %v2717
        %v4250 = vpack.c.b16 %v2722, %v2718
        %v4251 = vpack.c.b16 %v2723, %v2719
        %v4252 = vpack.c.b16 %v2728, %v2724
        %v4253 = vpack.c.b16 %v2729, %v2725
        %v4254 = vpack.c.b16 %v2730, %v2726
        %v4255 = vpack.c.b16 %v2731, %v2727
        %v4256 = vpack.c.b16 %v2736, %v2732
        %v4257 = vpack.c.b16 %v2737, %v2733
        %v4258 = vpack.c.b16 %v2738, %v2734
        %v4259 = vpack.c.b16 %v2739, %v2735
        %v4260 = vpack.c.b16 %v2744, %v2740
        %v4261 = vpack.c.b16 %v2745, %v2741
        %v4262 = vpack.c.b16 %v2746, %v2742
        %v4263 = vpack.c.b16 %v2747, %v2743
        %v4264 = vpack.c.b16 %v2752, %v2748
        %v4265 = vpack.c.b16 %v2753, %v2749
        %v4266 = vpack.c.b16 %v2754, %v2750
        %v4267 = vpack.c.b16 %v2755, %v2751
        %v4268 = vpack.c.b16 %v2760, %v2756
        %v4269 = vpack.c.b16 %v2761, %v2757
        %v4270 = vpack.c.b16 %v2762, %v2758
        %v4271 = vpack.c.b16 %v2763, %v2759
        %v4272 = vpack.c.b16 %v2768, %v2764
        %v4273 = vpack.c.b16 %v2769, %v2765
        %v4274 = vpack.c.b16 %v2770, %v2766
        %v4275 = vpack.c.b16 %v2771, %v2767
        %v4276 = vpack.c.b16 %v2776, %v2772
        %v4277 = vpack.c.b16 %v2777, %v2773
        %v4278 = vpack.c.b16 %v2778, %v2774
        %v4279 = vpack.c.b16 %v2779, %v2775
        %v4280 = vpack.c.b16 %v2784, %v2780
        %v4281 = vpack.c.b16 %v2785, %v2781
        %v4282 = vpack.c.b16 %v2786, %v2782
        %v4283 = vpack.c.b16 %v2787, %v2783
        %v4284 = vpack.c.b16 %v2792, %v2788
        %v4285 = vpack.c.b16 %v2793, %v2789
        %v4286 = vpack.c.b16 %v2794, %v2790
        %v4287 = vpack.c.b16 %v2795, %v2791
        %v4288 = vpack.c.b16 %v2800, %v2796
        %v4289 = vpack.c.b16 %v2801, %v2797
        %v4290 = vpack.c.b16 %v2802, %v2798
        %v4291 = vpack.c.b16 %v2803, %v2799
        %v4292 = vpack.c.b16 %v2808, %v2804
        %v4293 = vpack.c.b16 %v2809, %v2805
        %v4294 = vpack.c.b16 %v2810, %v2806
        %v4295 = vpack.c.b16 %v2811, %v2807
        %v4296 = vpack.c.b16 %v2816, %v2812
        %v4297 = vpack.c.b16 %v2817, %v2813
        %v4298 = vpack.c.b16 %v2818, %v2814
        %v4299 = vpack.c.b16 %v2819, %v2815
        %v4300 = vpack.c.b16 %v2824, %v2820
        %v4301 = vpack.c.b16 %v2825, %v2821
        %v4302 = vpack.c.b16 %v2826, %v2822
        %v4303 = vpack.c.b16 %v2827, %v2823
        %v4304 = vpack.c.b16 %v2832, %v2828
        %v4305 = vpack.c.b16 %v2833, %v2829
        %v4306 = vpack.c.b16 %v2834, %v2830
        %v4307 = vpack.c.b16 %v2835, %v2831
        %v4308 = vpack.c.b16 %v2840, %v2836
        %v4309 = vpack.c.b16 %v2841, %v2837
        %v4310 = vpack.c.b16 %v2842, %v2838
        %v4311 = vpack.c.b16 %v2843, %v2839
        %v4312 = vpack.c.b16 %v2848, %v2844
        %v4313 = vpack.c.b16 %v2849, %v2845
        %v4314 = vpack.c.b16 %v2850, %v2846
        %v4315 = vpack.c.b16 %v2851, %v2847
        %v4316 = vpack.c.b16 %v2856, %v2852
        %v4317 = vpack.c.b16 %v2857, %v2853
        %v4318 = vpack.c.b16 %v2858, %v2854
        %v4319 = vpack.c.b16 %v2859, %v2855
        %v4320 = vpack.c.b16 %v2864, %v2860
        %v4321 = vpack.c.b16 %v2865, %v2861
        %v4322 = vpack.c.b16 %v2866, %v2862
        %v4323 = vpack.c.b16 %v2867, %v2863
        %v4324 = vpack.c.b16 %v2872, %v2868
        %v4325 = vpack.c.b16 %v2873, %v2869
        %v4326 = vpack.c.b16 %v2874, %v2870
        %v4327 = vpack.c.b16 %v2875, %v2871
        %v4328 = vpack.c.b16 %v2880, %v2876
        %v4329 = vpack.c.b16 %v2881, %v2877
        %v4330 = vpack.c.b16 %v2882, %v2878
        %v4331 = vpack.c.b16 %v2883, %v2879
        %v4332 = vpack.c.b16 %v2888, %v2884
        %v4333 = vpack.c.b16 %v2889, %v2885
        %v4334 = vpack.c.b16 %v2890, %v2886
        %v4335 = vpack.c.b16 %v2891, %v2887
        %v4336 = vpack.c.b16 %v2896, %v2892
        %v4337 = vpack.c.b16 %v2897, %v2893
        %v4338 = vpack.c.b16 %v2898, %v2894
        %v4339 = vpack.c.b16 %v2899, %v2895
        %v4340 = vpack.c.b16 %v2904, %v2900
        %v4341 = vpack.c.b16 %v2905, %v2901
        %v4342 = vpack.c.b16 %v2906, %v2902
        %v4343 = vpack.c.b16 %v2907, %v2903
        %v4344 = vpack.c.b16 %v2912, %v2908
        %v4345 = vpack.c.b16 %v2913, %v2909
        %v4346 = vpack.c.b16 %v2914, %v2910
        %v4347 = vpack.c.b16 %v2915, %v2911
        %v4348 = vpack.c.b16 %v2920, %v2916
        %v4349 = vpack.c.b16 %v2921, %v2917
        %v4350 = vpack.c.b16 %v2922, %v2918
        %v4351 = vpack.c.b16 %v2923, %v2919
        %v4352 = vpack.c.b16 %v2928, %v2924
        %v4353 = vpack.c.b16 %v2929, %v2925
        %v4354 = vpack.c.b16 %v2930, %v2926
        %v4355 = vpack.c.b16 %v2931, %v2927
        %v4356 = vpack.c.b16 %v2936, %v2932
        %v4357 = vpack.c.b16 %v2937, %v2933
        %v4358 = vpack.c.b16 %v2938, %v2934
        %v4359 = vpack.c.b16 %v2939, %v2935
        %v4360 = vpack.c.b16 %v2944, %v2940
        %v4361 = vpack.c.b16 %v2945, %v2941
        %v4362 = vpack.c.b16 %v2946, %v2942
        %v4363 = vpack.c.b16 %v2947, %v2943
        %v4364 = vpack.c.b16 %v2952, %v2948
        %v4365 = vpack.c.b16 %v2953, %v2949
        %v4366 = vpack.c.b16 %v2954, %v2950
        %v4367 = vpack.c.b16 %v2955, %v2951
        %v4368 = vpack.c.b16 %v2960, %v2956
        %v4369 = vpack.c.b16 %v2961, %v2957
        %v4370 = vpack.c.b16 %v2962, %v2958
        %v4371 = vpack.c.b16 %v2963, %v2959
        %v4372 = vpack.c.b16 %v2968, %v2964
        %v4373 = vpack.c.b16 %v2969, %v2965
        %v4374 = vpack.c.b16 %v2970, %v2966
        %v4375 = vpack.c.b16 %v2971, %v2967
        %v4376 = vpack.c.b16 %v2976, %v2972
        %v4377 = vpack.c.b16 %v2977, %v2973
        %v4378 = vpack.c.b16 %v2978, %v2974
        %v4379 = vpack.c.b16 %v2979, %v2975
        %v4380 = vpack.c.b16 %v2984, %v2980
        %v4381 = vpack.c.b16 %v2985, %v2981
        %v4382 = vpack.c.b16 %v2986, %v2982
        %v4383 = vpack.c.b16 %v2987, %v2983
        %v4384 = vpack.c.b16 %v2992, %v2988
        %v4385 = vpack.c.b16 %v2993, %v2989
        %v4386 = vpack.c.b16 %v2994, %v2990
        %v4387 = vpack.c.b16 %v2995, %v2991
        %v4388 = vpack.c.b16 %v3000, %v2996
        %v4389 = vpack.c.b16 %v3001, %v2997
        %v4390 = vpack.c.b16 %v3002, %v2998
        %v4391 = vpack.c.b16 %v3003, %v2999
        %v4392 = vpack.c.b16 %v3008, %v3004
        %v4393 = vpack.c.b16 %v3009, %v3005
        %v4394 = vpack.c.b16 %v3010, %v3006
        %v4395 = vpack.c.b16 %v3011, %v3007
        %v4396 = vpack.c.b16 %v3016, %v3012
        %v4397 = vpack.c.b16 %v3017, %v3013
        %v4398 = vpack.c.b16 %v3018, %v3014
        %v4399 = vpack.c.b16 %v3019, %v3015
        %v4400 = vpack.c.b16 %v3024, %v3020
        %v4401 = vpack.c.b16 %v3025, %v3021
        %v4402 = vpack.c.b16 %v3026, %v3022
        %v4403 = vpack.c.b16 %v3027, %v3023
        %v4404 = vpack.c.b16 %v3032, %v3028
        %v4405 = vpack.c.b16 %v3033, %v3029
        %v4406 = vpack.c.b16 %v3034, %v3030
        %v4407 = vpack.c.b16 %v3035, %v3031
        %v4408 = vpack.c.b16 %v3040, %v3036
        %v4409 = vpack.c.b16 %v3041, %v3037
        %v4410 = vpack.c.b16 %v3042, %v3038
        %v4411 = vpack.c.b16 %v3043, %v3039
        %v4412 = vpack.c.b16 %v3048, %v3044
        %v4413 = vpack.c.b16 %v3049, %v3045
        %v4414 = vpack.c.b16 %v3050, %v3046
        %v4415 = vpack.c.b16 %v3051, %v3047
        %v4416 = vpack.c.b16 %v3056, %v3052
        %v4417 = vpack.c.b16 %v3057, %v3053
        %v4418 = vpack.c.b16 %v3058, %v3054
        %v4419 = vpack.c.b16 %v3059, %v3055
        %v4420 = vpack.c.b16 %v3064, %v3060
        %v4421 = vpack.c.b16 %v3065, %v3061
        %v4422 = vpack.c.b16 %v3066, %v3062
        %v4423 = vpack.c.b16 %v3067, %v3063
        %v4424 = vpack.c.b16 %v3072, %v3068
        %v4425 = vpack.c.b16 %v3073, %v3069
        %v4426 = vpack.c.b16 %v3074, %v3070
        %v4427 = vpack.c.b16 %v3075, %v3071
        %v4428 = vpack.c.b16 %v3080, %v3076
        %v4429 = vpack.c.b16 %v3081, %v3077
        %v4430 = vpack.c.b16 %v3082, %v3078
        %v4431 = vpack.c.b16 %v3083, %v3079
        %v4432 = vpack.c.b16 %v3088, %v3084
        %v4433 = vpack.c.b16 %v3089, %v3085
        %v4434 = vpack.c.b16 %v3090, %v3086
        %v4435 = vpack.c.b16 %v3091, %v3087
        %v4436 = vpack.c.b16 %v3096, %v3092
        %v4437 = vpack.c.b16 %v3097, %v3093
        %v4438 = vpack.c.b16 %v3098, %v3094
        %v4439 = vpack.c.b16 %v3099, %v3095
        %v4440 = vpack.c.b16 %v3104, %v3100
        %v4441 = vpack.c.b16 %v3105, %v3101
        %v4442 = vpack.c.b16 %v3106, %v3102
        %v4443 = vpack.c.b16 %v3107, %v3103
        %v4444 = vpack.c.b16 %v3112, %v3108
        %v4445 = vpack.c.b16 %v3113, %v3109
        %v4446 = vpack.c.b16 %v3114, %v3110
        %v4447 = vpack.c.b16 %v3115, %v3111
        %v4448 = vpack.c.b16 %v3120, %v3116
        %v4449 = vpack.c.b16 %v3121, %v3117
        %v4450 = vpack.c.b16 %v3122, %v3118
        %v4451 = vpack.c.b16 %v3123, %v3119
        %v4452 = vpack.c.b16 %v3128, %v3124
        %v4453 = vpack.c.b16 %v3129, %v3125
        %v4454 = vpack.c.b16 %v3130, %v3126
        %v4455 = vpack.c.b16 %v3131, %v3127
        %v4456 = vpack.c.b16 %v3136, %v3132
        %v4457 = vpack.c.b16 %v3137, %v3133
        %v4458 = vpack.c.b16 %v3138, %v3134
        %v4459 = vpack.c.b16 %v3139, %v3135
        %v4460 = vpack.c.b16 %v3144, %v3140
        %v4461 = vpack.c.b16 %v3145, %v3141
        %v4462 = vpack.c.b16 %v3146, %v3142
        %v4463 = vpack.c.b16 %v3147, %v3143
        %v4464 = vpack.c.b16 %v3152, %v3148
        %v4465 = vpack.c.b16 %v3153, %v3149
        %v4466 = vpack.c.b16 %v3154, %v3150
        %v4467 = vpack.c.b16 %v3155, %v3151
        %v4468 = vpack.c.b16 %v3160, %v3156
        %v4469 = vpack.c.b16 %v3161, %v3157
        %v4470 = vpack.c.b16 %v3162, %v3158
        %v4471 = vpack.c.b16 %v3163, %v3159
        %v4472 = vpack.c.b16 %v3168, %v3164
        %v4473 = vpack.c.b16 %v3169, %v3165
        %v4474 = vpack.c.b16 %v3170, %v3166
        %v4475 = vpack.c.b16 %v3171, %v3167
        %v4476 = vpack.c.b16 %v3176, %v3172
        %v4477 = vpack.c.b16 %v3177, %v3173
        %v4478 = vpack.c.b16 %v3178, %v3174
        %v4479 = vpack.c.b16 %v3179, %v3175
        %v4480 = vpack.c.b16 %v3184, %v3180
        %v4481 = vpack.c.b16 %v3185, %v3181
        %v4482 = vpack.c.b16 %v3186, %v3182
        %v4483 = vpack.c.b16 %v3187, %v3183
        %v4484 = vpack.c.b16 %v3192, %v3188
        %v4485 = vpack.c.b16 %v3193, %v3189
        %v4486 = vpack.c.b16 %v3194, %v3190
        %v4487 = vpack.c.b16 %v3195, %v3191
        %v4488 = vpack.c.b16 %v3200, %v3196
        %v4489 = vpack.c.b16 %v3201, %v3197
        %v4490 = vpack.c.b16 %v3202, %v3198
        %v4491 = vpack.c.b16 %v3203, %v3199
        %v4492 = vpack.c.b16 %v3208, %v3204
        %v4493 = vpack.c.b16 %v3209, %v3205
        %v4494 = vpack.c.b16 %v3210, %v3206
        %v4495 = vpack.c.b16 %v3211, %v3207
        %v4496 = vpack.c.b16 %v3216, %v3212
        %v4497 = vpack.c.b16 %v3217, %v3213
        %v4498 = vpack.c.b16 %v3218, %v3214
        %v4499 = vpack.c.b16 %v3219, %v3215
        %v4500 = vpack.c.b16 %v3224, %v3220
        %v4501 = vpack.c.b16 %v3225, %v3221
        %v4502 = vpack.c.b16 %v3226, %v3222
        %v4503 = vpack.c.b16 %v3227, %v3223
        %v4504 = vpack.c.b16 %v3232, %v3228
        %v4505 = vpack.c.b16 %v3233, %v3229
        %v4506 = vpack.c.b16 %v3234, %v3230
        %v4507 = vpack.c.b16 %v3235, %v3231
        %v4508 = vpack.c.b16 %v3240, %v3236
        %v4509 = vpack.c.b16 %v3241, %v3237
        %v4510 = vpack.c.b16 %v3242, %v3238
        %v4511 = vpack.c.b16 %v3243, %v3239
        %v4512 = vpack.c.b16 %v3248, %v3244
        %v4513 = vpack.c.b16 %v3249, %v3245
        %v4514 = vpack.c.b16 %v3250, %v3246
        %v4515 = vpack.c.b16 %v3251, %v3247
        %v4516 = vpack.c.b16 %v3256, %v3252
        %v4517 = vpack.c.b16 %v3257, %v3253
        %v4518 = vpack.c.b16 %v3258, %v3254
        %v4519 = vpack.c.b16 %v3259, %v3255
        %v4520 = vpack.c.b16 %v3264, %v3260
        %v4521 = vpack.c.b16 %v3265, %v3261
        %v4522 = vpack.c.b16 %v3266, %v3262
        %v4523 = vpack.c.b16 %v3267, %v3263
        %v4524 = vpack.c.b16 %v3272, %v3268
        %v4525 = vpack.c.b16 %v3273, %v3269
        %v4526 = vpack.c.b16 %v3274, %v3270
        %v4527 = vpack.c.b16 %v3275, %v3271
        %v4528 = vpack.c.b16 %v3280, %v3276
        %v4529 = vpack.c.b16 %v3281, %v3277
        %v4530 = vpack.c.b16 %v3282, %v3278
        %v4531 = vpack.c.b16 %v3283, %v3279
        %v4532 = vpack.c.b16 %v3288, %v3284
        %v4533 = vpack.c.b16 %v3289, %v3285
        %v4534 = vpack.c.b16 %v3290, %v3286
        %v4535 = vpack.c.b16 %v3291, %v3287
        %v4536 = vpack.c.b16 %v3296, %v3292
        %v4537 = vpack.c.b16 %v3297, %v3293
        %v4538 = vpack.c.b16 %v3298, %v3294
        %v4539 = vpack.c.b16 %v3299, %v3295
        %v4540 = vpack.c.b16 %v3304, %v3300
        %v4541 = vpack.c.b16 %v3305, %v3301
        %v4542 = vpack.c.b16 %v3306, %v3302
        %v4543 = vpack.c.b16 %v3307, %v3303
        %v4544 = vpack.c.b16 %v3312, %v3308
        %v4545 = vpack.c.b16 %v3313, %v3309
        %v4546 = vpack.c.b16 %v3314, %v3310
        %v4547 = vpack.c.b16 %v3315, %v3311
        %v4548 = vpack.c.b16 %v3320, %v3316
        %v4549 = vpack.c.b16 %v3321, %v3317
        %v4550 = vpack.c.b16 %v3322, %v3318
        %v4551 = vpack.c.b16 %v3323, %v3319
        %v4552 = vpack.c.b16 %v3328, %v3324
        %v4553 = vpack.c.b16 %v3329, %v3325
        %v4554 = vpack.c.b16 %v3330, %v3326
        %v4555 = vpack.c.b16 %v3331, %v3327
        %v4556 = vpack.c.b16 %v3336, %v3332
        %v4557 = vpack.c.b16 %v3337, %v3333
        %v4558 = vpack.c.b16 %v3338, %v3334
        %v4559 = vpack.c.b16 %v3339, %v3335
        %v4560 = vpack.c.b16 %v3344, %v3340
        %v4561 = vpack.c.b16 %v3345, %v3341
        %v4562 = vpack.c.b16 %v3346, %v3342
        %v4563 = vpack.c.b16 %v3347, %v3343
        %v4564 = vpack.c.b16 %v3352, %v3348
        %v4565 = vpack.c.b16 %v3353, %v3349
        %v4566 = vpack.c.b16 %v3354, %v3350
        %v4567 = vpack.c.b16 %v3355, %v3351
        %v4568 = vpack.c.b16 %v3360, %v3356
        %v4569 = vpack.c.b16 %v3361, %v3357
        %v4570 = vpack.c.b16 %v3362, %v3358
        %v4571 = vpack.c.b16 %v3363, %v3359
        %v4572 = vpack.c.b16 %v3368, %v3364
        %v4573 = vpack.c.b16 %v3369, %v3365
        %v4574 = vpack.c.b16 %v3370, %v3366
        %v4575 = vpack.c.b16 %v3371, %v3367
        %v4576 = vpack.c.b16 %v3376, %v3372
        %v4577 = vpack.c.b16 %v3377, %v3373
        %v4578 = vpack.c.b16 %v3378, %v3374
        %v4579 = vpack.c.b16 %v3379, %v3375
        %v4580 = vpack.c.b16 %v3384, %v3380
        %v4581 = vpack.c.b16 %v3385, %v3381
        %v4582 = vpack.c.b16 %v3386, %v3382
        %v4583 = vpack.c.b16 %v3387, %v3383
        %v4584 = vpack.c.b16 %v3392, %v3388
        %v4585 = vpack.c.b16 %v3393, %v3389
        %v4586 = vpack.c.b16 %v3394, %v3390
        %v4587 = vpack.c.b16 %v3395, %v3391
        %v4588 = vpack.c.b16 %v3400, %v3396
        %v4589 = vpack.c.b16 %v3401, %v3397
        %v4590 = vpack.c.b16 %v3402, %v3398
        %v4591 = vpack.c.b16 %v3403, %v3399
        %v4592 = vpack.c.b16 %v3408, %v3404
        %v4593 = vpack.c.b16 %v3409, %v3405
        %v4594 = vpack.c.b16 %v3410, %v3406
        %v4595 = vpack.c.b16 %v3411, %v3407
        %v4596 = vpack.c.b16 %v3416, %v3412
        %v4597 = vpack.c.b16 %v3417, %v3413
        %v4598 = vpack.c.b16 %v3418, %v3414
        %v4599 = vpack.c.b16 %v3419, %v3415
        %v4600 = vpack.c.b16 %v3424, %v3420
        %v4601 = vpack.c.b16 %v3425, %v3421
        %v4602 = vpack.c.b16 %v3426, %v3422
        %v4603 = vpack.c.b16 %v3427, %v3423
        %v4604 = vpack.c.b16 %v3432, %v3428
        %v4605 = vpack.c.b16 %v3433, %v3429
        %v4606 = vpack.c.b16 %v3434, %v3430
        %v4607 = vpack.c.b16 %v3435, %v3431
        %v4608 = vpack.c.b16 %v3440, %v3436
        %v4609 = vpack.c.b16 %v3441, %v3437
        %v4610 = vpack.c.b16 %v3442, %v3438
        %v4611 = vpack.c.b16 %v3443, %v3439
        %v4612 = vpack.c.b16 %v3448, %v3444
        %v4613 = vpack.c.b16 %v3449, %v3445
        %v4614 = vpack.c.b16 %v3450, %v3446
        %v4615 = vpack.c.b16 %v3451, %v3447
        %v4616 = vpack.c.b16 %v3456, %v3452
        %v4617 = vpack.c.b16 %v3457, %v3453
        %v4618 = vpack.c.b16 %v3458, %v3454
        %v4619 = vpack.c.b16 %v3459, %v3455
        %v4620 = vpack.c.b16 %v3464, %v3460
        %v4621 = vpack.c.b16 %v3465, %v3461
        %v4622 = vpack.c.b16 %v3466, %v3462
        %v4623 = vpack.c.b16 %v3467, %v3463
        %v4624 = vpack.c.b16 %v3472, %v3468
        %v4625 = vpack.c.b16 %v3473, %v3469
        %v4626 = vpack.c.b16 %v3474, %v3470
        %v4627 = vpack.c.b16 %v3475, %v3471
        %v4628 = vpack.c.b16 %v3480, %v3476
        %v4629 = vpack.c.b16 %v3481, %v3477
        %v4630 = vpack.c.b16 %v3482, %v3478
        %v4631 = vpack.c.b16 %v3483, %v3479
        %v4632 = vpack.c.b16 %v3488, %v3484
        %v4633 = vpack.c.b16 %v3489, %v3485
        %v4634 = vpack.c.b16 %v3490, %v3486
        %v4635 = vpack.c.b16 %v3491, %v3487
        %v4636 = vpack.c.b16 %v3496, %v3492
        %v4637 = vpack.c.b16 %v3497, %v3493
        %v4638 = vpack.c.b16 %v3498, %v3494
        %v4639 = vpack.c.b16 %v3499, %v3495
        %v4640 = vpack.c.b16 %v3504, %v3500
        %v4641 = vpack.c.b16 %v3505, %v3501
        %v4642 = vpack.c.b16 %v3506, %v3502
        %v4643 = vpack.c.b16 %v3507, %v3503
        %v4644 = vpack.c.b16 %v3512, %v3508
        %v4645 = vpack.c.b16 %v3513, %v3509
        %v4646 = vpack.c.b16 %v3514, %v3510
        %v4647 = vpack.c.b16 %v3515, %v3511
        %v4648 = vpack.c.b16 %v3520, %v3516
        %v4649 = vpack.c.b16 %v3521, %v3517
        %v4650 = vpack.c.b16 %v3522, %v3518
        %v4651 = vpack.c.b16 %v3523, %v3519
        %v4652 = vpack.c.b16 %v3528, %v3524
        %v4653 = vpack.c.b16 %v3529, %v3525
        %v4654 = vpack.c.b16 %v3530, %v3526
        %v4655 = vpack.c.b16 %v3531, %v3527
        %v4656 = vpack.c.b16 %v3536, %v3532
        %v4657 = vpack.c.b16 %v3537, %v3533
        %v4658 = vpack.c.b16 %v3538, %v3534
        %v4659 = vpack.c.b16 %v3539, %v3535
        %v4660 = vpack.c.b16 %v3544, %v3540
        %v4661 = vpack.c.b16 %v3545, %v3541
        %v4662 = vpack.c.b16 %v3546, %v3542
        %v4663 = vpack.c.b16 %v3547, %v3543
        %v4664 = vpack.c.b16 %v3552, %v3548
        %v4665 = vpack.c.b16 %v3553, %v3549
        %v4666 = vpack.c.b16 %v3554, %v3550
        %v4667 = vpack.c.b16 %v3555, %v3551
        %v4668 = vpack.c.b16 %v3560, %v3556
        %v4669 = vpack.c.b16 %v3561, %v3557
        %v4670 = vpack.c.b16 %v3562, %v3558
        %v4671 = vpack.c.b16 %v3563, %v3559
        %v4672 = vpack.c.b16 %v3568, %v3564
        %v4673 = vpack.c.b16 %v3569, %v3565
        %v4674 = vpack.c.b16 %v3570, %v3566
        %v4675 = vpack.c.b16 %v3571, %v3567
        %v4676 = vpack.c.b16 %v3576, %v3572
        %v4677 = vpack.c.b16 %v3577, %v3573
        %v4678 = vpack.c.b16 %v3578, %v3574
        %v4679 = vpack.c.b16 %v3579, %v3575
        %v4680 = vpack.c.b16 %v3584, %v3580
        %v4681 = vpack.c.b16 %v3585, %v3581
        %v4682 = vpack.c.b16 %v3586, %v3582
        %v4683 = vpack.c.b16 %v3587, %v3583
        %v4684 = vpack.c.b16 %v3592, %v3588
        %v4685 = vpack.c.b16 %v3593, %v3589
        %v4686 = vpack.c.b16 %v3594, %v3590
        %v4687 = vpack.c.b16 %v3595, %v3591
        %v4688 = vpack.c.b16 %v3600, %v3596
        %v4689 = vpack.c.b16 %v3601, %v3597
        %v4690 = vpack.c.b16 %v3602, %v3598
        %v4691 = vpack.c.b16 %v3603, %v3599
        %v4692 = vpack.c.b16 %v3608, %v3604
        %v4693 = vpack.c.b16 %v3609, %v3605
        %v4694 = vpack.c.b16 %v3610, %v3606
        %v4695 = vpack.c.b16 %v3611, %v3607
        %v4696 = vpack.c.b16 %v3616, %v3612
        %v4697 = vpack.c.b16 %v3617, %v3613
        %v4698 = vpack.c.b16 %v3618, %v3614
        %v4699 = vpack.c.b16 %v3619, %v3615
        %v4700 = vpack.c.b16 %v3624, %v3620
        %v4701 = vpack.c.b16 %v3625, %v3621
        %v4702 = vpack.c.b16 %v3626, %v3622
        %v4703 = vpack.c.b16 %v3627, %v3623
        %v4704 = vpack.c.b16 %v3632, %v3628
        %v4705 = vpack.c.b16 %v3633, %v3629
        %v4706 = vpack.c.b16 %v3634, %v3630
        %v4707 = vpack.c.b16 %v3635, %v3631
        %v4708 = vpack.c.b16 %v3640, %v3636
        %v4709 = vpack.c.b16 %v3641, %v3637
        %v4710 = vpack.c.b16 %v3642, %v3638
        %v4711 = vpack.c.b16 %v3643, %v3639
        %v4712 = vpack.c.b16 %v3648, %v3644
        %v4713 = vpack.c.b16 %v3649, %v3645
        %v4714 = vpack.c.b16 %v3650, %v3646
        %v4715 = vpack.c.b16 %v3651, %v3647
        %v4716 = vpack.c.b16 %v3656, %v3652
        %v4717 = vpack.c.b16 %v3657, %v3653
        %v4718 = vpack.c.b16 %v3658, %v3654
        %v4719 = vpack.c.b16 %v3659, %v3655
        %v4720 = vpack.c.b16 %v3664, %v3660
        %v4721 = vpack.c.b16 %v3665, %v3661
        %v4722 = vpack.c.b16 %v3666, %v3662
        %v4723 = vpack.c.b16 %v3667, %v3663
        %v4724 = vpack.c.b16 %v3672, %v3668
        %v4725 = vpack.c.b16 %v3673, %v3669
        %v4726 = vpack.c.b16 %v3674, %v3670
        %v4727 = vpack.c.b16 %v3675, %v3671
        %v4728 = vpack.c.b16 %v3680, %v3676
        %v4729 = vpack.c.b16 %v3681, %v3677
        %v4730 = vpack.c.b16 %v3682, %v3678
        %v4731 = vpack.c.b16 %v3683, %v3679
        %v4732 = vpack.c.b16 %v3688, %v3684
        %v4733 = vpack.c.b16 %v3689, %v3685
        %v4734 = vpack.c.b16 %v3690, %v3686
        %v4735 = vpack.c.b16 %v3691, %v3687
        %v4736 = vpack.c.b16 %v3696, %v3692
        %v4737 = vpack.c.b16 %v3697, %v3693
        %v4738 = vpack.c.b16 %v3698, %v3694
        %v4739 = vpack.c.b16 %v3699, %v3695
        %v4740 = vpack.c.b16 %v3704, %v3700
        %v4741 = vpack.c.b16 %v3705, %v3701
        %v4742 = vpack.c.b16 %v3706, %v3702
        %v4743 = vpack.c.b16 %v3707, %v3703
        %v4744 = vpack.c.b16 %v3712, %v3708
        %v4745 = vpack.c.b16 %v3713, %v3709
        %v4746 = vpack.c.b16 %v3714, %v3710
        %v4747 = vpack.c.b16 %v3715, %v3711
        %v4748 = vpack.c.b16 %v3720, %v3716
        %v4749 = vpack.c.b16 %v3721, %v3717
        %v4750 = vpack.c.b16 %v3722, %v3718
        %v4751 = vpack.c.b16 %v3723, %v3719
        %v4752 = vpack.c.b16 %v3728, %v3724
        %v4753 = vpack.c.b16 %v3729, %v3725
        %v4754 = vpack.c.b16 %v3730, %v3726
        %v4755 = vpack.c.b16 %v3731, %v3727
        %v4756 = vpack.c.b16 %v3736, %v3732
        %v4757 = vpack.c.b16 %v3737, %v3733
        %v4758 = vpack.c.b16 %v3738, %v3734
        %v4759 = vpack.c.b16 %v3739, %v3735
        %v4760 = vpack.c.b16 %v3744, %v3740
        %v4761 = vpack.c.b16 %v3745, %v3741
        %v4762 = vpack.c.b16 %v3746, %v3742
        %v4763 = vpack.c.b16 %v3747, %v3743
        %v4764 = vpack.c.b16 %v3752, %v3748
        %v4765 = vpack.c.b16 %v3753, %v3749
        %v4766 = vpack.c.b16 %v3754, %v3750
        %v4767 = vpack.c.b16 %v3755, %v3751
        %v4768 = vpack.c.b16 %v3760, %v3756
        %v4769 = vpack.c.b16 %v3761, %v3757
        %v4770 = vpack.c.b16 %v3762, %v3758
        %v4771 = vpack.c.b16 %v3763, %v3759
        %v4772 = vpack.c.b16 %v3768, %v3764
        %v4773 = vpack.c.b16 %v3769, %v3765
        %v4774 = vpack.c.b16 %v3770, %v3766
        %v4775 = vpack.c.b16 %v3771, %v3767
        %v4776 = vpack.c.b16 %v3776, %v3772
        %v4777 = vpack.c.b16 %v3777, %v3773
        %v4778 = vpack.c.b16 %v3778, %v3774
        %v4779 = vpack.c.b16 %v3779, %v3775
        %v4780 = vpack.c.b16 %v3784, %v3780
        %v4781 = vpack.c.b16 %v3785, %v3781
        %v4782 = vpack.c.b16 %v3786, %v3782
        %v4783 = vpack.c.b16 %v3787, %v3783
        %v4784 = vpack.c.b16 %v3792, %v3788
        %v4785 = vpack.c.b16 %v3793, %v3789
        %v4786 = vpack.c.b16 %v3794, %v3790
        %v4787 = vpack.c.b16 %v3795, %v3791
        %v4788 = vpack.c.b16 %v3800, %v3796
        %v4789 = vpack.c.b16 %v3801, %v3797
        %v4790 = vpack.c.b16 %v3802, %v3798
        %v4791 = vpack.c.b16 %v3803, %v3799
        %v4792 = vpack.c.b16 %v3808, %v3804
        %v4793 = vpack.c.b16 %v3809, %v3805
        %v4794 = vpack.c.b16 %v3810, %v3806
        %v4795 = vpack.c.b16 %v3811, %v3807
        %v4796 = vpack.c.b16 %v3816, %v3812
        %v4797 = vpack.c.b16 %v3817, %v3813
        %v4798 = vpack.c.b16 %v3818, %v3814
        %v4799 = vpack.c.b16 %v3819, %v3815
        %v4800 = vpack.c.b16 %v3824, %v3820
        %v4801 = vpack.c.b16 %v3825, %v3821
        %v4802 = vpack.c.b16 %v3826, %v3822
        %v4803 = vpack.c.b16 %v3827, %v3823
        %v4804 = vpack.c.b16 %v3832, %v3828
        %v4805 = vpack.c.b16 %v3833, %v3829
        %v4806 = vpack.c.b16 %v3834, %v3830
        %v4807 = vpack.c.b16 %v3835, %v3831
        %v4808 = vpack.c.b16 %v3840, %v3836
        %v4809 = vpack.c.b16 %v3841, %v3837
        %v4810 = vpack.c.b16 %v3842, %v3838
        %v4811 = vpack.c.b16 %v3843, %v3839
        %v4812 = vpack.c.b16 %v3848, %v3844
        %v4813 = vpack.c.b16 %v3849, %v3845
        %v4814 = vpack.c.b16 %v3850, %v3846
        %v4815 = vpack.c.b16 %v3851, %v3847
        %v4816 = vpack.c.b16 %v3856, %v3852
        %v4817 = vpack.c.b16 %v3857, %v3853
        %v4818 = vpack.c.b16 %v3858, %v3854
        %v4819 = vpack.c.b16 %v3859, %v3855
        %v4820 = vpack.c.b16 %v3864, %v3860
        %v4821 = vpack.c.b16 %v3865, %v3861
        %v4822 = vpack.c.b16 %v3866, %v3862
        %v4823 = vpack.c.b16 %v3867, %v3863
        %v4824 = vpack.c.b16 %v3872, %v3868
        %v4825 = vpack.c.b16 %v3873, %v3869
        %v4826 = vpack.c.b16 %v3874, %v3870
        %v4827 = vpack.c.b16 %v3875, %v3871
        %v4828 = vpack.c.b16 %v3880, %v3876
        %v4829 = vpack.c.b16 %v3881, %v3877
        %v4830 = vpack.c.b16 %v3882, %v3878
        %v4831 = vpack.c.b16 %v3883, %v3879
        %v4832 = vpack.c.b16 %v3888, %v3884
        %v4833 = vpack.c.b16 %v3889, %v3885
        %v4834 = vpack.c.b16 %v3890, %v3886
        %v4835 = vpack.c.b16 %v3891, %v3887
        %v4836 = vpack.c.b16 %v3896, %v3892
        %v4837 = vpack.c.b16 %v3897, %v3893
        %v4838 = vpack.c.b16 %v3898, %v3894
        %v4839 = vpack.c.b16 %v3899, %v3895
        %v4840 = vpack.c.b16 %v3904, %v3900
        %v4841 = vpack.c.b16 %v3905, %v3901
        %v4842 = vpack.c.b16 %v3906, %v3902
        %v4843 = vpack.c.b16 %v3907, %v3903
        %v4844 = vpack.c.b16 %v3912, %v3908
        %v4845 = vpack.c.b16 %v3913, %v3909
        %v4846 = vpack.c.b16 %v3914, %v3910
        %v4847 = vpack.c.b16 %v3915, %v3911
        %v4848 = vpack.c.b16 %v3920, %v3916
        %v4849 = vpack.c.b16 %v3921, %v3917
        %v4850 = vpack.c.b16 %v3922, %v3918
        %v4851 = vpack.c.b16 %v3923, %v3919
        %v4852 = vpack.c.b16 %v3928, %v3924
        %v4853 = vpack.c.b16 %v3929, %v3925
        %v4854 = vpack.c.b16 %v3930, %v3926
        %v4855 = vpack.c.b16 %v3931, %v3927
        %v4856 = vpack.c.b16 %v3936, %v3932
        %v4857 = vpack.c.b16 %v3937, %v3933
        %v4858 = vpack.c.b16 %v3938, %v3934
        %v4859 = vpack.c.b16 %v3939, %v3935
        %v4860 = vpack.c.b16 %v3944, %v3940
        %v4861 = vpack.c.b16 %v3945, %v3941
        %v4862 = vpack.c.b16 %v3946, %v3942
        %v4863 = vpack.c.b16 %v3947, %v3943
        %v4864 = vpack.c.b16 %v3952, %v3948
        %v4865 = vpack.c.b16 %v3953, %v3949
        %v4866 = vpack.c.b16 %v3954, %v3950
        %v4867 = vpack.c.b16 %v3955, %v3951
        %v4868 = vpack.c.b16 %v3960, %v3956
        %v4869 = vpack.c.b16 %v3961, %v3957
        %v4870 = vpack.c.b16 %v3962, %v3958
        %v4871 = vpack.c.b16 %v3963, %v3959
        %v4872 = vpack.c.b16 %v3968, %v3964
        %v4873 = vpack.c.b16 %v3969, %v3965
        %v4874 = vpack.c.b16 %v3970, %v3966
        %v4875 = vpack.c.b16 %v3971, %v3967
        %v4876 = vpack.c.b16 %v3976, %v3972
        %v4877 = vpack.c.b16 %v3977, %v3973
        %v4878 = vpack.c.b16 %v3978, %v3974
        %v4879 = vpack.c.b16 %v3979, %v3975
        %v4880 = vpack.c.b16 %v3984, %v3980
        %v4881 = vpack.c.b16 %v3985, %v3981
        %v4882 = vpack.c.b16 %v3986, %v3982
        %v4883 = vpack.c.b16 %v3987, %v3983
        %v4884 = vpack.c.b16 %v3992, %v3988
        %v4885 = vpack.c.b16 %v3993, %v3989
        %v4886 = vpack.c.b16 %v3994, %v3990
        %v4887 = vpack.c.b16 %v3995, %v3991
        %v4888 = vpack.c.b16 %v4000, %v3996
        %v4889 = vpack.c.b16 %v4001, %v3997
        %v4890 = vpack.c.b16 %v4002, %v3998
        %v4891 = vpack.c.b16 %v4003, %v3999
        %v4892 = vpack.c.b16 %v4008, %v4004
        %v4893 = vpack.c.b16 %v4009, %v4005
        %v4894 = vpack.c.b16 %v4010, %v4006
        %v4895 = vpack.c.b16 %v4011, %v4007
        %v4896 = vpack.c.b16 %v4016, %v4012
        %v4897 = vpack.c.b16 %v4017, %v4013
        %v4898 = vpack.c.b16 %v4018, %v4014
        %v4899 = vpack.c.b16 %v4019, %v4015
        %v4900 = vpack.c.b16 %v4024, %v4020
        %v4901 = vpack.c.b16 %v4025, %v4021
        %v4902 = vpack.c.b16 %v4026, %v4022
        %v4903 = vpack.c.b16 %v4027, %v4023
        %v4904 = vpack.c.b16 %v4032, %v4028
        %v4905 = vpack.c.b16 %v4033, %v4029
        %v4906 = vpack.c.b16 %v4034, %v4030
        %v4907 = vpack.c.b16 %v4035, %v4031
        %v4908 = vpack.c.b16 %v4040, %v4036
        %v4909 = vpack.c.b16 %v4041, %v4037
        %v4910 = vpack.c.b16 %v4042, %v4038
        %v4911 = vpack.c.b16 %v4043, %v4039
        %v4912 = vpack.c.b16 %v4048, %v4044
        %v4913 = vpack.c.b16 %v4049, %v4045
        %v4914 = vpack.c.b16 %v4050, %v4046
        %v4915 = vpack.c.b16 %v4051, %v4047
        %v4916 = vpack.c.b16 %v4056, %v4052
        %v4917 = vpack.c.b16 %v4057, %v4053
        %v4918 = vpack.c.b16 %v4058, %v4054
        %v4919 = vpack.c.b16 %v4059, %v4055
        %v4920 = vpack.c.b16 %v4064, %v4060
        %v4921 = vpack.c.b16 %v4065, %v4061
        %v4922 = vpack.c.b16 %v4066, %v4062
        %v4923 = vpack.c.b16 %v4067, %v4063
        %v4924 = vpack.c.b16 %v4072, %v4068
        %v4925 = vpack.c.b16 %v4073, %v4069
        %v4926 = vpack.c.b16 %v4074, %v4070
        %v4927 = vpack.c.b16 %v4075, %v4071
        %v4928 = vpack.c.b16 %v4080, %v4076
        %v4929 = vpack.c.b16 %v4081, %v4077
        %v4930 = vpack.c.b16 %v4082, %v4078
        %v4931 = vpack.c.b16 %v4083, %v4079
        %v4932 = vpack.c.b16 %v4088, %v4084
        %v4933 = vpack.c.b16 %v4089, %v4085
        %v4934 = vpack.c.b16 %v4090, %v4086
        %v4935 = vpack.c.b16 %v4091, %v4087
        %v4936 = vpack.c.b16 %v4096, %v4092
        %v4937 = vpack.c.b16 %v4097, %v4093
        %v4938 = vpack.c.b16 %v4098, %v4094
        %v4939 = vpack.c.b16 %v4099, %v4095
        %v4940 = vpack.c.b16 %v4104, %v4100
        %v4941 = vpack.c.b16 %v4105, %v4101
        %v4942 = vpack.c.b16 %v4106, %v4102
        %v4943 = vpack.c.b16 %v4107, %v4103
        %v4944 = vpack.c.b16 %v4112, %v4108
        %v4945 = vpack.c.b16 %v4113, %v4109
        %v4946 = vpack.c.b16 %v4114, %v4110
        %v4947 = vpack.c.b16 %v4115, %v4111
        %v4948 = vpack.c.b16 %v4120, %v4116
        %v4949 = vpack.c.b16 %v4121, %v4117
        %v4950 = vpack.c.b16 %v4122, %v4118
        %v4951 = vpack.c.b16 %v4123, %v4119
        %v4952 = vpack.c.b16 %v4128, %v4124
        %v4953 = vpack.c.b16 %v4129, %v4125
        %v4954 = vpack.c.b16 %v4130, %v4126
        %v4955 = vpack.c.b16 %v4131, %v4127
        %v4956 = vpack.c.b16 %v4136, %v4132
        %v4957 = vpack.c.b16 %v4137, %v4133
        %v4958 = vpack.c.b16 %v4138, %v4134
        %v4959 = vpack.c.b16 %v4139, %v4135
        %v4960 = vpack.c.b16 %v4144, %v4140
        %v4961 = vpack.c.b16 %v4145, %v4141
        %v4962 = vpack.c.b16 %v4146, %v4142
        %v4963 = vpack.c.b16 %v4147, %v4143
        %v4964 = vpack.c.b16 %v4152, %v4148
        %v4965 = vpack.c.b16 %v4153, %v4149
        %v4966 = vpack.c.b16 %v4154, %v4150
        %v4967 = vpack.c.b16 %v4155, %v4151
        %v4968 = vpack.c.b16 %v4160, %v4156
        %v4969 = vpack.c.b16 %v4161, %v4157
        %v4970 = vpack.c.b16 %v4162, %v4158
        %v4971 = vpack.c.b16 %v4163, %v4159
        %v4972 = vpack.c.b16 %v4168, %v4164
        %v4973 = vpack.c.b16 %v4169, %v4165
        %v4974 = vpack.c.b16 %v4170, %v4166
        %v4975 = vpack.c.b16 %v4171, %v4167
        %v4976 = vpack.c.b16 %v4176, %v4172
        %v4977 = vpack.c.b16 %v4177, %v4173
        %v4978 = vpack.c.b16 %v4178, %v4174
        %v4979 = vpack.c.b16 %v4179, %v4175
        %5780 = vmatprep.subr.bf16.mxu0 %v4209
        %5781 = vmatpush1.bf16.msra.mxu0 %v4208
        %5782 = vmatprep.subr.bf16.mxu0 %v4205
        %5783 = vmatpush1.bf16.msra.mxu0 %v4204
        %5784 = vmatprep.subr.bf16.mxu0 %v4201
        %5785 = vmatpush1.bf16.msra.mxu0 %v4200
        %5786 = vmatprep.subr.bf16.mxu0 %v4197
        %5787 = vmatpush1.bf16.msra.mxu0 %v4196
        %5788 = vmatprep.subr.bf16.mxu0 %v4193
        %5789 = vmatpush1.bf16.msra.mxu0 %v4192
        %5790 = vmatprep.subr.bf16.mxu0 %v4189
        %5791 = vmatpush1.bf16.msra.mxu0 %v4188
        %5792 = vmatprep.subr.bf16.mxu0 %v4185
        %5793 = vmatpush1.bf16.msra.mxu0 %v4184
        %5794 = vmatprep.subr.bf16.mxu0 %v4181
        %5795 = vmatpush1.bf16.msra.mxu0 %v4180
        %5796 = vmatprep.subr.bf16.mxu0 %v4241
        %5797 = vmatpush2.bf16.msra.mxu0 %v4240
        %5798 = vmatprep.subr.bf16.mxu0 %v4237
        %5799 = vmatpush2.bf16.msra.mxu0 %v4236
        %5800 = vmatprep.subr.bf16.mxu0 %v4233
        %5801 = vmatpush2.bf16.msra.mxu0 %v4232
        %5802 = vmatprep.subr.bf16.mxu0 %v4229
        %5803 = vmatpush2.bf16.msra.mxu0 %v4228
        %5804 = vmatprep.subr.bf16.mxu0 %v4225
        %5805 = vmatpush2.bf16.msra.mxu0 %v4224
        %5806 = vmatprep.subr.bf16.mxu0 %v4221
        %5807 = vmatpush2.bf16.msra.mxu0 %v4220
        %5808 = vmatprep.subr.bf16.mxu0 %v4217
        %5809 = vmatpush2.bf16.msra.mxu0 %v4216
        %5810 = vmatprep.subr.bf16.mxu0 %v4213
        %5811 = vmatpush2.bf16.msra.mxu0 %v4212
        %5812 = vmatprep.mubr.bf16.mxu0 %v956
        %5813 = vmatmul.mubr.bf16.gmra.mxu0 %v955
        %v5814 = vpop.f32.mrf.mxu0
        %v5815 = vadd.f32 0.0, %v5814
        %v5816 = vpop.f32.mrf.mxu0
        %v5817 = vadd.f32 0.0, %v5816
        %v5818 = vpop.f32.mrf.mxu0
        %v5819 = vpop.f32.mrf.mxu0
        %5820 = vdwg.mxu0
        %5821 = vmatprep.subr.bf16.mxu0 %v4273
        %5822 = vmatpush1.bf16.msra.mxu0 %v4272
        %5823 = vmatprep.subr.bf16.mxu0 %v4269
        %5824 = vmatpush1.bf16.msra.mxu0 %v4268
        %5825 = vmatprep.subr.bf16.mxu0 %v4265
        %5826 = vmatpush1.bf16.msra.mxu0 %v4264
        %5827 = vmatprep.subr.bf16.mxu0 %v4261
        %5828 = vmatpush1.bf16.msra.mxu0 %v4260
        %5829 = vmatprep.subr.bf16.mxu0 %v4257
        %5830 = vmatpush1.bf16.msra.mxu0 %v4256
        %5831 = vmatprep.subr.bf16.mxu0 %v4253
        %5832 = vmatpush1.bf16.msra.mxu0 %v4252
        %5833 = vmatprep.subr.bf16.mxu0 %v4249
        %5834 = vmatpush1.bf16.msra.mxu0 %v4248
        %5835 = vmatprep.subr.bf16.mxu0 %v4245
        %5836 = vmatpush1.bf16.msra.mxu0 %v4244
        %5837 = vmatprep.subr.bf16.mxu0 %v4305
        %5838 = vmatpush2.bf16.msra.mxu0 %v4304
        %5839 = vmatprep.subr.bf16.mxu0 %v4301
        %5840 = vmatpush2.bf16.msra.mxu0 %v4300
        %5841 = vmatprep.subr.bf16.mxu0 %v4297
        %5842 = vmatpush2.bf16.msra.mxu0 %v4296
        %5843 = vmatprep.subr.bf16.mxu0 %v4293
        %5844 = vmatpush2.bf16.msra.mxu0 %v4292
        %5845 = vmatprep.subr.bf16.mxu0 %v4289
        %5846 = vmatpush2.bf16.msra.mxu0 %v4288
        %5847 = vmatprep.subr.bf16.mxu0 %v4285
        %5848 = vmatpush2.bf16.msra.mxu0 %v4284
        %5849 = vmatprep.subr.bf16.mxu0 %v4281
        %5850 = vmatpush2.bf16.msra.mxu0 %v4280
        %5851 = vmatprep.subr.bf16.mxu0 %v4277
        %5852 = vmatpush2.bf16.msra.mxu0 %v4276
        %5853 = vmatprep.mubr.bf16.mxu0 %v958
        %5854 = vmatmul.mubr.bf16.gmra.mxu0 %v957
        %v5855 = vpop.f32.mrf.mxu0
        %v5856 = vadd.f32 %v5815, %v5855
        %v5857 = vpop.f32.mrf.mxu0
        %v5858 = vadd.f32 %v5817, %v5857
        %v5859 = vpop.f32.mrf.mxu0
        %v5860 = vpop.f32.mrf.mxu0
        %5861 = vdwg.mxu0
        %5862 = vmatprep.subr.bf16.mxu0 %v4337
        %5863 = vmatpush1.bf16.msra.mxu0 %v4336
        %5864 = vmatprep.subr.bf16.mxu0 %v4333
        %5865 = vmatpush1.bf16.msra.mxu0 %v4332
        %5866 = vmatprep.subr.bf16.mxu0 %v4329
        %5867 = vmatpush1.bf16.msra.mxu0 %v4328
        %5868 = vmatprep.subr.bf16.mxu0 %v4325
        %5869 = vmatpush1.bf16.msra.mxu0 %v4324
        %5870 = vmatprep.subr.bf16.mxu0 %v4321
        %5871 = vmatpush1.bf16.msra.mxu0 %v4320
        %5872 = vmatprep.subr.bf16.mxu0 %v4317
        %5873 = vmatpush1.bf16.msra.mxu0 %v4316
        %5874 = vmatprep.subr.bf16.mxu0 %v4313
        %5875 = vmatpush1.bf16.msra.mxu0 %v4312
        %5876 = vmatprep.subr.bf16.mxu0 %v4309
        %5877 = vmatpush1.bf16.msra.mxu0 %v4308
        %5878 = vmatprep.subr.bf16.mxu0 %v4369
        %5879 = vmatpush2.bf16.msra.mxu0 %v4368
        %5880 = vmatprep.subr.bf16.mxu0 %v4365
        %5881 = vmatpush2.bf16.msra.mxu0 %v4364
        %5882 = vmatprep.subr.bf16.mxu0 %v4361
        %5883 = vmatpush2.bf16.msra.mxu0 %v4360
        %5884 = vmatprep.subr.bf16.mxu0 %v4357
        %5885 = vmatpush2.bf16.msra.mxu0 %v4356
        %5886 = vmatprep.subr.bf16.mxu0 %v4353
        %5887 = vmatpush2.bf16.msra.mxu0 %v4352
        %5888 = vmatprep.subr.bf16.mxu0 %v4349
        %5889 = vmatpush2.bf16.msra.mxu0 %v4348
        %5890 = vmatprep.subr.bf16.mxu0 %v4345
        %5891 = vmatpush2.bf16.msra.mxu0 %v4344
        %5892 = vmatprep.subr.bf16.mxu0 %v4341
        %5893 = vmatpush2.bf16.msra.mxu0 %v4340
        %5894 = vmatprep.mubr.bf16.mxu0 %v960
        %5895 = vmatmul.mubr.bf16.gmra.mxu0 %v959
        %v5896 = vpop.f32.mrf.mxu0
        %v5897 = vadd.f32 %v5856, %v5896
        %v5898 = vpop.f32.mrf.mxu0
        %v5899 = vadd.f32 %v5858, %v5898
        %v5900 = vpop.f32.mrf.mxu0
        %v5901 = vpop.f32.mrf.mxu0
        %5902 = vdwg.mxu0
        %5903 = vmatprep.subr.bf16.mxu0 %v4401
        %5904 = vmatpush1.bf16.msra.mxu0 %v4400
        %5905 = vmatprep.subr.bf16.mxu0 %v4397
        %5906 = vmatpush1.bf16.msra.mxu0 %v4396
        %5907 = vmatprep.subr.bf16.mxu0 %v4393
        %5908 = vmatpush1.bf16.msra.mxu0 %v4392
        %5909 = vmatprep.subr.bf16.mxu0 %v4389
        %5910 = vmatpush1.bf16.msra.mxu0 %v4388
        %5911 = vmatprep.subr.bf16.mxu0 %v4385
        %5912 = vmatpush1.bf16.msra.mxu0 %v4384
        %5913 = vmatprep.subr.bf16.mxu0 %v4381
        %5914 = vmatpush1.bf16.msra.mxu0 %v4380
        %5915 = vmatprep.subr.bf16.mxu0 %v4377
        %5916 = vmatpush1.bf16.msra.mxu0 %v4376
        %5917 = vmatprep.subr.bf16.mxu0 %v4373
        %5918 = vmatpush1.bf16.msra.mxu0 %v4372
        %5919 = vmatprep.subr.bf16.mxu0 %v4433
        %5920 = vmatpush2.bf16.msra.mxu0 %v4432
        %5921 = vmatprep.subr.bf16.mxu0 %v4429
        %5922 = vmatpush2.bf16.msra.mxu0 %v4428
        %5923 = vmatprep.subr.bf16.mxu0 %v4425
        %5924 = vmatpush2.bf16.msra.mxu0 %v4424
        %5925 = vmatprep.subr.bf16.mxu0 %v4421
        %5926 = vmatpush2.bf16.msra.mxu0 %v4420
        %5927 = vmatprep.subr.bf16.mxu0 %v4417
        %5928 = vmatpush2.bf16.msra.mxu0 %v4416
        %5929 = vmatprep.subr.bf16.mxu0 %v4413
        %5930 = vmatpush2.bf16.msra.mxu0 %v4412
        %5931 = vmatprep.subr.bf16.mxu0 %v4409
        %5932 = vmatpush2.bf16.msra.mxu0 %v4408
        %5933 = vmatprep.subr.bf16.mxu0 %v4405
        %5934 = vmatpush2.bf16.msra.mxu0 %v4404
        %5935 = vmatprep.mubr.bf16.mxu0 %v962
        %5936 = vmatmul.mubr.bf16.gmra.mxu0 %v961
        %v5937 = vpop.f32.mrf.mxu0
        %v5938 = vadd.f32 %v5897, %v5937
        %v5939 = vpop.f32.mrf.mxu0
        %v5940 = vadd.f32 %v5899, %v5939
        %v5941 = vpop.f32.mrf.mxu0
        %v5942 = vpop.f32.mrf.mxu0
        %5943 = vdwg.mxu0
        %5944 = vmatprep.subr.bf16.mxu0 %v4465
        %5945 = vmatpush1.bf16.msra.mxu0 %v4464
        %5946 = vmatprep.subr.bf16.mxu0 %v4461
        %5947 = vmatpush1.bf16.msra.mxu0 %v4460
        %5948 = vmatprep.subr.bf16.mxu0 %v4457
        %5949 = vmatpush1.bf16.msra.mxu0 %v4456
        %5950 = vmatprep.subr.bf16.mxu0 %v4453
        %5951 = vmatpush1.bf16.msra.mxu0 %v4452
        %5952 = vmatprep.subr.bf16.mxu0 %v4449
        %5953 = vmatpush1.bf16.msra.mxu0 %v4448
        %5954 = vmatprep.subr.bf16.mxu0 %v4445
        %5955 = vmatpush1.bf16.msra.mxu0 %v4444
        %5956 = vmatprep.subr.bf16.mxu0 %v4441
        %5957 = vmatpush1.bf16.msra.mxu0 %v4440
        %5958 = vmatprep.subr.bf16.mxu0 %v4437
        %5959 = vmatpush1.bf16.msra.mxu0 %v4436
        %5960 = vmatprep.subr.bf16.mxu0 %v4497
        %5961 = vmatpush2.bf16.msra.mxu0 %v4496
        %5962 = vmatprep.subr.bf16.mxu0 %v4493
        %5963 = vmatpush2.bf16.msra.mxu0 %v4492
        %5964 = vmatprep.subr.bf16.mxu0 %v4489
        %5965 = vmatpush2.bf16.msra.mxu0 %v4488
        %5966 = vmatprep.subr.bf16.mxu0 %v4485
        %5967 = vmatpush2.bf16.msra.mxu0 %v4484
        %5968 = vmatprep.subr.bf16.mxu0 %v4481
        %5969 = vmatpush2.bf16.msra.mxu0 %v4480
        %5970 = vmatprep.subr.bf16.mxu0 %v4477
        %5971 = vmatpush2.bf16.msra.mxu0 %v4476
        %5972 = vmatprep.subr.bf16.mxu0 %v4473
        %5973 = vmatpush2.bf16.msra.mxu0 %v4472
        %5974 = vmatprep.subr.bf16.mxu0 %v4469
        %5975 = vmatpush2.bf16.msra.mxu0 %v4468
        %5976 = vmatprep.mubr.bf16.mxu0 %v964
        %5977 = vmatmul.mubr.bf16.gmra.mxu0 %v963
        %v5978 = vpop.f32.mrf.mxu0
        %v5979 = vadd.f32 %v5938, %v5978
        %v5980 = vpop.f32.mrf.mxu0
        %v5981 = vadd.f32 %v5940, %v5980
        %v5982 = vpop.f32.mrf.mxu0
        %v5983 = vpop.f32.mrf.mxu0
        %5984 = vdwg.mxu0
        %5985 = vmatprep.subr.bf16.mxu0 %v4529
        %5986 = vmatpush1.bf16.msra.mxu0 %v4528
        %5987 = vmatprep.subr.bf16.mxu0 %v4525
        %5988 = vmatpush1.bf16.msra.mxu0 %v4524
        %5989 = vmatprep.subr.bf16.mxu0 %v4521
        %5990 = vmatpush1.bf16.msra.mxu0 %v4520
        %5991 = vmatprep.subr.bf16.mxu0 %v4517
        %5992 = vmatpush1.bf16.msra.mxu0 %v4516
        %5993 = vmatprep.subr.bf16.mxu0 %v4513
        %5994 = vmatpush1.bf16.msra.mxu0 %v4512
        %5995 = vmatprep.subr.bf16.mxu0 %v4509
        %5996 = vmatpush1.bf16.msra.mxu0 %v4508
        %5997 = vmatprep.subr.bf16.mxu0 %v4505
        %5998 = vmatpush1.bf16.msra.mxu0 %v4504
        %5999 = vmatprep.subr.bf16.mxu0 %v4501
        %6000 = vmatpush1.bf16.msra.mxu0 %v4500
        %6001 = vmatprep.subr.bf16.mxu0 %v4561
        %6002 = vmatpush2.bf16.msra.mxu0 %v4560
        %6003 = vmatprep.subr.bf16.mxu0 %v4557
        %6004 = vmatpush2.bf16.msra.mxu0 %v4556
        %6005 = vmatprep.subr.bf16.mxu0 %v4553
        %6006 = vmatpush2.bf16.msra.mxu0 %v4552
        %6007 = vmatprep.subr.bf16.mxu0 %v4549
        %6008 = vmatpush2.bf16.msra.mxu0 %v4548
        %6009 = vmatprep.subr.bf16.mxu0 %v4545
        %6010 = vmatpush2.bf16.msra.mxu0 %v4544
        %6011 = vmatprep.subr.bf16.mxu0 %v4541
        %6012 = vmatpush2.bf16.msra.mxu0 %v4540
        %6013 = vmatprep.subr.bf16.mxu0 %v4537
        %6014 = vmatpush2.bf16.msra.mxu0 %v4536
        %6015 = vmatprep.subr.bf16.mxu0 %v4533
        %6016 = vmatpush2.bf16.msra.mxu0 %v4532
        %6017 = vmatprep.mubr.bf16.mxu0 %v966
        %6018 = vmatmul.mubr.bf16.gmra.mxu0 %v965
        %v6019 = vpop.f32.mrf.mxu0
        %v6020 = vadd.f32 %v5979, %v6019
        %v6021 = vpop.f32.mrf.mxu0
        %v6022 = vadd.f32 %v5981, %v6021
        %v6023 = vpop.f32.mrf.mxu0
        %v6024 = vpop.f32.mrf.mxu0
        %6025 = vdwg.mxu0
        %6026 = vmatprep.subr.bf16.mxu0 %v4593
        %6027 = vmatpush1.bf16.msra.mxu0 %v4592
        %6028 = vmatprep.subr.bf16.mxu0 %v4589
        %6029 = vmatpush1.bf16.msra.mxu0 %v4588
        %6030 = vmatprep.subr.bf16.mxu0 %v4585
        %6031 = vmatpush1.bf16.msra.mxu0 %v4584
        %6032 = vmatprep.subr.bf16.mxu0 %v4581
        %6033 = vmatpush1.bf16.msra.mxu0 %v4580
        %6034 = vmatprep.subr.bf16.mxu0 %v4577
        %6035 = vmatpush1.bf16.msra.mxu0 %v4576
        %6036 = vmatprep.subr.bf16.mxu0 %v4573
        %6037 = vmatpush1.bf16.msra.mxu0 %v4572
        %6038 = vmatprep.subr.bf16.mxu0 %v4569
        %6039 = vmatpush1.bf16.msra.mxu0 %v4568
        %6040 = vmatprep.subr.bf16.mxu0 %v4565
        %6041 = vmatpush1.bf16.msra.mxu0 %v4564
        %6042 = vmatprep.subr.bf16.mxu0 %v4625
        %6043 = vmatpush2.bf16.msra.mxu0 %v4624
        %6044 = vmatprep.subr.bf16.mxu0 %v4621
        %6045 = vmatpush2.bf16.msra.mxu0 %v4620
        %6046 = vmatprep.subr.bf16.mxu0 %v4617
        %6047 = vmatpush2.bf16.msra.mxu0 %v4616
        %6048 = vmatprep.subr.bf16.mxu0 %v4613
        %6049 = vmatpush2.bf16.msra.mxu0 %v4612
        %6050 = vmatprep.subr.bf16.mxu0 %v4609
        %6051 = vmatpush2.bf16.msra.mxu0 %v4608
        %6052 = vmatprep.subr.bf16.mxu0 %v4605
        %6053 = vmatpush2.bf16.msra.mxu0 %v4604
        %6054 = vmatprep.subr.bf16.mxu0 %v4601
        %6055 = vmatpush2.bf16.msra.mxu0 %v4600
        %6056 = vmatprep.subr.bf16.mxu0 %v4597
        %6057 = vmatpush2.bf16.msra.mxu0 %v4596
        %6058 = vmatprep.mubr.bf16.mxu0 %v968
        %6059 = vmatmul.mubr.bf16.gmra.mxu0 %v967
        %v6060 = vpop.f32.mrf.mxu0
        %v6061 = vadd.f32 %v6020, %v6060
        %v6062 = vpop.f32.mrf.mxu0
        %v6063 = vadd.f32 %v6022, %v6062
        %v6064 = vpop.f32.mrf.mxu0
        %v6065 = vpop.f32.mrf.mxu0
        %6066 = vdwg.mxu0
        %6067 = vmatprep.subr.bf16.mxu0 %v4657
        %6068 = vmatpush1.bf16.msra.mxu0 %v4656
        %6069 = vmatprep.subr.bf16.mxu0 %v4653
        %6070 = vmatpush1.bf16.msra.mxu0 %v4652
        %6071 = vmatprep.subr.bf16.mxu0 %v4649
        %6072 = vmatpush1.bf16.msra.mxu0 %v4648
        %6073 = vmatprep.subr.bf16.mxu0 %v4645
        %6074 = vmatpush1.bf16.msra.mxu0 %v4644
        %6075 = vmatprep.subr.bf16.mxu0 %v4641
        %6076 = vmatpush1.bf16.msra.mxu0 %v4640
        %6077 = vmatprep.subr.bf16.mxu0 %v4637
        %6078 = vmatpush1.bf16.msra.mxu0 %v4636
        %6079 = vmatprep.subr.bf16.mxu0 %v4633
        %6080 = vmatpush1.bf16.msra.mxu0 %v4632
        %6081 = vmatprep.subr.bf16.mxu0 %v4629
        %6082 = vmatpush1.bf16.msra.mxu0 %v4628
        %6083 = vmatprep.subr.bf16.mxu0 %v4689
        %6084 = vmatpush2.bf16.msra.mxu0 %v4688
        %6085 = vmatprep.subr.bf16.mxu0 %v4685
        %6086 = vmatpush2.bf16.msra.mxu0 %v4684
        %6087 = vmatprep.subr.bf16.mxu0 %v4681
        %6088 = vmatpush2.bf16.msra.mxu0 %v4680
        %6089 = vmatprep.subr.bf16.mxu0 %v4677
        %6090 = vmatpush2.bf16.msra.mxu0 %v4676
        %6091 = vmatprep.subr.bf16.mxu0 %v4673
        %6092 = vmatpush2.bf16.msra.mxu0 %v4672
        %6093 = vmatprep.subr.bf16.mxu0 %v4669
        %6094 = vmatpush2.bf16.msra.mxu0 %v4668
        %6095 = vmatprep.subr.bf16.mxu0 %v4665
        %6096 = vmatpush2.bf16.msra.mxu0 %v4664
        %6097 = vmatprep.subr.bf16.mxu0 %v4661
        %6098 = vmatpush2.bf16.msra.mxu0 %v4660
        %6099 = vmatprep.mubr.bf16.mxu0 %v970
        %6100 = vmatmul.mubr.bf16.gmra.mxu0 %v969
        %v6101 = vpop.f32.mrf.mxu0
        %v6102 = vadd.f32 %v6061, %v6101
        %v6103 = vpop.f32.mrf.mxu0
        %v6104 = vadd.f32 %v6063, %v6103
        %v6105 = vpop.f32.mrf.mxu0
        %v6106 = vpop.f32.mrf.mxu0
        %6107 = vdwg.mxu0
        %6108 = vmatprep.subr.bf16.mxu0 %v4721
        %6109 = vmatpush1.bf16.msra.mxu0 %v4720
        %6110 = vmatprep.subr.bf16.mxu0 %v4717
        %6111 = vmatpush1.bf16.msra.mxu0 %v4716
        %6112 = vmatprep.subr.bf16.mxu0 %v4713
        %6113 = vmatpush1.bf16.msra.mxu0 %v4712
        %6114 = vmatprep.subr.bf16.mxu0 %v4709
        %6115 = vmatpush1.bf16.msra.mxu0 %v4708
        %6116 = vmatprep.subr.bf16.mxu0 %v4705
        %6117 = vmatpush1.bf16.msra.mxu0 %v4704
        %6118 = vmatprep.subr.bf16.mxu0 %v4701
        %6119 = vmatpush1.bf16.msra.mxu0 %v4700
        %6120 = vmatprep.subr.bf16.mxu0 %v4697
        %6121 = vmatpush1.bf16.msra.mxu0 %v4696
        %6122 = vmatprep.subr.bf16.mxu0 %v4693
        %6123 = vmatpush1.bf16.msra.mxu0 %v4692
        %6124 = vmatprep.subr.bf16.mxu0 %v4753
        %6125 = vmatpush2.bf16.msra.mxu0 %v4752
        %6126 = vmatprep.subr.bf16.mxu0 %v4749
        %6127 = vmatpush2.bf16.msra.mxu0 %v4748
        %6128 = vmatprep.subr.bf16.mxu0 %v4745
        %6129 = vmatpush2.bf16.msra.mxu0 %v4744
        %6130 = vmatprep.subr.bf16.mxu0 %v4741
        %6131 = vmatpush2.bf16.msra.mxu0 %v4740
        %6132 = vmatprep.subr.bf16.mxu0 %v4737
        %6133 = vmatpush2.bf16.msra.mxu0 %v4736
        %6134 = vmatprep.subr.bf16.mxu0 %v4733
        %6135 = vmatpush2.bf16.msra.mxu0 %v4732
        %6136 = vmatprep.subr.bf16.mxu0 %v4729
        %6137 = vmatpush2.bf16.msra.mxu0 %v4728
        %6138 = vmatprep.subr.bf16.mxu0 %v4725
        %6139 = vmatpush2.bf16.msra.mxu0 %v4724
        %6140 = vmatprep.mubr.bf16.mxu0 %v972
        %6141 = vmatmul.mubr.bf16.gmra.mxu0 %v971
        %v6142 = vpop.f32.mrf.mxu0
        %v6143 = vadd.f32 %v6102, %v6142
        %v6144 = vpop.f32.mrf.mxu0
        %v6145 = vadd.f32 %v6104, %v6144
        %v6146 = vpop.f32.mrf.mxu0
        %v6147 = vpop.f32.mrf.mxu0
        %6148 = vdwg.mxu0
        %6149 = vmatprep.subr.bf16.mxu0 %v4785
        %6150 = vmatpush1.bf16.msra.mxu0 %v4784
        %6151 = vmatprep.subr.bf16.mxu0 %v4781
        %6152 = vmatpush1.bf16.msra.mxu0 %v4780
        %6153 = vmatprep.subr.bf16.mxu0 %v4777
        %6154 = vmatpush1.bf16.msra.mxu0 %v4776
        %6155 = vmatprep.subr.bf16.mxu0 %v4773
        %6156 = vmatpush1.bf16.msra.mxu0 %v4772
        %6157 = vmatprep.subr.bf16.mxu0 %v4769
        %6158 = vmatpush1.bf16.msra.mxu0 %v4768
        %6159 = vmatprep.subr.bf16.mxu0 %v4765
        %6160 = vmatpush1.bf16.msra.mxu0 %v4764
        %6161 = vmatprep.subr.bf16.mxu0 %v4761
        %6162 = vmatpush1.bf16.msra.mxu0 %v4760
        %6163 = vmatprep.subr.bf16.mxu0 %v4757
        %6164 = vmatpush1.bf16.msra.mxu0 %v4756
        %6165 = vmatprep.subr.bf16.mxu0 %v4817
        %6166 = vmatpush2.bf16.msra.mxu0 %v4816
        %6167 = vmatprep.subr.bf16.mxu0 %v4813
        %6168 = vmatpush2.bf16.msra.mxu0 %v4812
        %6169 = vmatprep.subr.bf16.mxu0 %v4809
        %6170 = vmatpush2.bf16.msra.mxu0 %v4808
        %6171 = vmatprep.subr.bf16.mxu0 %v4805
        %6172 = vmatpush2.bf16.msra.mxu0 %v4804
        %6173 = vmatprep.subr.bf16.mxu0 %v4801
        %6174 = vmatpush2.bf16.msra.mxu0 %v4800
        %6175 = vmatprep.subr.bf16.mxu0 %v4797
        %6176 = vmatpush2.bf16.msra.mxu0 %v4796
        %6177 = vmatprep.subr.bf16.mxu0 %v4793
        %6178 = vmatpush2.bf16.msra.mxu0 %v4792
        %6179 = vmatprep.subr.bf16.mxu0 %v4789
        %6180 = vmatpush2.bf16.msra.mxu0 %v4788
        %6181 = vmatprep.mubr.bf16.mxu0 %v974
        %6182 = vmatmul.mubr.bf16.gmra.mxu0 %v973
        %v6183 = vpop.f32.mrf.mxu0
        %v6184 = vadd.f32 %v6143, %v6183
        %v6185 = vpop.f32.mrf.mxu0
        %v6186 = vadd.f32 %v6145, %v6185
        %v6187 = vpop.f32.mrf.mxu0
        %v6188 = vpop.f32.mrf.mxu0
        %6189 = vdwg.mxu0
        %6190 = vmatprep.subr.bf16.mxu0 %v4849
        %6191 = vmatpush1.bf16.msra.mxu0 %v4848
        %6192 = vmatprep.subr.bf16.mxu0 %v4845
        %6193 = vmatpush1.bf16.msra.mxu0 %v4844
        %6194 = vmatprep.subr.bf16.mxu0 %v4841
        %6195 = vmatpush1.bf16.msra.mxu0 %v4840
        %6196 = vmatprep.subr.bf16.mxu0 %v4837
        %6197 = vmatpush1.bf16.msra.mxu0 %v4836
        %6198 = vmatprep.subr.bf16.mxu0 %v4833
        %6199 = vmatpush1.bf16.msra.mxu0 %v4832
        %6200 = vmatprep.subr.bf16.mxu0 %v4829
        %6201 = vmatpush1.bf16.msra.mxu0 %v4828
        %6202 = vmatprep.subr.bf16.mxu0 %v4825
        %6203 = vmatpush1.bf16.msra.mxu0 %v4824
        %6204 = vmatprep.subr.bf16.mxu0 %v4821
        %6205 = vmatpush1.bf16.msra.mxu0 %v4820
        %6206 = vmatprep.subr.bf16.mxu0 %v4881
        %6207 = vmatpush2.bf16.msra.mxu0 %v4880
        %6208 = vmatprep.subr.bf16.mxu0 %v4877
        %6209 = vmatpush2.bf16.msra.mxu0 %v4876
        %6210 = vmatprep.subr.bf16.mxu0 %v4873
        %6211 = vmatpush2.bf16.msra.mxu0 %v4872
        %6212 = vmatprep.subr.bf16.mxu0 %v4869
        %6213 = vmatpush2.bf16.msra.mxu0 %v4868
        %6214 = vmatprep.subr.bf16.mxu0 %v4865
        %6215 = vmatpush2.bf16.msra.mxu0 %v4864
        %6216 = vmatprep.subr.bf16.mxu0 %v4861
        %6217 = vmatpush2.bf16.msra.mxu0 %v4860
        %6218 = vmatprep.subr.bf16.mxu0 %v4857
        %6219 = vmatpush2.bf16.msra.mxu0 %v4856
        %6220 = vmatprep.subr.bf16.mxu0 %v4853
        %6221 = vmatpush2.bf16.msra.mxu0 %v4852
        %6222 = vmatprep.mubr.bf16.mxu0 %v976
        %6223 = vmatmul.mubr.bf16.gmra.mxu0 %v975
        %v6224 = vpop.f32.mrf.mxu0
        %v6225 = vadd.f32 %v6184, %v6224
        %v6226 = vpop.f32.mrf.mxu0
        %v6227 = vadd.f32 %v6186, %v6226
        %v6228 = vpop.f32.mrf.mxu0
        %v6229 = vpop.f32.mrf.mxu0
        %6230 = vdwg.mxu0
        %6231 = vmatprep.subr.bf16.mxu0 %v4913
        %6232 = vmatpush1.bf16.msra.mxu0 %v4912
        %6233 = vmatprep.subr.bf16.mxu0 %v4909
        %6234 = vmatpush1.bf16.msra.mxu0 %v4908
        %6235 = vmatprep.subr.bf16.mxu0 %v4905
        %6236 = vmatpush1.bf16.msra.mxu0 %v4904
        %6237 = vmatprep.subr.bf16.mxu0 %v4901
        %6238 = vmatpush1.bf16.msra.mxu0 %v4900
        %6239 = vmatprep.subr.bf16.mxu0 %v4897
        %6240 = vmatpush1.bf16.msra.mxu0 %v4896
        %6241 = vmatprep.subr.bf16.mxu0 %v4893
        %6242 = vmatpush1.bf16.msra.mxu0 %v4892
        %6243 = vmatprep.subr.bf16.mxu0 %v4889
        %6244 = vmatpush1.bf16.msra.mxu0 %v4888
        %6245 = vmatprep.subr.bf16.mxu0 %v4885
        %6246 = vmatpush1.bf16.msra.mxu0 %v4884
        %6247 = vmatprep.subr.bf16.mxu0 %v4945
        %6248 = vmatpush2.bf16.msra.mxu0 %v4944
        %6249 = vmatprep.subr.bf16.mxu0 %v4941
        %6250 = vmatpush2.bf16.msra.mxu0 %v4940
        %6251 = vmatprep.subr.bf16.mxu0 %v4937
        %6252 = vmatpush2.bf16.msra.mxu0 %v4936
        %6253 = vmatprep.subr.bf16.mxu0 %v4933
        %6254 = vmatpush2.bf16.msra.mxu0 %v4932
        %6255 = vmatprep.subr.bf16.mxu0 %v4929
        %6256 = vmatpush2.bf16.msra.mxu0 %v4928
        %6257 = vmatprep.subr.bf16.mxu0 %v4925
        %6258 = vmatpush2.bf16.msra.mxu0 %v4924
        %6259 = vmatprep.subr.bf16.mxu0 %v4921
        %6260 = vmatpush2.bf16.msra.mxu0 %v4920
        %6261 = vmatprep.subr.bf16.mxu0 %v4917
        %6262 = vmatpush2.bf16.msra.mxu0 %v4916
        %6263 = vmatprep.mubr.bf16.mxu0 %v978
        %6264 = vmatmul.mubr.bf16.gmra.mxu0 %v977
        %v6265 = vpop.f32.mrf.mxu0
        %v6266 = vadd.f32 %v6225, %v6265
        %v6267 = vpop.f32.mrf.mxu0
        %v6268 = vadd.f32 %v6227, %v6267
        %v6269 = vpop.f32.mrf.mxu0
        %v6270 = vpop.f32.mrf.mxu0
        %6271 = vdwg.mxu0
        %6272 = vmatprep.subr.bf16.mxu0 %v4977
        %6273 = vmatpush1.bf16.msra.mxu0 %v4976
        %6274 = vmatprep.subr.bf16.mxu0 %v4973
        %6275 = vmatpush1.bf16.msra.mxu0 %v4972
        %6276 = vmatprep.subr.bf16.mxu0 %v4969
        %6277 = vmatpush1.bf16.msra.mxu0 %v4968
        %6278 = vmatprep.subr.bf16.mxu0 %v4965
        %6279 = vmatpush1.bf16.msra.mxu0 %v4964
        %6280 = vmatprep.subr.bf16.mxu0 %v4961
        %6281 = vmatpush1.bf16.msra.mxu0 %v4960
        %6282 = vmatprep.subr.bf16.mxu0 %v4957
        %6283 = vmatpush1.bf16.msra.mxu0 %v4956
        %6284 = vmatprep.subr.bf16.mxu0 %v4953
        %6285 = vmatpush1.bf16.msra.mxu0 %v4952
        %6286 = vmatprep.subr.bf16.mxu0 %v4949
        %6287 = vmatpush1.bf16.msra.mxu0 %v4948
        %6288 = vmatprep.subr.bf16.mxu0 0
        %6289 = vmatpush2.bf16.msra.mxu0 0
        %6290 = vmatprep.subr.bf16.mxu0 0
        %6291 = vmatpush2.bf16.msra.mxu0 0
        %6292 = vmatprep.subr.bf16.mxu0 0
        %6293 = vmatpush2.bf16.msra.mxu0 0
        %6294 = vmatprep.subr.bf16.mxu0 0
        %6295 = vmatpush2.bf16.msra.mxu0 0
        %6296 = vmatprep.subr.bf16.mxu0 0
        %6297 = vmatpush2.bf16.msra.mxu0 0
        %6298 = vmatprep.subr.bf16.mxu0 0
        %6299 = vmatpush2.bf16.msra.mxu0 0
        %6300 = vmatprep.subr.bf16.mxu0 0
        %6301 = vmatpush2.bf16.msra.mxu0 0
        %6302 = vmatprep.subr.bf16.mxu0 0
        %6303 = vmatpush2.bf16.msra.mxu0 0
        %6304 = vmatprep.mubr.bf16.mxu0 0
        %6305 = vmatmul.mubr.bf16.gmra.mxu0 %v979
        %v6306 = vpop.f32.mrf.mxu0
        %v6307 = vadd.f32 %v6266, %v6306
        %v6308 = vpop.f32.mrf.mxu0
        %v6309 = vadd.f32 %v6268, %v6308
        %v6310 = vpop.f32.mrf.mxu0
        %v6311 = vpop.f32.mrf.mxu0
        %6312 = vdwg.mxu0
        %6313 = vmatprep.subr.bf16.mxu0 %v4211
        %6314 = vmatpush1.bf16.msra.mxu0 %v4210
        %6315 = vmatprep.subr.bf16.mxu0 %v4207
        %6316 = vmatpush1.bf16.msra.mxu0 %v4206
        %6317 = vmatprep.subr.bf16.mxu0 %v4203
        %6318 = vmatpush1.bf16.msra.mxu0 %v4202
        %6319 = vmatprep.subr.bf16.mxu0 %v4199
        %6320 = vmatpush1.bf16.msra.mxu0 %v4198
        %6321 = vmatprep.subr.bf16.mxu0 %v4195
        %6322 = vmatpush1.bf16.msra.mxu0 %v4194
        %6323 = vmatprep.subr.bf16.mxu0 %v4191
        %6324 = vmatpush1.bf16.msra.mxu0 %v4190
        %6325 = vmatprep.subr.bf16.mxu0 %v4187
        %6326 = vmatpush1.bf16.msra.mxu0 %v4186
        %6327 = vmatprep.subr.bf16.mxu0 %v4183
        %6328 = vmatpush1.bf16.msra.mxu0 %v4182
        %6329 = vmatprep.subr.bf16.mxu0 %v4243
        %6330 = vmatpush2.bf16.msra.mxu0 %v4242
        %6331 = vmatprep.subr.bf16.mxu0 %v4239
        %6332 = vmatpush2.bf16.msra.mxu0 %v4238
        %6333 = vmatprep.subr.bf16.mxu0 %v4235
        %6334 = vmatpush2.bf16.msra.mxu0 %v4234
        %6335 = vmatprep.subr.bf16.mxu0 %v4231
        %6336 = vmatpush2.bf16.msra.mxu0 %v4230
        %6337 = vmatprep.subr.bf16.mxu0 %v4227
        %6338 = vmatpush2.bf16.msra.mxu0 %v4226
        %6339 = vmatprep.subr.bf16.mxu0 %v4223
        %6340 = vmatpush2.bf16.msra.mxu0 %v4222
        %6341 = vmatprep.subr.bf16.mxu0 %v4219
        %6342 = vmatpush2.bf16.msra.mxu0 %v4218
        %6343 = vmatprep.subr.bf16.mxu0 %v4215
        %6344 = vmatpush2.bf16.msra.mxu0 %v4214
        %6345 = vmatprep.mubr.bf16.mxu0 %v956
        %6346 = vmatmul.mubr.bf16.gmra.mxu0 %v955
        %v6347 = vpop.f32.mrf.mxu0
        %v6348 = vadd.f32 0.0, %v6347
        %v6349 = vpop.f32.mrf.mxu0
        %v6350 = vadd.f32 0.0, %v6349
        %v6351 = vpop.f32.mrf.mxu0
        %v6352 = vpop.f32.mrf.mxu0
        %6353 = vdwg.mxu0
        %6354 = vmatprep.subr.bf16.mxu0 %v4275
        %6355 = vmatpush1.bf16.msra.mxu0 %v4274
        %6356 = vmatprep.subr.bf16.mxu0 %v4271
        %6357 = vmatpush1.bf16.msra.mxu0 %v4270
        %6358 = vmatprep.subr.bf16.mxu0 %v4267
        %6359 = vmatpush1.bf16.msra.mxu0 %v4266
        %6360 = vmatprep.subr.bf16.mxu0 %v4263
        %6361 = vmatpush1.bf16.msra.mxu0 %v4262
        %6362 = vmatprep.subr.bf16.mxu0 %v4259
        %6363 = vmatpush1.bf16.msra.mxu0 %v4258
        %6364 = vmatprep.subr.bf16.mxu0 %v4255
        %6365 = vmatpush1.bf16.msra.mxu0 %v4254
        %6366 = vmatprep.subr.bf16.mxu0 %v4251
        %6367 = vmatpush1.bf16.msra.mxu0 %v4250
        %6368 = vmatprep.subr.bf16.mxu0 %v4247
        %6369 = vmatpush1.bf16.msra.mxu0 %v4246
        %6370 = vmatprep.subr.bf16.mxu0 %v4307
        %6371 = vmatpush2.bf16.msra.mxu0 %v4306
        %6372 = vmatprep.subr.bf16.mxu0 %v4303
        %6373 = vmatpush2.bf16.msra.mxu0 %v4302
        %6374 = vmatprep.subr.bf16.mxu0 %v4299
        %6375 = vmatpush2.bf16.msra.mxu0 %v4298
        %6376 = vmatprep.subr.bf16.mxu0 %v4295
        %6377 = vmatpush2.bf16.msra.mxu0 %v4294
        %6378 = vmatprep.subr.bf16.mxu0 %v4291
        %6379 = vmatpush2.bf16.msra.mxu0 %v4290
        %6380 = vmatprep.subr.bf16.mxu0 %v4287
        %6381 = vmatpush2.bf16.msra.mxu0 %v4286
        %6382 = vmatprep.subr.bf16.mxu0 %v4283
        %6383 = vmatpush2.bf16.msra.mxu0 %v4282
        %6384 = vmatprep.subr.bf16.mxu0 %v4279
        %6385 = vmatpush2.bf16.msra.mxu0 %v4278
        %6386 = vmatprep.mubr.bf16.mxu0 %v958
        %6387 = vmatmul.mubr.bf16.gmra.mxu0 %v957
        %v6388 = vpop.f32.mrf.mxu0
        %v6389 = vadd.f32 %v6348, %v6388
        %v6390 = vpop.f32.mrf.mxu0
        %v6391 = vadd.f32 %v6350, %v6390
        %v6392 = vpop.f32.mrf.mxu0
        %v6393 = vpop.f32.mrf.mxu0
        %6394 = vdwg.mxu0
        %6395 = vmatprep.subr.bf16.mxu0 %v4339
        %6396 = vmatpush1.bf16.msra.mxu0 %v4338
        %6397 = vmatprep.subr.bf16.mxu0 %v4335
        %6398 = vmatpush1.bf16.msra.mxu0 %v4334
        %6399 = vmatprep.subr.bf16.mxu0 %v4331
        %6400 = vmatpush1.bf16.msra.mxu0 %v4330
        %6401 = vmatprep.subr.bf16.mxu0 %v4327
        %6402 = vmatpush1.bf16.msra.mxu0 %v4326
        %6403 = vmatprep.subr.bf16.mxu0 %v4323
        %6404 = vmatpush1.bf16.msra.mxu0 %v4322
        %6405 = vmatprep.subr.bf16.mxu0 %v4319
        %6406 = vmatpush1.bf16.msra.mxu0 %v4318
        %6407 = vmatprep.subr.bf16.mxu0 %v4315
        %6408 = vmatpush1.bf16.msra.mxu0 %v4314
        %6409 = vmatprep.subr.bf16.mxu0 %v4311
        %6410 = vmatpush1.bf16.msra.mxu0 %v4310
        %6411 = vmatprep.subr.bf16.mxu0 %v4371
        %6412 = vmatpush2.bf16.msra.mxu0 %v4370
        %6413 = vmatprep.subr.bf16.mxu0 %v4367
        %6414 = vmatpush2.bf16.msra.mxu0 %v4366
        %6415 = vmatprep.subr.bf16.mxu0 %v4363
        %6416 = vmatpush2.bf16.msra.mxu0 %v4362
        %6417 = vmatprep.subr.bf16.mxu0 %v4359
        %6418 = vmatpush2.bf16.msra.mxu0 %v4358
        %6419 = vmatprep.subr.bf16.mxu0 %v4355
        %6420 = vmatpush2.bf16.msra.mxu0 %v4354
        %6421 = vmatprep.subr.bf16.mxu0 %v4351
        %6422 = vmatpush2.bf16.msra.mxu0 %v4350
        %6423 = vmatprep.subr.bf16.mxu0 %v4347
        %6424 = vmatpush2.bf16.msra.mxu0 %v4346
        %6425 = vmatprep.subr.bf16.mxu0 %v4343
        %6426 = vmatpush2.bf16.msra.mxu0 %v4342
        %6427 = vmatprep.mubr.bf16.mxu0 %v960
        %6428 = vmatmul.mubr.bf16.gmra.mxu0 %v959
        %v6429 = vpop.f32.mrf.mxu0
        %v6430 = vadd.f32 %v6389, %v6429
        %v6431 = vpop.f32.mrf.mxu0
        %v6432 = vadd.f32 %v6391, %v6431
        %v6433 = vpop.f32.mrf.mxu0
        %v6434 = vpop.f32.mrf.mxu0
        %6435 = vdwg.mxu0
        %6436 = vmatprep.subr.bf16.mxu0 %v4403
        %6437 = vmatpush1.bf16.msra.mxu0 %v4402
        %6438 = vmatprep.subr.bf16.mxu0 %v4399
        %6439 = vmatpush1.bf16.msra.mxu0 %v4398
        %6440 = vmatprep.subr.bf16.mxu0 %v4395
        %6441 = vmatpush1.bf16.msra.mxu0 %v4394
        %6442 = vmatprep.subr.bf16.mxu0 %v4391
        %6443 = vmatpush1.bf16.msra.mxu0 %v4390
        %6444 = vmatprep.subr.bf16.mxu0 %v4387
        %6445 = vmatpush1.bf16.msra.mxu0 %v4386
        %6446 = vmatprep.subr.bf16.mxu0 %v4383
        %6447 = vmatpush1.bf16.msra.mxu0 %v4382
        %6448 = vmatprep.subr.bf16.mxu0 %v4379
        %6449 = vmatpush1.bf16.msra.mxu0 %v4378
        %6450 = vmatprep.subr.bf16.mxu0 %v4375
        %6451 = vmatpush1.bf16.msra.mxu0 %v4374
        %6452 = vmatprep.subr.bf16.mxu0 %v4435
        %6453 = vmatpush2.bf16.msra.mxu0 %v4434
        %6454 = vmatprep.subr.bf16.mxu0 %v4431
        %6455 = vmatpush2.bf16.msra.mxu0 %v4430
        %6456 = vmatprep.subr.bf16.mxu0 %v4427
        %6457 = vmatpush2.bf16.msra.mxu0 %v4426
        %6458 = vmatprep.subr.bf16.mxu0 %v4423
        %6459 = vmatpush2.bf16.msra.mxu0 %v4422
        %6460 = vmatprep.subr.bf16.mxu0 %v4419
        %6461 = vmatpush2.bf16.msra.mxu0 %v4418
        %6462 = vmatprep.subr.bf16.mxu0 %v4415
        %6463 = vmatpush2.bf16.msra.mxu0 %v4414
        %6464 = vmatprep.subr.bf16.mxu0 %v4411
        %6465 = vmatpush2.bf16.msra.mxu0 %v4410
        %6466 = vmatprep.subr.bf16.mxu0 %v4407
        %6467 = vmatpush2.bf16.msra.mxu0 %v4406
        %6468 = vmatprep.mubr.bf16.mxu0 %v962
        %6469 = vmatmul.mubr.bf16.gmra.mxu0 %v961
        %v6470 = vpop.f32.mrf.mxu0
        %v6471 = vadd.f32 %v6430, %v6470
        %v6472 = vpop.f32.mrf.mxu0
        %v6473 = vadd.f32 %v6432, %v6472
        %v6474 = vpop.f32.mrf.mxu0
        %v6475 = vpop.f32.mrf.mxu0
        %6476 = vdwg.mxu0
        %6477 = vmatprep.subr.bf16.mxu0 %v4467
        %6478 = vmatpush1.bf16.msra.mxu0 %v4466
        %6479 = vmatprep.subr.bf16.mxu0 %v4463
        %6480 = vmatpush1.bf16.msra.mxu0 %v4462
        %6481 = vmatprep.subr.bf16.mxu0 %v4459
        %6482 = vmatpush1.bf16.msra.mxu0 %v4458
        %6483 = vmatprep.subr.bf16.mxu0 %v4455
        %6484 = vmatpush1.bf16.msra.mxu0 %v4454
        %6485 = vmatprep.subr.bf16.mxu0 %v4451
        %6486 = vmatpush1.bf16.msra.mxu0 %v4450
        %6487 = vmatprep.subr.bf16.mxu0 %v4447
        %6488 = vmatpush1.bf16.msra.mxu0 %v4446
        %6489 = vmatprep.subr.bf16.mxu0 %v4443
        %6490 = vmatpush1.bf16.msra.mxu0 %v4442
        %6491 = vmatprep.subr.bf16.mxu0 %v4439
        %6492 = vmatpush1.bf16.msra.mxu0 %v4438
        %6493 = vmatprep.subr.bf16.mxu0 %v4499
        %6494 = vmatpush2.bf16.msra.mxu0 %v4498
        %6495 = vmatprep.subr.bf16.mxu0 %v4495
        %6496 = vmatpush2.bf16.msra.mxu0 %v4494
        %6497 = vmatprep.subr.bf16.mxu0 %v4491
        %6498 = vmatpush2.bf16.msra.mxu0 %v4490
        %6499 = vmatprep.subr.bf16.mxu0 %v4487
        %6500 = vmatpush2.bf16.msra.mxu0 %v4486
        %6501 = vmatprep.subr.bf16.mxu0 %v4483
        %6502 = vmatpush2.bf16.msra.mxu0 %v4482
        %6503 = vmatprep.subr.bf16.mxu0 %v4479
        %6504 = vmatpush2.bf16.msra.mxu0 %v4478
        %6505 = vmatprep.subr.bf16.mxu0 %v4475
        %6506 = vmatpush2.bf16.msra.mxu0 %v4474
        %6507 = vmatprep.subr.bf16.mxu0 %v4471
        %6508 = vmatpush2.bf16.msra.mxu0 %v4470
        %6509 = vmatprep.mubr.bf16.mxu0 %v964
        %6510 = vmatmul.mubr.bf16.gmra.mxu0 %v963
        %v6511 = vpop.f32.mrf.mxu0
        %v6512 = vadd.f32 %v6471, %v6511
        %v6513 = vpop.f32.mrf.mxu0
        %v6514 = vadd.f32 %v6473, %v6513
        %v6515 = vpop.f32.mrf.mxu0
        %v6516 = vpop.f32.mrf.mxu0
        %6517 = vdwg.mxu0
        %6518 = vmatprep.subr.bf16.mxu0 %v4531
        %6519 = vmatpush1.bf16.msra.mxu0 %v4530
        %6520 = vmatprep.subr.bf16.mxu0 %v4527
        %6521 = vmatpush1.bf16.msra.mxu0 %v4526
        %6522 = vmatprep.subr.bf16.mxu0 %v4523
        %6523 = vmatpush1.bf16.msra.mxu0 %v4522
        %6524 = vmatprep.subr.bf16.mxu0 %v4519
        %6525 = vmatpush1.bf16.msra.mxu0 %v4518
        %6526 = vmatprep.subr.bf16.mxu0 %v4515
        %6527 = vmatpush1.bf16.msra.mxu0 %v4514
        %6528 = vmatprep.subr.bf16.mxu0 %v4511
        %6529 = vmatpush1.bf16.msra.mxu0 %v4510
        %6530 = vmatprep.subr.bf16.mxu0 %v4507
        %6531 = vmatpush1.bf16.msra.mxu0 %v4506
        %6532 = vmatprep.subr.bf16.mxu0 %v4503
        %6533 = vmatpush1.bf16.msra.mxu0 %v4502
        %6534 = vmatprep.subr.bf16.mxu0 %v4563
        %6535 = vmatpush2.bf16.msra.mxu0 %v4562
        %6536 = vmatprep.subr.bf16.mxu0 %v4559
        %6537 = vmatpush2.bf16.msra.mxu0 %v4558
        %6538 = vmatprep.subr.bf16.mxu0 %v4555
        %6539 = vmatpush2.bf16.msra.mxu0 %v4554
        %6540 = vmatprep.subr.bf16.mxu0 %v4551
        %6541 = vmatpush2.bf16.msra.mxu0 %v4550
        %6542 = vmatprep.subr.bf16.mxu0 %v4547
        %6543 = vmatpush2.bf16.msra.mxu0 %v4546
        %6544 = vmatprep.subr.bf16.mxu0 %v4543
        %6545 = vmatpush2.bf16.msra.mxu0 %v4542
        %6546 = vmatprep.subr.bf16.mxu0 %v4539
        %6547 = vmatpush2.bf16.msra.mxu0 %v4538
        %6548 = vmatprep.subr.bf16.mxu0 %v4535
        %6549 = vmatpush2.bf16.msra.mxu0 %v4534
        %6550 = vmatprep.mubr.bf16.mxu0 %v966
        %6551 = vmatmul.mubr.bf16.gmra.mxu0 %v965
        %v6552 = vpop.f32.mrf.mxu0
        %v6553 = vadd.f32 %v6512, %v6552
        %v6554 = vpop.f32.mrf.mxu0
        %v6555 = vadd.f32 %v6514, %v6554
        %v6556 = vpop.f32.mrf.mxu0
        %v6557 = vpop.f32.mrf.mxu0
        %6558 = vdwg.mxu0
        %6559 = vmatprep.subr.bf16.mxu0 %v4595
        %6560 = vmatpush1.bf16.msra.mxu0 %v4594
        %6561 = vmatprep.subr.bf16.mxu0 %v4591
        %6562 = vmatpush1.bf16.msra.mxu0 %v4590
        %6563 = vmatprep.subr.bf16.mxu0 %v4587
        %6564 = vmatpush1.bf16.msra.mxu0 %v4586
        %6565 = vmatprep.subr.bf16.mxu0 %v4583
        %6566 = vmatpush1.bf16.msra.mxu0 %v4582
        %6567 = vmatprep.subr.bf16.mxu0 %v4579
        %6568 = vmatpush1.bf16.msra.mxu0 %v4578
        %6569 = vmatprep.subr.bf16.mxu0 %v4575
        %6570 = vmatpush1.bf16.msra.mxu0 %v4574
        %6571 = vmatprep.subr.bf16.mxu0 %v4571
        %6572 = vmatpush1.bf16.msra.mxu0 %v4570
        %6573 = vmatprep.subr.bf16.mxu0 %v4567
        %6574 = vmatpush1.bf16.msra.mxu0 %v4566
        %6575 = vmatprep.subr.bf16.mxu0 %v4627
        %6576 = vmatpush2.bf16.msra.mxu0 %v4626
        %6577 = vmatprep.subr.bf16.mxu0 %v4623
        %6578 = vmatpush2.bf16.msra.mxu0 %v4622
        %6579 = vmatprep.subr.bf16.mxu0 %v4619
        %6580 = vmatpush2.bf16.msra.mxu0 %v4618
        %6581 = vmatprep.subr.bf16.mxu0 %v4615
        %6582 = vmatpush2.bf16.msra.mxu0 %v4614
        %6583 = vmatprep.subr.bf16.mxu0 %v4611
        %6584 = vmatpush2.bf16.msra.mxu0 %v4610
        %6585 = vmatprep.subr.bf16.mxu0 %v4607
        %6586 = vmatpush2.bf16.msra.mxu0 %v4606
        %6587 = vmatprep.subr.bf16.mxu0 %v4603
        %6588 = vmatpush2.bf16.msra.mxu0 %v4602
        %6589 = vmatprep.subr.bf16.mxu0 %v4599
        %6590 = vmatpush2.bf16.msra.mxu0 %v4598
        %6591 = vmatprep.mubr.bf16.mxu0 %v968
        %6592 = vmatmul.mubr.bf16.gmra.mxu0 %v967
        %v6593 = vpop.f32.mrf.mxu0
        %v6594 = vadd.f32 %v6553, %v6593
        %v6595 = vpop.f32.mrf.mxu0
        %v6596 = vadd.f32 %v6555, %v6595
        %v6597 = vpop.f32.mrf.mxu0
        %v6598 = vpop.f32.mrf.mxu0
        %6599 = vdwg.mxu0
        %6600 = vmatprep.subr.bf16.mxu0 %v4659
        %6601 = vmatpush1.bf16.msra.mxu0 %v4658
        %6602 = vmatprep.subr.bf16.mxu0 %v4655
        %6603 = vmatpush1.bf16.msra.mxu0 %v4654
        %6604 = vmatprep.subr.bf16.mxu0 %v4651
        %6605 = vmatpush1.bf16.msra.mxu0 %v4650
        %6606 = vmatprep.subr.bf16.mxu0 %v4647
        %6607 = vmatpush1.bf16.msra.mxu0 %v4646
        %6608 = vmatprep.subr.bf16.mxu0 %v4643
        %6609 = vmatpush1.bf16.msra.mxu0 %v4642
        %6610 = vmatprep.subr.bf16.mxu0 %v4639
        %6611 = vmatpush1.bf16.msra.mxu0 %v4638
        %6612 = vmatprep.subr.bf16.mxu0 %v4635
        %6613 = vmatpush1.bf16.msra.mxu0 %v4634
        %6614 = vmatprep.subr.bf16.mxu0 %v4631
        %6615 = vmatpush1.bf16.msra.mxu0 %v4630
        %6616 = vmatprep.subr.bf16.mxu0 %v4691
        %6617 = vmatpush2.bf16.msra.mxu0 %v4690
        %6618 = vmatprep.subr.bf16.mxu0 %v4687
        %6619 = vmatpush2.bf16.msra.mxu0 %v4686
        %6620 = vmatprep.subr.bf16.mxu0 %v4683
        %6621 = vmatpush2.bf16.msra.mxu0 %v4682
        %6622 = vmatprep.subr.bf16.mxu0 %v4679
        %6623 = vmatpush2.bf16.msra.mxu0 %v4678
        %6624 = vmatprep.subr.bf16.mxu0 %v4675
        %6625 = vmatpush2.bf16.msra.mxu0 %v4674
        %6626 = vmatprep.subr.bf16.mxu0 %v4671
        %6627 = vmatpush2.bf16.msra.mxu0 %v4670
        %6628 = vmatprep.subr.bf16.mxu0 %v4667
        %6629 = vmatpush2.bf16.msra.mxu0 %v4666
        %6630 = vmatprep.subr.bf16.mxu0 %v4663
        %6631 = vmatpush2.bf16.msra.mxu0 %v4662
        %6632 = vmatprep.mubr.bf16.mxu0 %v970
        %6633 = vmatmul.mubr.bf16.gmra.mxu0 %v969
        %v6634 = vpop.f32.mrf.mxu0
        %v6635 = vadd.f32 %v6594, %v6634
        %v6636 = vpop.f32.mrf.mxu0
        %v6637 = vadd.f32 %v6596, %v6636
        %v6638 = vpop.f32.mrf.mxu0
        %v6639 = vpop.f32.mrf.mxu0
        %6640 = vdwg.mxu0
        %6641 = vmatprep.subr.bf16.mxu0 %v4723
        %6642 = vmatpush1.bf16.msra.mxu0 %v4722
        %6643 = vmatprep.subr.bf16.mxu0 %v4719
        %6644 = vmatpush1.bf16.msra.mxu0 %v4718
        %6645 = vmatprep.subr.bf16.mxu0 %v4715
        %6646 = vmatpush1.bf16.msra.mxu0 %v4714
        %6647 = vmatprep.subr.bf16.mxu0 %v4711
        %6648 = vmatpush1.bf16.msra.mxu0 %v4710
        %6649 = vmatprep.subr.bf16.mxu0 %v4707
        %6650 = vmatpush1.bf16.msra.mxu0 %v4706
        %6651 = vmatprep.subr.bf16.mxu0 %v4703
        %6652 = vmatpush1.bf16.msra.mxu0 %v4702
        %6653 = vmatprep.subr.bf16.mxu0 %v4699
        %6654 = vmatpush1.bf16.msra.mxu0 %v4698
        %6655 = vmatprep.subr.bf16.mxu0 %v4695
        %6656 = vmatpush1.bf16.msra.mxu0 %v4694
        %6657 = vmatprep.subr.bf16.mxu0 %v4755
        %6658 = vmatpush2.bf16.msra.mxu0 %v4754
        %6659 = vmatprep.subr.bf16.mxu0 %v4751
        %6660 = vmatpush2.bf16.msra.mxu0 %v4750
        %6661 = vmatprep.subr.bf16.mxu0 %v4747
        %6662 = vmatpush2.bf16.msra.mxu0 %v4746
        %6663 = vmatprep.subr.bf16.mxu0 %v4743
        %6664 = vmatpush2.bf16.msra.mxu0 %v4742
        %6665 = vmatprep.subr.bf16.mxu0 %v4739
        %6666 = vmatpush2.bf16.msra.mxu0 %v4738
        %6667 = vmatprep.subr.bf16.mxu0 %v4735
        %6668 = vmatpush2.bf16.msra.mxu0 %v4734
        %6669 = vmatprep.subr.bf16.mxu0 %v4731
        %6670 = vmatpush2.bf16.msra.mxu0 %v4730
        %6671 = vmatprep.subr.bf16.mxu0 %v4727
        %6672 = vmatpush2.bf16.msra.mxu0 %v4726
        %6673 = vmatprep.mubr.bf16.mxu0 %v972
        %6674 = vmatmul.mubr.bf16.gmra.mxu0 %v971
        %v6675 = vpop.f32.mrf.mxu0
        %v6676 = vadd.f32 %v6635, %v6675
        %v6677 = vpop.f32.mrf.mxu0
        %v6678 = vadd.f32 %v6637, %v6677
        %v6679 = vpop.f32.mrf.mxu0
        %v6680 = vpop.f32.mrf.mxu0
        %6681 = vdwg.mxu0
        %6682 = vmatprep.subr.bf16.mxu0 %v4787
        %6683 = vmatpush1.bf16.msra.mxu0 %v4786
        %6684 = vmatprep.subr.bf16.mxu0 %v4783
        %6685 = vmatpush1.bf16.msra.mxu0 %v4782
        %6686 = vmatprep.subr.bf16.mxu0 %v4779
        %6687 = vmatpush1.bf16.msra.mxu0 %v4778
        %6688 = vmatprep.subr.bf16.mxu0 %v4775
        %6689 = vmatpush1.bf16.msra.mxu0 %v4774
        %6690 = vmatprep.subr.bf16.mxu0 %v4771
        %6691 = vmatpush1.bf16.msra.mxu0 %v4770
        %6692 = vmatprep.subr.bf16.mxu0 %v4767
        %6693 = vmatpush1.bf16.msra.mxu0 %v4766
        %6694 = vmatprep.subr.bf16.mxu0 %v4763
        %6695 = vmatpush1.bf16.msra.mxu0 %v4762
        %6696 = vmatprep.subr.bf16.mxu0 %v4759
        %6697 = vmatpush1.bf16.msra.mxu0 %v4758
        %6698 = vmatprep.subr.bf16.mxu0 %v4819
        %6699 = vmatpush2.bf16.msra.mxu0 %v4818
        %6700 = vmatprep.subr.bf16.mxu0 %v4815
        %6701 = vmatpush2.bf16.msra.mxu0 %v4814
        %6702 = vmatprep.subr.bf16.mxu0 %v4811
        %6703 = vmatpush2.bf16.msra.mxu0 %v4810
        %6704 = vmatprep.subr.bf16.mxu0 %v4807
        %6705 = vmatpush2.bf16.msra.mxu0 %v4806
        %6706 = vmatprep.subr.bf16.mxu0 %v4803
        %6707 = vmatpush2.bf16.msra.mxu0 %v4802
        %6708 = vmatprep.subr.bf16.mxu0 %v4799
        %6709 = vmatpush2.bf16.msra.mxu0 %v4798
        %6710 = vmatprep.subr.bf16.mxu0 %v4795
        %6711 = vmatpush2.bf16.msra.mxu0 %v4794
        %6712 = vmatprep.subr.bf16.mxu0 %v4791
        %6713 = vmatpush2.bf16.msra.mxu0 %v4790
        %6714 = vmatprep.mubr.bf16.mxu0 %v974
        %6715 = vmatmul.mubr.bf16.gmra.mxu0 %v973
        %v6716 = vpop.f32.mrf.mxu0
        %v6717 = vadd.f32 %v6676, %v6716
        %v6718 = vpop.f32.mrf.mxu0
        %v6719 = vadd.f32 %v6678, %v6718
        %v6720 = vpop.f32.mrf.mxu0
        %v6721 = vpop.f32.mrf.mxu0
        %6722 = vdwg.mxu0
        %6723 = vmatprep.subr.bf16.mxu0 %v4851
        %6724 = vmatpush1.bf16.msra.mxu0 %v4850
        %6725 = vmatprep.subr.bf16.mxu0 %v4847
        %6726 = vmatpush1.bf16.msra.mxu0 %v4846
        %6727 = vmatprep.subr.bf16.mxu0 %v4843
        %6728 = vmatpush1.bf16.msra.mxu0 %v4842
        %6729 = vmatprep.subr.bf16.mxu0 %v4839
        %6730 = vmatpush1.bf16.msra.mxu0 %v4838
        %6731 = vmatprep.subr.bf16.mxu0 %v4835
        %6732 = vmatpush1.bf16.msra.mxu0 %v4834
        %6733 = vmatprep.subr.bf16.mxu0 %v4831
        %6734 = vmatpush1.bf16.msra.mxu0 %v4830
        %6735 = vmatprep.subr.bf16.mxu0 %v4827
        %6736 = vmatpush1.bf16.msra.mxu0 %v4826
        %6737 = vmatprep.subr.bf16.mxu0 %v4823
        %6738 = vmatpush1.bf16.msra.mxu0 %v4822
        %6739 = vmatprep.subr.bf16.mxu0 %v4883
        %6740 = vmatpush2.bf16.msra.mxu0 %v4882
        %6741 = vmatprep.subr.bf16.mxu0 %v4879
        %6742 = vmatpush2.bf16.msra.mxu0 %v4878
        %6743 = vmatprep.subr.bf16.mxu0 %v4875
        %6744 = vmatpush2.bf16.msra.mxu0 %v4874
        %6745 = vmatprep.subr.bf16.mxu0 %v4871
        %6746 = vmatpush2.bf16.msra.mxu0 %v4870
        %6747 = vmatprep.subr.bf16.mxu0 %v4867
        %6748 = vmatpush2.bf16.msra.mxu0 %v4866
        %6749 = vmatprep.subr.bf16.mxu0 %v4863
        %6750 = vmatpush2.bf16.msra.mxu0 %v4862
        %6751 = vmatprep.subr.bf16.mxu0 %v4859
        %6752 = vmatpush2.bf16.msra.mxu0 %v4858
        %6753 = vmatprep.subr.bf16.mxu0 %v4855
        %6754 = vmatpush2.bf16.msra.mxu0 %v4854
        %6755 = vmatprep.mubr.bf16.mxu0 %v976
        %6756 = vmatmul.mubr.bf16.gmra.mxu0 %v975
        %v6757 = vpop.f32.mrf.mxu0
        %v6758 = vadd.f32 %v6717, %v6757
        %v6759 = vpop.f32.mrf.mxu0
        %v6760 = vadd.f32 %v6719, %v6759
        %v6761 = vpop.f32.mrf.mxu0
        %v6762 = vpop.f32.mrf.mxu0
        %6763 = vdwg.mxu0
        %6764 = vmatprep.subr.bf16.mxu0 %v4915
        %6765 = vmatpush1.bf16.msra.mxu0 %v4914
        %6766 = vmatprep.subr.bf16.mxu0 %v4911
        %6767 = vmatpush1.bf16.msra.mxu0 %v4910
        %6768 = vmatprep.subr.bf16.mxu0 %v4907
        %6769 = vmatpush1.bf16.msra.mxu0 %v4906
        %6770 = vmatprep.subr.bf16.mxu0 %v4903
        %6771 = vmatpush1.bf16.msra.mxu0 %v4902
        %6772 = vmatprep.subr.bf16.mxu0 %v4899
        %6773 = vmatpush1.bf16.msra.mxu0 %v4898
        %6774 = vmatprep.subr.bf16.mxu0 %v4895
        %6775 = vmatpush1.bf16.msra.mxu0 %v4894
        %6776 = vmatprep.subr.bf16.mxu0 %v4891
        %6777 = vmatpush1.bf16.msra.mxu0 %v4890
        %6778 = vmatprep.subr.bf16.mxu0 %v4887
        %6779 = vmatpush1.bf16.msra.mxu0 %v4886
        %6780 = vmatprep.subr.bf16.mxu0 %v4947
        %6781 = vmatpush2.bf16.msra.mxu0 %v4946
        %6782 = vmatprep.subr.bf16.mxu0 %v4943
        %6783 = vmatpush2.bf16.msra.mxu0 %v4942
        %6784 = vmatprep.subr.bf16.mxu0 %v4939
        %6785 = vmatpush2.bf16.msra.mxu0 %v4938
        %6786 = vmatprep.subr.bf16.mxu0 %v4935
        %6787 = vmatpush2.bf16.msra.mxu0 %v4934
        %6788 = vmatprep.subr.bf16.mxu0 %v4931
        %6789 = vmatpush2.bf16.msra.mxu0 %v4930
        %6790 = vmatprep.subr.bf16.mxu0 %v4927
        %6791 = vmatpush2.bf16.msra.mxu0 %v4926
        %6792 = vmatprep.subr.bf16.mxu0 %v4923
        %6793 = vmatpush2.bf16.msra.mxu0 %v4922
        %6794 = vmatprep.subr.bf16.mxu0 %v4919
        %6795 = vmatpush2.bf16.msra.mxu0 %v4918
        %6796 = vmatprep.mubr.bf16.mxu0 %v978
        %6797 = vmatmul.mubr.bf16.gmra.mxu0 %v977
        %v6798 = vpop.f32.mrf.mxu0
        %v6799 = vadd.f32 %v6758, %v6798
        %v6800 = vpop.f32.mrf.mxu0
        %v6801 = vadd.f32 %v6760, %v6800
        %v6802 = vpop.f32.mrf.mxu0
        %v6803 = vpop.f32.mrf.mxu0
        %6804 = vdwg.mxu0
        %6805 = vmatprep.subr.bf16.mxu0 %v4979
        %6806 = vmatpush1.bf16.msra.mxu0 %v4978
        %6807 = vmatprep.subr.bf16.mxu0 %v4975
        %6808 = vmatpush1.bf16.msra.mxu0 %v4974
        %6809 = vmatprep.subr.bf16.mxu0 %v4971
        %6810 = vmatpush1.bf16.msra.mxu0 %v4970
        %6811 = vmatprep.subr.bf16.mxu0 %v4967
        %6812 = vmatpush1.bf16.msra.mxu0 %v4966
        %6813 = vmatprep.subr.bf16.mxu0 %v4963
        %6814 = vmatpush1.bf16.msra.mxu0 %v4962
        %6815 = vmatprep.subr.bf16.mxu0 %v4959
        %6816 = vmatpush1.bf16.msra.mxu0 %v4958
        %6817 = vmatprep.subr.bf16.mxu0 %v4955
        %6818 = vmatpush1.bf16.msra.mxu0 %v4954
        %6819 = vmatprep.subr.bf16.mxu0 %v4951
        %6820 = vmatpush1.bf16.msra.mxu0 %v4950
        %6821 = vmatprep.subr.bf16.mxu0 0
        %6822 = vmatpush2.bf16.msra.mxu0 0
        %6823 = vmatprep.subr.bf16.mxu0 0
        %6824 = vmatpush2.bf16.msra.mxu0 0
        %6825 = vmatprep.subr.bf16.mxu0 0
        %6826 = vmatpush2.bf16.msra.mxu0 0
        %6827 = vmatprep.subr.bf16.mxu0 0
        %6828 = vmatpush2.bf16.msra.mxu0 0
        %6829 = vmatprep.subr.bf16.mxu0 0
        %6830 = vmatpush2.bf16.msra.mxu0 0
        %6831 = vmatprep.subr.bf16.mxu0 0
        %6832 = vmatpush2.bf16.msra.mxu0 0
        %6833 = vmatprep.subr.bf16.mxu0 0
        %6834 = vmatpush2.bf16.msra.mxu0 0
        %6835 = vmatprep.subr.bf16.mxu0 0
        %6836 = vmatpush2.bf16.msra.mxu0 0
        %6837 = vmatprep.mubr.bf16.mxu0 0
        %6838 = vmatmul.mubr.bf16.gmra.mxu0 %v979
        %v6839 = vpop.f32.mrf.mxu0
        %v6840 = vadd.f32 %v6799, %v6839
        %v6841 = vpop.f32.mrf.mxu0
        %v6842 = vadd.f32 %v6801, %v6841
        %v6843 = vpop.f32.mrf.mxu0
        %v6844 = vpop.f32.mrf.mxu0
        %6845 = vdwg.mxu0
        %v6846 = vld [vmem:[%s5] sm:$0xff]
        %v6847 = vmax.f32 %v6307, %v6309
        %v6848 = vmax.f32 %v6840, %v6842
        %v6849 = vmax.f32 %v6847, %v6848
        %6851 = vset.pattern.permute.xlu0 0
        %6852 = vperm.xlu0 %6851, %v6846
        %v6853 = vpop.permute.xlu0 %6852
        %v6855 = vadd.f32 %v6849, %v6853
        %v6856 = vmax.f32 %v6855, 0.0
        %v6857 = vld [vmem:[%s7] sm:$0xf]
        %v6858 = vld [vmem:[%s7 + $0x4] sm:$0xf]
        %v6859 = vld [vmem:[%s7 + $0x8] sm:$0xf]
        %v6860 = vld [vmem:[%s7 + $0xc] sm:$0xf]
        %v6861 = vld [vmem:[%s7 + $0x10] sm:$0xf]
        %v6862 = vld [vmem:[%s7 + $0x14] sm:$0xf]
        %v6863 = vld [vmem:[%s7 + $0x18] sm:$0xf]
        %v6864 = vld [vmem:[%s7 + $0x1c] sm:$0xf]
        %v6865 = vld [vmem:[%s7 + $0x20] sm:$0xf]
        %v6866 = vpack.c.bf16 %v6856, %v6856
        %v6876 = vunpack.c.l.b16 %v6857
        %v6877 = vunpack.c.l.b16 %v6858
        %v6878 = vunpack.c.l.b16 %v6859
        %v6879 = vunpack.c.l.b16 %v6860
        %v6880 = vunpack.c.l.b16 %v6861
        %v6881 = vunpack.c.l.b16 %v6862
        %v6882 = vunpack.c.l.b16 %v6863
        %v6883 = vunpack.c.l.b16 %v6864
        %v6884 = vunpack.c.l.b16 %v6865
        %v6885 = vpack.c.b16 %v6877, %v6876
        %v6886 = vpack.c.b16 %v6879, %v6878
        %v6887 = vpack.c.b16 %v6881, %v6880
        %v6888 = vpack.c.b16 %v6883, %v6882
        %v6889 = vpack.c.b16 %v6884, %v6884
        %v6891 = vsel %vm775, %v6885, 0
        %v6894 = vsel %vm775, %v6886, 0
        %v6897 = vsel %vm775, %v6887, 0
        %v6900 = vsel %vm775, %v6888, 0
        %v6903 = vsel %vm775, %v6889, 0
        %v6906 = vsel %vm815, %v6866, 0
        %6908 = vmatprep.subr.bf16.mxu0 0
        %6909 = vmatpush1.bf16.msra.mxu0 0
        %6910 = vmatprep.subr.bf16.mxu0 0
        %6911 = vmatpush1.bf16.msra.mxu0 0
        %6912 = vmatprep.subr.bf16.mxu0 0
        %6913 = vmatpush1.bf16.msra.mxu0 0
        %6914 = vmatprep.subr.bf16.mxu0 0
        %6915 = vmatpush1.bf16.msra.mxu0 0
        %6916 = vmatprep.subr.bf16.mxu0 0
        %6917 = vmatpush1.bf16.msra.mxu0 0
        %6918 = vmatprep.subr.bf16.mxu0 0
        %6919 = vmatpush1.bf16.msra.mxu0 0
        %6920 = vmatprep.subr.bf16.mxu0 0
        %6921 = vmatpush1.bf16.msra.mxu0 0
        %6922 = vmatprep.subr.bf16.mxu0 0
        %6923 = vmatpush1.bf16.msra.mxu0 %v6906
        %6924 = vmatprep.subr.bf16.mxu0 0
        %6925 = vmatpush2.bf16.msra.mxu0 0
        %6926 = vmatprep.subr.bf16.mxu0 0
        %6927 = vmatpush2.bf16.msra.mxu0 0
        %6928 = vmatprep.subr.bf16.mxu0 0
        %6929 = vmatpush2.bf16.msra.mxu0 0
        %6930 = vmatprep.subr.bf16.mxu0 0
        %6931 = vmatpush2.bf16.msra.mxu0 0
        %6932 = vmatprep.subr.bf16.mxu0 0
        %6933 = vmatpush2.bf16.msra.mxu0 0
        %6934 = vmatprep.subr.bf16.mxu0 0
        %6935 = vmatpush2.bf16.msra.mxu0 0
        %6936 = vmatprep.subr.bf16.mxu0 0
        %6937 = vmatpush2.bf16.msra.mxu0 0
        %6938 = vmatprep.subr.bf16.mxu0 0
        %6939 = vmatpush2.bf16.msra.mxu0 0
        %6940 = vmatprep.mubr.bf16.mxu0 0
        %6941 = vmatmul.mubr.bf16.gmra.mxu0 %v6891
        %v6942 = vpop.f32.mrf.mxu0
        %v6943 = vadd.f32 0.0, %v6942
        %v6944 = vpop.f32.mrf.mxu0
        %v6945 = vpop.f32.mrf.mxu0
        %v6946 = vadd.f32 0.0, %v6945
        %v6947 = vpop.f32.mrf.mxu0
        %6948 = vmatprep.mubr.bf16.mxu0 0
        %6949 = vmatmul.mubr.bf16.gmra.mxu0 %v6894
        %v6950 = vpop.f32.mrf.mxu0
        %v6951 = vadd.f32 0.0, %v6950
        %v6952 = vpop.f32.mrf.mxu0
        %v6953 = vpop.f32.mrf.mxu0
        %v6954 = vadd.f32 0.0, %v6953
        %v6955 = vpop.f32.mrf.mxu0
        %6956 = vmatprep.mubr.bf16.mxu0 0
        %6957 = vmatmul.mubr.bf16.gmra.mxu0 %v6897
        %v6958 = vpop.f32.mrf.mxu0
        %v6959 = vadd.f32 0.0, %v6958
        %v6960 = vpop.f32.mrf.mxu0
        %v6961 = vpop.f32.mrf.mxu0
        %v6962 = vadd.f32 0.0, %v6961
        %v6963 = vpop.f32.mrf.mxu0
        %6964 = vmatprep.mubr.bf16.mxu0 0
        %6965 = vmatmul.mubr.bf16.gmra.mxu0 %v6900
        %v6966 = vpop.f32.mrf.mxu0
        %v6967 = vadd.f32 0.0, %v6966
        %v6968 = vpop.f32.mrf.mxu0
        %v6969 = vpop.f32.mrf.mxu0
        %v6970 = vadd.f32 0.0, %v6969
        %v6971 = vpop.f32.mrf.mxu0
        %6972 = vmatprep.mubr.bf16.mxu0 0
        %6973 = vmatmul.mubr.bf16.gmra.mxu0 %v6903
        %v6974 = vpop.f32.mrf.mxu0
        %v6975 = vadd.f32 0.0, %v6974
        %v6976 = vpop.f32.mrf.mxu0
        %v6977 = vpop.f32.mrf.mxu0
        %v6978 = vpop.f32.mrf.mxu0
        %6979 = vdwg.mxu0
        %v6980 = vpack.c.bf16 %v6943, %v6943
        %v6981 = vpack.c.bf16 %v6946, %v6946
        %v6982 = vpack.c.bf16 %v6951, %v6951
        %v6983 = vpack.c.bf16 %v6954, %v6954
        %v6984 = vpack.c.bf16 %v6959, %v6959
        %v6985 = vpack.c.bf16 %v6962, %v6962
        %v6986 = vpack.c.bf16 %v6967, %v6967
        %v6987 = vpack.c.bf16 %v6970, %v6970
        %v6988 = vpack.c.bf16 %v6975, %v6975
        %v6989 = vld [vmem:[%s6] sm:$0xff]
        %v6990 = vld [vmem:[%s6 + $0x8] sm:$0xff]
        %v6991 = vld [vmem:[%s6 + $0x10] sm:$0xff]
        %v6992 = vld [vmem:[%s6 + $0x18] sm:$0xff]
        %v6993 = vld [vmem:[%s6 + $0x20] sm:$0xff]
        %v6994 = vld [vmem:[%s6 + $0x28] sm:$0xff]
        %v6995 = vld [vmem:[%s6 + $0x30] sm:$0xff]
        %v6996 = vld [vmem:[%s6 + $0x38] sm:$0xff]
        %v6997 = vld [vmem:[%s6 + $0x40] sm:$0xff]
        %v6998 = vld [vmem:[%s6 + $0x48] sm:$0xff]
        %v6999 = vld [vmem:[%s6 + $0x50] sm:$0xff]
        %v7000 = vld [vmem:[%s6 + $0x58] sm:$0xff]
        %v7001 = vld [vmem:[%s6 + $0x60] sm:$0xff]
        %v7002 = vld [vmem:[%s6 + $0x68] sm:$0xff]
        %v7003 = vld [vmem:[%s6 + $0x70] sm:$0xff]
        %v7004 = vld [vmem:[%s6 + $0x78] sm:$0xff]
        %v7005 = vld [vmem:[%s6 + $0x80] sm:$0xff]
        %v7006 = vld [vmem:[%s6 + $0x88] sm:$0xff]
        %v7007 = vld [vmem:[%s6 + $0x90] sm:$0xff]
        %v7008 = vld [vmem:[%s6 + $0x98] sm:$0xff]
        %v7009 = vld [vmem:[%s6 + $0xa0] sm:$0xff]
        %v7010 = vld [vmem:[%s6 + $0xa8] sm:$0xff]
        %v7011 = vld [vmem:[%s6 + $0xb0] sm:$0xff]
        %v7012 = vld [vmem:[%s6 + $0xb8] sm:$0xff]
        %v7013 = vld [vmem:[%s6 + $0xc0] sm:$0xff]
        %v7014 = vld [vmem:[%s6 + $0xc8] sm:$0xff]
        %v7015 = vld [vmem:[%s6 + $0xd0] sm:$0xff]
        %v7016 = vld [vmem:[%s6 + $0xd8] sm:$0xff]
        %v7017 = vld [vmem:[%s6 + $0xe0] sm:$0xff]
        %v7018 = vld [vmem:[%s6 + $0xe8] sm:$0xff]
        %v7019 = vld [vmem:[%s6 + $0xf0] sm:$0xff]
        %v7020 = vld [vmem:[%s6 + $0xf8] sm:$0xff]
        %v7021 = vld [vmem:[%s6 + $0x100] sm:$0xff]
        %v7022 = vld [vmem:[%s6 + $0x108] sm:$0xff]
        %v7023 = vld [vmem:[%s6 + $0x110] sm:$0xff]
        %v7024 = vld [vmem:[%s6 + $0x118] sm:$0xff]
        %v7025 = vld [vmem:[%s6 + $0x120] sm:$0xff]
        %v7026 = vld [vmem:[%s6 + $0x128] sm:$0xff]
        %v7027 = vld [vmem:[%s6 + $0x130] sm:$0xff]
        %v7028 = vld [vmem:[%s6 + $0x138] sm:$0xff]
        %v7029 = vld [vmem:[%s6 + $0x140] sm:$0xff]
        %v7030 = vld [vmem:[%s6 + $0x148] sm:$0xff]
        %v7031 = vld [vmem:[%s6 + $0x150] sm:$0xff]
        %v7032 = vld [vmem:[%s6 + $0x158] sm:$0xff]
        %v7033 = vld [vmem:[%s6 + $0x160] sm:$0xff]
        %v7034 = vld [vmem:[%s6 + $0x168] sm:$0xff]
        %v7035 = vld [vmem:[%s6 + $0x170] sm:$0xff]
        %v7036 = vld [vmem:[%s6 + $0x178] sm:$0xff]
        %v7037 = vld [vmem:[%s6 + $0x180] sm:$0xff]
        %v7038 = vld [vmem:[%s6 + $0x188] sm:$0xff]
        %v7039 = vld [vmem:[%s6 + $0x190] sm:$0xff]
        %v7040 = vld [vmem:[%s6 + $0x198] sm:$0xff]
        %v7041 = vld [vmem:[%s6 + $0x1a0] sm:$0xff]
        %v7042 = vld [vmem:[%s6 + $0x1a8] sm:$0xff]
        %v7043 = vld [vmem:[%s6 + $0x1b0] sm:$0xff]
        %v7044 = vld [vmem:[%s6 + $0x1b8] sm:$0xff]
        %v7045 = vld [vmem:[%s6 + $0x1c0] sm:$0xff]
        %v7046 = vld [vmem:[%s6 + $0x1c8] sm:$0xff]
        %v7047 = vld [vmem:[%s6 + $0x1d0] sm:$0xff]
        %v7048 = vld [vmem:[%s6 + $0x1d8] sm:$0xff]
        %v7049 = vld [vmem:[%s6 + $0x1e0] sm:$0xff]
        %v7050 = vld [vmem:[%s6 + $0x1e8] sm:$0xff]
        %v7051 = vld [vmem:[%s6 + $0x1f0] sm:$0xff]
        %v7052 = vld [vmem:[%s6 + $0x1f8] sm:$0xff]
        %v7053 = vld [vmem:[%s6 + $0x200] sm:$0xff]
        %v7054 = vld [vmem:[%s6 + $0x208] sm:$0xff]
        %v7055 = vld [vmem:[%s6 + $0x210] sm:$0xff]
        %v7056 = vld [vmem:[%s6 + $0x218] sm:$0xff]
        %v7057 = vld [vmem:[%s6 + $0x220] sm:$0xff]
        %v7058 = vld [vmem:[%s6 + $0x228] sm:$0xff]
        %v7059 = vld [vmem:[%s6 + $0x230] sm:$0xff]
        %v7060 = vld [vmem:[%s6 + $0x238] sm:$0xff]
        %v7061 = vld [vmem:[%s6 + $0x240] sm:$0xff]
        %v7062 = vld [vmem:[%s6 + $0x248] sm:$0xff]
        %v7063 = vld [vmem:[%s6 + $0x250] sm:$0xff]
        %v7064 = vld [vmem:[%s6 + $0x258] sm:$0xff]
        %v7065 = vld [vmem:[%s6 + $0x260] sm:$0xff]
        %v7066 = vld [vmem:[%s6 + $0x268] sm:$0xff]
        %v7067 = vld [vmem:[%s6 + $0x270] sm:$0xff]
        %v7068 = vld [vmem:[%s6 + $0x278] sm:$0xff]
        %v7069 = vld [vmem:[%s6 + $0x280] sm:$0xff]
        %v7070 = vld [vmem:[%s6 + $0x288] sm:$0xff]
        %v7071 = vld [vmem:[%s6 + $0x290] sm:$0xff]
        %v7072 = vld [vmem:[%s6 + $0x298] sm:$0xff]
        %v7073 = vld [vmem:[%s6 + $0x2a0] sm:$0xff]
        %v7074 = vld [vmem:[%s6 + $0x2a8] sm:$0xff]
        %v7075 = vld [vmem:[%s6 + $0x2b0] sm:$0xff]
        %v7076 = vld [vmem:[%s6 + $0x2b8] sm:$0xff]
        %v7077 = vld [vmem:[%s6 + $0x2c0] sm:$0xff]
        %v7078 = vld [vmem:[%s6 + $0x2c8] sm:$0xff]
        %v7079 = vld [vmem:[%s6 + $0x2d0] sm:$0xff]
        %v7080 = vld [vmem:[%s6 + $0x2d8] sm:$0xff]
        %v7081 = vld [vmem:[%s6 + $0x2e0] sm:$0xff]
        %v7082 = vld [vmem:[%s6 + $0x2e8] sm:$0xff]
        %v7083 = vld [vmem:[%s6 + $0x2f0] sm:$0xff]
        %v7084 = vld [vmem:[%s6 + $0x2f8] sm:$0xff]
        %v7085 = vld [vmem:[%s6 + $0x300] sm:$0xff]
        %v7086 = vld [vmem:[%s6 + $0x308] sm:$0xff]
        %v7087 = vld [vmem:[%s6 + $0x310] sm:$0xff]
        %v7088 = vld [vmem:[%s6 + $0x318] sm:$0xff]
        %v7089 = vld [vmem:[%s6 + $0x320] sm:$0xff]
        %v7090 = vld [vmem:[%s6 + $0x328] sm:$0xff]
        %v7091 = vld [vmem:[%s6 + $0x330] sm:$0xff]
        %v7092 = vld [vmem:[%s6 + $0x338] sm:$0xff]
        %v7093 = vld [vmem:[%s6 + $0x340] sm:$0xff]
        %v7094 = vld [vmem:[%s6 + $0x348] sm:$0xff]
        %v7095 = vld [vmem:[%s6 + $0x350] sm:$0xff]
        %v7096 = vld [vmem:[%s6 + $0x358] sm:$0xff]
        %v7097 = vld [vmem:[%s6 + $0x360] sm:$0xff]
        %v7098 = vld [vmem:[%s6 + $0x368] sm:$0xff]
        %v7099 = vld [vmem:[%s6 + $0x370] sm:$0xff]
        %v7100 = vld [vmem:[%s6 + $0x378] sm:$0xff]
        %v7101 = vld [vmem:[%s6 + $0x380] sm:$0xff]
        %v7102 = vld [vmem:[%s6 + $0x388] sm:$0xff]
        %v7103 = vld [vmem:[%s6 + $0x390] sm:$0xff]
        %v7104 = vld [vmem:[%s6 + $0x398] sm:$0xff]
        %v7105 = vld [vmem:[%s6 + $0x3a0] sm:$0xff]
        %v7106 = vld [vmem:[%s6 + $0x3a8] sm:$0xff]
        %v7107 = vld [vmem:[%s6 + $0x3b0] sm:$0xff]
        %v7108 = vld [vmem:[%s6 + $0x3b8] sm:$0xff]
        %v7109 = vld [vmem:[%s6 + $0x3c0] sm:$0xff]
        %v7110 = vld [vmem:[%s6 + $0x3c8] sm:$0xff]
        %v7111 = vld [vmem:[%s6 + $0x3d0] sm:$0xff]
        %v7112 = vld [vmem:[%s6 + $0x3d8] sm:$0xff]
        %v7113 = vld [vmem:[%s6 + $0x3e0] sm:$0xff]
        %v7114 = vld [vmem:[%s6 + $0x3e8] sm:$0xff]
        %v7115 = vld [vmem:[%s6 + $0x3f0] sm:$0xff]
        %v7116 = vld [vmem:[%s6 + $0x3f8] sm:$0xff]
        %v7117 = vld [vmem:[%s6 + $0x400] sm:$0xff]
        %v7118 = vld [vmem:[%s6 + $0x408] sm:$0xff]
        %v7119 = vld [vmem:[%s6 + $0x410] sm:$0xff]
        %v7120 = vld [vmem:[%s6 + $0x418] sm:$0xff]
        %v7121 = vld [vmem:[%s6 + $0x420] sm:$0xff]
        %v7122 = vld [vmem:[%s6 + $0x428] sm:$0xff]
        %v7123 = vld [vmem:[%s6 + $0x430] sm:$0xff]
        %v7124 = vld [vmem:[%s6 + $0x438] sm:$0xff]
        %v7125 = vld [vmem:[%s6 + $0x440] sm:$0xff]
        %v7126 = vld [vmem:[%s6 + $0x448] sm:$0xff]
        %v7127 = vld [vmem:[%s6 + $0x450] sm:$0xff]
        %v7128 = vld [vmem:[%s6 + $0x458] sm:$0xff]
        %v7129 = vld [vmem:[%s6 + $0x460] sm:$0xff]
        %v7130 = vld [vmem:[%s6 + $0x468] sm:$0xff]
        %v7131 = vld [vmem:[%s6 + $0x470] sm:$0xff]
        %v7132 = vld [vmem:[%s6 + $0x478] sm:$0xff]
        %v7133 = vld [vmem:[%s6 + $0x480] sm:$0xff]
        %v7134 = vld [vmem:[%s6 + $0x488] sm:$0xff]
        %v7135 = vld [vmem:[%s6 + $0x490] sm:$0xff]
        %v7136 = vld [vmem:[%s6 + $0x498] sm:$0xff]
        %v7137 = vld [vmem:[%s6 + $0x4a0] sm:$0xff]
        %v7138 = vld [vmem:[%s6 + $0x4a8] sm:$0xff]
        %v7139 = vld [vmem:[%s6 + $0x4b0] sm:$0xff]
        %v7140 = vld [vmem:[%s6 + $0x4b8] sm:$0xff]
        %v7141 = vld [vmem:[%s6 + $0x4c0] sm:$0xff]
        %v7142 = vld [vmem:[%s6 + $0x4c8] sm:$0xff]
        %v7143 = vld [vmem:[%s6 + $0x4d0] sm:$0xff]
        %v7144 = vld [vmem:[%s6 + $0x4d8] sm:$0xff]
        %v7145 = vld [vmem:[%s6 + $0x4e0] sm:$0xff]
        %v7146 = vld [vmem:[%s6 + $0x4e8] sm:$0xff]
        %v7147 = vld [vmem:[%s6 + $0x4f0] sm:$0xff]
        %v7148 = vld [vmem:[%s6 + $0x4f8] sm:$0xff]
        %v7149 = vld [vmem:[%s6 + $0x500] sm:$0xff]
        %v7150 = vld [vmem:[%s6 + $0x508] sm:$0xff]
        %v7151 = vld [vmem:[%s6 + $0x510] sm:$0xff]
        %v7152 = vld [vmem:[%s6 + $0x518] sm:$0xff]
        %v7153 = vld [vmem:[%s6 + $0x520] sm:$0xff]
        %v7154 = vld [vmem:[%s6 + $0x528] sm:$0xff]
        %v7155 = vld [vmem:[%s6 + $0x530] sm:$0xff]
        %v7156 = vld [vmem:[%s6 + $0x538] sm:$0xff]
        %v7157 = vld [vmem:[%s6 + $0x540] sm:$0xff]
        %v7158 = vld [vmem:[%s6 + $0x548] sm:$0xff]
        %v7159 = vld [vmem:[%s6 + $0x550] sm:$0xff]
        %v7160 = vld [vmem:[%s6 + $0x558] sm:$0xff]
        %v7161 = vld [vmem:[%s6 + $0x560] sm:$0xff]
        %v7162 = vld [vmem:[%s6 + $0x568] sm:$0xff]
        %v7163 = vld [vmem:[%s6 + $0x570] sm:$0xff]
        %v7164 = vld [vmem:[%s6 + $0x578] sm:$0xff]
        %v7165 = vld [vmem:[%s6 + $0x580] sm:$0xff]
        %v7166 = vld [vmem:[%s6 + $0x588] sm:$0xff]
        %v7167 = vld [vmem:[%s6 + $0x590] sm:$0xff]
        %v7168 = vld [vmem:[%s6 + $0x598] sm:$0xff]
        %v7169 = vld [vmem:[%s6 + $0x5a0] sm:$0xff]
        %v7170 = vld [vmem:[%s6 + $0x5a8] sm:$0xff]
        %v7171 = vld [vmem:[%s6 + $0x5b0] sm:$0xff]
        %v7172 = vld [vmem:[%s6 + $0x5b8] sm:$0xff]
        %v7173 = vld [vmem:[%s6 + $0x5c0] sm:$0xff]
        %v7174 = vld [vmem:[%s6 + $0x5c8] sm:$0xff]
        %v7175 = vld [vmem:[%s6 + $0x5d0] sm:$0xff]
        %v7176 = vld [vmem:[%s6 + $0x5d8] sm:$0xff]
        %v7177 = vld [vmem:[%s6 + $0x5e0] sm:$0xff]
        %v7178 = vld [vmem:[%s6 + $0x5e8] sm:$0xff]
        %v7179 = vld [vmem:[%s6 + $0x5f0] sm:$0xff]
        %v7180 = vld [vmem:[%s6 + $0x5f8] sm:$0xff]
        %v7181 = vld [vmem:[%s6 + $0x600] sm:$0xff]
        %v7182 = vld [vmem:[%s6 + $0x608] sm:$0xff]
        %v7183 = vld [vmem:[%s6 + $0x610] sm:$0xff]
        %v7184 = vld [vmem:[%s6 + $0x618] sm:$0xff]
        %v7185 = vld [vmem:[%s6 + $0x620] sm:$0xff]
        %v7186 = vld [vmem:[%s6 + $0x628] sm:$0xff]
        %v7187 = vld [vmem:[%s6 + $0x630] sm:$0xff]
        %v7188 = vld [vmem:[%s6 + $0x638] sm:$0xff]
        %v7189 = vld [vmem:[%s6 + $0x640] sm:$0xff]
        %v7190 = vld [vmem:[%s6 + $0x648] sm:$0xff]
        %v7191 = vld [vmem:[%s6 + $0x650] sm:$0xff]
        %v7192 = vld [vmem:[%s6 + $0x658] sm:$0xff]
        %v7193 = vld [vmem:[%s6 + $0x660] sm:$0xff]
        %v7194 = vld [vmem:[%s6 + $0x668] sm:$0xff]
        %v7195 = vld [vmem:[%s6 + $0x670] sm:$0xff]
        %v7196 = vld [vmem:[%s6 + $0x678] sm:$0xff]
        %v7197 = vld [vmem:[%s6 + $0x680] sm:$0xff]
        %v7198 = vld [vmem:[%s6 + $0x688] sm:$0xff]
        %v7199 = vld [vmem:[%s6 + $0x690] sm:$0xff]
        %v7200 = vld [vmem:[%s6 + $0x698] sm:$0xff]
        %v7201 = vld [vmem:[%s6 + $0x6a0] sm:$0xff]
        %v7202 = vld [vmem:[%s6 + $0x6a8] sm:$0xff]
        %v7203 = vld [vmem:[%s6 + $0x6b0] sm:$0xff]
        %v7204 = vld [vmem:[%s6 + $0x6b8] sm:$0xff]
        %v7205 = vld [vmem:[%s6 + $0x6c0] sm:$0xff]
        %v7206 = vld [vmem:[%s6 + $0x6c8] sm:$0xff]
        %v7207 = vld [vmem:[%s6 + $0x6d0] sm:$0xff]
        %v7208 = vld [vmem:[%s6 + $0x6d8] sm:$0xff]
        %v7209 = vld [vmem:[%s6 + $0x6e0] sm:$0xff]
        %v7210 = vld [vmem:[%s6 + $0x6e8] sm:$0xff]
        %v7211 = vld [vmem:[%s6 + $0x6f0] sm:$0xff]
        %v7212 = vld [vmem:[%s6 + $0x6f8] sm:$0xff]
        %v7213 = vld [vmem:[%s6 + $0x700] sm:$0xff]
        %v7214 = vld [vmem:[%s6 + $0x708] sm:$0xff]
        %v7215 = vld [vmem:[%s6 + $0x710] sm:$0xff]
        %v7216 = vld [vmem:[%s6 + $0x718] sm:$0xff]
        %v7217 = vld [vmem:[%s6 + $0x720] sm:$0xff]
        %v7218 = vld [vmem:[%s6 + $0x728] sm:$0xff]
        %v7219 = vld [vmem:[%s6 + $0x730] sm:$0xff]
        %v7220 = vld [vmem:[%s6 + $0x738] sm:$0xff]
        %v7221 = vld [vmem:[%s6 + $0x740] sm:$0xff]
        %v7222 = vld [vmem:[%s6 + $0x748] sm:$0xff]
        %v7223 = vld [vmem:[%s6 + $0x750] sm:$0xff]
        %v7224 = vld [vmem:[%s6 + $0x758] sm:$0xff]
        %v7225 = vld [vmem:[%s6 + $0x760] sm:$0xff]
        %v7226 = vld [vmem:[%s6 + $0x768] sm:$0xff]
        %v7227 = vld [vmem:[%s6 + $0x770] sm:$0xff]
        %v7228 = vld [vmem:[%s6 + $0x778] sm:$0xff]
        %v7229 = vld [vmem:[%s6 + $0x780] sm:$0xff]
        %v7230 = vld [vmem:[%s6 + $0x788] sm:$0xff]
        %v7231 = vld [vmem:[%s6 + $0x790] sm:$0xff]
        %v7232 = vld [vmem:[%s6 + $0x798] sm:$0xff]
        %v7233 = vld [vmem:[%s6 + $0x7a0] sm:$0xff]
        %v7234 = vld [vmem:[%s6 + $0x7a8] sm:$0xff]
        %v7235 = vld [vmem:[%s6 + $0x7b0] sm:$0xff]
        %v7236 = vld [vmem:[%s6 + $0x7b8] sm:$0xff]
        %v7237 = vld [vmem:[%s6 + $0x7c0] sm:$0xff]
        %v7238 = vld [vmem:[%s6 + $0x7c8] sm:$0xff]
        %v7239 = vld [vmem:[%s6 + $0x7d0] sm:$0xff]
        %v7240 = vld [vmem:[%s6 + $0x7d8] sm:$0xff]
        %v7241 = vld [vmem:[%s6 + $0x7e0] sm:$0xff]
        %v7242 = vld [vmem:[%s6 + $0x7e8] sm:$0xff]
        %v7243 = vld [vmem:[%s6 + $0x7f0] sm:$0xff]
        %v7244 = vld [vmem:[%s6 + $0x7f8] sm:$0xff]
        %v7245 = vld [vmem:[%s6 + $0x800] sm:$0xff]
        %v7246 = vld [vmem:[%s6 + $0x808] sm:$0xff]
        %v7247 = vld [vmem:[%s6 + $0x810] sm:$0xff]
        %v7248 = vld [vmem:[%s6 + $0x818] sm:$0xff]
        %v7249 = vld [vmem:[%s6 + $0x820] sm:$0xff]
        %v7250 = vld [vmem:[%s6 + $0x828] sm:$0xff]
        %v7251 = vld [vmem:[%s6 + $0x830] sm:$0xff]
        %v7252 = vld [vmem:[%s6 + $0x838] sm:$0xff]
        %v7253 = vld [vmem:[%s6 + $0x840] sm:$0xff]
        %v7254 = vld [vmem:[%s6 + $0x848] sm:$0xff]
        %v7255 = vld [vmem:[%s6 + $0x850] sm:$0xff]
        %v7256 = vld [vmem:[%s6 + $0x858] sm:$0xff]
        %v7257 = vld [vmem:[%s6 + $0x860] sm:$0xff]
        %v7258 = vld [vmem:[%s6 + $0x868] sm:$0xff]
        %v7259 = vld [vmem:[%s6 + $0x870] sm:$0xff]
        %v7260 = vld [vmem:[%s6 + $0x878] sm:$0xff]
        %v7261 = vld [vmem:[%s6 + $0x880] sm:$0xff]
        %v7262 = vld [vmem:[%s6 + $0x888] sm:$0xff]
        %v7263 = vld [vmem:[%s6 + $0x890] sm:$0xff]
        %v7264 = vld [vmem:[%s6 + $0x898] sm:$0xff]
        %v7265 = vld [vmem:[%s6 + $0x8a0] sm:$0xff]
        %v7266 = vld [vmem:[%s6 + $0x8a8] sm:$0xff]
        %v7267 = vld [vmem:[%s6 + $0x8b0] sm:$0xff]
        %v7268 = vld [vmem:[%s6 + $0x8b8] sm:$0xff]
        %v7269 = vld [vmem:[%s6 + $0x8c0] sm:$0xff]
        %v7270 = vld [vmem:[%s6 + $0x8c8] sm:$0xff]
        %v7271 = vld [vmem:[%s6 + $0x8d0] sm:$0xff]
        %v7272 = vld [vmem:[%s6 + $0x8d8] sm:$0xff]
        %v7273 = vld [vmem:[%s6 + $0x8e0] sm:$0xff]
        %v7274 = vld [vmem:[%s6 + $0x8e8] sm:$0xff]
        %v7275 = vld [vmem:[%s6 + $0x8f0] sm:$0xff]
        %v7276 = vld [vmem:[%s6 + $0x8f8] sm:$0xff]
        %v7565 = vunpack.c.l.b16 %v6989
        %v7566 = vunpack.c.h.b16 %v6989
        %v7567 = vunpack.c.l.b16 %v6990
        %v7568 = vunpack.c.h.b16 %v6990
        %v7569 = vunpack.c.l.b16 %v6991
        %v7570 = vunpack.c.h.b16 %v6991
        %v7571 = vunpack.c.l.b16 %v6992
        %v7572 = vunpack.c.h.b16 %v6992
        %v7573 = vunpack.c.l.b16 %v6993
        %v7574 = vunpack.c.h.b16 %v6993
        %v7575 = vunpack.c.l.b16 %v6994
        %v7576 = vunpack.c.h.b16 %v6994
        %v7577 = vunpack.c.l.b16 %v6995
        %v7578 = vunpack.c.h.b16 %v6995
        %v7579 = vunpack.c.l.b16 %v6996
        %v7580 = vunpack.c.h.b16 %v6996
        %v7581 = vunpack.c.l.b16 %v6997
        %v7582 = vunpack.c.h.b16 %v6997
        %v7583 = vunpack.c.l.b16 %v6998
        %v7584 = vunpack.c.h.b16 %v6998
        %v7585 = vunpack.c.l.b16 %v6999
        %v7586 = vunpack.c.h.b16 %v6999
        %v7587 = vunpack.c.l.b16 %v7000
        %v7588 = vunpack.c.h.b16 %v7000
        %v7589 = vunpack.c.l.b16 %v7001
        %v7590 = vunpack.c.h.b16 %v7001
        %v7591 = vunpack.c.l.b16 %v7002
        %v7592 = vunpack.c.h.b16 %v7002
        %v7593 = vunpack.c.l.b16 %v7003
        %v7594 = vunpack.c.h.b16 %v7003
        %v7595 = vunpack.c.l.b16 %v7004
        %v7596 = vunpack.c.h.b16 %v7004
        %v7597 = vunpack.c.l.b16 %v7005
        %v7598 = vunpack.c.h.b16 %v7005
        %v7599 = vunpack.c.l.b16 %v7006
        %v7600 = vunpack.c.h.b16 %v7006
        %v7601 = vunpack.c.l.b16 %v7007
        %v7602 = vunpack.c.h.b16 %v7007
        %v7603 = vunpack.c.l.b16 %v7008
        %v7604 = vunpack.c.h.b16 %v7008
        %v7605 = vunpack.c.l.b16 %v7009
        %v7606 = vunpack.c.h.b16 %v7009
        %v7607 = vunpack.c.l.b16 %v7010
        %v7608 = vunpack.c.h.b16 %v7010
        %v7609 = vunpack.c.l.b16 %v7011
        %v7610 = vunpack.c.h.b16 %v7011
        %v7611 = vunpack.c.l.b16 %v7012
        %v7612 = vunpack.c.h.b16 %v7012
        %v7613 = vunpack.c.l.b16 %v7013
        %v7614 = vunpack.c.h.b16 %v7013
        %v7615 = vunpack.c.l.b16 %v7014
        %v7616 = vunpack.c.h.b16 %v7014
        %v7617 = vunpack.c.l.b16 %v7015
        %v7618 = vunpack.c.h.b16 %v7015
        %v7619 = vunpack.c.l.b16 %v7016
        %v7620 = vunpack.c.h.b16 %v7016
        %v7621 = vunpack.c.l.b16 %v7017
        %v7622 = vunpack.c.h.b16 %v7017
        %v7623 = vunpack.c.l.b16 %v7018
        %v7624 = vunpack.c.h.b16 %v7018
        %v7625 = vunpack.c.l.b16 %v7019
        %v7626 = vunpack.c.h.b16 %v7019
        %v7627 = vunpack.c.l.b16 %v7020
        %v7628 = vunpack.c.h.b16 %v7020
        %v7629 = vunpack.c.l.b16 %v7021
        %v7630 = vunpack.c.h.b16 %v7021
        %v7631 = vunpack.c.l.b16 %v7022
        %v7632 = vunpack.c.h.b16 %v7022
        %v7633 = vunpack.c.l.b16 %v7023
        %v7634 = vunpack.c.h.b16 %v7023
        %v7635 = vunpack.c.l.b16 %v7024
        %v7636 = vunpack.c.h.b16 %v7024
        %v7637 = vunpack.c.l.b16 %v7025
        %v7638 = vunpack.c.h.b16 %v7025
        %v7639 = vunpack.c.l.b16 %v7026
        %v7640 = vunpack.c.h.b16 %v7026
        %v7641 = vunpack.c.l.b16 %v7027
        %v7642 = vunpack.c.h.b16 %v7027
        %v7643 = vunpack.c.l.b16 %v7028
        %v7644 = vunpack.c.h.b16 %v7028
        %v7645 = vunpack.c.l.b16 %v7029
        %v7646 = vunpack.c.h.b16 %v7029
        %v7647 = vunpack.c.l.b16 %v7030
        %v7648 = vunpack.c.h.b16 %v7030
        %v7649 = vunpack.c.l.b16 %v7031
        %v7650 = vunpack.c.h.b16 %v7031
        %v7651 = vunpack.c.l.b16 %v7032
        %v7652 = vunpack.c.h.b16 %v7032
        %v7653 = vunpack.c.l.b16 %v7033
        %v7654 = vunpack.c.h.b16 %v7033
        %v7655 = vunpack.c.l.b16 %v7034
        %v7656 = vunpack.c.h.b16 %v7034
        %v7657 = vunpack.c.l.b16 %v7035
        %v7658 = vunpack.c.h.b16 %v7035
        %v7659 = vunpack.c.l.b16 %v7036
        %v7660 = vunpack.c.h.b16 %v7036
        %v7661 = vunpack.c.l.b16 %v7037
        %v7662 = vunpack.c.h.b16 %v7037
        %v7663 = vunpack.c.l.b16 %v7038
        %v7664 = vunpack.c.h.b16 %v7038
        %v7665 = vunpack.c.l.b16 %v7039
        %v7666 = vunpack.c.h.b16 %v7039
        %v7667 = vunpack.c.l.b16 %v7040
        %v7668 = vunpack.c.h.b16 %v7040
        %v7669 = vunpack.c.l.b16 %v7041
        %v7670 = vunpack.c.h.b16 %v7041
        %v7671 = vunpack.c.l.b16 %v7042
        %v7672 = vunpack.c.h.b16 %v7042
        %v7673 = vunpack.c.l.b16 %v7043
        %v7674 = vunpack.c.h.b16 %v7043
        %v7675 = vunpack.c.l.b16 %v7044
        %v7676 = vunpack.c.h.b16 %v7044
        %v7677 = vunpack.c.l.b16 %v7045
        %v7678 = vunpack.c.h.b16 %v7045
        %v7679 = vunpack.c.l.b16 %v7046
        %v7680 = vunpack.c.h.b16 %v7046
        %v7681 = vunpack.c.l.b16 %v7047
        %v7682 = vunpack.c.h.b16 %v7047
        %v7683 = vunpack.c.l.b16 %v7048
        %v7684 = vunpack.c.h.b16 %v7048
        %v7685 = vunpack.c.l.b16 %v7049
        %v7686 = vunpack.c.h.b16 %v7049
        %v7687 = vunpack.c.l.b16 %v7050
        %v7688 = vunpack.c.h.b16 %v7050
        %v7689 = vunpack.c.l.b16 %v7051
        %v7690 = vunpack.c.h.b16 %v7051
        %v7691 = vunpack.c.l.b16 %v7052
        %v7692 = vunpack.c.h.b16 %v7052
        %v7693 = vunpack.c.l.b16 %v7053
        %v7694 = vunpack.c.h.b16 %v7053
        %v7695 = vunpack.c.l.b16 %v7054
        %v7696 = vunpack.c.h.b16 %v7054
        %v7697 = vunpack.c.l.b16 %v7055
        %v7698 = vunpack.c.h.b16 %v7055
        %v7699 = vunpack.c.l.b16 %v7056
        %v7700 = vunpack.c.h.b16 %v7056
        %v7701 = vunpack.c.l.b16 %v7057
        %v7702 = vunpack.c.h.b16 %v7057
        %v7703 = vunpack.c.l.b16 %v7058
        %v7704 = vunpack.c.h.b16 %v7058
        %v7705 = vunpack.c.l.b16 %v7059
        %v7706 = vunpack.c.h.b16 %v7059
        %v7707 = vunpack.c.l.b16 %v7060
        %v7708 = vunpack.c.h.b16 %v7060
        %v7709 = vunpack.c.l.b16 %v7061
        %v7710 = vunpack.c.h.b16 %v7061
        %v7711 = vunpack.c.l.b16 %v7062
        %v7712 = vunpack.c.h.b16 %v7062
        %v7713 = vunpack.c.l.b16 %v7063
        %v7714 = vunpack.c.h.b16 %v7063
        %v7715 = vunpack.c.l.b16 %v7064
        %v7716 = vunpack.c.h.b16 %v7064
        %v7717 = vunpack.c.l.b16 %v7065
        %v7718 = vunpack.c.h.b16 %v7065
        %v7719 = vunpack.c.l.b16 %v7066
        %v7720 = vunpack.c.h.b16 %v7066
        %v7721 = vunpack.c.l.b16 %v7067
        %v7722 = vunpack.c.h.b16 %v7067
        %v7723 = vunpack.c.l.b16 %v7068
        %v7724 = vunpack.c.h.b16 %v7068
        %v7725 = vunpack.c.l.b16 %v7069
        %v7726 = vunpack.c.h.b16 %v7069
        %v7727 = vunpack.c.l.b16 %v7070
        %v7728 = vunpack.c.h.b16 %v7070
        %v7729 = vunpack.c.l.b16 %v7071
        %v7730 = vunpack.c.h.b16 %v7071
        %v7731 = vunpack.c.l.b16 %v7072
        %v7732 = vunpack.c.h.b16 %v7072
        %v7733 = vunpack.c.l.b16 %v7073
        %v7734 = vunpack.c.h.b16 %v7073
        %v7735 = vunpack.c.l.b16 %v7074
        %v7736 = vunpack.c.h.b16 %v7074
        %v7737 = vunpack.c.l.b16 %v7075
        %v7738 = vunpack.c.h.b16 %v7075
        %v7739 = vunpack.c.l.b16 %v7076
        %v7740 = vunpack.c.h.b16 %v7076
        %v7741 = vunpack.c.l.b16 %v7077
        %v7742 = vunpack.c.h.b16 %v7077
        %v7743 = vunpack.c.l.b16 %v7078
        %v7744 = vunpack.c.h.b16 %v7078
        %v7745 = vunpack.c.l.b16 %v7079
        %v7746 = vunpack.c.h.b16 %v7079
        %v7747 = vunpack.c.l.b16 %v7080
        %v7748 = vunpack.c.h.b16 %v7080
        %v7749 = vunpack.c.l.b16 %v7081
        %v7750 = vunpack.c.h.b16 %v7081
        %v7751 = vunpack.c.l.b16 %v7082
        %v7752 = vunpack.c.h.b16 %v7082
        %v7753 = vunpack.c.l.b16 %v7083
        %v7754 = vunpack.c.h.b16 %v7083
        %v7755 = vunpack.c.l.b16 %v7084
        %v7756 = vunpack.c.h.b16 %v7084
        %v7757 = vunpack.c.l.b16 %v7085
        %v7758 = vunpack.c.h.b16 %v7085
        %v7759 = vunpack.c.l.b16 %v7086
        %v7760 = vunpack.c.h.b16 %v7086
        %v7761 = vunpack.c.l.b16 %v7087
        %v7762 = vunpack.c.h.b16 %v7087
        %v7763 = vunpack.c.l.b16 %v7088
        %v7764 = vunpack.c.h.b16 %v7088
        %v7765 = vunpack.c.l.b16 %v7089
        %v7766 = vunpack.c.h.b16 %v7089
        %v7767 = vunpack.c.l.b16 %v7090
        %v7768 = vunpack.c.h.b16 %v7090
        %v7769 = vunpack.c.l.b16 %v7091
        %v7770 = vunpack.c.h.b16 %v7091
        %v7771 = vunpack.c.l.b16 %v7092
        %v7772 = vunpack.c.h.b16 %v7092
        %v7773 = vunpack.c.l.b16 %v7093
        %v7774 = vunpack.c.h.b16 %v7093
        %v7775 = vunpack.c.l.b16 %v7094
        %v7776 = vunpack.c.h.b16 %v7094
        %v7777 = vunpack.c.l.b16 %v7095
        %v7778 = vunpack.c.h.b16 %v7095
        %v7779 = vunpack.c.l.b16 %v7096
        %v7780 = vunpack.c.h.b16 %v7096
        %v7781 = vunpack.c.l.b16 %v7097
        %v7782 = vunpack.c.h.b16 %v7097
        %v7783 = vunpack.c.l.b16 %v7098
        %v7784 = vunpack.c.h.b16 %v7098
        %v7785 = vunpack.c.l.b16 %v7099
        %v7786 = vunpack.c.h.b16 %v7099
        %v7787 = vunpack.c.l.b16 %v7100
        %v7788 = vunpack.c.h.b16 %v7100
        %v7789 = vunpack.c.l.b16 %v7101
        %v7790 = vunpack.c.h.b16 %v7101
        %v7791 = vunpack.c.l.b16 %v7102
        %v7792 = vunpack.c.h.b16 %v7102
        %v7793 = vunpack.c.l.b16 %v7103
        %v7794 = vunpack.c.h.b16 %v7103
        %v7795 = vunpack.c.l.b16 %v7104
        %v7796 = vunpack.c.h.b16 %v7104
        %v7797 = vunpack.c.l.b16 %v7105
        %v7798 = vunpack.c.h.b16 %v7105
        %v7799 = vunpack.c.l.b16 %v7106
        %v7800 = vunpack.c.h.b16 %v7106
        %v7801 = vunpack.c.l.b16 %v7107
        %v7802 = vunpack.c.h.b16 %v7107
        %v7803 = vunpack.c.l.b16 %v7108
        %v7804 = vunpack.c.h.b16 %v7108
        %v7805 = vunpack.c.l.b16 %v7109
        %v7806 = vunpack.c.h.b16 %v7109
        %v7807 = vunpack.c.l.b16 %v7110
        %v7808 = vunpack.c.h.b16 %v7110
        %v7809 = vunpack.c.l.b16 %v7111
        %v7810 = vunpack.c.h.b16 %v7111
        %v7811 = vunpack.c.l.b16 %v7112
        %v7812 = vunpack.c.h.b16 %v7112
        %v7813 = vunpack.c.l.b16 %v7113
        %v7814 = vunpack.c.h.b16 %v7113
        %v7815 = vunpack.c.l.b16 %v7114
        %v7816 = vunpack.c.h.b16 %v7114
        %v7817 = vunpack.c.l.b16 %v7115
        %v7818 = vunpack.c.h.b16 %v7115
        %v7819 = vunpack.c.l.b16 %v7116
        %v7820 = vunpack.c.h.b16 %v7116
        %v7821 = vunpack.c.l.b16 %v7117
        %v7822 = vunpack.c.h.b16 %v7117
        %v7823 = vunpack.c.l.b16 %v7118
        %v7824 = vunpack.c.h.b16 %v7118
        %v7825 = vunpack.c.l.b16 %v7119
        %v7826 = vunpack.c.h.b16 %v7119
        %v7827 = vunpack.c.l.b16 %v7120
        %v7828 = vunpack.c.h.b16 %v7120
        %v7829 = vunpack.c.l.b16 %v7121
        %v7830 = vunpack.c.h.b16 %v7121
        %v7831 = vunpack.c.l.b16 %v7122
        %v7832 = vunpack.c.h.b16 %v7122
        %v7833 = vunpack.c.l.b16 %v7123
        %v7834 = vunpack.c.h.b16 %v7123
        %v7835 = vunpack.c.l.b16 %v7124
        %v7836 = vunpack.c.h.b16 %v7124
        %v7837 = vunpack.c.l.b16 %v7125
        %v7838 = vunpack.c.h.b16 %v7125
        %v7839 = vunpack.c.l.b16 %v7126
        %v7840 = vunpack.c.h.b16 %v7126
        %v7841 = vunpack.c.l.b16 %v7127
        %v7842 = vunpack.c.h.b16 %v7127
        %v7843 = vunpack.c.l.b16 %v7128
        %v7844 = vunpack.c.h.b16 %v7128
        %v7845 = vunpack.c.l.b16 %v7129
        %v7846 = vunpack.c.h.b16 %v7129
        %v7847 = vunpack.c.l.b16 %v7130
        %v7848 = vunpack.c.h.b16 %v7130
        %v7849 = vunpack.c.l.b16 %v7131
        %v7850 = vunpack.c.h.b16 %v7131
        %v7851 = vunpack.c.l.b16 %v7132
        %v7852 = vunpack.c.h.b16 %v7132
        %v7853 = vunpack.c.l.b16 %v7133
        %v7854 = vunpack.c.h.b16 %v7133
        %v7855 = vunpack.c.l.b16 %v7134
        %v7856 = vunpack.c.h.b16 %v7134
        %v7857 = vunpack.c.l.b16 %v7135
        %v7858 = vunpack.c.h.b16 %v7135
        %v7859 = vunpack.c.l.b16 %v7136
        %v7860 = vunpack.c.h.b16 %v7136
        %v7861 = vunpack.c.l.b16 %v7137
        %v7862 = vunpack.c.h.b16 %v7137
        %v7863 = vunpack.c.l.b16 %v7138
        %v7864 = vunpack.c.h.b16 %v7138
        %v7865 = vunpack.c.l.b16 %v7139
        %v7866 = vunpack.c.h.b16 %v7139
        %v7867 = vunpack.c.l.b16 %v7140
        %v7868 = vunpack.c.h.b16 %v7140
        %v7869 = vunpack.c.l.b16 %v7141
        %v7870 = vunpack.c.h.b16 %v7141
        %v7871 = vunpack.c.l.b16 %v7142
        %v7872 = vunpack.c.h.b16 %v7142
        %v7873 = vunpack.c.l.b16 %v7143
        %v7874 = vunpack.c.h.b16 %v7143
        %v7875 = vunpack.c.l.b16 %v7144
        %v7876 = vunpack.c.h.b16 %v7144
        %v7877 = vunpack.c.l.b16 %v7145
        %v7878 = vunpack.c.h.b16 %v7145
        %v7879 = vunpack.c.l.b16 %v7146
        %v7880 = vunpack.c.h.b16 %v7146
        %v7881 = vunpack.c.l.b16 %v7147
        %v7882 = vunpack.c.h.b16 %v7147
        %v7883 = vunpack.c.l.b16 %v7148
        %v7884 = vunpack.c.h.b16 %v7148
        %v7885 = vunpack.c.l.b16 %v7149
        %v7886 = vunpack.c.h.b16 %v7149
        %v7887 = vunpack.c.l.b16 %v7150
        %v7888 = vunpack.c.h.b16 %v7150
        %v7889 = vunpack.c.l.b16 %v7151
        %v7890 = vunpack.c.h.b16 %v7151
        %v7891 = vunpack.c.l.b16 %v7152
        %v7892 = vunpack.c.h.b16 %v7152
        %v7893 = vunpack.c.l.b16 %v7153
        %v7894 = vunpack.c.h.b16 %v7153
        %v7895 = vunpack.c.l.b16 %v7154
        %v7896 = vunpack.c.h.b16 %v7154
        %v7897 = vunpack.c.l.b16 %v7155
        %v7898 = vunpack.c.h.b16 %v7155
        %v7899 = vunpack.c.l.b16 %v7156
        %v7900 = vunpack.c.h.b16 %v7156
        %v7901 = vunpack.c.l.b16 %v7157
        %v7902 = vunpack.c.h.b16 %v7157
        %v7903 = vunpack.c.l.b16 %v7158
        %v7904 = vunpack.c.h.b16 %v7158
        %v7905 = vunpack.c.l.b16 %v7159
        %v7906 = vunpack.c.h.b16 %v7159
        %v7907 = vunpack.c.l.b16 %v7160
        %v7908 = vunpack.c.h.b16 %v7160
        %v7909 = vunpack.c.l.b16 %v7161
        %v7910 = vunpack.c.h.b16 %v7161
        %v7911 = vunpack.c.l.b16 %v7162
        %v7912 = vunpack.c.h.b16 %v7162
        %v7913 = vunpack.c.l.b16 %v7163
        %v7914 = vunpack.c.h.b16 %v7163
        %v7915 = vunpack.c.l.b16 %v7164
        %v7916 = vunpack.c.h.b16 %v7164
        %v7917 = vunpack.c.l.b16 %v7165
        %v7918 = vunpack.c.h.b16 %v7165
        %v7919 = vunpack.c.l.b16 %v7166
        %v7920 = vunpack.c.h.b16 %v7166
        %v7921 = vunpack.c.l.b16 %v7167
        %v7922 = vunpack.c.h.b16 %v7167
        %v7923 = vunpack.c.l.b16 %v7168
        %v7924 = vunpack.c.h.b16 %v7168
        %v7925 = vunpack.c.l.b16 %v7169
        %v7926 = vunpack.c.h.b16 %v7169
        %v7927 = vunpack.c.l.b16 %v7170
        %v7928 = vunpack.c.h.b16 %v7170
        %v7929 = vunpack.c.l.b16 %v7171
        %v7930 = vunpack.c.h.b16 %v7171
        %v7931 = vunpack.c.l.b16 %v7172
        %v7932 = vunpack.c.h.b16 %v7172
        %v7933 = vunpack.c.l.b16 %v7173
        %v7934 = vunpack.c.h.b16 %v7173
        %v7935 = vunpack.c.l.b16 %v7174
        %v7936 = vunpack.c.h.b16 %v7174
        %v7937 = vunpack.c.l.b16 %v7175
        %v7938 = vunpack.c.h.b16 %v7175
        %v7939 = vunpack.c.l.b16 %v7176
        %v7940 = vunpack.c.h.b16 %v7176
        %v7941 = vunpack.c.l.b16 %v7177
        %v7942 = vunpack.c.h.b16 %v7177
        %v7943 = vunpack.c.l.b16 %v7178
        %v7944 = vunpack.c.h.b16 %v7178
        %v7945 = vunpack.c.l.b16 %v7179
        %v7946 = vunpack.c.h.b16 %v7179
        %v7947 = vunpack.c.l.b16 %v7180
        %v7948 = vunpack.c.h.b16 %v7180
        %v7949 = vunpack.c.l.b16 %v7181
        %v7950 = vunpack.c.h.b16 %v7181
        %v7951 = vunpack.c.l.b16 %v7182
        %v7952 = vunpack.c.h.b16 %v7182
        %v7953 = vunpack.c.l.b16 %v7183
        %v7954 = vunpack.c.h.b16 %v7183
        %v7955 = vunpack.c.l.b16 %v7184
        %v7956 = vunpack.c.h.b16 %v7184
        %v7957 = vunpack.c.l.b16 %v7185
        %v7958 = vunpack.c.h.b16 %v7185
        %v7959 = vunpack.c.l.b16 %v7186
        %v7960 = vunpack.c.h.b16 %v7186
        %v7961 = vunpack.c.l.b16 %v7187
        %v7962 = vunpack.c.h.b16 %v7187
        %v7963 = vunpack.c.l.b16 %v7188
        %v7964 = vunpack.c.h.b16 %v7188
        %v7965 = vunpack.c.l.b16 %v7189
        %v7966 = vunpack.c.h.b16 %v7189
        %v7967 = vunpack.c.l.b16 %v7190
        %v7968 = vunpack.c.h.b16 %v7190
        %v7969 = vunpack.c.l.b16 %v7191
        %v7970 = vunpack.c.h.b16 %v7191
        %v7971 = vunpack.c.l.b16 %v7192
        %v7972 = vunpack.c.h.b16 %v7192
        %v7973 = vunpack.c.l.b16 %v7193
        %v7974 = vunpack.c.h.b16 %v7193
        %v7975 = vunpack.c.l.b16 %v7194
        %v7976 = vunpack.c.h.b16 %v7194
        %v7977 = vunpack.c.l.b16 %v7195
        %v7978 = vunpack.c.h.b16 %v7195
        %v7979 = vunpack.c.l.b16 %v7196
        %v7980 = vunpack.c.h.b16 %v7196
        %v7981 = vunpack.c.l.b16 %v7197
        %v7982 = vunpack.c.h.b16 %v7197
        %v7983 = vunpack.c.l.b16 %v7198
        %v7984 = vunpack.c.h.b16 %v7198
        %v7985 = vunpack.c.l.b16 %v7199
        %v7986 = vunpack.c.h.b16 %v7199
        %v7987 = vunpack.c.l.b16 %v7200
        %v7988 = vunpack.c.h.b16 %v7200
        %v7989 = vunpack.c.l.b16 %v7201
        %v7990 = vunpack.c.h.b16 %v7201
        %v7991 = vunpack.c.l.b16 %v7202
        %v7992 = vunpack.c.h.b16 %v7202
        %v7993 = vunpack.c.l.b16 %v7203
        %v7994 = vunpack.c.h.b16 %v7203
        %v7995 = vunpack.c.l.b16 %v7204
        %v7996 = vunpack.c.h.b16 %v7204
        %v7997 = vunpack.c.l.b16 %v7205
        %v7998 = vunpack.c.h.b16 %v7205
        %v7999 = vunpack.c.l.b16 %v7206
        %v8000 = vunpack.c.h.b16 %v7206
        %v8001 = vunpack.c.l.b16 %v7207
        %v8002 = vunpack.c.h.b16 %v7207
        %v8003 = vunpack.c.l.b16 %v7208
        %v8004 = vunpack.c.h.b16 %v7208
        %v8005 = vunpack.c.l.b16 %v7209
        %v8006 = vunpack.c.h.b16 %v7209
        %v8007 = vunpack.c.l.b16 %v7210
        %v8008 = vunpack.c.h.b16 %v7210
        %v8009 = vunpack.c.l.b16 %v7211
        %v8010 = vunpack.c.h.b16 %v7211
        %v8011 = vunpack.c.l.b16 %v7212
        %v8012 = vunpack.c.h.b16 %v7212
        %v8013 = vunpack.c.l.b16 %v7213
        %v8014 = vunpack.c.h.b16 %v7213
        %v8015 = vunpack.c.l.b16 %v7214
        %v8016 = vunpack.c.h.b16 %v7214
        %v8017 = vunpack.c.l.b16 %v7215
        %v8018 = vunpack.c.h.b16 %v7215
        %v8019 = vunpack.c.l.b16 %v7216
        %v8020 = vunpack.c.h.b16 %v7216
        %v8021 = vunpack.c.l.b16 %v7217
        %v8022 = vunpack.c.h.b16 %v7217
        %v8023 = vunpack.c.l.b16 %v7218
        %v8024 = vunpack.c.h.b16 %v7218
        %v8025 = vunpack.c.l.b16 %v7219
        %v8026 = vunpack.c.h.b16 %v7219
        %v8027 = vunpack.c.l.b16 %v7220
        %v8028 = vunpack.c.h.b16 %v7220
        %v8029 = vunpack.c.l.b16 %v7221
        %v8030 = vunpack.c.h.b16 %v7221
        %v8031 = vunpack.c.l.b16 %v7222
        %v8032 = vunpack.c.h.b16 %v7222
        %v8033 = vunpack.c.l.b16 %v7223
        %v8034 = vunpack.c.h.b16 %v7223
        %v8035 = vunpack.c.l.b16 %v7224
        %v8036 = vunpack.c.h.b16 %v7224
        %v8037 = vunpack.c.l.b16 %v7225
        %v8038 = vunpack.c.h.b16 %v7225
        %v8039 = vunpack.c.l.b16 %v7226
        %v8040 = vunpack.c.h.b16 %v7226
        %v8041 = vunpack.c.l.b16 %v7227
        %v8042 = vunpack.c.h.b16 %v7227
        %v8043 = vunpack.c.l.b16 %v7228
        %v8044 = vunpack.c.h.b16 %v7228
        %v8045 = vunpack.c.l.b16 %v7229
        %v8046 = vunpack.c.h.b16 %v7229
        %v8047 = vunpack.c.l.b16 %v7230
        %v8048 = vunpack.c.h.b16 %v7230
        %v8049 = vunpack.c.l.b16 %v7231
        %v8050 = vunpack.c.h.b16 %v7231
        %v8051 = vunpack.c.l.b16 %v7232
        %v8052 = vunpack.c.h.b16 %v7232
        %v8053 = vunpack.c.l.b16 %v7233
        %v8054 = vunpack.c.h.b16 %v7233
        %v8055 = vunpack.c.l.b16 %v7234
        %v8056 = vunpack.c.h.b16 %v7234
        %v8057 = vunpack.c.l.b16 %v7235
        %v8058 = vunpack.c.h.b16 %v7235
        %v8059 = vunpack.c.l.b16 %v7236
        %v8060 = vunpack.c.h.b16 %v7236
        %v8061 = vunpack.c.l.b16 %v7237
        %v8062 = vunpack.c.h.b16 %v7237
        %v8063 = vunpack.c.l.b16 %v7238
        %v8064 = vunpack.c.h.b16 %v7238
        %v8065 = vunpack.c.l.b16 %v7239
        %v8066 = vunpack.c.h.b16 %v7239
        %v8067 = vunpack.c.l.b16 %v7240
        %v8068 = vunpack.c.h.b16 %v7240
        %v8069 = vunpack.c.l.b16 %v7241
        %v8070 = vunpack.c.h.b16 %v7241
        %v8071 = vunpack.c.l.b16 %v7242
        %v8072 = vunpack.c.h.b16 %v7242
        %v8073 = vunpack.c.l.b16 %v7243
        %v8074 = vunpack.c.h.b16 %v7243
        %v8075 = vunpack.c.l.b16 %v7244
        %v8076 = vunpack.c.h.b16 %v7244
        %v8077 = vunpack.c.l.b16 %v7245
        %v8078 = vunpack.c.h.b16 %v7245
        %v8079 = vunpack.c.l.b16 %v7246
        %v8080 = vunpack.c.h.b16 %v7246
        %v8081 = vunpack.c.l.b16 %v7247
        %v8082 = vunpack.c.h.b16 %v7247
        %v8083 = vunpack.c.l.b16 %v7248
        %v8084 = vunpack.c.h.b16 %v7248
        %v8085 = vunpack.c.l.b16 %v7249
        %v8086 = vunpack.c.h.b16 %v7249
        %v8087 = vunpack.c.l.b16 %v7250
        %v8088 = vunpack.c.h.b16 %v7250
        %v8089 = vunpack.c.l.b16 %v7251
        %v8090 = vunpack.c.h.b16 %v7251
        %v8091 = vunpack.c.l.b16 %v7252
        %v8092 = vunpack.c.h.b16 %v7252
        %v8093 = vunpack.c.l.b16 %v7253
        %v8094 = vunpack.c.h.b16 %v7253
        %v8095 = vunpack.c.l.b16 %v7254
        %v8096 = vunpack.c.h.b16 %v7254
        %v8097 = vunpack.c.l.b16 %v7255
        %v8098 = vunpack.c.h.b16 %v7255
        %v8099 = vunpack.c.l.b16 %v7256
        %v8100 = vunpack.c.h.b16 %v7256
        %v8101 = vunpack.c.l.b16 %v7257
        %v8102 = vunpack.c.h.b16 %v7257
        %v8103 = vunpack.c.l.b16 %v7258
        %v8104 = vunpack.c.h.b16 %v7258
        %v8105 = vunpack.c.l.b16 %v7259
        %v8106 = vunpack.c.h.b16 %v7259
        %v8107 = vunpack.c.l.b16 %v7260
        %v8108 = vunpack.c.h.b16 %v7260
        %v8109 = vunpack.c.l.b16 %v7261
        %v8110 = vunpack.c.h.b16 %v7261
        %v8111 = vunpack.c.l.b16 %v7262
        %v8112 = vunpack.c.h.b16 %v7262
        %v8113 = vunpack.c.l.b16 %v7263
        %v8114 = vunpack.c.h.b16 %v7263
        %v8115 = vunpack.c.l.b16 %v7264
        %v8116 = vunpack.c.h.b16 %v7264
        %v8117 = vunpack.c.l.b16 %v7265
        %v8118 = vunpack.c.h.b16 %v7265
        %v8119 = vunpack.c.l.b16 %v7266
        %v8120 = vunpack.c.h.b16 %v7266
        %v8121 = vunpack.c.l.b16 %v7267
        %v8122 = vunpack.c.h.b16 %v7267
        %v8123 = vunpack.c.l.b16 %v7268
        %v8124 = vunpack.c.h.b16 %v7268
        %v8125 = vunpack.c.l.b16 %v7269
        %v8126 = vunpack.c.h.b16 %v7269
        %v8127 = vunpack.c.l.b16 %v7270
        %v8128 = vunpack.c.h.b16 %v7270
        %v8129 = vunpack.c.l.b16 %v7271
        %v8130 = vunpack.c.h.b16 %v7271
        %v8131 = vunpack.c.l.b16 %v7272
        %v8132 = vunpack.c.h.b16 %v7272
        %v8133 = vunpack.c.l.b16 %v7273
        %v8134 = vunpack.c.h.b16 %v7273
        %v8135 = vunpack.c.l.b16 %v7274
        %v8136 = vunpack.c.h.b16 %v7274
        %v8137 = vunpack.c.l.b16 %v7275
        %v8138 = vunpack.c.h.b16 %v7275
        %v8139 = vunpack.c.l.b16 %v7276
        %v8140 = vunpack.c.h.b16 %v7276
        %v8141 = vpack.c.b16 %v7569, %v7565
        %v8142 = vpack.c.b16 %v7570, %v7566
        %v8143 = vpack.c.b16 %v7571, %v7567
        %v8144 = vpack.c.b16 %v7572, %v7568
        %v8145 = vpack.c.b16 %v7577, %v7573
        %v8146 = vpack.c.b16 %v7578, %v7574
        %v8147 = vpack.c.b16 %v7579, %v7575
        %v8148 = vpack.c.b16 %v7580, %v7576
        %v8149 = vpack.c.b16 %v7585, %v7581
        %v8150 = vpack.c.b16 %v7586, %v7582
        %v8151 = vpack.c.b16 %v7587, %v7583
        %v8152 = vpack.c.b16 %v7588, %v7584
        %v8153 = vpack.c.b16 %v7593, %v7589
        %v8154 = vpack.c.b16 %v7594, %v7590
        %v8155 = vpack.c.b16 %v7595, %v7591
        %v8156 = vpack.c.b16 %v7596, %v7592
        %v8157 = vpack.c.b16 %v7601, %v7597
        %v8158 = vpack.c.b16 %v7602, %v7598
        %v8159 = vpack.c.b16 %v7603, %v7599
        %v8160 = vpack.c.b16 %v7604, %v7600
        %v8161 = vpack.c.b16 %v7609, %v7605
        %v8162 = vpack.c.b16 %v7610, %v7606
        %v8163 = vpack.c.b16 %v7611, %v7607
        %v8164 = vpack.c.b16 %v7612, %v7608
        %v8165 = vpack.c.b16 %v7617, %v7613
        %v8166 = vpack.c.b16 %v7618, %v7614
        %v8167 = vpack.c.b16 %v7619, %v7615
        %v8168 = vpack.c.b16 %v7620, %v7616
        %v8169 = vpack.c.b16 %v7625, %v7621
        %v8170 = vpack.c.b16 %v7626, %v7622
        %v8171 = vpack.c.b16 %v7627, %v7623
        %v8172 = vpack.c.b16 %v7628, %v7624
        %v8173 = vpack.c.b16 %v7633, %v7629
        %v8174 = vpack.c.b16 %v7634, %v7630
        %v8175 = vpack.c.b16 %v7635, %v7631
        %v8176 = vpack.c.b16 %v7636, %v7632
        %v8177 = vpack.c.b16 %v7641, %v7637
        %v8178 = vpack.c.b16 %v7642, %v7638
        %v8179 = vpack.c.b16 %v7643, %v7639
        %v8180 = vpack.c.b16 %v7644, %v7640
        %v8181 = vpack.c.b16 %v7649, %v7645
        %v8182 = vpack.c.b16 %v7650, %v7646
        %v8183 = vpack.c.b16 %v7651, %v7647
        %v8184 = vpack.c.b16 %v7652, %v7648
        %v8185 = vpack.c.b16 %v7657, %v7653
        %v8186 = vpack.c.b16 %v7658, %v7654
        %v8187 = vpack.c.b16 %v7659, %v7655
        %v8188 = vpack.c.b16 %v7660, %v7656
        %v8189 = vpack.c.b16 %v7665, %v7661
        %v8190 = vpack.c.b16 %v7666, %v7662
        %v8191 = vpack.c.b16 %v7667, %v7663
        %v8192 = vpack.c.b16 %v7668, %v7664
        %v8193 = vpack.c.b16 %v7673, %v7669
        %v8194 = vpack.c.b16 %v7674, %v7670
        %v8195 = vpack.c.b16 %v7675, %v7671
        %v8196 = vpack.c.b16 %v7676, %v7672
        %v8197 = vpack.c.b16 %v7681, %v7677
        %v8198 = vpack.c.b16 %v7682, %v7678
        %v8199 = vpack.c.b16 %v7683, %v7679
        %v8200 = vpack.c.b16 %v7684, %v7680
        %v8201 = vpack.c.b16 %v7689, %v7685
        %v8202 = vpack.c.b16 %v7690, %v7686
        %v8203 = vpack.c.b16 %v7691, %v7687
        %v8204 = vpack.c.b16 %v7692, %v7688
        %v8205 = vpack.c.b16 %v7697, %v7693
        %v8206 = vpack.c.b16 %v7698, %v7694
        %v8207 = vpack.c.b16 %v7699, %v7695
        %v8208 = vpack.c.b16 %v7700, %v7696
        %v8209 = vpack.c.b16 %v7705, %v7701
        %v8210 = vpack.c.b16 %v7706, %v7702
        %v8211 = vpack.c.b16 %v7707, %v7703
        %v8212 = vpack.c.b16 %v7708, %v7704
        %v8213 = vpack.c.b16 %v7713, %v7709
        %v8214 = vpack.c.b16 %v7714, %v7710
        %v8215 = vpack.c.b16 %v7715, %v7711
        %v8216 = vpack.c.b16 %v7716, %v7712
        %v8217 = vpack.c.b16 %v7721, %v7717
        %v8218 = vpack.c.b16 %v7722, %v7718
        %v8219 = vpack.c.b16 %v7723, %v7719
        %v8220 = vpack.c.b16 %v7724, %v7720
        %v8221 = vpack.c.b16 %v7729, %v7725
        %v8222 = vpack.c.b16 %v7730, %v7726
        %v8223 = vpack.c.b16 %v7731, %v7727
        %v8224 = vpack.c.b16 %v7732, %v7728
        %v8225 = vpack.c.b16 %v7737, %v7733
        %v8226 = vpack.c.b16 %v7738, %v7734
        %v8227 = vpack.c.b16 %v7739, %v7735
        %v8228 = vpack.c.b16 %v7740, %v7736
        %v8229 = vpack.c.b16 %v7745, %v7741
        %v8230 = vpack.c.b16 %v7746, %v7742
        %v8231 = vpack.c.b16 %v7747, %v7743
        %v8232 = vpack.c.b16 %v7748, %v7744
        %v8233 = vpack.c.b16 %v7753, %v7749
        %v8234 = vpack.c.b16 %v7754, %v7750
        %v8235 = vpack.c.b16 %v7755, %v7751
        %v8236 = vpack.c.b16 %v7756, %v7752
        %v8237 = vpack.c.b16 %v7761, %v7757
        %v8238 = vpack.c.b16 %v7762, %v7758
        %v8239 = vpack.c.b16 %v7763, %v7759
        %v8240 = vpack.c.b16 %v7764, %v7760
        %v8241 = vpack.c.b16 %v7769, %v7765
        %v8242 = vpack.c.b16 %v7770, %v7766
        %v8243 = vpack.c.b16 %v7771, %v7767
        %v8244 = vpack.c.b16 %v7772, %v7768
        %v8245 = vpack.c.b16 %v7777, %v7773
        %v8246 = vpack.c.b16 %v7778, %v7774
        %v8247 = vpack.c.b16 %v7779, %v7775
        %v8248 = vpack.c.b16 %v7780, %v7776
        %v8249 = vpack.c.b16 %v7785, %v7781
        %v8250 = vpack.c.b16 %v7786, %v7782
        %v8251 = vpack.c.b16 %v7787, %v7783
        %v8252 = vpack.c.b16 %v7788, %v7784
        %v8253 = vpack.c.b16 %v7793, %v7789
        %v8254 = vpack.c.b16 %v7794, %v7790
        %v8255 = vpack.c.b16 %v7795, %v7791
        %v8256 = vpack.c.b16 %v7796, %v7792
        %v8257 = vpack.c.b16 %v7801, %v7797
        %v8258 = vpack.c.b16 %v7802, %v7798
        %v8259 = vpack.c.b16 %v7803, %v7799
        %v8260 = vpack.c.b16 %v7804, %v7800
        %v8261 = vpack.c.b16 %v7809, %v7805
        %v8262 = vpack.c.b16 %v7810, %v7806
        %v8263 = vpack.c.b16 %v7811, %v7807
        %v8264 = vpack.c.b16 %v7812, %v7808
        %v8265 = vpack.c.b16 %v7817, %v7813
        %v8266 = vpack.c.b16 %v7818, %v7814
        %v8267 = vpack.c.b16 %v7819, %v7815
        %v8268 = vpack.c.b16 %v7820, %v7816
        %v8269 = vpack.c.b16 %v7825, %v7821
        %v8270 = vpack.c.b16 %v7826, %v7822
        %v8271 = vpack.c.b16 %v7827, %v7823
        %v8272 = vpack.c.b16 %v7828, %v7824
        %v8273 = vpack.c.b16 %v7833, %v7829
        %v8274 = vpack.c.b16 %v7834, %v7830
        %v8275 = vpack.c.b16 %v7835, %v7831
        %v8276 = vpack.c.b16 %v7836, %v7832
        %v8277 = vpack.c.b16 %v7841, %v7837
        %v8278 = vpack.c.b16 %v7842, %v7838
        %v8279 = vpack.c.b16 %v7843, %v7839
        %v8280 = vpack.c.b16 %v7844, %v7840
        %v8281 = vpack.c.b16 %v7849, %v7845
        %v8282 = vpack.c.b16 %v7850, %v7846
        %v8283 = vpack.c.b16 %v7851, %v7847
        %v8284 = vpack.c.b16 %v7852, %v7848
        %v8285 = vpack.c.b16 %v7857, %v7853
        %v8286 = vpack.c.b16 %v7858, %v7854
        %v8287 = vpack.c.b16 %v7859, %v7855
        %v8288 = vpack.c.b16 %v7860, %v7856
        %v8289 = vpack.c.b16 %v7865, %v7861
        %v8290 = vpack.c.b16 %v7866, %v7862
        %v8291 = vpack.c.b16 %v7867, %v7863
        %v8292 = vpack.c.b16 %v7868, %v7864
        %v8293 = vpack.c.b16 %v7873, %v7869
        %v8294 = vpack.c.b16 %v7874, %v7870
        %v8295 = vpack.c.b16 %v7875, %v7871
        %v8296 = vpack.c.b16 %v7876, %v7872
        %v8297 = vpack.c.b16 %v7881, %v7877
        %v8298 = vpack.c.b16 %v7882, %v7878
        %v8299 = vpack.c.b16 %v7883, %v7879
        %v8300 = vpack.c.b16 %v7884, %v7880
        %v8301 = vpack.c.b16 %v7889, %v7885
        %v8302 = vpack.c.b16 %v7890, %v7886
        %v8303 = vpack.c.b16 %v7891, %v7887
        %v8304 = vpack.c.b16 %v7892, %v7888
        %v8305 = vpack.c.b16 %v7897, %v7893
        %v8306 = vpack.c.b16 %v7898, %v7894
        %v8307 = vpack.c.b16 %v7899, %v7895
        %v8308 = vpack.c.b16 %v7900, %v7896
        %v8309 = vpack.c.b16 %v7905, %v7901
        %v8310 = vpack.c.b16 %v7906, %v7902
        %v8311 = vpack.c.b16 %v7907, %v7903
        %v8312 = vpack.c.b16 %v7908, %v7904
        %v8313 = vpack.c.b16 %v7913, %v7909
        %v8314 = vpack.c.b16 %v7914, %v7910
        %v8315 = vpack.c.b16 %v7915, %v7911
        %v8316 = vpack.c.b16 %v7916, %v7912
        %v8317 = vpack.c.b16 %v7921, %v7917
        %v8318 = vpack.c.b16 %v7922, %v7918
        %v8319 = vpack.c.b16 %v7923, %v7919
        %v8320 = vpack.c.b16 %v7924, %v7920
        %v8321 = vpack.c.b16 %v7929, %v7925
        %v8322 = vpack.c.b16 %v7930, %v7926
        %v8323 = vpack.c.b16 %v7931, %v7927
        %v8324 = vpack.c.b16 %v7932, %v7928
        %v8325 = vpack.c.b16 %v7937, %v7933
        %v8326 = vpack.c.b16 %v7938, %v7934
        %v8327 = vpack.c.b16 %v7939, %v7935
        %v8328 = vpack.c.b16 %v7940, %v7936
        %v8329 = vpack.c.b16 %v7945, %v7941
        %v8330 = vpack.c.b16 %v7946, %v7942
        %v8331 = vpack.c.b16 %v7947, %v7943
        %v8332 = vpack.c.b16 %v7948, %v7944
        %v8333 = vpack.c.b16 %v7953, %v7949
        %v8334 = vpack.c.b16 %v7954, %v7950
        %v8335 = vpack.c.b16 %v7955, %v7951
        %v8336 = vpack.c.b16 %v7956, %v7952
        %v8337 = vpack.c.b16 %v7961, %v7957
        %v8338 = vpack.c.b16 %v7962, %v7958
        %v8339 = vpack.c.b16 %v7963, %v7959
        %v8340 = vpack.c.b16 %v7964, %v7960
        %v8341 = vpack.c.b16 %v7969, %v7965
        %v8342 = vpack.c.b16 %v7970, %v7966
        %v8343 = vpack.c.b16 %v7971, %v7967
        %v8344 = vpack.c.b16 %v7972, %v7968
        %v8345 = vpack.c.b16 %v7977, %v7973
        %v8346 = vpack.c.b16 %v7978, %v7974
        %v8347 = vpack.c.b16 %v7979, %v7975
        %v8348 = vpack.c.b16 %v7980, %v7976
        %v8349 = vpack.c.b16 %v7985, %v7981
        %v8350 = vpack.c.b16 %v7986, %v7982
        %v8351 = vpack.c.b16 %v7987, %v7983
        %v8352 = vpack.c.b16 %v7988, %v7984
        %v8353 = vpack.c.b16 %v7993, %v7989
        %v8354 = vpack.c.b16 %v7994, %v7990
        %v8355 = vpack.c.b16 %v7995, %v7991
        %v8356 = vpack.c.b16 %v7996, %v7992
        %v8357 = vpack.c.b16 %v8001, %v7997
        %v8358 = vpack.c.b16 %v8002, %v7998
        %v8359 = vpack.c.b16 %v8003, %v7999
        %v8360 = vpack.c.b16 %v8004, %v8000
        %v8361 = vpack.c.b16 %v8009, %v8005
        %v8362 = vpack.c.b16 %v8010, %v8006
        %v8363 = vpack.c.b16 %v8011, %v8007
        %v8364 = vpack.c.b16 %v8012, %v8008
        %v8365 = vpack.c.b16 %v8017, %v8013
        %v8366 = vpack.c.b16 %v8018, %v8014
        %v8367 = vpack.c.b16 %v8019, %v8015
        %v8368 = vpack.c.b16 %v8020, %v8016
        %v8369 = vpack.c.b16 %v8025, %v8021
        %v8370 = vpack.c.b16 %v8026, %v8022
        %v8371 = vpack.c.b16 %v8027, %v8023
        %v8372 = vpack.c.b16 %v8028, %v8024
        %v8373 = vpack.c.b16 %v8033, %v8029
        %v8374 = vpack.c.b16 %v8034, %v8030
        %v8375 = vpack.c.b16 %v8035, %v8031
        %v8376 = vpack.c.b16 %v8036, %v8032
        %v8377 = vpack.c.b16 %v8041, %v8037
        %v8378 = vpack.c.b16 %v8042, %v8038
        %v8379 = vpack.c.b16 %v8043, %v8039
        %v8380 = vpack.c.b16 %v8044, %v8040
        %v8381 = vpack.c.b16 %v8049, %v8045
        %v8382 = vpack.c.b16 %v8050, %v8046
        %v8383 = vpack.c.b16 %v8051, %v8047
        %v8384 = vpack.c.b16 %v8052, %v8048
        %v8385 = vpack.c.b16 %v8057, %v8053
        %v8386 = vpack.c.b16 %v8058, %v8054
        %v8387 = vpack.c.b16 %v8059, %v8055
        %v8388 = vpack.c.b16 %v8060, %v8056
        %v8389 = vpack.c.b16 %v8065, %v8061
        %v8390 = vpack.c.b16 %v8066, %v8062
        %v8391 = vpack.c.b16 %v8067, %v8063
        %v8392 = vpack.c.b16 %v8068, %v8064
        %v8393 = vpack.c.b16 %v8073, %v8069
        %v8394 = vpack.c.b16 %v8074, %v8070
        %v8395 = vpack.c.b16 %v8075, %v8071
        %v8396 = vpack.c.b16 %v8076, %v8072
        %v8397 = vpack.c.b16 %v8081, %v8077
        %v8398 = vpack.c.b16 %v8082, %v8078
        %v8399 = vpack.c.b16 %v8083, %v8079
        %v8400 = vpack.c.b16 %v8084, %v8080
        %v8401 = vpack.c.b16 %v8089, %v8085
        %v8402 = vpack.c.b16 %v8090, %v8086
        %v8403 = vpack.c.b16 %v8091, %v8087
        %v8404 = vpack.c.b16 %v8092, %v8088
        %v8405 = vpack.c.b16 %v8097, %v8093
        %v8406 = vpack.c.b16 %v8098, %v8094
        %v8407 = vpack.c.b16 %v8099, %v8095
        %v8408 = vpack.c.b16 %v8100, %v8096
        %v8409 = vpack.c.b16 %v8105, %v8101
        %v8410 = vpack.c.b16 %v8106, %v8102
        %v8411 = vpack.c.b16 %v8107, %v8103
        %v8412 = vpack.c.b16 %v8108, %v8104
        %v8413 = vpack.c.b16 %v8113, %v8109
        %v8414 = vpack.c.b16 %v8114, %v8110
        %v8415 = vpack.c.b16 %v8115, %v8111
        %v8416 = vpack.c.b16 %v8116, %v8112
        %v8417 = vpack.c.b16 %v8121, %v8117
        %v8418 = vpack.c.b16 %v8122, %v8118
        %v8419 = vpack.c.b16 %v8123, %v8119
        %v8420 = vpack.c.b16 %v8124, %v8120
        %v8421 = vpack.c.b16 %v8129, %v8125
        %v8422 = vpack.c.b16 %v8130, %v8126
        %v8423 = vpack.c.b16 %v8131, %v8127
        %v8424 = vpack.c.b16 %v8132, %v8128
        %v8425 = vpack.c.b16 %v8137, %v8133
        %v8426 = vpack.c.b16 %v8138, %v8134
        %v8427 = vpack.c.b16 %v8139, %v8135
        %v8428 = vpack.c.b16 %v8140, %v8136
        %8717 = vmatprep.subr.bf16.mxu0 %v8170
        %8718 = vmatpush1.bf16.msra.mxu0 %v8169
        %8719 = vmatprep.subr.bf16.mxu0 %v8166
        %8720 = vmatpush1.bf16.msra.mxu0 %v8165
        %8721 = vmatprep.subr.bf16.mxu0 %v8162
        %8722 = vmatpush1.bf16.msra.mxu0 %v8161
        %8723 = vmatprep.subr.bf16.mxu0 %v8158
        %8724 = vmatpush1.bf16.msra.mxu0 %v8157
        %8725 = vmatprep.subr.bf16.mxu0 %v8154
        %8726 = vmatpush1.bf16.msra.mxu0 %v8153
        %8727 = vmatprep.subr.bf16.mxu0 %v8150
        %8728 = vmatpush1.bf16.msra.mxu0 %v8149
        %8729 = vmatprep.subr.bf16.mxu0 %v8146
        %8730 = vmatpush1.bf16.msra.mxu0 %v8145
        %8731 = vmatprep.subr.bf16.mxu0 %v8142
        %8732 = vmatpush1.bf16.msra.mxu0 %v8141
        %8733 = vmatprep.subr.bf16.mxu0 %v8202
        %8734 = vmatpush2.bf16.msra.mxu0 %v8201
        %8735 = vmatprep.subr.bf16.mxu0 %v8198
        %8736 = vmatpush2.bf16.msra.mxu0 %v8197
        %8737 = vmatprep.subr.bf16.mxu0 %v8194
        %8738 = vmatpush2.bf16.msra.mxu0 %v8193
        %8739 = vmatprep.subr.bf16.mxu0 %v8190
        %8740 = vmatpush2.bf16.msra.mxu0 %v8189
        %8741 = vmatprep.subr.bf16.mxu0 %v8186
        %8742 = vmatpush2.bf16.msra.mxu0 %v8185
        %8743 = vmatprep.subr.bf16.mxu0 %v8182
        %8744 = vmatpush2.bf16.msra.mxu0 %v8181
        %8745 = vmatprep.subr.bf16.mxu0 %v8178
        %8746 = vmatpush2.bf16.msra.mxu0 %v8177
        %8747 = vmatprep.subr.bf16.mxu0 %v8174
        %8748 = vmatpush2.bf16.msra.mxu0 %v8173
        %8749 = vmatprep.mubr.bf16.mxu0 %v6981
        %8750 = vmatmul.mubr.bf16.gmra.mxu0 %v6980
        %v8751 = vpop.f32.mrf.mxu0
        %v8752 = vadd.f32 0.0, %v8751
        %v8753 = vpop.f32.mrf.mxu0
        %v8754 = vadd.f32 0.0, %v8753
        %v8755 = vpop.f32.mrf.mxu0
        %v8756 = vpop.f32.mrf.mxu0
        %8757 = vdwg.mxu0
        %8758 = vmatprep.subr.bf16.mxu0 %v8234
        %8759 = vmatpush1.bf16.msra.mxu0 %v8233
        %8760 = vmatprep.subr.bf16.mxu0 %v8230
        %8761 = vmatpush1.bf16.msra.mxu0 %v8229
        %8762 = vmatprep.subr.bf16.mxu0 %v8226
        %8763 = vmatpush1.bf16.msra.mxu0 %v8225
        %8764 = vmatprep.subr.bf16.mxu0 %v8222
        %8765 = vmatpush1.bf16.msra.mxu0 %v8221
        %8766 = vmatprep.subr.bf16.mxu0 %v8218
        %8767 = vmatpush1.bf16.msra.mxu0 %v8217
        %8768 = vmatprep.subr.bf16.mxu0 %v8214
        %8769 = vmatpush1.bf16.msra.mxu0 %v8213
        %8770 = vmatprep.subr.bf16.mxu0 %v8210
        %8771 = vmatpush1.bf16.msra.mxu0 %v8209
        %8772 = vmatprep.subr.bf16.mxu0 %v8206
        %8773 = vmatpush1.bf16.msra.mxu0 %v8205
        %8774 = vmatprep.subr.bf16.mxu0 %v8266
        %8775 = vmatpush2.bf16.msra.mxu0 %v8265
        %8776 = vmatprep.subr.bf16.mxu0 %v8262
        %8777 = vmatpush2.bf16.msra.mxu0 %v8261
        %8778 = vmatprep.subr.bf16.mxu0 %v8258
        %8779 = vmatpush2.bf16.msra.mxu0 %v8257
        %8780 = vmatprep.subr.bf16.mxu0 %v8254
        %8781 = vmatpush2.bf16.msra.mxu0 %v8253
        %8782 = vmatprep.subr.bf16.mxu0 %v8250
        %8783 = vmatpush2.bf16.msra.mxu0 %v8249
        %8784 = vmatprep.subr.bf16.mxu0 %v8246
        %8785 = vmatpush2.bf16.msra.mxu0 %v8245
        %8786 = vmatprep.subr.bf16.mxu0 %v8242
        %8787 = vmatpush2.bf16.msra.mxu0 %v8241
        %8788 = vmatprep.subr.bf16.mxu0 %v8238
        %8789 = vmatpush2.bf16.msra.mxu0 %v8237
        %8790 = vmatprep.mubr.bf16.mxu0 %v6983
        %8791 = vmatmul.mubr.bf16.gmra.mxu0 %v6982
        %v8792 = vpop.f32.mrf.mxu0
        %v8793 = vadd.f32 %v8752, %v8792
        %v8794 = vpop.f32.mrf.mxu0
        %v8795 = vadd.f32 %v8754, %v8794
        %v8796 = vpop.f32.mrf.mxu0
        %v8797 = vpop.f32.mrf.mxu0
        %8798 = vdwg.mxu0
        %8799 = vmatprep.subr.bf16.mxu0 %v8298
        %8800 = vmatpush1.bf16.msra.mxu0 %v8297
        %8801 = vmatprep.subr.bf16.mxu0 %v8294
        %8802 = vmatpush1.bf16.msra.mxu0 %v8293
        %8803 = vmatprep.subr.bf16.mxu0 %v8290
        %8804 = vmatpush1.bf16.msra.mxu0 %v8289
        %8805 = vmatprep.subr.bf16.mxu0 %v8286
        %8806 = vmatpush1.bf16.msra.mxu0 %v8285
        %8807 = vmatprep.subr.bf16.mxu0 %v8282
        %8808 = vmatpush1.bf16.msra.mxu0 %v8281
        %8809 = vmatprep.subr.bf16.mxu0 %v8278
        %8810 = vmatpush1.bf16.msra.mxu0 %v8277
        %8811 = vmatprep.subr.bf16.mxu0 %v8274
        %8812 = vmatpush1.bf16.msra.mxu0 %v8273
        %8813 = vmatprep.subr.bf16.mxu0 %v8270
        %8814 = vmatpush1.bf16.msra.mxu0 %v8269
        %8815 = vmatprep.subr.bf16.mxu0 %v8330
        %8816 = vmatpush2.bf16.msra.mxu0 %v8329
        %8817 = vmatprep.subr.bf16.mxu0 %v8326
        %8818 = vmatpush2.bf16.msra.mxu0 %v8325
        %8819 = vmatprep.subr.bf16.mxu0 %v8322
        %8820 = vmatpush2.bf16.msra.mxu0 %v8321
        %8821 = vmatprep.subr.bf16.mxu0 %v8318
        %8822 = vmatpush2.bf16.msra.mxu0 %v8317
        %8823 = vmatprep.subr.bf16.mxu0 %v8314
        %8824 = vmatpush2.bf16.msra.mxu0 %v8313
        %8825 = vmatprep.subr.bf16.mxu0 %v8310
        %8826 = vmatpush2.bf16.msra.mxu0 %v8309
        %8827 = vmatprep.subr.bf16.mxu0 %v8306
        %8828 = vmatpush2.bf16.msra.mxu0 %v8305
        %8829 = vmatprep.subr.bf16.mxu0 %v8302
        %8830 = vmatpush2.bf16.msra.mxu0 %v8301
        %8831 = vmatprep.mubr.bf16.mxu0 %v6985
        %8832 = vmatmul.mubr.bf16.gmra.mxu0 %v6984
        %v8833 = vpop.f32.mrf.mxu0
        %v8834 = vadd.f32 %v8793, %v8833
        %v8835 = vpop.f32.mrf.mxu0
        %v8836 = vadd.f32 %v8795, %v8835
        %v8837 = vpop.f32.mrf.mxu0
        %v8838 = vpop.f32.mrf.mxu0
        %8839 = vdwg.mxu0
        %8840 = vmatprep.subr.bf16.mxu0 %v8362
        %8841 = vmatpush1.bf16.msra.mxu0 %v8361
        %8842 = vmatprep.subr.bf16.mxu0 %v8358
        %8843 = vmatpush1.bf16.msra.mxu0 %v8357
        %8844 = vmatprep.subr.bf16.mxu0 %v8354
        %8845 = vmatpush1.bf16.msra.mxu0 %v8353
        %8846 = vmatprep.subr.bf16.mxu0 %v8350
        %8847 = vmatpush1.bf16.msra.mxu0 %v8349
        %8848 = vmatprep.subr.bf16.mxu0 %v8346
        %8849 = vmatpush1.bf16.msra.mxu0 %v8345
        %8850 = vmatprep.subr.bf16.mxu0 %v8342
        %8851 = vmatpush1.bf16.msra.mxu0 %v8341
        %8852 = vmatprep.subr.bf16.mxu0 %v8338
        %8853 = vmatpush1.bf16.msra.mxu0 %v8337
        %8854 = vmatprep.subr.bf16.mxu0 %v8334
        %8855 = vmatpush1.bf16.msra.mxu0 %v8333
        %8856 = vmatprep.subr.bf16.mxu0 %v8394
        %8857 = vmatpush2.bf16.msra.mxu0 %v8393
        %8858 = vmatprep.subr.bf16.mxu0 %v8390
        %8859 = vmatpush2.bf16.msra.mxu0 %v8389
        %8860 = vmatprep.subr.bf16.mxu0 %v8386
        %8861 = vmatpush2.bf16.msra.mxu0 %v8385
        %8862 = vmatprep.subr.bf16.mxu0 %v8382
        %8863 = vmatpush2.bf16.msra.mxu0 %v8381
        %8864 = vmatprep.subr.bf16.mxu0 %v8378
        %8865 = vmatpush2.bf16.msra.mxu0 %v8377
        %8866 = vmatprep.subr.bf16.mxu0 %v8374
        %8867 = vmatpush2.bf16.msra.mxu0 %v8373
        %8868 = vmatprep.subr.bf16.mxu0 %v8370
        %8869 = vmatpush2.bf16.msra.mxu0 %v8369
        %8870 = vmatprep.subr.bf16.mxu0 %v8366
        %8871 = vmatpush2.bf16.msra.mxu0 %v8365
        %8872 = vmatprep.mubr.bf16.mxu0 %v6987
        %8873 = vmatmul.mubr.bf16.gmra.mxu0 %v6986
        %v8874 = vpop.f32.mrf.mxu0
        %v8875 = vadd.f32 %v8834, %v8874
        %v8876 = vpop.f32.mrf.mxu0
        %v8877 = vadd.f32 %v8836, %v8876
        %v8878 = vpop.f32.mrf.mxu0
        %v8879 = vpop.f32.mrf.mxu0
        %8880 = vdwg.mxu0
        %8881 = vmatprep.subr.bf16.mxu0 %v8426
        %8882 = vmatpush1.bf16.msra.mxu0 %v8425
        %8883 = vmatprep.subr.bf16.mxu0 %v8422
        %8884 = vmatpush1.bf16.msra.mxu0 %v8421
        %8885 = vmatprep.subr.bf16.mxu0 %v8418
        %8886 = vmatpush1.bf16.msra.mxu0 %v8417
        %8887 = vmatprep.subr.bf16.mxu0 %v8414
        %8888 = vmatpush1.bf16.msra.mxu0 %v8413
        %8889 = vmatprep.subr.bf16.mxu0 %v8410
        %8890 = vmatpush1.bf16.msra.mxu0 %v8409
        %8891 = vmatprep.subr.bf16.mxu0 %v8406
        %8892 = vmatpush1.bf16.msra.mxu0 %v8405
        %8893 = vmatprep.subr.bf16.mxu0 %v8402
        %8894 = vmatpush1.bf16.msra.mxu0 %v8401
        %8895 = vmatprep.subr.bf16.mxu0 %v8398
        %8896 = vmatpush1.bf16.msra.mxu0 %v8397
        %8897 = vmatprep.subr.bf16.mxu0 0
        %8898 = vmatpush2.bf16.msra.mxu0 0
        %8899 = vmatprep.subr.bf16.mxu0 0
        %8900 = vmatpush2.bf16.msra.mxu0 0
        %8901 = vmatprep.subr.bf16.mxu0 0
        %8902 = vmatpush2.bf16.msra.mxu0 0
        %8903 = vmatprep.subr.bf16.mxu0 0
        %8904 = vmatpush2.bf16.msra.mxu0 0
        %8905 = vmatprep.subr.bf16.mxu0 0
        %8906 = vmatpush2.bf16.msra.mxu0 0
        %8907 = vmatprep.subr.bf16.mxu0 0
        %8908 = vmatpush2.bf16.msra.mxu0 0
        %8909 = vmatprep.subr.bf16.mxu0 0
        %8910 = vmatpush2.bf16.msra.mxu0 0
        %8911 = vmatprep.subr.bf16.mxu0 0
        %8912 = vmatpush2.bf16.msra.mxu0 0
        %8913 = vmatprep.mubr.bf16.mxu0 0
        %8914 = vmatmul.mubr.bf16.gmra.mxu0 %v6988
        %v8915 = vpop.f32.mrf.mxu0
        %v8916 = vadd.f32 %v8875, %v8915
        %v8917 = vpop.f32.mrf.mxu0
        %v8918 = vadd.f32 %v8877, %v8917
        %v8919 = vpop.f32.mrf.mxu0
        %v8920 = vpop.f32.mrf.mxu0
        %8921 = vdwg.mxu0
        %8922 = vmatprep.subr.bf16.mxu0 %v8172
        %8923 = vmatpush1.bf16.msra.mxu0 %v8171
        %8924 = vmatprep.subr.bf16.mxu0 %v8168
        %8925 = vmatpush1.bf16.msra.mxu0 %v8167
        %8926 = vmatprep.subr.bf16.mxu0 %v8164
        %8927 = vmatpush1.bf16.msra.mxu0 %v8163
        %8928 = vmatprep.subr.bf16.mxu0 %v8160
        %8929 = vmatpush1.bf16.msra.mxu0 %v8159
        %8930 = vmatprep.subr.bf16.mxu0 %v8156
        %8931 = vmatpush1.bf16.msra.mxu0 %v8155
        %8932 = vmatprep.subr.bf16.mxu0 %v8152
        %8933 = vmatpush1.bf16.msra.mxu0 %v8151
        %8934 = vmatprep.subr.bf16.mxu0 %v8148
        %8935 = vmatpush1.bf16.msra.mxu0 %v8147
        %8936 = vmatprep.subr.bf16.mxu0 %v8144
        %8937 = vmatpush1.bf16.msra.mxu0 %v8143
        %8938 = vmatprep.subr.bf16.mxu0 %v8204
        %8939 = vmatpush2.bf16.msra.mxu0 %v8203
        %8940 = vmatprep.subr.bf16.mxu0 %v8200
        %8941 = vmatpush2.bf16.msra.mxu0 %v8199
        %8942 = vmatprep.subr.bf16.mxu0 %v8196
        %8943 = vmatpush2.bf16.msra.mxu0 %v8195
        %8944 = vmatprep.subr.bf16.mxu0 %v8192
        %8945 = vmatpush2.bf16.msra.mxu0 %v8191
        %8946 = vmatprep.subr.bf16.mxu0 %v8188
        %8947 = vmatpush2.bf16.msra.mxu0 %v8187
        %8948 = vmatprep.subr.bf16.mxu0 %v8184
        %8949 = vmatpush2.bf16.msra.mxu0 %v8183
        %8950 = vmatprep.subr.bf16.mxu0 %v8180
        %8951 = vmatpush2.bf16.msra.mxu0 %v8179
        %8952 = vmatprep.subr.bf16.mxu0 %v8176
        %8953 = vmatpush2.bf16.msra.mxu0 %v8175
        %8954 = vmatprep.mubr.bf16.mxu0 %v6981
        %8955 = vmatmul.mubr.bf16.gmra.mxu0 %v6980
        %v8956 = vpop.f32.mrf.mxu0
        %v8957 = vadd.f32 0.0, %v8956
        %v8958 = vpop.f32.mrf.mxu0
        %v8959 = vadd.f32 0.0, %v8958
        %v8960 = vpop.f32.mrf.mxu0
        %v8961 = vpop.f32.mrf.mxu0
        %8962 = vdwg.mxu0
        %8963 = vmatprep.subr.bf16.mxu0 %v8236
        %8964 = vmatpush1.bf16.msra.mxu0 %v8235
        %8965 = vmatprep.subr.bf16.mxu0 %v8232
        %8966 = vmatpush1.bf16.msra.mxu0 %v8231
        %8967 = vmatprep.subr.bf16.mxu0 %v8228
        %8968 = vmatpush1.bf16.msra.mxu0 %v8227
        %8969 = vmatprep.subr.bf16.mxu0 %v8224
        %8970 = vmatpush1.bf16.msra.mxu0 %v8223
        %8971 = vmatprep.subr.bf16.mxu0 %v8220
        %8972 = vmatpush1.bf16.msra.mxu0 %v8219
        %8973 = vmatprep.subr.bf16.mxu0 %v8216
        %8974 = vmatpush1.bf16.msra.mxu0 %v8215
        %8975 = vmatprep.subr.bf16.mxu0 %v8212
        %8976 = vmatpush1.bf16.msra.mxu0 %v8211
        %8977 = vmatprep.subr.bf16.mxu0 %v8208
        %8978 = vmatpush1.bf16.msra.mxu0 %v8207
        %8979 = vmatprep.subr.bf16.mxu0 %v8268
        %8980 = vmatpush2.bf16.msra.mxu0 %v8267
        %8981 = vmatprep.subr.bf16.mxu0 %v8264
        %8982 = vmatpush2.bf16.msra.mxu0 %v8263
        %8983 = vmatprep.subr.bf16.mxu0 %v8260
        %8984 = vmatpush2.bf16.msra.mxu0 %v8259
        %8985 = vmatprep.subr.bf16.mxu0 %v8256
        %8986 = vmatpush2.bf16.msra.mxu0 %v8255
        %8987 = vmatprep.subr.bf16.mxu0 %v8252
        %8988 = vmatpush2.bf16.msra.mxu0 %v8251
        %8989 = vmatprep.subr.bf16.mxu0 %v8248
        %8990 = vmatpush2.bf16.msra.mxu0 %v8247
        %8991 = vmatprep.subr.bf16.mxu0 %v8244
        %8992 = vmatpush2.bf16.msra.mxu0 %v8243
        %8993 = vmatprep.subr.bf16.mxu0 %v8240
        %8994 = vmatpush2.bf16.msra.mxu0 %v8239
        %8995 = vmatprep.mubr.bf16.mxu0 %v6983
        %8996 = vmatmul.mubr.bf16.gmra.mxu0 %v6982
        %v8997 = vpop.f32.mrf.mxu0
        %v8998 = vadd.f32 %v8957, %v8997
        %v8999 = vpop.f32.mrf.mxu0
        %v9000 = vadd.f32 %v8959, %v8999
        %v9001 = vpop.f32.mrf.mxu0
        %v9002 = vpop.f32.mrf.mxu0
        %9003 = vdwg.mxu0
        %9004 = vmatprep.subr.bf16.mxu0 %v8300
        %9005 = vmatpush1.bf16.msra.mxu0 %v8299
        %9006 = vmatprep.subr.bf16.mxu0 %v8296
        %9007 = vmatpush1.bf16.msra.mxu0 %v8295
        %9008 = vmatprep.subr.bf16.mxu0 %v8292
        %9009 = vmatpush1.bf16.msra.mxu0 %v8291
        %9010 = vmatprep.subr.bf16.mxu0 %v8288
        %9011 = vmatpush1.bf16.msra.mxu0 %v8287
        %9012 = vmatprep.subr.bf16.mxu0 %v8284
        %9013 = vmatpush1.bf16.msra.mxu0 %v8283
        %9014 = vmatprep.subr.bf16.mxu0 %v8280
        %9015 = vmatpush1.bf16.msra.mxu0 %v8279
        %9016 = vmatprep.subr.bf16.mxu0 %v8276
        %9017 = vmatpush1.bf16.msra.mxu0 %v8275
        %9018 = vmatprep.subr.bf16.mxu0 %v8272
        %9019 = vmatpush1.bf16.msra.mxu0 %v8271
        %9020 = vmatprep.subr.bf16.mxu0 %v8332
        %9021 = vmatpush2.bf16.msra.mxu0 %v8331
        %9022 = vmatprep.subr.bf16.mxu0 %v8328
        %9023 = vmatpush2.bf16.msra.mxu0 %v8327
        %9024 = vmatprep.subr.bf16.mxu0 %v8324
        %9025 = vmatpush2.bf16.msra.mxu0 %v8323
        %9026 = vmatprep.subr.bf16.mxu0 %v8320
        %9027 = vmatpush2.bf16.msra.mxu0 %v8319
        %9028 = vmatprep.subr.bf16.mxu0 %v8316
        %9029 = vmatpush2.bf16.msra.mxu0 %v8315
        %9030 = vmatprep.subr.bf16.mxu0 %v8312
        %9031 = vmatpush2.bf16.msra.mxu0 %v8311
        %9032 = vmatprep.subr.bf16.mxu0 %v8308
        %9033 = vmatpush2.bf16.msra.mxu0 %v8307
        %9034 = vmatprep.subr.bf16.mxu0 %v8304
        %9035 = vmatpush2.bf16.msra.mxu0 %v8303
        %9036 = vmatprep.mubr.bf16.mxu0 %v6985
        %9037 = vmatmul.mubr.bf16.gmra.mxu0 %v6984
        %v9038 = vpop.f32.mrf.mxu0
        %v9039 = vadd.f32 %v8998, %v9038
        %v9040 = vpop.f32.mrf.mxu0
        %v9041 = vadd.f32 %v9000, %v9040
        %v9042 = vpop.f32.mrf.mxu0
        %v9043 = vpop.f32.mrf.mxu0
        %9044 = vdwg.mxu0
        %9045 = vmatprep.subr.bf16.mxu0 %v8364
        %9046 = vmatpush1.bf16.msra.mxu0 %v8363
        %9047 = vmatprep.subr.bf16.mxu0 %v8360
        %9048 = vmatpush1.bf16.msra.mxu0 %v8359
        %9049 = vmatprep.subr.bf16.mxu0 %v8356
        %9050 = vmatpush1.bf16.msra.mxu0 %v8355
        %9051 = vmatprep.subr.bf16.mxu0 %v8352
        %9052 = vmatpush1.bf16.msra.mxu0 %v8351
        %9053 = vmatprep.subr.bf16.mxu0 %v8348
        %9054 = vmatpush1.bf16.msra.mxu0 %v8347
        %9055 = vmatprep.subr.bf16.mxu0 %v8344
        %9056 = vmatpush1.bf16.msra.mxu0 %v8343
        %9057 = vmatprep.subr.bf16.mxu0 %v8340
        %9058 = vmatpush1.bf16.msra.mxu0 %v8339
        %9059 = vmatprep.subr.bf16.mxu0 %v8336
        %9060 = vmatpush1.bf16.msra.mxu0 %v8335
        %9061 = vmatprep.subr.bf16.mxu0 %v8396
        %9062 = vmatpush2.bf16.msra.mxu0 %v8395
        %9063 = vmatprep.subr.bf16.mxu0 %v8392
        %9064 = vmatpush2.bf16.msra.mxu0 %v8391
        %9065 = vmatprep.subr.bf16.mxu0 %v8388
        %9066 = vmatpush2.bf16.msra.mxu0 %v8387
        %9067 = vmatprep.subr.bf16.mxu0 %v8384
        %9068 = vmatpush2.bf16.msra.mxu0 %v8383
        %9069 = vmatprep.subr.bf16.mxu0 %v8380
        %9070 = vmatpush2.bf16.msra.mxu0 %v8379
        %9071 = vmatprep.subr.bf16.mxu0 %v8376
        %9072 = vmatpush2.bf16.msra.mxu0 %v8375
        %9073 = vmatprep.subr.bf16.mxu0 %v8372
        %9074 = vmatpush2.bf16.msra.mxu0 %v8371
        %9075 = vmatprep.subr.bf16.mxu0 %v8368
        %9076 = vmatpush2.bf16.msra.mxu0 %v8367
        %9077 = vmatprep.mubr.bf16.mxu0 %v6987
        %9078 = vmatmul.mubr.bf16.gmra.mxu0 %v6986
        %v9079 = vpop.f32.mrf.mxu0
        %v9080 = vadd.f32 %v9039, %v9079
        %v9081 = vpop.f32.mrf.mxu0
        %v9082 = vadd.f32 %v9041, %v9081
        %v9083 = vpop.f32.mrf.mxu0
        %v9084 = vpop.f32.mrf.mxu0
        %9085 = vdwg.mxu0
        %9086 = vmatprep.subr.bf16.mxu0 %v8428
        %9087 = vmatpush1.bf16.msra.mxu0 %v8427
        %9088 = vmatprep.subr.bf16.mxu0 %v8424
        %9089 = vmatpush1.bf16.msra.mxu0 %v8423
        %9090 = vmatprep.subr.bf16.mxu0 %v8420
        %9091 = vmatpush1.bf16.msra.mxu0 %v8419
        %9092 = vmatprep.subr.bf16.mxu0 %v8416
        %9093 = vmatpush1.bf16.msra.mxu0 %v8415
        %9094 = vmatprep.subr.bf16.mxu0 %v8412
        %9095 = vmatpush1.bf16.msra.mxu0 %v8411
        %9096 = vmatprep.subr.bf16.mxu0 %v8408
        %9097 = vmatpush1.bf16.msra.mxu0 %v8407
        %9098 = vmatprep.subr.bf16.mxu0 %v8404
        %9099 = vmatpush1.bf16.msra.mxu0 %v8403
        %9100 = vmatprep.subr.bf16.mxu0 %v8400
        %9101 = vmatpush1.bf16.msra.mxu0 %v8399
        %9102 = vmatprep.subr.bf16.mxu0 0
        %9103 = vmatpush2.bf16.msra.mxu0 0
        %9104 = vmatprep.subr.bf16.mxu0 0
        %9105 = vmatpush2.bf16.msra.mxu0 0
        %9106 = vmatprep.subr.bf16.mxu0 0
        %9107 = vmatpush2.bf16.msra.mxu0 0
        %9108 = vmatprep.subr.bf16.mxu0 0
        %9109 = vmatpush2.bf16.msra.mxu0 0
        %9110 = vmatprep.subr.bf16.mxu0 0
        %9111 = vmatpush2.bf16.msra.mxu0 0
        %9112 = vmatprep.subr.bf16.mxu0 0
        %9113 = vmatpush2.bf16.msra.mxu0 0
        %9114 = vmatprep.subr.bf16.mxu0 0
        %9115 = vmatpush2.bf16.msra.mxu0 0
        %9116 = vmatprep.subr.bf16.mxu0 0
        %9117 = vmatpush2.bf16.msra.mxu0 0
        %9118 = vmatprep.mubr.bf16.mxu0 0
        %9119 = vmatmul.mubr.bf16.gmra.mxu0 %v6988
        %v9120 = vpop.f32.mrf.mxu0
        %v9121 = vadd.f32 %v9080, %v9120
        %v9122 = vpop.f32.mrf.mxu0
        %v9123 = vadd.f32 %v9082, %v9122
        %v9124 = vpop.f32.mrf.mxu0
        %v9125 = vpop.f32.mrf.mxu0
        %9126 = vdwg.mxu0
        %v9127 = vld [vmem:[%s8] sm:$0xff]
        %v9128 = vmax.f32 %v8916, %v8918
        %v9129 = vmax.f32 %v9121, %v9123
        %v9130 = vmax.f32 %v9128, %v9129
        %9132 = vset.pattern.permute.xlu0 0
        %9133 = vperm.xlu0 %9132, %v9127
        %v9134 = vpop.permute.xlu0 %9133
        %v9136 = vadd.f32 %v9130, %v9134
        %v9137 = vmax.f32 %v9136, 0.0
        %v9138 = vld [vmem:[%s10] sm:$0xf]
        %v9139 = vld [vmem:[%s10 + $0x4] sm:$0xf]
        %v9140 = vld [vmem:[%s10 + $0x8] sm:$0xf]
        %v9141 = vld [vmem:[%s10 + $0xc] sm:$0xf]
        %v9142 = vld [vmem:[%s10 + $0x10] sm:$0xf]
        %v9143 = vld [vmem:[%s10 + $0x14] sm:$0xf]
        %v9144 = vld [vmem:[%s10 + $0x18] sm:$0xf]
        %v9145 = vld [vmem:[%s10 + $0x1c] sm:$0xf]
        %v9146 = vld [vmem:[%s10 + $0x20] sm:$0xf]
        %v9147 = vpack.c.bf16 %v9137, %v9137
        %v9157 = vunpack.c.l.b16 %v9138
        %v9158 = vunpack.c.l.b16 %v9139
        %v9159 = vunpack.c.l.b16 %v9140
        %v9160 = vunpack.c.l.b16 %v9141
        %v9161 = vunpack.c.l.b16 %v9142
        %v9162 = vunpack.c.l.b16 %v9143
        %v9163 = vunpack.c.l.b16 %v9144
        %v9164 = vunpack.c.l.b16 %v9145
        %v9165 = vunpack.c.l.b16 %v9146
        %v9166 = vpack.c.b16 %v9158, %v9157
        %v9167 = vpack.c.b16 %v9160, %v9159
        %v9168 = vpack.c.b16 %v9162, %v9161
        %v9169 = vpack.c.b16 %v9164, %v9163
        %v9170 = vpack.c.b16 %v9165, %v9165
        %v9172 = vsel %vm775, %v9166, 0
        %v9175 = vsel %vm775, %v9167, 0
        %v9178 = vsel %vm775, %v9168, 0
        %v9181 = vsel %vm775, %v9169, 0
        %v9184 = vsel %vm775, %v9170, 0
        %v9187 = vsel %vm815, %v9147, 0
        %9189 = vmatprep.subr.bf16.mxu0 0
        %9190 = vmatpush1.bf16.msra.mxu0 0
        %9191 = vmatprep.subr.bf16.mxu0 0
        %9192 = vmatpush1.bf16.msra.mxu0 0
        %9193 = vmatprep.subr.bf16.mxu0 0
        %9194 = vmatpush1.bf16.msra.mxu0 0
        %9195 = vmatprep.subr.bf16.mxu0 0
        %9196 = vmatpush1.bf16.msra.mxu0 0
        %9197 = vmatprep.subr.bf16.mxu0 0
        %9198 = vmatpush1.bf16.msra.mxu0 0
        %9199 = vmatprep.subr.bf16.mxu0 0
        %9200 = vmatpush1.bf16.msra.mxu0 0
        %9201 = vmatprep.subr.bf16.mxu0 0
        %9202 = vmatpush1.bf16.msra.mxu0 0
        %9203 = vmatprep.subr.bf16.mxu0 0
        %9204 = vmatpush1.bf16.msra.mxu0 %v9187
        %9205 = vmatprep.subr.bf16.mxu0 0
        %9206 = vmatpush2.bf16.msra.mxu0 0
        %9207 = vmatprep.subr.bf16.mxu0 0
        %9208 = vmatpush2.bf16.msra.mxu0 0
        %9209 = vmatprep.subr.bf16.mxu0 0
        %9210 = vmatpush2.bf16.msra.mxu0 0
        %9211 = vmatprep.subr.bf16.mxu0 0
        %9212 = vmatpush2.bf16.msra.mxu0 0
        %9213 = vmatprep.subr.bf16.mxu0 0
        %9214 = vmatpush2.bf16.msra.mxu0 0
        %9215 = vmatprep.subr.bf16.mxu0 0
        %9216 = vmatpush2.bf16.msra.mxu0 0
        %9217 = vmatprep.subr.bf16.mxu0 0
        %9218 = vmatpush2.bf16.msra.mxu0 0
        %9219 = vmatprep.subr.bf16.mxu0 0
        %9220 = vmatpush2.bf16.msra.mxu0 0
        %9221 = vmatprep.mubr.bf16.mxu0 0
        %9222 = vmatmul.mubr.bf16.gmra.mxu0 %v9172
        %v9223 = vpop.f32.mrf.mxu0
        %v9224 = vadd.f32 0.0, %v9223
        %v9225 = vpop.f32.mrf.mxu0
        %v9226 = vpop.f32.mrf.mxu0
        %v9227 = vadd.f32 0.0, %v9226
        %v9228 = vpop.f32.mrf.mxu0
        %9229 = vmatprep.mubr.bf16.mxu0 0
        %9230 = vmatmul.mubr.bf16.gmra.mxu0 %v9175
        %v9231 = vpop.f32.mrf.mxu0
        %v9232 = vadd.f32 0.0, %v9231
        %v9233 = vpop.f32.mrf.mxu0
        %v9234 = vpop.f32.mrf.mxu0
        %v9235 = vadd.f32 0.0, %v9234
        %v9236 = vpop.f32.mrf.mxu0
        %9237 = vmatprep.mubr.bf16.mxu0 0
        %9238 = vmatmul.mubr.bf16.gmra.mxu0 %v9178
        %v9239 = vpop.f32.mrf.mxu0
        %v9240 = vadd.f32 0.0, %v9239
        %v9241 = vpop.f32.mrf.mxu0
        %v9242 = vpop.f32.mrf.mxu0
        %v9243 = vadd.f32 0.0, %v9242
        %v9244 = vpop.f32.mrf.mxu0
        %9245 = vmatprep.mubr.bf16.mxu0 0
        %9246 = vmatmul.mubr.bf16.gmra.mxu0 %v9181
        %v9247 = vpop.f32.mrf.mxu0
        %v9248 = vadd.f32 0.0, %v9247
        %v9249 = vpop.f32.mrf.mxu0
        %v9250 = vpop.f32.mrf.mxu0
        %v9251 = vadd.f32 0.0, %v9250
        %v9252 = vpop.f32.mrf.mxu0
        %9253 = vmatprep.mubr.bf16.mxu0 0
        %9254 = vmatmul.mubr.bf16.gmra.mxu0 %v9184
        %v9255 = vpop.f32.mrf.mxu0
        %v9256 = vadd.f32 0.0, %v9255
        %v9257 = vpop.f32.mrf.mxu0
        %v9258 = vpop.f32.mrf.mxu0
        %v9259 = vpop.f32.mrf.mxu0
        %9260 = vdwg.mxu0
        %v9261 = vpack.c.bf16 %v9224, %v9224
        %v9262 = vpack.c.bf16 %v9227, %v9227
        %v9263 = vpack.c.bf16 %v9232, %v9232
        %v9264 = vpack.c.bf16 %v9235, %v9235
        %v9265 = vpack.c.bf16 %v9240, %v9240
        %v9266 = vpack.c.bf16 %v9243, %v9243
        %v9267 = vpack.c.bf16 %v9248, %v9248
        %v9268 = vpack.c.bf16 %v9251, %v9251
        %v9269 = vpack.c.bf16 %v9256, %v9256
        %v9270 = vld [vmem:[#allocation3] sm:$0xff]
        %v9271 = vld [vmem:[#allocation3 + $0x8] sm:$0xff]
        %v9272 = vld [vmem:[#allocation3 + $0x10] sm:$0xff]
        %v9273 = vld [vmem:[#allocation3 + $0x18] sm:$0xff]
        %v9274 = vld [vmem:[#allocation3 + $0x20] sm:$0xff]
        %v9275 = vld [vmem:[#allocation3 + $0x28] sm:$0xff]
        %v9276 = vld [vmem:[#allocation3 + $0x30] sm:$0xff]
        %v9277 = vld [vmem:[#allocation3 + $0x38] sm:$0xff]
        %v9278 = vld [vmem:[#allocation3 + $0x40] sm:$0xff]
        %v9279 = vld [vmem:[#allocation3 + $0x48] sm:$0xff]
        %v9280 = vld [vmem:[#allocation3 + $0x50] sm:$0xff]
        %v9281 = vld [vmem:[#allocation3 + $0x58] sm:$0xff]
        %v9282 = vld [vmem:[#allocation3 + $0x60] sm:$0xff]
        %v9283 = vld [vmem:[#allocation3 + $0x68] sm:$0xff]
        %v9284 = vld [vmem:[#allocation3 + $0x70] sm:$0xff]
        %v9285 = vld [vmem:[#allocation3 + $0x78] sm:$0xff]
        %v9286 = vld [vmem:[#allocation3 + $0x80] sm:$0xff]
        %v9287 = vld [vmem:[#allocation3 + $0x88] sm:$0xff]
        %v9288 = vld [vmem:[#allocation3 + $0x90] sm:$0xff]
        %v9289 = vld [vmem:[#allocation3 + $0x98] sm:$0xff]
        %v9290 = vld [vmem:[#allocation3 + $0xa0] sm:$0xff]
        %v9291 = vld [vmem:[#allocation3 + $0xa8] sm:$0xff]
        %v9292 = vld [vmem:[#allocation3 + $0xb0] sm:$0xff]
        %v9293 = vld [vmem:[#allocation3 + $0xb8] sm:$0xff]
        %v9294 = vld [vmem:[#allocation3 + $0xc0] sm:$0xff]
        %v9295 = vld [vmem:[#allocation3 + $0xc8] sm:$0xff]
        %v9296 = vld [vmem:[#allocation3 + $0xd0] sm:$0xff]
        %v9297 = vld [vmem:[#allocation3 + $0xd8] sm:$0xff]
        %v9298 = vld [vmem:[#allocation3 + $0xe0] sm:$0xff]
        %v9299 = vld [vmem:[#allocation3 + $0xe8] sm:$0xff]
        %v9300 = vld [vmem:[#allocation3 + $0xf0] sm:$0xff]
        %v9301 = vld [vmem:[#allocation3 + $0xf8] sm:$0xff]
        %v9302 = vld [vmem:[#allocation3 + $0x100] sm:$0xff]
        %v9303 = vld [vmem:[#allocation3 + $0x108] sm:$0xff]
        %v9304 = vld [vmem:[#allocation3 + $0x110] sm:$0xff]
        %v9305 = vld [vmem:[#allocation3 + $0x118] sm:$0xff]
        %v9306 = vld [vmem:[#allocation3 + $0x120] sm:$0xff]
        %v9307 = vld [vmem:[#allocation3 + $0x128] sm:$0xff]
        %v9308 = vld [vmem:[#allocation3 + $0x130] sm:$0xff]
        %v9309 = vld [vmem:[#allocation3 + $0x138] sm:$0xff]
        %v9310 = vld [vmem:[#allocation3 + $0x140] sm:$0xff]
        %v9311 = vld [vmem:[#allocation3 + $0x148] sm:$0xff]
        %v9312 = vld [vmem:[#allocation3 + $0x150] sm:$0xff]
        %v9313 = vld [vmem:[#allocation3 + $0x158] sm:$0xff]
        %v9314 = vld [vmem:[#allocation3 + $0x160] sm:$0xff]
        %v9315 = vld [vmem:[#allocation3 + $0x168] sm:$0xff]
        %v9316 = vld [vmem:[#allocation3 + $0x170] sm:$0xff]
        %v9317 = vld [vmem:[#allocation3 + $0x178] sm:$0xff]
        %v9318 = vld [vmem:[#allocation3 + $0x180] sm:$0xff]
        %v9319 = vld [vmem:[#allocation3 + $0x188] sm:$0xff]
        %v9320 = vld [vmem:[#allocation3 + $0x190] sm:$0xff]
        %v9321 = vld [vmem:[#allocation3 + $0x198] sm:$0xff]
        %v9322 = vld [vmem:[#allocation3 + $0x1a0] sm:$0xff]
        %v9323 = vld [vmem:[#allocation3 + $0x1a8] sm:$0xff]
        %v9324 = vld [vmem:[#allocation3 + $0x1b0] sm:$0xff]
        %v9325 = vld [vmem:[#allocation3 + $0x1b8] sm:$0xff]
        %v9326 = vld [vmem:[#allocation3 + $0x1c0] sm:$0xff]
        %v9327 = vld [vmem:[#allocation3 + $0x1c8] sm:$0xff]
        %v9328 = vld [vmem:[#allocation3 + $0x1d0] sm:$0xff]
        %v9329 = vld [vmem:[#allocation3 + $0x1d8] sm:$0xff]
        %v9330 = vld [vmem:[#allocation3 + $0x1e0] sm:$0xff]
        %v9331 = vld [vmem:[#allocation3 + $0x1e8] sm:$0xff]
        %v9332 = vld [vmem:[#allocation3 + $0x1f0] sm:$0xff]
        %v9333 = vld [vmem:[#allocation3 + $0x1f8] sm:$0xff]
        %v9334 = vld [vmem:[#allocation3 + $0x200] sm:$0xff]
        %v9335 = vld [vmem:[#allocation3 + $0x208] sm:$0xff]
        %v9336 = vld [vmem:[#allocation3 + $0x210] sm:$0xff]
        %v9337 = vld [vmem:[#allocation3 + $0x218] sm:$0xff]
        %v9338 = vld [vmem:[#allocation3 + $0x220] sm:$0xff]
        %v9339 = vld [vmem:[#allocation3 + $0x228] sm:$0xff]
        %v9340 = vld [vmem:[#allocation3 + $0x230] sm:$0xff]
        %v9341 = vld [vmem:[#allocation3 + $0x238] sm:$0xff]
        %v9342 = vld [vmem:[#allocation3 + $0x240] sm:$0xff]
        %v9343 = vld [vmem:[#allocation3 + $0x248] sm:$0xff]
        %v9344 = vld [vmem:[#allocation3 + $0x250] sm:$0xff]
        %v9345 = vld [vmem:[#allocation3 + $0x258] sm:$0xff]
        %v9346 = vld [vmem:[#allocation3 + $0x260] sm:$0xff]
        %v9347 = vld [vmem:[#allocation3 + $0x268] sm:$0xff]
        %v9348 = vld [vmem:[#allocation3 + $0x270] sm:$0xff]
        %v9349 = vld [vmem:[#allocation3 + $0x278] sm:$0xff]
        %v9350 = vld [vmem:[#allocation3 + $0x280] sm:$0xff]
        %v9351 = vld [vmem:[#allocation3 + $0x288] sm:$0xff]
        %v9352 = vld [vmem:[#allocation3 + $0x290] sm:$0xff]
        %v9353 = vld [vmem:[#allocation3 + $0x298] sm:$0xff]
        %v9354 = vld [vmem:[#allocation3 + $0x2a0] sm:$0xff]
        %v9355 = vld [vmem:[#allocation3 + $0x2a8] sm:$0xff]
        %v9356 = vld [vmem:[#allocation3 + $0x2b0] sm:$0xff]
        %v9357 = vld [vmem:[#allocation3 + $0x2b8] sm:$0xff]
        %v9358 = vld [vmem:[#allocation3 + $0x2c0] sm:$0xff]
        %v9359 = vld [vmem:[#allocation3 + $0x2c8] sm:$0xff]
        %v9360 = vld [vmem:[#allocation3 + $0x2d0] sm:$0xff]
        %v9361 = vld [vmem:[#allocation3 + $0x2d8] sm:$0xff]
        %v9362 = vld [vmem:[#allocation3 + $0x2e0] sm:$0xff]
        %v9363 = vld [vmem:[#allocation3 + $0x2e8] sm:$0xff]
        %v9364 = vld [vmem:[#allocation3 + $0x2f0] sm:$0xff]
        %v9365 = vld [vmem:[#allocation3 + $0x2f8] sm:$0xff]
        %v9366 = vld [vmem:[#allocation3 + $0x300] sm:$0xff]
        %v9367 = vld [vmem:[#allocation3 + $0x308] sm:$0xff]
        %v9368 = vld [vmem:[#allocation3 + $0x310] sm:$0xff]
        %v9369 = vld [vmem:[#allocation3 + $0x318] sm:$0xff]
        %v9370 = vld [vmem:[#allocation3 + $0x320] sm:$0xff]
        %v9371 = vld [vmem:[#allocation3 + $0x328] sm:$0xff]
        %v9372 = vld [vmem:[#allocation3 + $0x330] sm:$0xff]
        %v9373 = vld [vmem:[#allocation3 + $0x338] sm:$0xff]
        %v9374 = vld [vmem:[#allocation3 + $0x340] sm:$0xff]
        %v9375 = vld [vmem:[#allocation3 + $0x348] sm:$0xff]
        %v9376 = vld [vmem:[#allocation3 + $0x350] sm:$0xff]
        %v9377 = vld [vmem:[#allocation3 + $0x358] sm:$0xff]
        %v9378 = vld [vmem:[#allocation3 + $0x360] sm:$0xff]
        %v9379 = vld [vmem:[#allocation3 + $0x368] sm:$0xff]
        %v9380 = vld [vmem:[#allocation3 + $0x370] sm:$0xff]
        %v9381 = vld [vmem:[#allocation3 + $0x378] sm:$0xff]
        %v9382 = vld [vmem:[#allocation3 + $0x380] sm:$0xff]
        %v9383 = vld [vmem:[#allocation3 + $0x388] sm:$0xff]
        %v9384 = vld [vmem:[#allocation3 + $0x390] sm:$0xff]
        %v9385 = vld [vmem:[#allocation3 + $0x398] sm:$0xff]
        %v9386 = vld [vmem:[#allocation3 + $0x3a0] sm:$0xff]
        %v9387 = vld [vmem:[#allocation3 + $0x3a8] sm:$0xff]
        %v9388 = vld [vmem:[#allocation3 + $0x3b0] sm:$0xff]
        %v9389 = vld [vmem:[#allocation3 + $0x3b8] sm:$0xff]
        %v9390 = vld [vmem:[#allocation3 + $0x3c0] sm:$0xff]
        %v9391 = vld [vmem:[#allocation3 + $0x3c8] sm:$0xff]
        %v9392 = vld [vmem:[#allocation3 + $0x3d0] sm:$0xff]
        %v9393 = vld [vmem:[#allocation3 + $0x3d8] sm:$0xff]
        %v9394 = vld [vmem:[#allocation3 + $0x3e0] sm:$0xff]
        %v9395 = vld [vmem:[#allocation3 + $0x3e8] sm:$0xff]
        %v9396 = vld [vmem:[#allocation3 + $0x3f0] sm:$0xff]
        %v9397 = vld [vmem:[#allocation3 + $0x3f8] sm:$0xff]
        %v9398 = vld [vmem:[#allocation3 + $0x400] sm:$0xff]
        %v9399 = vld [vmem:[#allocation3 + $0x408] sm:$0xff]
        %v9400 = vld [vmem:[#allocation3 + $0x410] sm:$0xff]
        %v9401 = vld [vmem:[#allocation3 + $0x418] sm:$0xff]
        %v9402 = vld [vmem:[#allocation3 + $0x420] sm:$0xff]
        %v9403 = vld [vmem:[#allocation3 + $0x428] sm:$0xff]
        %v9404 = vld [vmem:[#allocation3 + $0x430] sm:$0xff]
        %v9405 = vld [vmem:[#allocation3 + $0x438] sm:$0xff]
        %v9406 = vld [vmem:[#allocation3 + $0x440] sm:$0xff]
        %v9407 = vld [vmem:[#allocation3 + $0x448] sm:$0xff]
        %v9408 = vld [vmem:[#allocation3 + $0x450] sm:$0xff]
        %v9409 = vld [vmem:[#allocation3 + $0x458] sm:$0xff]
        %v9410 = vld [vmem:[#allocation3 + $0x460] sm:$0xff]
        %v9411 = vld [vmem:[#allocation3 + $0x468] sm:$0xff]
        %v9412 = vld [vmem:[#allocation3 + $0x470] sm:$0xff]
        %v9413 = vld [vmem:[#allocation3 + $0x478] sm:$0xff]
        %v9414 = vld [vmem:[#allocation3 + $0x480] sm:$0xff]
        %v9415 = vld [vmem:[#allocation3 + $0x488] sm:$0xff]
        %v9416 = vld [vmem:[#allocation3 + $0x490] sm:$0xff]
        %v9417 = vld [vmem:[#allocation3 + $0x498] sm:$0xff]
        %v9418 = vld [vmem:[#allocation3 + $0x4a0] sm:$0xff]
        %v9419 = vld [vmem:[#allocation3 + $0x4a8] sm:$0xff]
        %v9420 = vld [vmem:[#allocation3 + $0x4b0] sm:$0xff]
        %v9421 = vld [vmem:[#allocation3 + $0x4b8] sm:$0xff]
        %v9422 = vld [vmem:[#allocation3 + $0x4c0] sm:$0xff]
        %v9423 = vld [vmem:[#allocation3 + $0x4c8] sm:$0xff]
        %v9424 = vld [vmem:[#allocation3 + $0x4d0] sm:$0xff]
        %v9425 = vld [vmem:[#allocation3 + $0x4d8] sm:$0xff]
        %v9426 = vld [vmem:[#allocation3 + $0x4e0] sm:$0xff]
        %v9427 = vld [vmem:[#allocation3 + $0x4e8] sm:$0xff]
        %v9428 = vld [vmem:[#allocation3 + $0x4f0] sm:$0xff]
        %v9429 = vld [vmem:[#allocation3 + $0x4f8] sm:$0xff]
        %v9430 = vld [vmem:[#allocation3 + $0x500] sm:$0xff]
        %v9431 = vld [vmem:[#allocation3 + $0x508] sm:$0xff]
        %v9432 = vld [vmem:[#allocation3 + $0x510] sm:$0xff]
        %v9433 = vld [vmem:[#allocation3 + $0x518] sm:$0xff]
        %v9434 = vld [vmem:[#allocation3 + $0x520] sm:$0xff]
        %v9435 = vld [vmem:[#allocation3 + $0x528] sm:$0xff]
        %v9436 = vld [vmem:[#allocation3 + $0x530] sm:$0xff]
        %v9437 = vld [vmem:[#allocation3 + $0x538] sm:$0xff]
        %v9438 = vld [vmem:[#allocation3 + $0x540] sm:$0xff]
        %v9439 = vld [vmem:[#allocation3 + $0x548] sm:$0xff]
        %v9440 = vld [vmem:[#allocation3 + $0x550] sm:$0xff]
        %v9441 = vld [vmem:[#allocation3 + $0x558] sm:$0xff]
        %v9442 = vld [vmem:[#allocation3 + $0x560] sm:$0xff]
        %v9443 = vld [vmem:[#allocation3 + $0x568] sm:$0xff]
        %v9444 = vld [vmem:[#allocation3 + $0x570] sm:$0xff]
        %v9445 = vld [vmem:[#allocation3 + $0x578] sm:$0xff]
        %v9446 = vld [vmem:[#allocation3 + $0x580] sm:$0xff]
        %v9447 = vld [vmem:[#allocation3 + $0x588] sm:$0xff]
        %v9448 = vld [vmem:[#allocation3 + $0x590] sm:$0xff]
        %v9449 = vld [vmem:[#allocation3 + $0x598] sm:$0xff]
        %v9450 = vld [vmem:[#allocation3 + $0x5a0] sm:$0xff]
        %v9451 = vld [vmem:[#allocation3 + $0x5a8] sm:$0xff]
        %v9452 = vld [vmem:[#allocation3 + $0x5b0] sm:$0xff]
        %v9453 = vld [vmem:[#allocation3 + $0x5b8] sm:$0xff]
        %v9454 = vld [vmem:[#allocation3 + $0x5c0] sm:$0xff]
        %v9455 = vld [vmem:[#allocation3 + $0x5c8] sm:$0xff]
        %v9456 = vld [vmem:[#allocation3 + $0x5d0] sm:$0xff]
        %v9457 = vld [vmem:[#allocation3 + $0x5d8] sm:$0xff]
        %v9458 = vld [vmem:[#allocation3 + $0x5e0] sm:$0xff]
        %v9459 = vld [vmem:[#allocation3 + $0x5e8] sm:$0xff]
        %v9460 = vld [vmem:[#allocation3 + $0x5f0] sm:$0xff]
        %v9461 = vld [vmem:[#allocation3 + $0x5f8] sm:$0xff]
        %v9462 = vld [vmem:[#allocation3 + $0x600] sm:$0xff]
        %v9463 = vld [vmem:[#allocation3 + $0x608] sm:$0xff]
        %v9464 = vld [vmem:[#allocation3 + $0x610] sm:$0xff]
        %v9465 = vld [vmem:[#allocation3 + $0x618] sm:$0xff]
        %v9466 = vld [vmem:[#allocation3 + $0x620] sm:$0xff]
        %v9467 = vld [vmem:[#allocation3 + $0x628] sm:$0xff]
        %v9468 = vld [vmem:[#allocation3 + $0x630] sm:$0xff]
        %v9469 = vld [vmem:[#allocation3 + $0x638] sm:$0xff]
        %v9470 = vld [vmem:[#allocation3 + $0x640] sm:$0xff]
        %v9471 = vld [vmem:[#allocation3 + $0x648] sm:$0xff]
        %v9472 = vld [vmem:[#allocation3 + $0x650] sm:$0xff]
        %v9473 = vld [vmem:[#allocation3 + $0x658] sm:$0xff]
        %v9474 = vld [vmem:[#allocation3 + $0x660] sm:$0xff]
        %v9475 = vld [vmem:[#allocation3 + $0x668] sm:$0xff]
        %v9476 = vld [vmem:[#allocation3 + $0x670] sm:$0xff]
        %v9477 = vld [vmem:[#allocation3 + $0x678] sm:$0xff]
        %v9478 = vld [vmem:[#allocation3 + $0x680] sm:$0xff]
        %v9479 = vld [vmem:[#allocation3 + $0x688] sm:$0xff]
        %v9480 = vld [vmem:[#allocation3 + $0x690] sm:$0xff]
        %v9481 = vld [vmem:[#allocation3 + $0x698] sm:$0xff]
        %v9482 = vld [vmem:[#allocation3 + $0x6a0] sm:$0xff]
        %v9483 = vld [vmem:[#allocation3 + $0x6a8] sm:$0xff]
        %v9484 = vld [vmem:[#allocation3 + $0x6b0] sm:$0xff]
        %v9485 = vld [vmem:[#allocation3 + $0x6b8] sm:$0xff]
        %v9486 = vld [vmem:[#allocation3 + $0x6c0] sm:$0xff]
        %v9487 = vld [vmem:[#allocation3 + $0x6c8] sm:$0xff]
        %v9488 = vld [vmem:[#allocation3 + $0x6d0] sm:$0xff]
        %v9489 = vld [vmem:[#allocation3 + $0x6d8] sm:$0xff]
        %v9490 = vld [vmem:[#allocation3 + $0x6e0] sm:$0xff]
        %v9491 = vld [vmem:[#allocation3 + $0x6e8] sm:$0xff]
        %v9492 = vld [vmem:[#allocation3 + $0x6f0] sm:$0xff]
        %v9493 = vld [vmem:[#allocation3 + $0x6f8] sm:$0xff]
        %v9494 = vld [vmem:[#allocation3 + $0x700] sm:$0xff]
        %v9495 = vld [vmem:[#allocation3 + $0x708] sm:$0xff]
        %v9496 = vld [vmem:[#allocation3 + $0x710] sm:$0xff]
        %v9497 = vld [vmem:[#allocation3 + $0x718] sm:$0xff]
        %v9498 = vld [vmem:[#allocation3 + $0x720] sm:$0xff]
        %v9499 = vld [vmem:[#allocation3 + $0x728] sm:$0xff]
        %v9500 = vld [vmem:[#allocation3 + $0x730] sm:$0xff]
        %v9501 = vld [vmem:[#allocation3 + $0x738] sm:$0xff]
        %v9502 = vld [vmem:[#allocation3 + $0x740] sm:$0xff]
        %v9503 = vld [vmem:[#allocation3 + $0x748] sm:$0xff]
        %v9504 = vld [vmem:[#allocation3 + $0x750] sm:$0xff]
        %v9505 = vld [vmem:[#allocation3 + $0x758] sm:$0xff]
        %v9506 = vld [vmem:[#allocation3 + $0x760] sm:$0xff]
        %v9507 = vld [vmem:[#allocation3 + $0x768] sm:$0xff]
        %v9508 = vld [vmem:[#allocation3 + $0x770] sm:$0xff]
        %v9509 = vld [vmem:[#allocation3 + $0x778] sm:$0xff]
        %v9510 = vld [vmem:[#allocation3 + $0x780] sm:$0xff]
        %v9511 = vld [vmem:[#allocation3 + $0x788] sm:$0xff]
        %v9512 = vld [vmem:[#allocation3 + $0x790] sm:$0xff]
        %v9513 = vld [vmem:[#allocation3 + $0x798] sm:$0xff]
        %v9514 = vld [vmem:[#allocation3 + $0x7a0] sm:$0xff]
        %v9515 = vld [vmem:[#allocation3 + $0x7a8] sm:$0xff]
        %v9516 = vld [vmem:[#allocation3 + $0x7b0] sm:$0xff]
        %v9517 = vld [vmem:[#allocation3 + $0x7b8] sm:$0xff]
        %v9518 = vld [vmem:[#allocation3 + $0x7c0] sm:$0xff]
        %v9519 = vld [vmem:[#allocation3 + $0x7c8] sm:$0xff]
        %v9520 = vld [vmem:[#allocation3 + $0x7d0] sm:$0xff]
        %v9521 = vld [vmem:[#allocation3 + $0x7d8] sm:$0xff]
        %v9522 = vld [vmem:[#allocation3 + $0x7e0] sm:$0xff]
        %v9523 = vld [vmem:[#allocation3 + $0x7e8] sm:$0xff]
        %v9524 = vld [vmem:[#allocation3 + $0x7f0] sm:$0xff]
        %v9525 = vld [vmem:[#allocation3 + $0x7f8] sm:$0xff]
        %v9526 = vld [vmem:[#allocation3 + $0x800] sm:$0xff]
        %v9527 = vld [vmem:[#allocation3 + $0x808] sm:$0xff]
        %v9528 = vld [vmem:[#allocation3 + $0x810] sm:$0xff]
        %v9529 = vld [vmem:[#allocation3 + $0x818] sm:$0xff]
        %v9530 = vld [vmem:[#allocation3 + $0x820] sm:$0xff]
        %v9531 = vld [vmem:[#allocation3 + $0x828] sm:$0xff]
        %v9532 = vld [vmem:[#allocation3 + $0x830] sm:$0xff]
        %v9533 = vld [vmem:[#allocation3 + $0x838] sm:$0xff]
        %v9534 = vld [vmem:[#allocation3 + $0x840] sm:$0xff]
        %v9535 = vld [vmem:[#allocation3 + $0x848] sm:$0xff]
        %v9536 = vld [vmem:[#allocation3 + $0x850] sm:$0xff]
        %v9537 = vld [vmem:[#allocation3 + $0x858] sm:$0xff]
        %v9538 = vld [vmem:[#allocation3 + $0x860] sm:$0xff]
        %v9539 = vld [vmem:[#allocation3 + $0x868] sm:$0xff]
        %v9540 = vld [vmem:[#allocation3 + $0x870] sm:$0xff]
        %v9541 = vld [vmem:[#allocation3 + $0x878] sm:$0xff]
        %v9542 = vld [vmem:[#allocation3 + $0x880] sm:$0xff]
        %v9543 = vld [vmem:[#allocation3 + $0x888] sm:$0xff]
        %v9544 = vld [vmem:[#allocation3 + $0x890] sm:$0xff]
        %v9545 = vld [vmem:[#allocation3 + $0x898] sm:$0xff]
        %v9546 = vld [vmem:[#allocation3 + $0x8a0] sm:$0xff]
        %v9547 = vld [vmem:[#allocation3 + $0x8a8] sm:$0xff]
        %v9548 = vld [vmem:[#allocation3 + $0x8b0] sm:$0xff]
        %v9549 = vld [vmem:[#allocation3 + $0x8b8] sm:$0xff]
        %v9550 = vld [vmem:[#allocation3 + $0x8c0] sm:$0xff]
        %v9551 = vld [vmem:[#allocation3 + $0x8c8] sm:$0xff]
        %v9552 = vld [vmem:[#allocation3 + $0x8d0] sm:$0xff]
        %v9553 = vld [vmem:[#allocation3 + $0x8d8] sm:$0xff]
        %v9554 = vld [vmem:[#allocation3 + $0x8e0] sm:$0xff]
        %v9555 = vld [vmem:[#allocation3 + $0x8e8] sm:$0xff]
        %v9556 = vld [vmem:[#allocation3 + $0x8f0] sm:$0xff]
        %v9557 = vld [vmem:[#allocation3 + $0x8f8] sm:$0xff]
        %v9846 = vunpack.c.l.b16 %v9270
        %v9847 = vunpack.c.h.b16 %v9270
        %v9848 = vunpack.c.l.b16 %v9271
        %v9849 = vunpack.c.h.b16 %v9271
        %v9850 = vunpack.c.l.b16 %v9272
        %v9851 = vunpack.c.h.b16 %v9272
        %v9852 = vunpack.c.l.b16 %v9273
        %v9853 = vunpack.c.h.b16 %v9273
        %v9854 = vunpack.c.l.b16 %v9274
        %v9855 = vunpack.c.h.b16 %v9274
        %v9856 = vunpack.c.l.b16 %v9275
        %v9857 = vunpack.c.h.b16 %v9275
        %v9858 = vunpack.c.l.b16 %v9276
        %v9859 = vunpack.c.h.b16 %v9276
        %v9860 = vunpack.c.l.b16 %v9277
        %v9861 = vunpack.c.h.b16 %v9277
        %v9862 = vunpack.c.l.b16 %v9278
        %v9863 = vunpack.c.h.b16 %v9278
        %v9864 = vunpack.c.l.b16 %v9279
        %v9865 = vunpack.c.h.b16 %v9279
        %v9866 = vunpack.c.l.b16 %v9280
        %v9867 = vunpack.c.h.b16 %v9280
        %v9868 = vunpack.c.l.b16 %v9281
        %v9869 = vunpack.c.h.b16 %v9281
        %v9870 = vunpack.c.l.b16 %v9282
        %v9871 = vunpack.c.h.b16 %v9282
        %v9872 = vunpack.c.l.b16 %v9283
        %v9873 = vunpack.c.h.b16 %v9283
        %v9874 = vunpack.c.l.b16 %v9284
        %v9875 = vunpack.c.h.b16 %v9284
        %v9876 = vunpack.c.l.b16 %v9285
        %v9877 = vunpack.c.h.b16 %v9285
        %v9878 = vunpack.c.l.b16 %v9286
        %v9879 = vunpack.c.h.b16 %v9286
        %v9880 = vunpack.c.l.b16 %v9287
        %v9881 = vunpack.c.h.b16 %v9287
        %v9882 = vunpack.c.l.b16 %v9288
        %v9883 = vunpack.c.h.b16 %v9288
        %v9884 = vunpack.c.l.b16 %v9289
        %v9885 = vunpack.c.h.b16 %v9289
        %v9886 = vunpack.c.l.b16 %v9290
        %v9887 = vunpack.c.h.b16 %v9290
        %v9888 = vunpack.c.l.b16 %v9291
        %v9889 = vunpack.c.h.b16 %v9291
        %v9890 = vunpack.c.l.b16 %v9292
        %v9891 = vunpack.c.h.b16 %v9292
        %v9892 = vunpack.c.l.b16 %v9293
        %v9893 = vunpack.c.h.b16 %v9293
        %v9894 = vunpack.c.l.b16 %v9294
        %v9895 = vunpack.c.h.b16 %v9294
        %v9896 = vunpack.c.l.b16 %v9295
        %v9897 = vunpack.c.h.b16 %v9295
        %v9898 = vunpack.c.l.b16 %v9296
        %v9899 = vunpack.c.h.b16 %v9296
        %v9900 = vunpack.c.l.b16 %v9297
        %v9901 = vunpack.c.h.b16 %v9297
        %v9902 = vunpack.c.l.b16 %v9298
        %v9903 = vunpack.c.h.b16 %v9298
        %v9904 = vunpack.c.l.b16 %v9299
        %v9905 = vunpack.c.h.b16 %v9299
        %v9906 = vunpack.c.l.b16 %v9300
        %v9907 = vunpack.c.h.b16 %v9300
        %v9908 = vunpack.c.l.b16 %v9301
        %v9909 = vunpack.c.h.b16 %v9301
        %v9910 = vunpack.c.l.b16 %v9302
        %v9911 = vunpack.c.h.b16 %v9302
        %v9912 = vunpack.c.l.b16 %v9303
        %v9913 = vunpack.c.h.b16 %v9303
        %v9914 = vunpack.c.l.b16 %v9304
        %v9915 = vunpack.c.h.b16 %v9304
        %v9916 = vunpack.c.l.b16 %v9305
        %v9917 = vunpack.c.h.b16 %v9305
        %v9918 = vunpack.c.l.b16 %v9306
        %v9919 = vunpack.c.h.b16 %v9306
        %v9920 = vunpack.c.l.b16 %v9307
        %v9921 = vunpack.c.h.b16 %v9307
        %v9922 = vunpack.c.l.b16 %v9308
        %v9923 = vunpack.c.h.b16 %v9308
        %v9924 = vunpack.c.l.b16 %v9309
        %v9925 = vunpack.c.h.b16 %v9309
        %v9926 = vunpack.c.l.b16 %v9310
        %v9927 = vunpack.c.h.b16 %v9310
        %v9928 = vunpack.c.l.b16 %v9311
        %v9929 = vunpack.c.h.b16 %v9311
        %v9930 = vunpack.c.l.b16 %v9312
        %v9931 = vunpack.c.h.b16 %v9312
        %v9932 = vunpack.c.l.b16 %v9313
        %v9933 = vunpack.c.h.b16 %v9313
        %v9934 = vunpack.c.l.b16 %v9314
        %v9935 = vunpack.c.h.b16 %v9314
        %v9936 = vunpack.c.l.b16 %v9315
        %v9937 = vunpack.c.h.b16 %v9315
        %v9938 = vunpack.c.l.b16 %v9316
        %v9939 = vunpack.c.h.b16 %v9316
        %v9940 = vunpack.c.l.b16 %v9317
        %v9941 = vunpack.c.h.b16 %v9317
        %v9942 = vunpack.c.l.b16 %v9318
        %v9943 = vunpack.c.h.b16 %v9318
        %v9944 = vunpack.c.l.b16 %v9319
        %v9945 = vunpack.c.h.b16 %v9319
        %v9946 = vunpack.c.l.b16 %v9320
        %v9947 = vunpack.c.h.b16 %v9320
        %v9948 = vunpack.c.l.b16 %v9321
        %v9949 = vunpack.c.h.b16 %v9321
        %v9950 = vunpack.c.l.b16 %v9322
        %v9951 = vunpack.c.h.b16 %v9322
        %v9952 = vunpack.c.l.b16 %v9323
        %v9953 = vunpack.c.h.b16 %v9323
        %v9954 = vunpack.c.l.b16 %v9324
        %v9955 = vunpack.c.h.b16 %v9324
        %v9956 = vunpack.c.l.b16 %v9325
        %v9957 = vunpack.c.h.b16 %v9325
        %v9958 = vunpack.c.l.b16 %v9326
        %v9959 = vunpack.c.h.b16 %v9326
        %v9960 = vunpack.c.l.b16 %v9327
        %v9961 = vunpack.c.h.b16 %v9327
        %v9962 = vunpack.c.l.b16 %v9328
        %v9963 = vunpack.c.h.b16 %v9328
        %v9964 = vunpack.c.l.b16 %v9329
        %v9965 = vunpack.c.h.b16 %v9329
        %v9966 = vunpack.c.l.b16 %v9330
        %v9967 = vunpack.c.h.b16 %v9330
        %v9968 = vunpack.c.l.b16 %v9331
        %v9969 = vunpack.c.h.b16 %v9331
        %v9970 = vunpack.c.l.b16 %v9332
        %v9971 = vunpack.c.h.b16 %v9332
        %v9972 = vunpack.c.l.b16 %v9333
        %v9973 = vunpack.c.h.b16 %v9333
        %v9974 = vunpack.c.l.b16 %v9334
        %v9975 = vunpack.c.h.b16 %v9334
        %v9976 = vunpack.c.l.b16 %v9335
        %v9977 = vunpack.c.h.b16 %v9335
        %v9978 = vunpack.c.l.b16 %v9336
        %v9979 = vunpack.c.h.b16 %v9336
        %v9980 = vunpack.c.l.b16 %v9337
        %v9981 = vunpack.c.h.b16 %v9337
        %v9982 = vunpack.c.l.b16 %v9338
        %v9983 = vunpack.c.h.b16 %v9338
        %v9984 = vunpack.c.l.b16 %v9339
        %v9985 = vunpack.c.h.b16 %v9339
        %v9986 = vunpack.c.l.b16 %v9340
        %v9987 = vunpack.c.h.b16 %v9340
        %v9988 = vunpack.c.l.b16 %v9341
        %v9989 = vunpack.c.h.b16 %v9341
        %v9990 = vunpack.c.l.b16 %v9342
        %v9991 = vunpack.c.h.b16 %v9342
        %v9992 = vunpack.c.l.b16 %v9343
        %v9993 = vunpack.c.h.b16 %v9343
        %v9994 = vunpack.c.l.b16 %v9344
        %v9995 = vunpack.c.h.b16 %v9344
        %v9996 = vunpack.c.l.b16 %v9345
        %v9997 = vunpack.c.h.b16 %v9345
        %v9998 = vunpack.c.l.b16 %v9346
        %v9999 = vunpack.c.h.b16 %v9346
        %v10000 = vunpack.c.l.b16 %v9347
        %v10001 = vunpack.c.h.b16 %v9347
        %v10002 = vunpack.c.l.b16 %v9348
        %v10003 = vunpack.c.h.b16 %v9348
        %v10004 = vunpack.c.l.b16 %v9349
        %v10005 = vunpack.c.h.b16 %v9349
        %v10006 = vunpack.c.l.b16 %v9350
        %v10007 = vunpack.c.h.b16 %v9350
        %v10008 = vunpack.c.l.b16 %v9351
        %v10009 = vunpack.c.h.b16 %v9351
        %v10010 = vunpack.c.l.b16 %v9352
        %v10011 = vunpack.c.h.b16 %v9352
        %v10012 = vunpack.c.l.b16 %v9353
        %v10013 = vunpack.c.h.b16 %v9353
        %v10014 = vunpack.c.l.b16 %v9354
        %v10015 = vunpack.c.h.b16 %v9354
        %v10016 = vunpack.c.l.b16 %v9355
        %v10017 = vunpack.c.h.b16 %v9355
        %v10018 = vunpack.c.l.b16 %v9356
        %v10019 = vunpack.c.h.b16 %v9356
        %v10020 = vunpack.c.l.b16 %v9357
        %v10021 = vunpack.c.h.b16 %v9357
        %v10022 = vunpack.c.l.b16 %v9358
        %v10023 = vunpack.c.h.b16 %v9358
        %v10024 = vunpack.c.l.b16 %v9359
        %v10025 = vunpack.c.h.b16 %v9359
        %v10026 = vunpack.c.l.b16 %v9360
        %v10027 = vunpack.c.h.b16 %v9360
        %v10028 = vunpack.c.l.b16 %v9361
        %v10029 = vunpack.c.h.b16 %v9361
        %v10030 = vunpack.c.l.b16 %v9362
        %v10031 = vunpack.c.h.b16 %v9362
        %v10032 = vunpack.c.l.b16 %v9363
        %v10033 = vunpack.c.h.b16 %v9363
        %v10034 = vunpack.c.l.b16 %v9364
        %v10035 = vunpack.c.h.b16 %v9364
        %v10036 = vunpack.c.l.b16 %v9365
        %v10037 = vunpack.c.h.b16 %v9365
        %v10038 = vunpack.c.l.b16 %v9366
        %v10039 = vunpack.c.h.b16 %v9366
        %v10040 = vunpack.c.l.b16 %v9367
        %v10041 = vunpack.c.h.b16 %v9367
        %v10042 = vunpack.c.l.b16 %v9368
        %v10043 = vunpack.c.h.b16 %v9368
        %v10044 = vunpack.c.l.b16 %v9369
        %v10045 = vunpack.c.h.b16 %v9369
        %v10046 = vunpack.c.l.b16 %v9370
        %v10047 = vunpack.c.h.b16 %v9370
        %v10048 = vunpack.c.l.b16 %v9371
        %v10049 = vunpack.c.h.b16 %v9371
        %v10050 = vunpack.c.l.b16 %v9372
        %v10051 = vunpack.c.h.b16 %v9372
        %v10052 = vunpack.c.l.b16 %v9373
        %v10053 = vunpack.c.h.b16 %v9373
        %v10054 = vunpack.c.l.b16 %v9374
        %v10055 = vunpack.c.h.b16 %v9374
        %v10056 = vunpack.c.l.b16 %v9375
        %v10057 = vunpack.c.h.b16 %v9375
        %v10058 = vunpack.c.l.b16 %v9376
        %v10059 = vunpack.c.h.b16 %v9376
        %v10060 = vunpack.c.l.b16 %v9377
        %v10061 = vunpack.c.h.b16 %v9377
        %v10062 = vunpack.c.l.b16 %v9378
        %v10063 = vunpack.c.h.b16 %v9378
        %v10064 = vunpack.c.l.b16 %v9379
        %v10065 = vunpack.c.h.b16 %v9379
        %v10066 = vunpack.c.l.b16 %v9380
        %v10067 = vunpack.c.h.b16 %v9380
        %v10068 = vunpack.c.l.b16 %v9381
        %v10069 = vunpack.c.h.b16 %v9381
        %v10070 = vunpack.c.l.b16 %v9382
        %v10071 = vunpack.c.h.b16 %v9382
        %v10072 = vunpack.c.l.b16 %v9383
        %v10073 = vunpack.c.h.b16 %v9383
        %v10074 = vunpack.c.l.b16 %v9384
        %v10075 = vunpack.c.h.b16 %v9384
        %v10076 = vunpack.c.l.b16 %v9385
        %v10077 = vunpack.c.h.b16 %v9385
        %v10078 = vunpack.c.l.b16 %v9386
        %v10079 = vunpack.c.h.b16 %v9386
        %v10080 = vunpack.c.l.b16 %v9387
        %v10081 = vunpack.c.h.b16 %v9387
        %v10082 = vunpack.c.l.b16 %v9388
        %v10083 = vunpack.c.h.b16 %v9388
        %v10084 = vunpack.c.l.b16 %v9389
        %v10085 = vunpack.c.h.b16 %v9389
        %v10086 = vunpack.c.l.b16 %v9390
        %v10087 = vunpack.c.h.b16 %v9390
        %v10088 = vunpack.c.l.b16 %v9391
        %v10089 = vunpack.c.h.b16 %v9391
        %v10090 = vunpack.c.l.b16 %v9392
        %v10091 = vunpack.c.h.b16 %v9392
        %v10092 = vunpack.c.l.b16 %v9393
        %v10093 = vunpack.c.h.b16 %v9393
        %v10094 = vunpack.c.l.b16 %v9394
        %v10095 = vunpack.c.h.b16 %v9394
        %v10096 = vunpack.c.l.b16 %v9395
        %v10097 = vunpack.c.h.b16 %v9395
        %v10098 = vunpack.c.l.b16 %v9396
        %v10099 = vunpack.c.h.b16 %v9396
        %v10100 = vunpack.c.l.b16 %v9397
        %v10101 = vunpack.c.h.b16 %v9397
        %v10102 = vunpack.c.l.b16 %v9398
        %v10103 = vunpack.c.h.b16 %v9398
        %v10104 = vunpack.c.l.b16 %v9399
        %v10105 = vunpack.c.h.b16 %v9399
        %v10106 = vunpack.c.l.b16 %v9400
        %v10107 = vunpack.c.h.b16 %v9400
        %v10108 = vunpack.c.l.b16 %v9401
        %v10109 = vunpack.c.h.b16 %v9401
        %v10110 = vunpack.c.l.b16 %v9402
        %v10111 = vunpack.c.h.b16 %v9402
        %v10112 = vunpack.c.l.b16 %v9403
        %v10113 = vunpack.c.h.b16 %v9403
        %v10114 = vunpack.c.l.b16 %v9404
        %v10115 = vunpack.c.h.b16 %v9404
        %v10116 = vunpack.c.l.b16 %v9405
        %v10117 = vunpack.c.h.b16 %v9405
        %v10118 = vunpack.c.l.b16 %v9406
        %v10119 = vunpack.c.h.b16 %v9406
        %v10120 = vunpack.c.l.b16 %v9407
        %v10121 = vunpack.c.h.b16 %v9407
        %v10122 = vunpack.c.l.b16 %v9408
        %v10123 = vunpack.c.h.b16 %v9408
        %v10124 = vunpack.c.l.b16 %v9409
        %v10125 = vunpack.c.h.b16 %v9409
        %v10126 = vunpack.c.l.b16 %v9410
        %v10127 = vunpack.c.h.b16 %v9410
        %v10128 = vunpack.c.l.b16 %v9411
        %v10129 = vunpack.c.h.b16 %v9411
        %v10130 = vunpack.c.l.b16 %v9412
        %v10131 = vunpack.c.h.b16 %v9412
        %v10132 = vunpack.c.l.b16 %v9413
        %v10133 = vunpack.c.h.b16 %v9413
        %v10134 = vunpack.c.l.b16 %v9414
        %v10135 = vunpack.c.h.b16 %v9414
        %v10136 = vunpack.c.l.b16 %v9415
        %v10137 = vunpack.c.h.b16 %v9415
        %v10138 = vunpack.c.l.b16 %v9416
        %v10139 = vunpack.c.h.b16 %v9416
        %v10140 = vunpack.c.l.b16 %v9417
        %v10141 = vunpack.c.h.b16 %v9417
        %v10142 = vunpack.c.l.b16 %v9418
        %v10143 = vunpack.c.h.b16 %v9418
        %v10144 = vunpack.c.l.b16 %v9419
        %v10145 = vunpack.c.h.b16 %v9419
        %v10146 = vunpack.c.l.b16 %v9420
        %v10147 = vunpack.c.h.b16 %v9420
        %v10148 = vunpack.c.l.b16 %v9421
        %v10149 = vunpack.c.h.b16 %v9421
        %v10150 = vunpack.c.l.b16 %v9422
        %v10151 = vunpack.c.h.b16 %v9422
        %v10152 = vunpack.c.l.b16 %v9423
        %v10153 = vunpack.c.h.b16 %v9423
        %v10154 = vunpack.c.l.b16 %v9424
        %v10155 = vunpack.c.h.b16 %v9424
        %v10156 = vunpack.c.l.b16 %v9425
        %v10157 = vunpack.c.h.b16 %v9425
        %v10158 = vunpack.c.l.b16 %v9426
        %v10159 = vunpack.c.h.b16 %v9426
        %v10160 = vunpack.c.l.b16 %v9427
        %v10161 = vunpack.c.h.b16 %v9427
        %v10162 = vunpack.c.l.b16 %v9428
        %v10163 = vunpack.c.h.b16 %v9428
        %v10164 = vunpack.c.l.b16 %v9429
        %v10165 = vunpack.c.h.b16 %v9429
        %v10166 = vunpack.c.l.b16 %v9430
        %v10167 = vunpack.c.h.b16 %v9430
        %v10168 = vunpack.c.l.b16 %v9431
        %v10169 = vunpack.c.h.b16 %v9431
        %v10170 = vunpack.c.l.b16 %v9432
        %v10171 = vunpack.c.h.b16 %v9432
        %v10172 = vunpack.c.l.b16 %v9433
        %v10173 = vunpack.c.h.b16 %v9433
        %v10174 = vunpack.c.l.b16 %v9434
        %v10175 = vunpack.c.h.b16 %v9434
        %v10176 = vunpack.c.l.b16 %v9435
        %v10177 = vunpack.c.h.b16 %v9435
        %v10178 = vunpack.c.l.b16 %v9436
        %v10179 = vunpack.c.h.b16 %v9436
        %v10180 = vunpack.c.l.b16 %v9437
        %v10181 = vunpack.c.h.b16 %v9437
        %v10182 = vunpack.c.l.b16 %v9438
        %v10183 = vunpack.c.h.b16 %v9438
        %v10184 = vunpack.c.l.b16 %v9439
        %v10185 = vunpack.c.h.b16 %v9439
        %v10186 = vunpack.c.l.b16 %v9440
        %v10187 = vunpack.c.h.b16 %v9440
        %v10188 = vunpack.c.l.b16 %v9441
        %v10189 = vunpack.c.h.b16 %v9441
        %v10190 = vunpack.c.l.b16 %v9442
        %v10191 = vunpack.c.h.b16 %v9442
        %v10192 = vunpack.c.l.b16 %v9443
        %v10193 = vunpack.c.h.b16 %v9443
        %v10194 = vunpack.c.l.b16 %v9444
        %v10195 = vunpack.c.h.b16 %v9444
        %v10196 = vunpack.c.l.b16 %v9445
        %v10197 = vunpack.c.h.b16 %v9445
        %v10198 = vunpack.c.l.b16 %v9446
        %v10199 = vunpack.c.h.b16 %v9446
        %v10200 = vunpack.c.l.b16 %v9447
        %v10201 = vunpack.c.h.b16 %v9447
        %v10202 = vunpack.c.l.b16 %v9448
        %v10203 = vunpack.c.h.b16 %v9448
        %v10204 = vunpack.c.l.b16 %v9449
        %v10205 = vunpack.c.h.b16 %v9449
        %v10206 = vunpack.c.l.b16 %v9450
        %v10207 = vunpack.c.h.b16 %v9450
        %v10208 = vunpack.c.l.b16 %v9451
        %v10209 = vunpack.c.h.b16 %v9451
        %v10210 = vunpack.c.l.b16 %v9452
        %v10211 = vunpack.c.h.b16 %v9452
        %v10212 = vunpack.c.l.b16 %v9453
        %v10213 = vunpack.c.h.b16 %v9453
        %v10214 = vunpack.c.l.b16 %v9454
        %v10215 = vunpack.c.h.b16 %v9454
        %v10216 = vunpack.c.l.b16 %v9455
        %v10217 = vunpack.c.h.b16 %v9455
        %v10218 = vunpack.c.l.b16 %v9456
        %v10219 = vunpack.c.h.b16 %v9456
        %v10220 = vunpack.c.l.b16 %v9457
        %v10221 = vunpack.c.h.b16 %v9457
        %v10222 = vunpack.c.l.b16 %v9458
        %v10223 = vunpack.c.h.b16 %v9458
        %v10224 = vunpack.c.l.b16 %v9459
        %v10225 = vunpack.c.h.b16 %v9459
        %v10226 = vunpack.c.l.b16 %v9460
        %v10227 = vunpack.c.h.b16 %v9460
        %v10228 = vunpack.c.l.b16 %v9461
        %v10229 = vunpack.c.h.b16 %v9461
        %v10230 = vunpack.c.l.b16 %v9462
        %v10231 = vunpack.c.h.b16 %v9462
        %v10232 = vunpack.c.l.b16 %v9463
        %v10233 = vunpack.c.h.b16 %v9463
        %v10234 = vunpack.c.l.b16 %v9464
        %v10235 = vunpack.c.h.b16 %v9464
        %v10236 = vunpack.c.l.b16 %v9465
        %v10237 = vunpack.c.h.b16 %v9465
        %v10238 = vunpack.c.l.b16 %v9466
        %v10239 = vunpack.c.h.b16 %v9466
        %v10240 = vunpack.c.l.b16 %v9467
        %v10241 = vunpack.c.h.b16 %v9467
        %v10242 = vunpack.c.l.b16 %v9468
        %v10243 = vunpack.c.h.b16 %v9468
        %v10244 = vunpack.c.l.b16 %v9469
        %v10245 = vunpack.c.h.b16 %v9469
        %v10246 = vunpack.c.l.b16 %v9470
        %v10247 = vunpack.c.h.b16 %v9470
        %v10248 = vunpack.c.l.b16 %v9471
        %v10249 = vunpack.c.h.b16 %v9471
        %v10250 = vunpack.c.l.b16 %v9472
        %v10251 = vunpack.c.h.b16 %v9472
        %v10252 = vunpack.c.l.b16 %v9473
        %v10253 = vunpack.c.h.b16 %v9473
        %v10254 = vunpack.c.l.b16 %v9474
        %v10255 = vunpack.c.h.b16 %v9474
        %v10256 = vunpack.c.l.b16 %v9475
        %v10257 = vunpack.c.h.b16 %v9475
        %v10258 = vunpack.c.l.b16 %v9476
        %v10259 = vunpack.c.h.b16 %v9476
        %v10260 = vunpack.c.l.b16 %v9477
        %v10261 = vunpack.c.h.b16 %v9477
        %v10262 = vunpack.c.l.b16 %v9478
        %v10263 = vunpack.c.h.b16 %v9478
        %v10264 = vunpack.c.l.b16 %v9479
        %v10265 = vunpack.c.h.b16 %v9479
        %v10266 = vunpack.c.l.b16 %v9480
        %v10267 = vunpack.c.h.b16 %v9480
        %v10268 = vunpack.c.l.b16 %v9481
        %v10269 = vunpack.c.h.b16 %v9481
        %v10270 = vunpack.c.l.b16 %v9482
        %v10271 = vunpack.c.h.b16 %v9482
        %v10272 = vunpack.c.l.b16 %v9483
        %v10273 = vunpack.c.h.b16 %v9483
        %v10274 = vunpack.c.l.b16 %v9484
        %v10275 = vunpack.c.h.b16 %v9484
        %v10276 = vunpack.c.l.b16 %v9485
        %v10277 = vunpack.c.h.b16 %v9485
        %v10278 = vunpack.c.l.b16 %v9486
        %v10279 = vunpack.c.h.b16 %v9486
        %v10280 = vunpack.c.l.b16 %v9487
        %v10281 = vunpack.c.h.b16 %v9487
        %v10282 = vunpack.c.l.b16 %v9488
        %v10283 = vunpack.c.h.b16 %v9488
        %v10284 = vunpack.c.l.b16 %v9489
        %v10285 = vunpack.c.h.b16 %v9489
        %v10286 = vunpack.c.l.b16 %v9490
        %v10287 = vunpack.c.h.b16 %v9490
        %v10288 = vunpack.c.l.b16 %v9491
        %v10289 = vunpack.c.h.b16 %v9491
        %v10290 = vunpack.c.l.b16 %v9492
        %v10291 = vunpack.c.h.b16 %v9492
        %v10292 = vunpack.c.l.b16 %v9493
        %v10293 = vunpack.c.h.b16 %v9493
        %v10294 = vunpack.c.l.b16 %v9494
        %v10295 = vunpack.c.h.b16 %v9494
        %v10296 = vunpack.c.l.b16 %v9495
        %v10297 = vunpack.c.h.b16 %v9495
        %v10298 = vunpack.c.l.b16 %v9496
        %v10299 = vunpack.c.h.b16 %v9496
        %v10300 = vunpack.c.l.b16 %v9497
        %v10301 = vunpack.c.h.b16 %v9497
        %v10302 = vunpack.c.l.b16 %v9498
        %v10303 = vunpack.c.h.b16 %v9498
        %v10304 = vunpack.c.l.b16 %v9499
        %v10305 = vunpack.c.h.b16 %v9499
        %v10306 = vunpack.c.l.b16 %v9500
        %v10307 = vunpack.c.h.b16 %v9500
        %v10308 = vunpack.c.l.b16 %v9501
        %v10309 = vunpack.c.h.b16 %v9501
        %v10310 = vunpack.c.l.b16 %v9502
        %v10311 = vunpack.c.h.b16 %v9502
        %v10312 = vunpack.c.l.b16 %v9503
        %v10313 = vunpack.c.h.b16 %v9503
        %v10314 = vunpack.c.l.b16 %v9504
        %v10315 = vunpack.c.h.b16 %v9504
        %v10316 = vunpack.c.l.b16 %v9505
        %v10317 = vunpack.c.h.b16 %v9505
        %v10318 = vunpack.c.l.b16 %v9506
        %v10319 = vunpack.c.h.b16 %v9506
        %v10320 = vunpack.c.l.b16 %v9507
        %v10321 = vunpack.c.h.b16 %v9507
        %v10322 = vunpack.c.l.b16 %v9508
        %v10323 = vunpack.c.h.b16 %v9508
        %v10324 = vunpack.c.l.b16 %v9509
        %v10325 = vunpack.c.h.b16 %v9509
        %v10326 = vunpack.c.l.b16 %v9510
        %v10327 = vunpack.c.h.b16 %v9510
        %v10328 = vunpack.c.l.b16 %v9511
        %v10329 = vunpack.c.h.b16 %v9511
        %v10330 = vunpack.c.l.b16 %v9512
        %v10331 = vunpack.c.h.b16 %v9512
        %v10332 = vunpack.c.l.b16 %v9513
        %v10333 = vunpack.c.h.b16 %v9513
        %v10334 = vunpack.c.l.b16 %v9514
        %v10335 = vunpack.c.h.b16 %v9514
        %v10336 = vunpack.c.l.b16 %v9515
        %v10337 = vunpack.c.h.b16 %v9515
        %v10338 = vunpack.c.l.b16 %v9516
        %v10339 = vunpack.c.h.b16 %v9516
        %v10340 = vunpack.c.l.b16 %v9517
        %v10341 = vunpack.c.h.b16 %v9517
        %v10342 = vunpack.c.l.b16 %v9518
        %v10343 = vunpack.c.h.b16 %v9518
        %v10344 = vunpack.c.l.b16 %v9519
        %v10345 = vunpack.c.h.b16 %v9519
        %v10346 = vunpack.c.l.b16 %v9520
        %v10347 = vunpack.c.h.b16 %v9520
        %v10348 = vunpack.c.l.b16 %v9521
        %v10349 = vunpack.c.h.b16 %v9521
        %v10350 = vunpack.c.l.b16 %v9522
        %v10351 = vunpack.c.h.b16 %v9522
        %v10352 = vunpack.c.l.b16 %v9523
        %v10353 = vunpack.c.h.b16 %v9523
        %v10354 = vunpack.c.l.b16 %v9524
        %v10355 = vunpack.c.h.b16 %v9524
        %v10356 = vunpack.c.l.b16 %v9525
        %v10357 = vunpack.c.h.b16 %v9525
        %v10358 = vunpack.c.l.b16 %v9526
        %v10359 = vunpack.c.h.b16 %v9526
        %v10360 = vunpack.c.l.b16 %v9527
        %v10361 = vunpack.c.h.b16 %v9527
        %v10362 = vunpack.c.l.b16 %v9528
        %v10363 = vunpack.c.h.b16 %v9528
        %v10364 = vunpack.c.l.b16 %v9529
        %v10365 = vunpack.c.h.b16 %v9529
        %v10366 = vunpack.c.l.b16 %v9530
        %v10367 = vunpack.c.h.b16 %v9530
        %v10368 = vunpack.c.l.b16 %v9531
        %v10369 = vunpack.c.h.b16 %v9531
        %v10370 = vunpack.c.l.b16 %v9532
        %v10371 = vunpack.c.h.b16 %v9532
        %v10372 = vunpack.c.l.b16 %v9533
        %v10373 = vunpack.c.h.b16 %v9533
        %v10374 = vunpack.c.l.b16 %v9534
        %v10375 = vunpack.c.h.b16 %v9534
        %v10376 = vunpack.c.l.b16 %v9535
        %v10377 = vunpack.c.h.b16 %v9535
        %v10378 = vunpack.c.l.b16 %v9536
        %v10379 = vunpack.c.h.b16 %v9536
        %v10380 = vunpack.c.l.b16 %v9537
        %v10381 = vunpack.c.h.b16 %v9537
        %v10382 = vunpack.c.l.b16 %v9538
        %v10383 = vunpack.c.h.b16 %v9538
        %v10384 = vunpack.c.l.b16 %v9539
        %v10385 = vunpack.c.h.b16 %v9539
        %v10386 = vunpack.c.l.b16 %v9540
        %v10387 = vunpack.c.h.b16 %v9540
        %v10388 = vunpack.c.l.b16 %v9541
        %v10389 = vunpack.c.h.b16 %v9541
        %v10390 = vunpack.c.l.b16 %v9542
        %v10391 = vunpack.c.h.b16 %v9542
        %v10392 = vunpack.c.l.b16 %v9543
        %v10393 = vunpack.c.h.b16 %v9543
        %v10394 = vunpack.c.l.b16 %v9544
        %v10395 = vunpack.c.h.b16 %v9544
        %v10396 = vunpack.c.l.b16 %v9545
        %v10397 = vunpack.c.h.b16 %v9545
        %v10398 = vunpack.c.l.b16 %v9546
        %v10399 = vunpack.c.h.b16 %v9546
        %v10400 = vunpack.c.l.b16 %v9547
        %v10401 = vunpack.c.h.b16 %v9547
        %v10402 = vunpack.c.l.b16 %v9548
        %v10403 = vunpack.c.h.b16 %v9548
        %v10404 = vunpack.c.l.b16 %v9549
        %v10405 = vunpack.c.h.b16 %v9549
        %v10406 = vunpack.c.l.b16 %v9550
        %v10407 = vunpack.c.h.b16 %v9550
        %v10408 = vunpack.c.l.b16 %v9551
        %v10409 = vunpack.c.h.b16 %v9551
        %v10410 = vunpack.c.l.b16 %v9552
        %v10411 = vunpack.c.h.b16 %v9552
        %v10412 = vunpack.c.l.b16 %v9553
        %v10413 = vunpack.c.h.b16 %v9553
        %v10414 = vunpack.c.l.b16 %v9554
        %v10415 = vunpack.c.h.b16 %v9554
        %v10416 = vunpack.c.l.b16 %v9555
        %v10417 = vunpack.c.h.b16 %v9555
        %v10418 = vunpack.c.l.b16 %v9556
        %v10419 = vunpack.c.h.b16 %v9556
        %v10420 = vunpack.c.l.b16 %v9557
        %v10421 = vunpack.c.h.b16 %v9557
        %v10422 = vpack.c.b16 %v9850, %v9846
        %v10423 = vpack.c.b16 %v9851, %v9847
        %v10424 = vpack.c.b16 %v9852, %v9848
        %v10425 = vpack.c.b16 %v9853, %v9849
        %v10426 = vpack.c.b16 %v9858, %v9854
        %v10427 = vpack.c.b16 %v9859, %v9855
        %v10428 = vpack.c.b16 %v9860, %v9856
        %v10429 = vpack.c.b16 %v9861, %v9857
        %v10430 = vpack.c.b16 %v9866, %v9862
        %v10431 = vpack.c.b16 %v9867, %v9863
        %v10432 = vpack.c.b16 %v9868, %v9864
        %v10433 = vpack.c.b16 %v9869, %v9865
        %v10434 = vpack.c.b16 %v9874, %v9870
        %v10435 = vpack.c.b16 %v9875, %v9871
        %v10436 = vpack.c.b16 %v9876, %v9872
        %v10437 = vpack.c.b16 %v9877, %v9873
        %v10438 = vpack.c.b16 %v9882, %v9878
        %v10439 = vpack.c.b16 %v9883, %v9879
        %v10440 = vpack.c.b16 %v9884, %v9880
        %v10441 = vpack.c.b16 %v9885, %v9881
        %v10442 = vpack.c.b16 %v9890, %v9886
        %v10443 = vpack.c.b16 %v9891, %v9887
        %v10444 = vpack.c.b16 %v9892, %v9888
        %v10445 = vpack.c.b16 %v9893, %v9889
        %v10446 = vpack.c.b16 %v9898, %v9894
        %v10447 = vpack.c.b16 %v9899, %v9895
        %v10448 = vpack.c.b16 %v9900, %v9896
        %v10449 = vpack.c.b16 %v9901, %v9897
        %v10450 = vpack.c.b16 %v9906, %v9902
        %v10451 = vpack.c.b16 %v9907, %v9903
        %v10452 = vpack.c.b16 %v9908, %v9904
        %v10453 = vpack.c.b16 %v9909, %v9905
        %v10454 = vpack.c.b16 %v9914, %v9910
        %v10455 = vpack.c.b16 %v9915, %v9911
        %v10456 = vpack.c.b16 %v9916, %v9912
        %v10457 = vpack.c.b16 %v9917, %v9913
        %v10458 = vpack.c.b16 %v9922, %v9918
        %v10459 = vpack.c.b16 %v9923, %v9919
        %v10460 = vpack.c.b16 %v9924, %v9920
        %v10461 = vpack.c.b16 %v9925, %v9921
        %v10462 = vpack.c.b16 %v9930, %v9926
        %v10463 = vpack.c.b16 %v9931, %v9927
        %v10464 = vpack.c.b16 %v9932, %v9928
        %v10465 = vpack.c.b16 %v9933, %v9929
        %v10466 = vpack.c.b16 %v9938, %v9934
        %v10467 = vpack.c.b16 %v9939, %v9935
        %v10468 = vpack.c.b16 %v9940, %v9936
        %v10469 = vpack.c.b16 %v9941, %v9937
        %v10470 = vpack.c.b16 %v9946, %v9942
        %v10471 = vpack.c.b16 %v9947, %v9943
        %v10472 = vpack.c.b16 %v9948, %v9944
        %v10473 = vpack.c.b16 %v9949, %v9945
        %v10474 = vpack.c.b16 %v9954, %v9950
        %v10475 = vpack.c.b16 %v9955, %v9951
        %v10476 = vpack.c.b16 %v9956, %v9952
        %v10477 = vpack.c.b16 %v9957, %v9953
        %v10478 = vpack.c.b16 %v9962, %v9958
        %v10479 = vpack.c.b16 %v9963, %v9959
        %v10480 = vpack.c.b16 %v9964, %v9960
        %v10481 = vpack.c.b16 %v9965, %v9961
        %v10482 = vpack.c.b16 %v9970, %v9966
        %v10483 = vpack.c.b16 %v9971, %v9967
        %v10484 = vpack.c.b16 %v9972, %v9968
        %v10485 = vpack.c.b16 %v9973, %v9969
        %v10486 = vpack.c.b16 %v9978, %v9974
        %v10487 = vpack.c.b16 %v9979, %v9975
        %v10488 = vpack.c.b16 %v9980, %v9976
        %v10489 = vpack.c.b16 %v9981, %v9977
        %v10490 = vpack.c.b16 %v9986, %v9982
        %v10491 = vpack.c.b16 %v9987, %v9983
        %v10492 = vpack.c.b16 %v9988, %v9984
        %v10493 = vpack.c.b16 %v9989, %v9985
        %v10494 = vpack.c.b16 %v9994, %v9990
        %v10495 = vpack.c.b16 %v9995, %v9991
        %v10496 = vpack.c.b16 %v9996, %v9992
        %v10497 = vpack.c.b16 %v9997, %v9993
        %v10498 = vpack.c.b16 %v10002, %v9998
        %v10499 = vpack.c.b16 %v10003, %v9999
        %v10500 = vpack.c.b16 %v10004, %v10000
        %v10501 = vpack.c.b16 %v10005, %v10001
        %v10502 = vpack.c.b16 %v10010, %v10006
        %v10503 = vpack.c.b16 %v10011, %v10007
        %v10504 = vpack.c.b16 %v10012, %v10008
        %v10505 = vpack.c.b16 %v10013, %v10009
        %v10506 = vpack.c.b16 %v10018, %v10014
        %v10507 = vpack.c.b16 %v10019, %v10015
        %v10508 = vpack.c.b16 %v10020, %v10016
        %v10509 = vpack.c.b16 %v10021, %v10017
        %v10510 = vpack.c.b16 %v10026, %v10022
        %v10511 = vpack.c.b16 %v10027, %v10023
        %v10512 = vpack.c.b16 %v10028, %v10024
        %v10513 = vpack.c.b16 %v10029, %v10025
        %v10514 = vpack.c.b16 %v10034, %v10030
        %v10515 = vpack.c.b16 %v10035, %v10031
        %v10516 = vpack.c.b16 %v10036, %v10032
        %v10517 = vpack.c.b16 %v10037, %v10033
        %v10518 = vpack.c.b16 %v10042, %v10038
        %v10519 = vpack.c.b16 %v10043, %v10039
        %v10520 = vpack.c.b16 %v10044, %v10040
        %v10521 = vpack.c.b16 %v10045, %v10041
        %v10522 = vpack.c.b16 %v10050, %v10046
        %v10523 = vpack.c.b16 %v10051, %v10047
        %v10524 = vpack.c.b16 %v10052, %v10048
        %v10525 = vpack.c.b16 %v10053, %v10049
        %v10526 = vpack.c.b16 %v10058, %v10054
        %v10527 = vpack.c.b16 %v10059, %v10055
        %v10528 = vpack.c.b16 %v10060, %v10056
        %v10529 = vpack.c.b16 %v10061, %v10057
        %v10530 = vpack.c.b16 %v10066, %v10062
        %v10531 = vpack.c.b16 %v10067, %v10063
        %v10532 = vpack.c.b16 %v10068, %v10064
        %v10533 = vpack.c.b16 %v10069, %v10065
        %v10534 = vpack.c.b16 %v10074, %v10070
        %v10535 = vpack.c.b16 %v10075, %v10071
        %v10536 = vpack.c.b16 %v10076, %v10072
        %v10537 = vpack.c.b16 %v10077, %v10073
        %v10538 = vpack.c.b16 %v10082, %v10078
        %v10539 = vpack.c.b16 %v10083, %v10079
        %v10540 = vpack.c.b16 %v10084, %v10080
        %v10541 = vpack.c.b16 %v10085, %v10081
        %v10542 = vpack.c.b16 %v10090, %v10086
        %v10543 = vpack.c.b16 %v10091, %v10087
        %v10544 = vpack.c.b16 %v10092, %v10088
        %v10545 = vpack.c.b16 %v10093, %v10089
        %v10546 = vpack.c.b16 %v10098, %v10094
        %v10547 = vpack.c.b16 %v10099, %v10095
        %v10548 = vpack.c.b16 %v10100, %v10096
        %v10549 = vpack.c.b16 %v10101, %v10097
        %v10550 = vpack.c.b16 %v10106, %v10102
        %v10551 = vpack.c.b16 %v10107, %v10103
        %v10552 = vpack.c.b16 %v10108, %v10104
        %v10553 = vpack.c.b16 %v10109, %v10105
        %v10554 = vpack.c.b16 %v10114, %v10110
        %v10555 = vpack.c.b16 %v10115, %v10111
        %v10556 = vpack.c.b16 %v10116, %v10112
        %v10557 = vpack.c.b16 %v10117, %v10113
        %v10558 = vpack.c.b16 %v10122, %v10118
        %v10559 = vpack.c.b16 %v10123, %v10119
        %v10560 = vpack.c.b16 %v10124, %v10120
        %v10561 = vpack.c.b16 %v10125, %v10121
        %v10562 = vpack.c.b16 %v10130, %v10126
        %v10563 = vpack.c.b16 %v10131, %v10127
        %v10564 = vpack.c.b16 %v10132, %v10128
        %v10565 = vpack.c.b16 %v10133, %v10129
        %v10566 = vpack.c.b16 %v10138, %v10134
        %v10567 = vpack.c.b16 %v10139, %v10135
        %v10568 = vpack.c.b16 %v10140, %v10136
        %v10569 = vpack.c.b16 %v10141, %v10137
        %v10570 = vpack.c.b16 %v10146, %v10142
        %v10571 = vpack.c.b16 %v10147, %v10143
        %v10572 = vpack.c.b16 %v10148, %v10144
        %v10573 = vpack.c.b16 %v10149, %v10145
        %v10574 = vpack.c.b16 %v10154, %v10150
        %v10575 = vpack.c.b16 %v10155, %v10151
        %v10576 = vpack.c.b16 %v10156, %v10152
        %v10577 = vpack.c.b16 %v10157, %v10153
        %v10578 = vpack.c.b16 %v10162, %v10158
        %v10579 = vpack.c.b16 %v10163, %v10159
        %v10580 = vpack.c.b16 %v10164, %v10160
        %v10581 = vpack.c.b16 %v10165, %v10161
        %v10582 = vpack.c.b16 %v10170, %v10166
        %v10583 = vpack.c.b16 %v10171, %v10167
        %v10584 = vpack.c.b16 %v10172, %v10168
        %v10585 = vpack.c.b16 %v10173, %v10169
        %v10586 = vpack.c.b16 %v10178, %v10174
        %v10587 = vpack.c.b16 %v10179, %v10175
        %v10588 = vpack.c.b16 %v10180, %v10176
        %v10589 = vpack.c.b16 %v10181, %v10177
        %v10590 = vpack.c.b16 %v10186, %v10182
        %v10591 = vpack.c.b16 %v10187, %v10183
        %v10592 = vpack.c.b16 %v10188, %v10184
        %v10593 = vpack.c.b16 %v10189, %v10185
        %v10594 = vpack.c.b16 %v10194, %v10190
        %v10595 = vpack.c.b16 %v10195, %v10191
        %v10596 = vpack.c.b16 %v10196, %v10192
        %v10597 = vpack.c.b16 %v10197, %v10193
        %v10598 = vpack.c.b16 %v10202, %v10198
        %v10599 = vpack.c.b16 %v10203, %v10199
        %v10600 = vpack.c.b16 %v10204, %v10200
        %v10601 = vpack.c.b16 %v10205, %v10201
        %v10602 = vpack.c.b16 %v10210, %v10206
        %v10603 = vpack.c.b16 %v10211, %v10207
        %v10604 = vpack.c.b16 %v10212, %v10208
        %v10605 = vpack.c.b16 %v10213, %v10209
        %v10606 = vpack.c.b16 %v10218, %v10214
        %v10607 = vpack.c.b16 %v10219, %v10215
        %v10608 = vpack.c.b16 %v10220, %v10216
        %v10609 = vpack.c.b16 %v10221, %v10217
        %v10610 = vpack.c.b16 %v10226, %v10222
        %v10611 = vpack.c.b16 %v10227, %v10223
        %v10612 = vpack.c.b16 %v10228, %v10224
        %v10613 = vpack.c.b16 %v10229, %v10225
        %v10614 = vpack.c.b16 %v10234, %v10230
        %v10615 = vpack.c.b16 %v10235, %v10231
        %v10616 = vpack.c.b16 %v10236, %v10232
        %v10617 = vpack.c.b16 %v10237, %v10233
        %v10618 = vpack.c.b16 %v10242, %v10238
        %v10619 = vpack.c.b16 %v10243, %v10239
        %v10620 = vpack.c.b16 %v10244, %v10240
        %v10621 = vpack.c.b16 %v10245, %v10241
        %v10622 = vpack.c.b16 %v10250, %v10246
        %v10623 = vpack.c.b16 %v10251, %v10247
        %v10624 = vpack.c.b16 %v10252, %v10248
        %v10625 = vpack.c.b16 %v10253, %v10249
        %v10626 = vpack.c.b16 %v10258, %v10254
        %v10627 = vpack.c.b16 %v10259, %v10255
        %v10628 = vpack.c.b16 %v10260, %v10256
        %v10629 = vpack.c.b16 %v10261, %v10257
        %v10630 = vpack.c.b16 %v10266, %v10262
        %v10631 = vpack.c.b16 %v10267, %v10263
        %v10632 = vpack.c.b16 %v10268, %v10264
        %v10633 = vpack.c.b16 %v10269, %v10265
        %v10634 = vpack.c.b16 %v10274, %v10270
        %v10635 = vpack.c.b16 %v10275, %v10271
        %v10636 = vpack.c.b16 %v10276, %v10272
        %v10637 = vpack.c.b16 %v10277, %v10273
        %v10638 = vpack.c.b16 %v10282, %v10278
        %v10639 = vpack.c.b16 %v10283, %v10279
        %v10640 = vpack.c.b16 %v10284, %v10280
        %v10641 = vpack.c.b16 %v10285, %v10281
        %v10642 = vpack.c.b16 %v10290, %v10286
        %v10643 = vpack.c.b16 %v10291, %v10287
        %v10644 = vpack.c.b16 %v10292, %v10288
        %v10645 = vpack.c.b16 %v10293, %v10289
        %v10646 = vpack.c.b16 %v10298, %v10294
        %v10647 = vpack.c.b16 %v10299, %v10295
        %v10648 = vpack.c.b16 %v10300, %v10296
        %v10649 = vpack.c.b16 %v10301, %v10297
        %v10650 = vpack.c.b16 %v10306, %v10302
        %v10651 = vpack.c.b16 %v10307, %v10303
        %v10652 = vpack.c.b16 %v10308, %v10304
        %v10653 = vpack.c.b16 %v10309, %v10305
        %v10654 = vpack.c.b16 %v10314, %v10310
        %v10655 = vpack.c.b16 %v10315, %v10311
        %v10656 = vpack.c.b16 %v10316, %v10312
        %v10657 = vpack.c.b16 %v10317, %v10313
        %v10658 = vpack.c.b16 %v10322, %v10318
        %v10659 = vpack.c.b16 %v10323, %v10319
        %v10660 = vpack.c.b16 %v10324, %v10320
        %v10661 = vpack.c.b16 %v10325, %v10321
        %v10662 = vpack.c.b16 %v10330, %v10326
        %v10663 = vpack.c.b16 %v10331, %v10327
        %v10664 = vpack.c.b16 %v10332, %v10328
        %v10665 = vpack.c.b16 %v10333, %v10329
        %v10666 = vpack.c.b16 %v10338, %v10334
        %v10667 = vpack.c.b16 %v10339, %v10335
        %v10668 = vpack.c.b16 %v10340, %v10336
        %v10669 = vpack.c.b16 %v10341, %v10337
        %v10670 = vpack.c.b16 %v10346, %v10342
        %v10671 = vpack.c.b16 %v10347, %v10343
        %v10672 = vpack.c.b16 %v10348, %v10344
        %v10673 = vpack.c.b16 %v10349, %v10345
        %v10674 = vpack.c.b16 %v10354, %v10350
        %v10675 = vpack.c.b16 %v10355, %v10351
        %v10676 = vpack.c.b16 %v10356, %v10352
        %v10677 = vpack.c.b16 %v10357, %v10353
        %v10678 = vpack.c.b16 %v10362, %v10358
        %v10679 = vpack.c.b16 %v10363, %v10359
        %v10680 = vpack.c.b16 %v10364, %v10360
        %v10681 = vpack.c.b16 %v10365, %v10361
        %v10682 = vpack.c.b16 %v10370, %v10366
        %v10683 = vpack.c.b16 %v10371, %v10367
        %v10684 = vpack.c.b16 %v10372, %v10368
        %v10685 = vpack.c.b16 %v10373, %v10369
        %v10686 = vpack.c.b16 %v10378, %v10374
        %v10687 = vpack.c.b16 %v10379, %v10375
        %v10688 = vpack.c.b16 %v10380, %v10376
        %v10689 = vpack.c.b16 %v10381, %v10377
        %v10690 = vpack.c.b16 %v10386, %v10382
        %v10691 = vpack.c.b16 %v10387, %v10383
        %v10692 = vpack.c.b16 %v10388, %v10384
        %v10693 = vpack.c.b16 %v10389, %v10385
        %v10694 = vpack.c.b16 %v10394, %v10390
        %v10695 = vpack.c.b16 %v10395, %v10391
        %v10696 = vpack.c.b16 %v10396, %v10392
        %v10697 = vpack.c.b16 %v10397, %v10393
        %v10698 = vpack.c.b16 %v10402, %v10398
        %v10699 = vpack.c.b16 %v10403, %v10399
        %v10700 = vpack.c.b16 %v10404, %v10400
        %v10701 = vpack.c.b16 %v10405, %v10401
        %v10702 = vpack.c.b16 %v10410, %v10406
        %v10703 = vpack.c.b16 %v10411, %v10407
        %v10704 = vpack.c.b16 %v10412, %v10408
        %v10705 = vpack.c.b16 %v10413, %v10409
        %v10706 = vpack.c.b16 %v10418, %v10414
        %v10707 = vpack.c.b16 %v10419, %v10415
        %v10708 = vpack.c.b16 %v10420, %v10416
        %v10709 = vpack.c.b16 %v10421, %v10417
        %10998 = vmatprep.subr.bf16.mxu0 %v10451
        %10999 = vmatpush1.bf16.msra.mxu0 %v10450
        %11000 = vmatprep.subr.bf16.mxu0 %v10447
        %11001 = vmatpush1.bf16.msra.mxu0 %v10446
        %11002 = vmatprep.subr.bf16.mxu0 %v10443
        %11003 = vmatpush1.bf16.msra.mxu0 %v10442
        %11004 = vmatprep.subr.bf16.mxu0 %v10439
        %11005 = vmatpush1.bf16.msra.mxu0 %v10438
        %11006 = vmatprep.subr.bf16.mxu0 %v10435
        %11007 = vmatpush1.bf16.msra.mxu0 %v10434
        %11008 = vmatprep.subr.bf16.mxu0 %v10431
        %11009 = vmatpush1.bf16.msra.mxu0 %v10430
        %11010 = vmatprep.subr.bf16.mxu0 %v10427
        %11011 = vmatpush1.bf16.msra.mxu0 %v10426
        %11012 = vmatprep.subr.bf16.mxu0 %v10423
        %11013 = vmatpush1.bf16.msra.mxu0 %v10422
        %11014 = vmatprep.subr.bf16.mxu0 %v10483
        %11015 = vmatpush2.bf16.msra.mxu0 %v10482
        %11016 = vmatprep.subr.bf16.mxu0 %v10479
        %11017 = vmatpush2.bf16.msra.mxu0 %v10478
        %11018 = vmatprep.subr.bf16.mxu0 %v10475
        %11019 = vmatpush2.bf16.msra.mxu0 %v10474
        %11020 = vmatprep.subr.bf16.mxu0 %v10471
        %11021 = vmatpush2.bf16.msra.mxu0 %v10470
        %11022 = vmatprep.subr.bf16.mxu0 %v10467
        %11023 = vmatpush2.bf16.msra.mxu0 %v10466
        %11024 = vmatprep.subr.bf16.mxu0 %v10463
        %11025 = vmatpush2.bf16.msra.mxu0 %v10462
        %11026 = vmatprep.subr.bf16.mxu0 %v10459
        %11027 = vmatpush2.bf16.msra.mxu0 %v10458
        %11028 = vmatprep.subr.bf16.mxu0 %v10455
        %11029 = vmatpush2.bf16.msra.mxu0 %v10454
        %11030 = vmatprep.mubr.bf16.mxu0 %v9262
        %11031 = vmatmul.mubr.bf16.gmra.mxu0 %v9261
        %v11032 = vpop.f32.mrf.mxu0
        %v11033 = vadd.f32 0.0, %v11032
        %v11034 = vpop.f32.mrf.mxu0
        %v11035 = vadd.f32 0.0, %v11034
        %v11036 = vpop.f32.mrf.mxu0
        %v11037 = vpop.f32.mrf.mxu0
        %11038 = vdwg.mxu0
        %11039 = vmatprep.subr.bf16.mxu0 %v10515
        %11040 = vmatpush1.bf16.msra.mxu0 %v10514
        %11041 = vmatprep.subr.bf16.mxu0 %v10511
        %11042 = vmatpush1.bf16.msra.mxu0 %v10510
        %11043 = vmatprep.subr.bf16.mxu0 %v10507
        %11044 = vmatpush1.bf16.msra.mxu0 %v10506
        %11045 = vmatprep.subr.bf16.mxu0 %v10503
        %11046 = vmatpush1.bf16.msra.mxu0 %v10502
        %11047 = vmatprep.subr.bf16.mxu0 %v10499
        %11048 = vmatpush1.bf16.msra.mxu0 %v10498
        %11049 = vmatprep.subr.bf16.mxu0 %v10495
        %11050 = vmatpush1.bf16.msra.mxu0 %v10494
        %11051 = vmatprep.subr.bf16.mxu0 %v10491
        %11052 = vmatpush1.bf16.msra.mxu0 %v10490
        %11053 = vmatprep.subr.bf16.mxu0 %v10487
        %11054 = vmatpush1.bf16.msra.mxu0 %v10486
        %11055 = vmatprep.subr.bf16.mxu0 %v10547
        %11056 = vmatpush2.bf16.msra.mxu0 %v10546
        %11057 = vmatprep.subr.bf16.mxu0 %v10543
        %11058 = vmatpush2.bf16.msra.mxu0 %v10542
        %11059 = vmatprep.subr.bf16.mxu0 %v10539
        %11060 = vmatpush2.bf16.msra.mxu0 %v10538
        %11061 = vmatprep.subr.bf16.mxu0 %v10535
        %11062 = vmatpush2.bf16.msra.mxu0 %v10534
        %11063 = vmatprep.subr.bf16.mxu0 %v10531
        %11064 = vmatpush2.bf16.msra.mxu0 %v10530
        %11065 = vmatprep.subr.bf16.mxu0 %v10527
        %11066 = vmatpush2.bf16.msra.mxu0 %v10526
        %11067 = vmatprep.subr.bf16.mxu0 %v10523
        %11068 = vmatpush2.bf16.msra.mxu0 %v10522
        %11069 = vmatprep.subr.bf16.mxu0 %v10519
        %11070 = vmatpush2.bf16.msra.mxu0 %v10518
        %11071 = vmatprep.mubr.bf16.mxu0 %v9264
        %11072 = vmatmul.mubr.bf16.gmra.mxu0 %v9263
        %v11073 = vpop.f32.mrf.mxu0
        %v11074 = vadd.f32 %v11033, %v11073
        %v11075 = vpop.f32.mrf.mxu0
        %v11076 = vadd.f32 %v11035, %v11075
        %v11077 = vpop.f32.mrf.mxu0
        %v11078 = vpop.f32.mrf.mxu0
        %11079 = vdwg.mxu0
        %11080 = vmatprep.subr.bf16.mxu0 %v10579
        %11081 = vmatpush1.bf16.msra.mxu0 %v10578
        %11082 = vmatprep.subr.bf16.mxu0 %v10575
        %11083 = vmatpush1.bf16.msra.mxu0 %v10574
        %11084 = vmatprep.subr.bf16.mxu0 %v10571
        %11085 = vmatpush1.bf16.msra.mxu0 %v10570
        %11086 = vmatprep.subr.bf16.mxu0 %v10567
        %11087 = vmatpush1.bf16.msra.mxu0 %v10566
        %11088 = vmatprep.subr.bf16.mxu0 %v10563
        %11089 = vmatpush1.bf16.msra.mxu0 %v10562
        %11090 = vmatprep.subr.bf16.mxu0 %v10559
        %11091 = vmatpush1.bf16.msra.mxu0 %v10558
        %11092 = vmatprep.subr.bf16.mxu0 %v10555
        %11093 = vmatpush1.bf16.msra.mxu0 %v10554
        %11094 = vmatprep.subr.bf16.mxu0 %v10551
        %11095 = vmatpush1.bf16.msra.mxu0 %v10550
        %11096 = vmatprep.subr.bf16.mxu0 %v10611
        %11097 = vmatpush2.bf16.msra.mxu0 %v10610
        %11098 = vmatprep.subr.bf16.mxu0 %v10607
        %11099 = vmatpush2.bf16.msra.mxu0 %v10606
        %11100 = vmatprep.subr.bf16.mxu0 %v10603
        %11101 = vmatpush2.bf16.msra.mxu0 %v10602
        %11102 = vmatprep.subr.bf16.mxu0 %v10599
        %11103 = vmatpush2.bf16.msra.mxu0 %v10598
        %11104 = vmatprep.subr.bf16.mxu0 %v10595
        %11105 = vmatpush2.bf16.msra.mxu0 %v10594
        %11106 = vmatprep.subr.bf16.mxu0 %v10591
        %11107 = vmatpush2.bf16.msra.mxu0 %v10590
        %11108 = vmatprep.subr.bf16.mxu0 %v10587
        %11109 = vmatpush2.bf16.msra.mxu0 %v10586
        %11110 = vmatprep.subr.bf16.mxu0 %v10583
        %11111 = vmatpush2.bf16.msra.mxu0 %v10582
        %11112 = vmatprep.mubr.bf16.mxu0 %v9266
        %11113 = vmatmul.mubr.bf16.gmra.mxu0 %v9265
        %v11114 = vpop.f32.mrf.mxu0
        %v11115 = vadd.f32 %v11074, %v11114
        %v11116 = vpop.f32.mrf.mxu0
        %v11117 = vadd.f32 %v11076, %v11116
        %v11118 = vpop.f32.mrf.mxu0
        %v11119 = vpop.f32.mrf.mxu0
        %11120 = vdwg.mxu0
        %11121 = vmatprep.subr.bf16.mxu0 %v10643
        %11122 = vmatpush1.bf16.msra.mxu0 %v10642
        %11123 = vmatprep.subr.bf16.mxu0 %v10639
        %11124 = vmatpush1.bf16.msra.mxu0 %v10638
        %11125 = vmatprep.subr.bf16.mxu0 %v10635
        %11126 = vmatpush1.bf16.msra.mxu0 %v10634
        %11127 = vmatprep.subr.bf16.mxu0 %v10631
        %11128 = vmatpush1.bf16.msra.mxu0 %v10630
        %11129 = vmatprep.subr.bf16.mxu0 %v10627
        %11130 = vmatpush1.bf16.msra.mxu0 %v10626
        %11131 = vmatprep.subr.bf16.mxu0 %v10623
        %11132 = vmatpush1.bf16.msra.mxu0 %v10622
        %11133 = vmatprep.subr.bf16.mxu0 %v10619
        %11134 = vmatpush1.bf16.msra.mxu0 %v10618
        %11135 = vmatprep.subr.bf16.mxu0 %v10615
        %11136 = vmatpush1.bf16.msra.mxu0 %v10614
        %11137 = vmatprep.subr.bf16.mxu0 %v10675
        %11138 = vmatpush2.bf16.msra.mxu0 %v10674
        %11139 = vmatprep.subr.bf16.mxu0 %v10671
        %11140 = vmatpush2.bf16.msra.mxu0 %v10670
        %11141 = vmatprep.subr.bf16.mxu0 %v10667
        %11142 = vmatpush2.bf16.msra.mxu0 %v10666
        %11143 = vmatprep.subr.bf16.mxu0 %v10663
        %11144 = vmatpush2.bf16.msra.mxu0 %v10662
        %11145 = vmatprep.subr.bf16.mxu0 %v10659
        %11146 = vmatpush2.bf16.msra.mxu0 %v10658
        %11147 = vmatprep.subr.bf16.mxu0 %v10655
        %11148 = vmatpush2.bf16.msra.mxu0 %v10654
        %11149 = vmatprep.subr.bf16.mxu0 %v10651
        %11150 = vmatpush2.bf16.msra.mxu0 %v10650
        %11151 = vmatprep.subr.bf16.mxu0 %v10647
        %11152 = vmatpush2.bf16.msra.mxu0 %v10646
        %11153 = vmatprep.mubr.bf16.mxu0 %v9268
        %11154 = vmatmul.mubr.bf16.gmra.mxu0 %v9267
        %v11155 = vpop.f32.mrf.mxu0
        %v11156 = vadd.f32 %v11115, %v11155
        %v11157 = vpop.f32.mrf.mxu0
        %v11158 = vadd.f32 %v11117, %v11157
        %v11159 = vpop.f32.mrf.mxu0
        %v11160 = vpop.f32.mrf.mxu0
        %11161 = vdwg.mxu0
        %11162 = vmatprep.subr.bf16.mxu0 %v10707
        %11163 = vmatpush1.bf16.msra.mxu0 %v10706
        %11164 = vmatprep.subr.bf16.mxu0 %v10703
        %11165 = vmatpush1.bf16.msra.mxu0 %v10702
        %11166 = vmatprep.subr.bf16.mxu0 %v10699
        %11167 = vmatpush1.bf16.msra.mxu0 %v10698
        %11168 = vmatprep.subr.bf16.mxu0 %v10695
        %11169 = vmatpush1.bf16.msra.mxu0 %v10694
        %11170 = vmatprep.subr.bf16.mxu0 %v10691
        %11171 = vmatpush1.bf16.msra.mxu0 %v10690
        %11172 = vmatprep.subr.bf16.mxu0 %v10687
        %11173 = vmatpush1.bf16.msra.mxu0 %v10686
        %11174 = vmatprep.subr.bf16.mxu0 %v10683
        %11175 = vmatpush1.bf16.msra.mxu0 %v10682
        %11176 = vmatprep.subr.bf16.mxu0 %v10679
        %11177 = vmatpush1.bf16.msra.mxu0 %v10678
        %11178 = vmatprep.subr.bf16.mxu0 0
        %11179 = vmatpush2.bf16.msra.mxu0 0
        %11180 = vmatprep.subr.bf16.mxu0 0
        %11181 = vmatpush2.bf16.msra.mxu0 0
        %11182 = vmatprep.subr.bf16.mxu0 0
        %11183 = vmatpush2.bf16.msra.mxu0 0
        %11184 = vmatprep.subr.bf16.mxu0 0
        %11185 = vmatpush2.bf16.msra.mxu0 0
        %11186 = vmatprep.subr.bf16.mxu0 0
        %11187 = vmatpush2.bf16.msra.mxu0 0
        %11188 = vmatprep.subr.bf16.mxu0 0
        %11189 = vmatpush2.bf16.msra.mxu0 0
        %11190 = vmatprep.subr.bf16.mxu0 0
        %11191 = vmatpush2.bf16.msra.mxu0 0
        %11192 = vmatprep.subr.bf16.mxu0 0
        %11193 = vmatpush2.bf16.msra.mxu0 0
        %11194 = vmatprep.mubr.bf16.mxu0 0
        %11195 = vmatmul.mubr.bf16.gmra.mxu0 %v9269
        %v11196 = vpop.f32.mrf.mxu0
        %v11197 = vadd.f32 %v11156, %v11196
        %v11198 = vpop.f32.mrf.mxu0
        %v11199 = vadd.f32 %v11158, %v11198
        %v11200 = vpop.f32.mrf.mxu0
        %v11201 = vpop.f32.mrf.mxu0
        %11202 = vdwg.mxu0
        %11203 = vmatprep.subr.bf16.mxu0 %v10453
        %11204 = vmatpush1.bf16.msra.mxu0 %v10452
        %11205 = vmatprep.subr.bf16.mxu0 %v10449
        %11206 = vmatpush1.bf16.msra.mxu0 %v10448
        %11207 = vmatprep.subr.bf16.mxu0 %v10445
        %11208 = vmatpush1.bf16.msra.mxu0 %v10444
        %11209 = vmatprep.subr.bf16.mxu0 %v10441
        %11210 = vmatpush1.bf16.msra.mxu0 %v10440
        %11211 = vmatprep.subr.bf16.mxu0 %v10437
        %11212 = vmatpush1.bf16.msra.mxu0 %v10436
        %11213 = vmatprep.subr.bf16.mxu0 %v10433
        %11214 = vmatpush1.bf16.msra.mxu0 %v10432
        %11215 = vmatprep.subr.bf16.mxu0 %v10429
        %11216 = vmatpush1.bf16.msra.mxu0 %v10428
        %11217 = vmatprep.subr.bf16.mxu0 %v10425
        %11218 = vmatpush1.bf16.msra.mxu0 %v10424
        %11219 = vmatprep.subr.bf16.mxu0 %v10485
        %11220 = vmatpush2.bf16.msra.mxu0 %v10484
        %11221 = vmatprep.subr.bf16.mxu0 %v10481
        %11222 = vmatpush2.bf16.msra.mxu0 %v10480
        %11223 = vmatprep.subr.bf16.mxu0 %v10477
        %11224 = vmatpush2.bf16.msra.mxu0 %v10476
        %11225 = vmatprep.subr.bf16.mxu0 %v10473
        %11226 = vmatpush2.bf16.msra.mxu0 %v10472
        %11227 = vmatprep.subr.bf16.mxu0 %v10469
        %11228 = vmatpush2.bf16.msra.mxu0 %v10468
        %11229 = vmatprep.subr.bf16.mxu0 %v10465
        %11230 = vmatpush2.bf16.msra.mxu0 %v10464
        %11231 = vmatprep.subr.bf16.mxu0 %v10461
        %11232 = vmatpush2.bf16.msra.mxu0 %v10460
        %11233 = vmatprep.subr.bf16.mxu0 %v10457
        %11234 = vmatpush2.bf16.msra.mxu0 %v10456
        %11235 = vmatprep.mubr.bf16.mxu0 %v9262
        %11236 = vmatmul.mubr.bf16.gmra.mxu0 %v9261
        %v11237 = vpop.f32.mrf.mxu0
        %v11238 = vadd.f32 0.0, %v11237
        %v11239 = vpop.f32.mrf.mxu0
        %v11240 = vadd.f32 0.0, %v11239
        %v11241 = vpop.f32.mrf.mxu0
        %v11242 = vpop.f32.mrf.mxu0
        %11243 = vdwg.mxu0
        %11244 = vmatprep.subr.bf16.mxu0 %v10517
        %11245 = vmatpush1.bf16.msra.mxu0 %v10516
        %11246 = vmatprep.subr.bf16.mxu0 %v10513
        %11247 = vmatpush1.bf16.msra.mxu0 %v10512
        %11248 = vmatprep.subr.bf16.mxu0 %v10509
        %11249 = vmatpush1.bf16.msra.mxu0 %v10508
        %11250 = vmatprep.subr.bf16.mxu0 %v10505
        %11251 = vmatpush1.bf16.msra.mxu0 %v10504
        %11252 = vmatprep.subr.bf16.mxu0 %v10501
        %11253 = vmatpush1.bf16.msra.mxu0 %v10500
        %11254 = vmatprep.subr.bf16.mxu0 %v10497
        %11255 = vmatpush1.bf16.msra.mxu0 %v10496
        %11256 = vmatprep.subr.bf16.mxu0 %v10493
        %11257 = vmatpush1.bf16.msra.mxu0 %v10492
        %11258 = vmatprep.subr.bf16.mxu0 %v10489
        %11259 = vmatpush1.bf16.msra.mxu0 %v10488
        %11260 = vmatprep.subr.bf16.mxu0 %v10549
        %11261 = vmatpush2.bf16.msra.mxu0 %v10548
        %11262 = vmatprep.subr.bf16.mxu0 %v10545
        %11263 = vmatpush2.bf16.msra.mxu0 %v10544
        %11264 = vmatprep.subr.bf16.mxu0 %v10541
        %11265 = vmatpush2.bf16.msra.mxu0 %v10540
        %11266 = vmatprep.subr.bf16.mxu0 %v10537
        %11267 = vmatpush2.bf16.msra.mxu0 %v10536
        %11268 = vmatprep.subr.bf16.mxu0 %v10533
        %11269 = vmatpush2.bf16.msra.mxu0 %v10532
        %11270 = vmatprep.subr.bf16.mxu0 %v10529
        %11271 = vmatpush2.bf16.msra.mxu0 %v10528
        %11272 = vmatprep.subr.bf16.mxu0 %v10525
        %11273 = vmatpush2.bf16.msra.mxu0 %v10524
        %11274 = vmatprep.subr.bf16.mxu0 %v10521
        %11275 = vmatpush2.bf16.msra.mxu0 %v10520
        %11276 = vmatprep.mubr.bf16.mxu0 %v9264
        %11277 = vmatmul.mubr.bf16.gmra.mxu0 %v9263
        %v11278 = vpop.f32.mrf.mxu0
        %v11279 = vadd.f32 %v11238, %v11278
        %v11280 = vpop.f32.mrf.mxu0
        %v11281 = vadd.f32 %v11240, %v11280
        %v11282 = vpop.f32.mrf.mxu0
        %v11283 = vpop.f32.mrf.mxu0
        %11284 = vdwg.mxu0
        %11285 = vmatprep.subr.bf16.mxu0 %v10581
        %11286 = vmatpush1.bf16.msra.mxu0 %v10580
        %11287 = vmatprep.subr.bf16.mxu0 %v10577
        %11288 = vmatpush1.bf16.msra.mxu0 %v10576
        %11289 = vmatprep.subr.bf16.mxu0 %v10573
        %11290 = vmatpush1.bf16.msra.mxu0 %v10572
        %11291 = vmatprep.subr.bf16.mxu0 %v10569
        %11292 = vmatpush1.bf16.msra.mxu0 %v10568
        %11293 = vmatprep.subr.bf16.mxu0 %v10565
        %11294 = vmatpush1.bf16.msra.mxu0 %v10564
        %11295 = vmatprep.subr.bf16.mxu0 %v10561
        %11296 = vmatpush1.bf16.msra.mxu0 %v10560
        %11297 = vmatprep.subr.bf16.mxu0 %v10557
        %11298 = vmatpush1.bf16.msra.mxu0 %v10556
        %11299 = vmatprep.subr.bf16.mxu0 %v10553
        %11300 = vmatpush1.bf16.msra.mxu0 %v10552
        %11301 = vmatprep.subr.bf16.mxu0 %v10613
        %11302 = vmatpush2.bf16.msra.mxu0 %v10612
        %11303 = vmatprep.subr.bf16.mxu0 %v10609
        %11304 = vmatpush2.bf16.msra.mxu0 %v10608
        %11305 = vmatprep.subr.bf16.mxu0 %v10605
        %11306 = vmatpush2.bf16.msra.mxu0 %v10604
        %11307 = vmatprep.subr.bf16.mxu0 %v10601
        %11308 = vmatpush2.bf16.msra.mxu0 %v10600
        %11309 = vmatprep.subr.bf16.mxu0 %v10597
        %11310 = vmatpush2.bf16.msra.mxu0 %v10596
        %11311 = vmatprep.subr.bf16.mxu0 %v10593
        %11312 = vmatpush2.bf16.msra.mxu0 %v10592
        %11313 = vmatprep.subr.bf16.mxu0 %v10589
        %11314 = vmatpush2.bf16.msra.mxu0 %v10588
        %11315 = vmatprep.subr.bf16.mxu0 %v10585
        %11316 = vmatpush2.bf16.msra.mxu0 %v10584
        %11317 = vmatprep.mubr.bf16.mxu0 %v9266
        %11318 = vmatmul.mubr.bf16.gmra.mxu0 %v9265
        %v11319 = vpop.f32.mrf.mxu0
        %v11320 = vadd.f32 %v11279, %v11319
        %v11321 = vpop.f32.mrf.mxu0
        %v11322 = vadd.f32 %v11281, %v11321
        %v11323 = vpop.f32.mrf.mxu0
        %v11324 = vpop.f32.mrf.mxu0
        %11325 = vdwg.mxu0
        %11326 = vmatprep.subr.bf16.mxu0 %v10645
        %11327 = vmatpush1.bf16.msra.mxu0 %v10644
        %11328 = vmatprep.subr.bf16.mxu0 %v10641
        %11329 = vmatpush1.bf16.msra.mxu0 %v10640
        %11330 = vmatprep.subr.bf16.mxu0 %v10637
        %11331 = vmatpush1.bf16.msra.mxu0 %v10636
        %11332 = vmatprep.subr.bf16.mxu0 %v10633
        %11333 = vmatpush1.bf16.msra.mxu0 %v10632
        %11334 = vmatprep.subr.bf16.mxu0 %v10629
        %11335 = vmatpush1.bf16.msra.mxu0 %v10628
        %11336 = vmatprep.subr.bf16.mxu0 %v10625
        %11337 = vmatpush1.bf16.msra.mxu0 %v10624
        %11338 = vmatprep.subr.bf16.mxu0 %v10621
        %11339 = vmatpush1.bf16.msra.mxu0 %v10620
        %11340 = vmatprep.subr.bf16.mxu0 %v10617
        %11341 = vmatpush1.bf16.msra.mxu0 %v10616
        %11342 = vmatprep.subr.bf16.mxu0 %v10677
        %11343 = vmatpush2.bf16.msra.mxu0 %v10676
        %11344 = vmatprep.subr.bf16.mxu0 %v10673
        %11345 = vmatpush2.bf16.msra.mxu0 %v10672
        %11346 = vmatprep.subr.bf16.mxu0 %v10669
        %11347 = vmatpush2.bf16.msra.mxu0 %v10668
        %11348 = vmatprep.subr.bf16.mxu0 %v10665
        %11349 = vmatpush2.bf16.msra.mxu0 %v10664
        %11350 = vmatprep.subr.bf16.mxu0 %v10661
        %11351 = vmatpush2.bf16.msra.mxu0 %v10660
        %11352 = vmatprep.subr.bf16.mxu0 %v10657
        %11353 = vmatpush2.bf16.msra.mxu0 %v10656
        %11354 = vmatprep.subr.bf16.mxu0 %v10653
        %11355 = vmatpush2.bf16.msra.mxu0 %v10652
        %11356 = vmatprep.subr.bf16.mxu0 %v10649
        %11357 = vmatpush2.bf16.msra.mxu0 %v10648
        %11358 = vmatprep.mubr.bf16.mxu0 %v9268
        %11359 = vmatmul.mubr.bf16.gmra.mxu0 %v9267
        %v11360 = vpop.f32.mrf.mxu0
        %v11361 = vadd.f32 %v11320, %v11360
        %v11362 = vpop.f32.mrf.mxu0
        %v11363 = vadd.f32 %v11322, %v11362
        %v11364 = vpop.f32.mrf.mxu0
        %v11365 = vpop.f32.mrf.mxu0
        %11366 = vdwg.mxu0
        %11367 = vmatprep.subr.bf16.mxu0 %v10709
        %11368 = vmatpush1.bf16.msra.mxu0 %v10708
        %11369 = vmatprep.subr.bf16.mxu0 %v10705
        %11370 = vmatpush1.bf16.msra.mxu0 %v10704
        %11371 = vmatprep.subr.bf16.mxu0 %v10701
        %11372 = vmatpush1.bf16.msra.mxu0 %v10700
        %11373 = vmatprep.subr.bf16.mxu0 %v10697
        %11374 = vmatpush1.bf16.msra.mxu0 %v10696
        %11375 = vmatprep.subr.bf16.mxu0 %v10693
        %11376 = vmatpush1.bf16.msra.mxu0 %v10692
        %11377 = vmatprep.subr.bf16.mxu0 %v10689
        %11378 = vmatpush1.bf16.msra.mxu0 %v10688
        %11379 = vmatprep.subr.bf16.mxu0 %v10685
        %11380 = vmatpush1.bf16.msra.mxu0 %v10684
        %11381 = vmatprep.subr.bf16.mxu0 %v10681
        %11382 = vmatpush1.bf16.msra.mxu0 %v10680
        %11383 = vmatprep.subr.bf16.mxu0 0
        %11384 = vmatpush2.bf16.msra.mxu0 0
        %11385 = vmatprep.subr.bf16.mxu0 0
        %11386 = vmatpush2.bf16.msra.mxu0 0
        %11387 = vmatprep.subr.bf16.mxu0 0
        %11388 = vmatpush2.bf16.msra.mxu0 0
        %11389 = vmatprep.subr.bf16.mxu0 0
        %11390 = vmatpush2.bf16.msra.mxu0 0
        %11391 = vmatprep.subr.bf16.mxu0 0
        %11392 = vmatpush2.bf16.msra.mxu0 0
        %11393 = vmatprep.subr.bf16.mxu0 0
        %11394 = vmatpush2.bf16.msra.mxu0 0
        %11395 = vmatprep.subr.bf16.mxu0 0
        %11396 = vmatpush2.bf16.msra.mxu0 0
        %11397 = vmatprep.subr.bf16.mxu0 0
        %11398 = vmatpush2.bf16.msra.mxu0 0
        %11399 = vmatprep.mubr.bf16.mxu0 0
        %11400 = vmatmul.mubr.bf16.gmra.mxu0 %v9269
        %v11401 = vpop.f32.mrf.mxu0
        %v11402 = vadd.f32 %v11361, %v11401
        %v11403 = vpop.f32.mrf.mxu0
        %v11404 = vadd.f32 %v11363, %v11403
        %v11405 = vpop.f32.mrf.mxu0
        %v11406 = vpop.f32.mrf.mxu0
        %11407 = vdwg.mxu0
        %v11408 = vld [vmem:[%s11] sm:$0xff]
        %v11409 = vmax.f32 %v11197, %v11199
        %v11410 = vmax.f32 %v11402, %v11404
        %v11411 = vmax.f32 %v11409, %v11410
        %11413 = vset.pattern.permute.xlu0 0
        %11414 = vperm.xlu0 %11413, %v11408
        %v11415 = vpop.permute.xlu0 %11414
        %v11417 = vadd.f32 %v11411, %v11415
        %v11418 = vmax.f32 %v11417, 0.0
        %v11419 = vpack.c.bf16 %v11418, %v11418
        %v11420 = vld [vmem:[%s12] sm:$0xf]
        %v11421 = vld [vmem:[%s12 + $0x4] sm:$0xf]
        %v11422 = vld [vmem:[%s12 + $0x8] sm:$0xf]
        %v11423 = vld [vmem:[%s12 + $0xc] sm:$0xf]
        %v11428 = vunpack.c.l.b16 %v11420
        %v11429 = vunpack.c.l.b16 %v11421
        %v11430 = vunpack.c.l.b16 %v11422
        %v11431 = vunpack.c.l.b16 %v11423
        %v11432 = vpack.c.b16 %v11429, %v11428
        %v11433 = vpack.c.b16 %v11431, %v11430
        %v11435 = vsel %vm775, %v11432, 0
        %v11438 = vsel %vm775, %v11433, 0
        %v11441 = vsel %vm815, %v11419, 0
        %11443 = vmatprep.subr.bf16.mxu0 0
        %11444 = vmatpush1.bf16.msra.mxu0 0
        %11445 = vmatprep.subr.bf16.mxu0 0
        %11446 = vmatpush1.bf16.msra.mxu0 0
        %11447 = vmatprep.subr.bf16.mxu0 0
        %11448 = vmatpush1.bf16.msra.mxu0 0
        %11449 = vmatprep.subr.bf16.mxu0 0
        %11450 = vmatpush1.bf16.msra.mxu0 0
        %11451 = vmatprep.subr.bf16.mxu0 0
        %11452 = vmatpush1.bf16.msra.mxu0 0
        %11453 = vmatprep.subr.bf16.mxu0 0
        %11454 = vmatpush1.bf16.msra.mxu0 0
        %11455 = vmatprep.subr.bf16.mxu0 0
        %11456 = vmatpush1.bf16.msra.mxu0 0
        %11457 = vmatprep.subr.bf16.mxu0 0
        %11458 = vmatpush1.bf16.msra.mxu0 %v11441
        %11459 = vmatprep.subr.bf16.mxu0 0
        %11460 = vmatpush2.bf16.msra.mxu0 0
        %11461 = vmatprep.subr.bf16.mxu0 0
        %11462 = vmatpush2.bf16.msra.mxu0 0
        %11463 = vmatprep.subr.bf16.mxu0 0
        %11464 = vmatpush2.bf16.msra.mxu0 0
        %11465 = vmatprep.subr.bf16.mxu0 0
        %11466 = vmatpush2.bf16.msra.mxu0 0
        %11467 = vmatprep.subr.bf16.mxu0 0
        %11468 = vmatpush2.bf16.msra.mxu0 0
        %11469 = vmatprep.subr.bf16.mxu0 0
        %11470 = vmatpush2.bf16.msra.mxu0 0
        %11471 = vmatprep.subr.bf16.mxu0 0
        %11472 = vmatpush2.bf16.msra.mxu0 0
        %11473 = vmatprep.subr.bf16.mxu0 0
        %11474 = vmatpush2.bf16.msra.mxu0 0
        %11475 = vmatprep.mubr.bf16.mxu0 0
        %11476 = vmatmul.mubr.bf16.gmra.mxu0 %v11435
        %v11477 = vpop.f32.mrf.mxu0
        %v11478 = vadd.f32 0.0, %v11477
        %v11479 = vpop.f32.mrf.mxu0
        %v11480 = vpop.f32.mrf.mxu0
        %v11481 = vadd.f32 0.0, %v11480
        %v11482 = vpop.f32.mrf.mxu0
        %11483 = vmatprep.mubr.bf16.mxu0 0
        %11484 = vmatmul.mubr.bf16.gmra.mxu0 %v11438
        %v11485 = vpop.f32.mrf.mxu0
        %v11486 = vadd.f32 0.0, %v11485
        %v11487 = vpop.f32.mrf.mxu0
        %v11488 = vpop.f32.mrf.mxu0
        %v11489 = vadd.f32 0.0, %v11488
        %v11490 = vpop.f32.mrf.mxu0
        %11491 = vdwg.mxu0
        %v11492 = vpack.c.bf16 %v11481, %v11478
        %v11493 = vpack.c.bf16 %v11489, %v11486
        %v11494 = vld [vmem:[%s14] sm:$0xf]
        %v11495 = vld [vmem:[%s14 + $0x4] sm:$0xf]
        %v11496 = vld [vmem:[%s14 + $0x8] sm:$0xf]
        %v11497 = vld [vmem:[%s14 + $0xc] sm:$0xf]
        %v11498 = vld [vmem:[%s14 + $0x10] sm:$0xf]
        %v11499 = vld [vmem:[%s14 + $0x14] sm:$0xf]
        %v11500 = vld [vmem:[%s14 + $0x18] sm:$0xf]
        %v11501 = vld [vmem:[%s14 + $0x1c] sm:$0xf]
        %v11502 = vld [vmem:[%s14 + $0x20] sm:$0xf]
        %v11503 = vld [vmem:[%s14 + $0x24] sm:$0xf]
        %v11504 = vld [vmem:[%s14 + $0x28] sm:$0xf]
        %v11505 = vld [vmem:[%s14 + $0x2c] sm:$0xf]
        %v11506 = vld [vmem:[%s14 + $0x30] sm:$0xf]
        %v11507 = vld [vmem:[%s14 + $0x34] sm:$0xf]
        %v11508 = vld [vmem:[%s14 + $0x38] sm:$0xf]
        %v11509 = vld [vmem:[%s14 + $0x3c] sm:$0xf]
        %v11510 = vld [vmem:[%s13] sm:$0xff]
        %v11511 = vld [vmem:[%s13 + $0x8] sm:$0xff]
        %v11512 = vld [vmem:[%s13 + $0x10] sm:$0xff]
        %v11513 = vld [vmem:[%s13 + $0x18] sm:$0xff]
        %11515 = vset.pattern.permute.xlu0 0
        %11516 = vperm.xlu0 %11515, %v11510
        %v11517 = vpop.permute.xlu0 %11516
        %11520 = vset.pattern.permute.xlu0 0
        %11521 = vperm.xlu0 %11520, %v11511
        %v11522 = vpop.permute.xlu0 %11521
        %11525 = vset.pattern.permute.xlu0 0
        %11526 = vperm.xlu0 %11525, %v11512
        %v11527 = vpop.permute.xlu0 %11526
        %11530 = vset.pattern.permute.xlu0 0
        %11531 = vperm.xlu0 %11530, %v11513
        %v11532 = vpop.permute.xlu0 %11531
        %v11550 = vunpack.c.l.b16 %v11494
        %v11551 = vunpack.c.l.b16 %v11495
        %v11552 = vunpack.c.l.b16 %v11496
        %v11553 = vunpack.c.l.b16 %v11497
        %v11554 = vunpack.c.l.b16 %v11498
        %v11555 = vunpack.c.l.b16 %v11499
        %v11556 = vunpack.c.l.b16 %v11500
        %v11557 = vunpack.c.l.b16 %v11501
        %v11558 = vunpack.c.l.b16 %v11502
        %v11559 = vunpack.c.l.b16 %v11503
        %v11560 = vunpack.c.l.b16 %v11504
        %v11561 = vunpack.c.l.b16 %v11505
        %v11562 = vunpack.c.l.b16 %v11506
        %v11563 = vunpack.c.l.b16 %v11507
        %v11564 = vunpack.c.l.b16 %v11508
        %v11565 = vunpack.c.l.b16 %v11509
        %v11566 = vpack.c.b16 %v11551, %v11550
        %v11567 = vpack.c.b16 %v11553, %v11552
        %v11568 = vpack.c.b16 %v11555, %v11554
        %v11569 = vpack.c.b16 %v11557, %v11556
        %v11570 = vpack.c.b16 %v11559, %v11558
        %v11571 = vpack.c.b16 %v11561, %v11560
        %v11572 = vpack.c.b16 %v11563, %v11562
        %v11573 = vpack.c.b16 %v11565, %v11564
        %11582 = vmatprep.subr.bf16.mxu0 0
        %11583 = vmatpush1.bf16.msra.mxu0 %v11573
        %11584 = vmatprep.subr.bf16.mxu0 0
        %11585 = vmatpush1.bf16.msra.mxu0 %v11572
        %11586 = vmatprep.subr.bf16.mxu0 0
        %11587 = vmatpush1.bf16.msra.mxu0 %v11571
        %11588 = vmatprep.subr.bf16.mxu0 0
        %11589 = vmatpush1.bf16.msra.mxu0 %v11570
        %11590 = vmatprep.subr.bf16.mxu0 0
        %11591 = vmatpush1.bf16.msra.mxu0 %v11569
        %11592 = vmatprep.subr.bf16.mxu0 0
        %11593 = vmatpush1.bf16.msra.mxu0 %v11568
        %11594 = vmatprep.subr.bf16.mxu0 0
        %11595 = vmatpush1.bf16.msra.mxu0 %v11567
        %11596 = vmatprep.subr.bf16.mxu0 0
        %11597 = vmatpush1.bf16.msra.mxu0 %v11566
        %11598 = vmatprep.subr.bf16.mxu0 0
        %11599 = vmatpush2.bf16.msra.mxu0 0
        %11600 = vmatprep.subr.bf16.mxu0 0
        %11601 = vmatpush2.bf16.msra.mxu0 0
        %11602 = vmatprep.subr.bf16.mxu0 0
        %11603 = vmatpush2.bf16.msra.mxu0 0
        %11604 = vmatprep.subr.bf16.mxu0 0
        %11605 = vmatpush2.bf16.msra.mxu0 0
        %11606 = vmatprep.subr.bf16.mxu0 0
        %11607 = vmatpush2.bf16.msra.mxu0 0
        %11608 = vmatprep.subr.bf16.mxu0 0
        %11609 = vmatpush2.bf16.msra.mxu0 0
        %11610 = vmatprep.subr.bf16.mxu0 0
        %11611 = vmatpush2.bf16.msra.mxu0 0
        %11612 = vmatprep.subr.bf16.mxu0 0
        %11613 = vmatpush2.bf16.msra.mxu0 0
        %11614 = vmatprep.mubr.bf16.mxu0 0
        %11615 = vmatmul.mubr.bf16.gmra.mxu0 %v11492
        %v11616 = vpop.f32.mrf.mxu0
        %v11617 = vadd.f32 %v11517, %v11616
        %v11618 = vpop.f32.mrf.mxu0
        %v11619 = vpop.f32.mrf.mxu0
        %v11620 = vadd.f32 %v11522, %v11619
        %v11621 = vpop.f32.mrf.mxu0
        %11622 = vmatprep.mubr.bf16.mxu0 0
        %11623 = vmatmul.mubr.bf16.gmra.mxu0 %v11493
        %v11624 = vpop.f32.mrf.mxu0
        %v11625 = vadd.f32 %v11527, %v11624
        %v11626 = vpop.f32.mrf.mxu0
        %v11627 = vpop.f32.mrf.mxu0
        %v11628 = vadd.f32 %v11532, %v11627
        %v11629 = vpop.f32.mrf.mxu0
        %11630 = vdwg.mxu0
        %11631 = vst [vmem:[%s537] sm:$0xff] %v11617
        %11632 = vst [vmem:[%s537 + $0x8] sm:$0xff] %v11620
        %11633 = vst [vmem:[%s537 + $0x10] sm:$0xff] %v11625
        %11634 = vst [vmem:[%s537 + $0x18] sm:$0xff] %v11628
        %s11635 = sand.u32 %s355, 1
        %s11636 = sand.u32 %s355, 1
        %s11637 = smul.addr %s11636, 32
        %s11638 = scalar_lea.vmem [#allocation5], %s11637
        // Predicated region
        $region108: #{cnn_backbone_forward.1} parent=98 // pred_check
          %p11639 = pneg %p365
        $region109: #{cnn_backbone_forward.1} parent=98 // pred_check_branch
          %11641 = sbr.rel (%p11639) target = $region111
        $region110: #{cnn_backbone_forward.1} parent=98 // pred_region
          %s11642 = smul.addr %s27, 8
          %s11643 = scalar_lea.vmem %s15, %s11642
          // Predicated region
          $region112: #{cnn_backbone_forward.1} parent=110 // pred_check
            _
          $region113: #{cnn_backbone_forward.1} parent=110 // pred_check_branch
            %11645 = sbr.rel (0) target = $region115
          $region114: #{cnn_backbone_forward.1} parent=110 // pred_region
            // Predicated region
            $region116: #{cnn_backbone_forward.1} parent=114 // pred_check
              _
            $region117: #{cnn_backbone_forward.1} parent=114 // pred_check_branch
              %11647 = sbr.rel (0) target = $region119
            $region118: #{cnn_backbone_forward.1} parent=114 // pred_region
              // Predicated region
              $region131: #{cnn_backbone_forward.1} parent=118 // pred_check
                _
              $region132: #{cnn_backbone_forward.1} parent=118 // pred_check_branch
                %11669 = sbr.rel (0) target = $region134
              $region133: #{cnn_backbone_forward.1} parent=118 // pred_region
                loop: start=0, step=1, limit=1
                $region135: #{cnn_backbone_forward.1} parent=133 // loop_pre_header
                  _
                $region136: #{cnn_backbone_forward.1} parent=133 // loop_header
                  %s11671 = sphi 0, %s11675
                  %p11672 = scmp.ge.s32.totalorder %s11671, 1
                  %s11676 = sphi %s11638, %s11638
                  %s11677 = sphi %s11643, %s11643
                $region137: #{cnn_backbone_forward.1} parent=133 // loop_header_branch
                  %11674 = sbr.rel (%p11672) target = $region141
                $region138: #{cnn_backbone_forward.1} parent=133 // loop_body
                  %v11678 = vld [vmem:[%s11676] sm:$0xff]
                  %11679 = vst [vmem:[%s11677] sm:$0xff] %v11678
                  %v11680 = vld [vmem:[%s11676 + $0x8] sm:$0xff]
                  %11681 = vst [vmem:[%s11677 + $0x10] sm:$0xff] %v11680
                  %v11682 = vld [vmem:[%s11676 + $0x10] sm:$0xff]
                  %11683 = vst [vmem:[%s11677 + $0x20] sm:$0xff] %v11682
                  %v11684 = vld [vmem:[%s11676 + $0x18] sm:$0xff]
                  %11685 = vst [vmem:[%s11677 + $0x30] sm:$0xff] %v11684
                $region139: #{cnn_backbone_forward.1} parent=133 // loop_footer
                  %s11675 = sadd.s32 1, %s11671
                $region140: #{cnn_backbone_forward.1} parent=133 // loop_footer_branch
                  %11670 = sbr.rel target = $region136
                $region141: #{cnn_backbone_forward.1} parent=133 // loop_exit
                  _
              $region134: #{cnn_backbone_forward.1} parent=118 // pred_fallthru
                _
              // Predicated region
              $region142: #{cnn_backbone_forward.1} parent=118 // pred_check
                _
              $region143: #{cnn_backbone_forward.1} parent=118 // pred_check_branch
                %11687 = sbr.rel target = $region145
              $region144: #{cnn_backbone_forward.1} parent=118 // pred_region
                _
              $region145: #{cnn_backbone_forward.1} parent=118 // pred_fallthru
                _
            $region119: #{cnn_backbone_forward.1} parent=114 // pred_fallthru
              _
            // Predicated region
            $region120: #{cnn_backbone_forward.1} parent=114 // pred_check
              _
            $region121: #{cnn_backbone_forward.1} parent=114 // pred_check_branch
              %11649 = sbr.rel target = $region123
            $region122: #{cnn_backbone_forward.1} parent=114 // pred_region
              %s11651 = ssub.s32 256, 1
              loop: start=0, step=1, limit=1
              $region124: #{cnn_backbone_forward.1} parent=122 // loop_pre_header
                _
              $region125: #{cnn_backbone_forward.1} parent=122 // loop_header
                %s11653 = sphi 0, %s11657
                %p11654 = scmp.ge.s32.totalorder %s11653, 1
                %s11658 = sphi %s11638, %s11638
                %s11659 = sphi %s11643, %s11643
              $region126: #{cnn_backbone_forward.1} parent=122 // loop_header_branch
                %11656 = sbr.rel (%p11654) target = $region130
              $region127: #{cnn_backbone_forward.1} parent=122 // loop_body
                %v11660 = vld [vmem:[%s11658] sm:%s11651]
                %11661 = vst [vmem:[%s11659] sm:%s11651] %v11660
                %v11662 = vld [vmem:[%s11658 + $0x8] sm:%s11651]
                %11663 = vst [vmem:[%s11659 + $0x10] sm:%s11651] %v11662
                %v11664 = vld [vmem:[%s11658 + $0x10] sm:%s11651]
                %11665 = vst [vmem:[%s11659 + $0x20] sm:%s11651] %v11664
                %v11666 = vld [vmem:[%s11658 + $0x18] sm:%s11651]
                %11667 = vst [vmem:[%s11659 + $0x30] sm:%s11651] %v11666
              $region128: #{cnn_backbone_forward.1} parent=122 // loop_footer
                %s11657 = sadd.s32 1, %s11653
              $region129: #{cnn_backbone_forward.1} parent=122 // loop_footer_branch
                %11652 = sbr.rel target = $region125
              $region130: #{cnn_backbone_forward.1} parent=122 // loop_exit
                _
            $region123: #{cnn_backbone_forward.1} parent=114 // pred_fallthru
              _
          $region115: #{cnn_backbone_forward.1} parent=110 // pred_fallthru
            _
          %11688 = vnop
        $region111: #{cnn_backbone_forward.1} parent=98 // pred_fallthru
          _
      $region99: #{cnn_backbone_forward.1} parent=5 // pred_fallthru
        _
      %p11689 = scmp.le.s32.totalorder 2, %s22
      // Predicated region
      $region146: #{cnn_backbone_forward.1} parent=5 // pred_check
        %p11690 = pneg %p11689
      $region147: #{cnn_backbone_forward.1} parent=5 // pred_check_branch
        %11692 = sbr.rel (%p11690) target = $region149
      $region148: #{cnn_backbone_forward.1} parent=5 // pred_region
        %s11693 = ssub.s32 %s22, 2
        // Predicated region
        $region150: #{cnn_backbone_forward.1} parent=148 // pred_check
          %p11694 = pneg %p371
        $region151: #{cnn_backbone_forward.1} parent=148 // pred_check_branch
          %11696 = sbr.rel (%p11694) target = $region153
        $region152: #{cnn_backbone_forward.1} parent=148 // pred_region
          %s11697 = sand.u32 %s356, 1
          %s11698 = sand.u32 %s356, 1
          %s11699 = smul.addr %s11698, 32
          %s11700 = scalar_lea.vmem [#allocation5], %s11699
        $region153: #{cnn_backbone_forward.1} parent=148 // pred_fallthru
          _
      $region149: #{cnn_backbone_forward.1} parent=5 // pred_fallthru
        _
    $region6: #{cnn_backbone_forward.1} parent=1 // loop_footer
      %s26 = sadd.s32 1, %s22
    $region7: #{cnn_backbone_forward.1} parent=1 // loop_footer_branch
      %21 = sbr.rel target = $region3
    $region8: #{cnn_backbone_forward.1} parent=1 // loop_exit
      _
    %11701 = vsyncpa [#allocation4], 1
    %s11702 = scalar_lea.sflag [#allocation4], 1
    %11703 = vsyncpa %s11702, 1

</llo_original>
